<compile_context>
chip_gen: v7x
topology: tpu7x:2x2x1
jax: 0.10.0
libtpu: 0.0.40
codegen_flags: <defaults>
</compile_context>

<pallas_src>
import functools
import math

import jax
import jax.numpy as jnp
from jax.experimental import pallas as pl
from jax.experimental.pallas import tpu as pltpu


# ----------------------------------------------------------------------------
# Fused forward kernel (one grid step == one image)
# ----------------------------------------------------------------------------
def _gelu(x):
    # exact (erf) GELU, matching torch.nn.GELU() default
    return 0.5 * x * (1.0 + jax.lax.erf(x * 0.7071067811865475))


def _fused_forward_kernel(x_ref, w1_ref, b1_ref, p1_ref, w2_ref, b2_ref,
                          p2_ref, wl_ref, bl_ref, out_ref, pool1_s, pool2_s):
    f32 = jnp.float32
    bf16 = jnp.bfloat16

    # --- Conv1 (5x5, pad 2) + bias + GELU, one copy per pool-x-parity -------
    # x_ref: (1, 36, 96) = H-padded rows x (W*Cin) lanes.
    # w1_ref[kh, px]: (96, 128) block-Toeplitz weights, lanes = (x_out, Cout).
    b1b = jnp.broadcast_to(b1_ref[...], (32, 128)).astype(f32)   # hoisted
    g1 = []
    for px in range(2):
        acc = b1b
        for kh in range(5):
            acc = acc + jnp.dot(x_ref[0, kh:kh + 32, :], w1_ref[kh, px],
                                preferred_element_type=f32)
        g1.append(_gelu(acc).astype(bf16))

    # --- MaxPool1 2x2: y-parity selection matmuls + elementwise max ---------
    # p1_ref[py]: (20, 32), row (2+yo) picks conv row 2*yo+py; rows 0,1,18,19
    # stay zero -> conv2's H zero padding comes for free.
    cand = [jnp.dot(p1_ref[py], g1[px], preferred_element_type=f32)
            for py in range(2) for px in range(2)]
    pool1_s[...] = jnp.maximum(jnp.maximum(cand[0], cand[1]),
                               jnp.maximum(cand[2], cand[3])).astype(bf16)

    # --- Conv2 (5x5, pad 2) + bias + GELU, per pool-x-parity ----------------
    b2b = jnp.broadcast_to(b2_ref[...], (16, 512)).astype(f32)   # hoisted
    g2 = []
    for px in range(2):
        acc = b2b
        for kh in range(5):
            acc = acc + jnp.dot(pool1_s[kh:kh + 16, :], w2_ref[kh, px],
                                preferred_element_type=f32)
        g2.append(_gelu(acc).astype(bf16))

    # --- MaxPool2 2x2 -> (8, 512) features: rows = y, lanes = (x, c) --------
    cand2 = [jnp.dot(p2_ref[py], g2[px], preferred_element_type=f32)
             for py in range(2) for px in range(2)]
    pool2_s[...] = jnp.maximum(jnp.maximum(cand2[0], cand2[1]),
                               jnp.maximum(cand2[2], cand2[3])).astype(bf16)

    # --- Linear (column-permuted weights, classes padded to 128) + softmax --
    logits = bl_ref[...]                                   # (1, 128) f32
    for y in range(8):
        logits = logits + jnp.dot(pool2_s[y:y + 1, :], wl_ref[y],
                                  preferred_element_type=f32)
    m = jnp.max(logits, axis=-1, keepdims=True)
    e = jnp.exp(logits - m)                                # padded classes -> 0
    out_ref[0] = e / jnp.sum(e, axis=-1, keepdims=True)


# ----------------------------------------------------------------------------
# Parameter prep: fold conv taps / padding / pool parity / flatten order into
# constant operand matrices (done once, outside the hot path).
# ----------------------------------------------------------------------------
def prepare_params(params, num_classes):
    f32, bf16 = jnp.float32, jnp.bfloat16
    assert num_classes <= 128

    def conv_toeplitz(w_oihw, w_in, w_out):
        # (5, 2, w_in*Cin, w_out*Cout): per kh tap and per pool-x-parity px,
        # M[xin*Cin+ci, xo*Cout+co] = w[co, ci, kh, kw] with
        # kw = xin - (2*xo+px) + 2 if 0 <= kw < 5 else 0 (zero W-padding folded).
        cout, cin = w_oihw.shape[0], w_oihw.shape[1]
        w_t = jnp.transpose(w_oihw, (2, 3, 1, 0)).astype(f32)   # (kh, kw, ci, co)
        xin = jnp.arange(w_in)[:, None]
        xo = jnp.arange(w_out)[None, :]
        per_kh = []
        for kh in range(5):
            per_px = []
            for px in range(2):
                kw = xin - 2 * xo - px + 2                      # (w_in, w_out)
                valid = ((kw >= 0) & (kw < 5)).astype(f32)
                blk = w_t[kh][jnp.clip(kw, 0, 4)]               # (w_in, w_out, ci, co)
                blk = blk * valid[:, :, None, None]
                blk = jnp.transpose(blk, (0, 2, 1, 3))          # (xin, ci, xo, co)
                per_px.append(blk.reshape(w_in * cin, w_out * cout))
            per_kh.append(jnp.stack(per_px))
        return jnp.stack(per_kh).astype(bf16)

    def pool_row_select(n_out, n_in, pad):
        # (2, n_out + 2*pad, n_in): row pad+yo selects input row 2*yo+py.
        mats = []
        for py in range(2):
            m = jnp.zeros((n_out + 2 * pad, n_in), f32)
            m = m.at[pad + jnp.arange(n_out), 2 * jnp.arange(n_out) + py].set(1.0)
            mats.append(m)
        return jnp.stack(mats).astype(bf16)

    nc = num_classes
    # PyTorch flatten order of (C=64, H=8, W=8) is f = c*64 + y*8 + x; permute
    # the Linear columns to the kernel's (y, x, c) order and pad classes to 128.
    wl = params["wl"].astype(f32)                              # (nc, 4096)
    wl_r = jnp.transpose(wl.reshape(nc, 64, 8, 8), (2, 3, 1, 0))  # (y, x, c, n)
    wls = jnp.pad(wl_r.reshape(8, 512, nc), ((0, 0), (0, 0), (0, 128 - nc)))
    blp = jnp.full((1, 128), -1e30, f32).at[0, :nc].set(params["bl"].astype(f32))

    return {
        "w1s": conv_toeplitz(params["w1"], 32, 16),            # (5, 2, 96, 128)
        "b1l": jnp.tile(params["b1"].astype(f32), 16).reshape(1, 128),
        "p1": pool_row_select(16, 32, 2),                      # (2, 20, 32)
        "w2s": conv_toeplitz(params["w2"], 16, 8),             # (5, 2, 128, 512)
        "b2l": jnp.tile(params["b2"].astype(f32), 8).reshape(1, 512),
        "p2": pool_row_select(8, 16, 0),                       # (2, 8, 16)
        "wls": wls.astype(bf16),                               # (8, 512, 128)
        "blp": blp,                                            # (1, 128)
    }


# ----------------------------------------------------------------------------
# Wrapper: one fused pallas_call, grid over the batch
# ----------------------------------------------------------------------------
def shallow_cnn_forward(x_nchw, prep, *, num_classes):
    """Forward pass equivalent to ShallowCNN.forward (input NCHW float32)."""
    b = x_nchw.shape[0]
    # Cheap, input-side-only repack: NCHW -> rows=H, lanes=(W, Cin), zero-pad H
    # by 2 for the 5x5 conv, and cast the matmul operand to bf16.
    x = jnp.transpose(x_nchw, (0, 2, 3, 1)).reshape(b, 32, 32 * 3)
    x = jnp.pad(x, ((0, 0), (2, 2), (0, 0))).astype(jnp.bfloat16)   # (B, 36, 96)

    out = pl.pallas_call(
        _fused_forward_kernel,
        out_shape=jax.ShapeDtypeStruct((b, 1, 128), jnp.float32),
        grid_spec=pltpu.PrefetchScalarGridSpec(
            num_scalar_prefetch=0,
            grid=(b,),
            in_specs=[
                pl.BlockSpec((1, 36, 96), lambda i: (i, 0, 0)),          # x
                pl.BlockSpec((5, 2, 96, 128), lambda i: (0, 0, 0, 0)),   # w1s
                pl.BlockSpec((1, 128), lambda i: (0, 0)),                # b1l
                pl.BlockSpec((2, 20, 32), lambda i: (0, 0, 0)),          # p1
                pl.BlockSpec((5, 2, 128, 512), lambda i: (0, 0, 0, 0)),  # w2s
                pl.BlockSpec((1, 512), lambda i: (0, 0)),                # b2l
                pl.BlockSpec((2, 8, 16), lambda i: (0, 0, 0)),           # p2
                pl.BlockSpec((8, 512, 128), lambda i: (0, 0, 0)),        # wls
                pl.BlockSpec((1, 128), lambda i: (0, 0)),                # blp
            ],
            out_specs=pl.BlockSpec((1, 1, 128), lambda i: (i, 0, 0)),
            scratch_shapes=[pltpu.VMEM((20, 128), jnp.bfloat16),   # pooled1 (H-padded)
                            pltpu.VMEM((8, 512), jnp.bfloat16)],   # pooled2 / features
        ),
        compiler_params=pltpu.CompilerParams(
            dimension_semantics=("parallel",),
            vmem_limit_bytes=32 * 1024 * 1024,
        ),
    )(x, prep["w1s"], prep["b1l"], prep["p1"], prep["w2s"], prep["b2l"],
      prep["p2"], prep["wls"], prep["blp"])
    return out[:, 0, :num_classes]


# ----------------------------------------------------------------------------
# Deterministic parameter init (xavier_uniform weights, zero biases)
# ----------------------------------------------------------------------------
def init_params(key, num_classes):
    k1, k2, k3 = jax.random.split(key, 3)

    def xavier(k, shape, fan_in, fan_out):
        bound = math.sqrt(6.0 / (fan_in + fan_out))
        return jax.random.uniform(k, shape, jnp.float32, -bound, bound)

    return {
        "w1": xavier(k1, (8, 3, 5, 5), 3 * 25, 8 * 25),      # Conv2d(3, 8, 5)
        "b1": jnp.zeros((8,), jnp.float32),
        "w2": xavier(k2, (64, 8, 5, 5), 8 * 25, 64 * 25),    # Conv2d(8, 64, 5)
        "b2": jnp.zeros((64,), jnp.float32),
        "wl": xavier(k3, (num_classes, 64 * 8 * 8), 64 * 8 * 8, num_classes),
        "bl": jnp.zeros((num_classes,), jnp.float32),
    }


# ----------------------------------------------------------------------------
# Pure-JAX (XLA) reference of the same module, for a correctness cross-check
# ----------------------------------------------------------------------------
def reference_forward(x_nchw, params):
    def conv(x, w, b):
        y = jax.lax.conv_general_dilated(
            x, w, window_strides=(1, 1), padding=((2, 2), (2, 2)),
            dimension_numbers=("NCHW", "OIHW", "NCHW"))
        return y + b[None, :, None, None]

    def pool(x):
        return jax.lax.reduce_window(x, -jnp.inf, jax.lax.max,
                                     (1, 1, 2, 2), (1, 1, 2, 2), "VALID")

    x = pool(_gelu(conv(x_nchw, params["w1"], params["b1"])))
    x = pool(_gelu(conv(x, params["w2"], params["b2"])))
    feat = x.reshape(x.shape[0], -1)                 # NCHW flatten, like PyTorch
    logits = feat @ params["wl"].T + params["bl"]
    return jax.nn.softmax(logits, axis=-1)


if __name__ == "__main__":
    num_classes = 10
    key = jax.random.PRNGKey(0)
    kx, kp = jax.random.split(key)

    # The Linear(64*8*8, .) layer implies 3x32x32 inputs (32 -> 16 -> 8).
    x = jax.random.normal(kx, (2, 3, 32, 32), jnp.float32)   # NCHW like PyTorch
    params = init_params(kp, num_classes)
    prep = prepare_params(params, num_classes)

    fwd = jax.jit(functools.partial(shallow_cnn_forward, num_classes=num_classes))
    out = jax.block_until_ready(fwd(x, prep))

    assert out.shape == (2, num_classes)
    assert bool(jnp.all(jnp.isfinite(out)))
    assert bool(jnp.allclose(jnp.sum(out, axis=1), 1.0, atol=1e-4))

    ref = reference_forward(x, params)               # f32 XLA reference
    err = float(jnp.max(jnp.abs(out - ref)))
    assert err < 2e-2, f"max |pallas - reference| = {err}"   # bf16 matmul tolerance

    print("KERNEL_OK")
</pallas_src>

<mosaic_0001>
module attributes {stable_mosaic.version = 11 : i64} {
  func.func @_fused_forward_kernel(%arg0: i32, %arg1: memref<1x36x96xbf16, #tpu.memory_space<vmem>>, %arg2: memref<5x2x96x128xbf16, #tpu.memory_space<vmem>>, %arg3: memref<1x128xf32, #tpu.memory_space<vmem>>, %arg4: memref<2x20x32xbf16, #tpu.memory_space<vmem>>, %arg5: memref<5x2x128x512xbf16, #tpu.memory_space<vmem>>, %arg6: memref<1x512xf32, #tpu.memory_space<vmem>>, %arg7: memref<2x8x16xbf16, #tpu.memory_space<vmem>>, %arg8: memref<8x512x128xbf16, #tpu.memory_space<vmem>>, %arg9: memref<1x128xf32, #tpu.memory_space<vmem>>, %arg10: memref<1x1x128xf32, #tpu.memory_space<vmem>>, %arg11: memref<20x128xbf16, #tpu.memory_space<vmem>>, %arg12: memref<8x512xbf16, #tpu.memory_space<vmem>>) attributes {dimension_semantics = [#tpu.dimension_semantics<parallel>], iteration_bounds = array<i64: 2>, scalar_prefetch = 0 : i64, scratch_operands = 2 : i64, tpu.core_type = #tpu.core_type<tc>, window_params = [{transform_indices = @transform_0, window_bounds = array<i64: 1, 36, 96>}, {pipeline_mode = #tpu.pipeline_mode<synchronous>, transform_indices = @transform_1, window_bounds = array<i64: 5, 2, 96, 128>}, {pipeline_mode = #tpu.pipeline_mode<synchronous>, transform_indices = @transform_2, window_bounds = array<i64: 1, 128>}, {pipeline_mode = #tpu.pipeline_mode<synchronous>, transform_indices = @transform_3, window_bounds = array<i64: 2, 20, 32>}, {pipeline_mode = #tpu.pipeline_mode<synchronous>, transform_indices = @transform_4, window_bounds = array<i64: 5, 2, 128, 512>}, {pipeline_mode = #tpu.pipeline_mode<synchronous>, transform_indices = @transform_5, window_bounds = array<i64: 1, 512>}, {pipeline_mode = #tpu.pipeline_mode<synchronous>, transform_indices = @transform_6, window_bounds = array<i64: 2, 8, 16>}, {pipeline_mode = #tpu.pipeline_mode<synchronous>, transform_indices = @transform_7, window_bounds = array<i64: 8, 512, 128>}, {pipeline_mode = #tpu.pipeline_mode<synchronous>, transform_indices = @transform_8, window_bounds = array<i64: 1, 128>}, {transform_indices = @transform_9, window_bounds = array<i64: 1, 1, 128>}]} {
    %c0 = arith.constant 0 : index
    %c0_0 = arith.constant 0 : index
    %0 = vector.load %arg3[%c0, %c0_0] : memref<1x128xf32, #tpu.memory_space<vmem>>, vector<1x128xf32>
    %1 = vector.shape_cast %0 : vector<1x128xf32> to vector<1x128xf32>
    %2 = vector.broadcast %1 : vector<1x128xf32> to vector<32x128xf32>
    %c0_1 = arith.constant 0 : index
    %c0_2 = arith.constant 0 : index
    %c0_3 = arith.constant 0 : index
    %3 = vector.load %arg1[%c0_1, %c0_2, %c0_3] : memref<1x36x96xbf16, #tpu.memory_space<vmem>>, vector<1x32x96xbf16>
    %4 = vector.shape_cast %3 : vector<1x32x96xbf16> to vector<32x96xbf16>
    %c0_4 = arith.constant 0 : index
    %c0_5 = arith.constant 0 : index
    %c0_6 = arith.constant 0 : index
    %c0_7 = arith.constant 0 : index
    %5 = vector.load %arg2[%c0_4, %c0_5, %c0_6, %c0_7] : memref<5x2x96x128xbf16, #tpu.memory_space<vmem>>, vector<1x1x96x128xbf16>
    %6 = vector.shape_cast %5 : vector<1x1x96x128xbf16> to vector<96x128xbf16>
    %cst = arith.constant dense<0.000000e+00> : vector<32x128xf32>
    %7 = tpu.matmul %4, %6, %cst {dimension_numbers = #tpu.dot_dimension_numbers<[1], [0], [0], [1], [0, 0, 1, 1], [], []>} : vector<32x96xbf16>, vector<96x128xbf16>, vector<32x128xf32> -> vector<32x128xf32>
    %8 = arith.addf %2, %7 : vector<32x128xf32>
    %c0_8 = arith.constant 0 : index
    %c1 = arith.constant 1 : index
    %c0_9 = arith.constant 0 : index
    %9 = vector.load %arg1[%c0_8, %c1, %c0_9] : memref<1x36x96xbf16, #tpu.memory_space<vmem>>, vector<1x32x96xbf16>
    %10 = vector.shape_cast %9 : vector<1x32x96xbf16> to vector<32x96xbf16>
    %c1_10 = arith.constant 1 : index
    %c0_11 = arith.constant 0 : index
    %c0_12 = arith.constant 0 : index
    %c0_13 = arith.constant 0 : index
    %11 = vector.load %arg2[%c1_10, %c0_11, %c0_12, %c0_13] : memref<5x2x96x128xbf16, #tpu.memory_space<vmem>>, vector<1x1x96x128xbf16>
    %12 = vector.shape_cast %11 : vector<1x1x96x128xbf16> to vector<96x128xbf16>
    %cst_14 = arith.constant dense<0.000000e+00> : vector<32x128xf32>
    %13 = tpu.matmul %10, %12, %cst_14 {dimension_numbers = #tpu.dot_dimension_numbers<[1], [0], [0], [1], [0, 0, 1, 1], [], []>} : vector<32x96xbf16>, vector<96x128xbf16>, vector<32x128xf32> -> vector<32x128xf32>
    %14 = arith.addf %8, %13 : vector<32x128xf32>
    %c0_15 = arith.constant 0 : index
    %c2 = arith.constant 2 : index
    %c0_16 = arith.constant 0 : index
    %15 = vector.load %arg1[%c0_15, %c2, %c0_16] : memref<1x36x96xbf16, #tpu.memory_space<vmem>>, vector<1x32x96xbf16>
    %16 = vector.shape_cast %15 : vector<1x32x96xbf16> to vector<32x96xbf16>
    %c2_17 = arith.constant 2 : index
    %c0_18 = arith.constant 0 : index
    %c0_19 = arith.constant 0 : index
    %c0_20 = arith.constant 0 : index
    %17 = vector.load %arg2[%c2_17, %c0_18, %c0_19, %c0_20] : memref<5x2x96x128xbf16, #tpu.memory_space<vmem>>, vector<1x1x96x128xbf16>
    %18 = vector.shape_cast %17 : vector<1x1x96x128xbf16> to vector<96x128xbf16>
    %cst_21 = arith.constant dense<0.000000e+00> : vector<32x128xf32>
    %19 = tpu.matmul %16, %18, %cst_21 {dimension_numbers = #tpu.dot_dimension_numbers<[1], [0], [0], [1], [0, 0, 1, 1], [], []>} : vector<32x96xbf16>, vector<96x128xbf16>, vector<32x128xf32> -> vector<32x128xf32>
    %20 = arith.addf %14, %19 : vector<32x128xf32>
    %c0_22 = arith.constant 0 : index
    %c3 = arith.constant 3 : index
    %c0_23 = arith.constant 0 : index
    %21 = vector.load %arg1[%c0_22, %c3, %c0_23] : memref<1x36x96xbf16, #tpu.memory_space<vmem>>, vector<1x32x96xbf16>
    %22 = vector.shape_cast %21 : vector<1x32x96xbf16> to vector<32x96xbf16>
    %c3_24 = arith.constant 3 : index
    %c0_25 = arith.constant 0 : index
    %c0_26 = arith.constant 0 : index
    %c0_27 = arith.constant 0 : index
    %23 = vector.load %arg2[%c3_24, %c0_25, %c0_26, %c0_27] : memref<5x2x96x128xbf16, #tpu.memory_space<vmem>>, vector<1x1x96x128xbf16>
    %24 = vector.shape_cast %23 : vector<1x1x96x128xbf16> to vector<96x128xbf16>
    %cst_28 = arith.constant dense<0.000000e+00> : vector<32x128xf32>
    %25 = tpu.matmul %22, %24, %cst_28 {dimension_numbers = #tpu.dot_dimension_numbers<[1], [0], [0], [1], [0, 0, 1, 1], [], []>} : vector<32x96xbf16>, vector<96x128xbf16>, vector<32x128xf32> -> vector<32x128xf32>
    %26 = arith.addf %20, %25 : vector<32x128xf32>
    %c0_29 = arith.constant 0 : index
    %c4 = arith.constant 4 : index
    %c0_30 = arith.constant 0 : index
    %27 = vector.load %arg1[%c0_29, %c4, %c0_30] : memref<1x36x96xbf16, #tpu.memory_space<vmem>>, vector<1x32x96xbf16>
    %28 = vector.shape_cast %27 : vector<1x32x96xbf16> to vector<32x96xbf16>
    %c4_31 = arith.constant 4 : index
    %c0_32 = arith.constant 0 : index
    %c0_33 = arith.constant 0 : index
    %c0_34 = arith.constant 0 : index
    %29 = vector.load %arg2[%c4_31, %c0_32, %c0_33, %c0_34] : memref<5x2x96x128xbf16, #tpu.memory_space<vmem>>, vector<1x1x96x128xbf16>
    %30 = vector.shape_cast %29 : vector<1x1x96x128xbf16> to vector<96x128xbf16>
    %cst_35 = arith.constant dense<0.000000e+00> : vector<32x128xf32>
    %31 = tpu.matmul %28, %30, %cst_35 {dimension_numbers = #tpu.dot_dimension_numbers<[1], [0], [0], [1], [0, 0, 1, 1], [], []>} : vector<32x96xbf16>, vector<96x128xbf16>, vector<32x128xf32> -> vector<32x128xf32>
    %32 = arith.addf %26, %31 : vector<32x128xf32>
    %cst_36 = arith.constant 5.000000e-01 : f32
    %33 = vector.broadcast %cst_36 : f32 to vector<32x128xf32>
    %34 = arith.mulf %33, %32 : vector<32x128xf32>
    %cst_37 = arith.constant 0.707106769 : f32
    %35 = vector.broadcast %cst_37 : f32 to vector<32x128xf32>
    %36 = arith.mulf %32, %35 : vector<32x128xf32>
    %37 = math.erf %36 : vector<32x128xf32>
    %cst_38 = arith.constant 1.000000e+00 : f32
    %38 = vector.broadcast %cst_38 : f32 to vector<32x128xf32>
    %39 = arith.addf %38, %37 : vector<32x128xf32>
    %40 = arith.mulf %34, %39 : vector<32x128xf32>
    %41 = arith.truncf %40 : vector<32x128xf32> to vector<32x128xbf16>
    %c0_39 = arith.constant 0 : index
    %c0_40 = arith.constant 0 : index
    %c0_41 = arith.constant 0 : index
    %42 = vector.load %arg1[%c0_39, %c0_40, %c0_41] : memref<1x36x96xbf16, #tpu.memory_space<vmem>>, vector<1x32x96xbf16>
    %43 = vector.shape_cast %42 : vector<1x32x96xbf16> to vector<32x96xbf16>
    %c0_42 = arith.constant 0 : index
    %c1_43 = arith.constant 1 : index
    %c0_44 = arith.constant 0 : index
    %c0_45 = arith.constant 0 : index
    %44 = vector.load %arg2[%c0_42, %c1_43, %c0_44, %c0_45] : memref<5x2x96x128xbf16, #tpu.memory_space<vmem>>, vector<1x1x96x128xbf16>
    %45 = vector.shape_cast %44 : vector<1x1x96x128xbf16> to vector<96x128xbf16>
    %cst_46 = arith.constant dense<0.000000e+00> : vector<32x128xf32>
    %46 = tpu.matmul %43, %45, %cst_46 {dimension_numbers = #tpu.dot_dimension_numbers<[1], [0], [0], [1], [0, 0, 1, 1], [], []>} : vector<32x96xbf16>, vector<96x128xbf16>, vector<32x128xf32> -> vector<32x128xf32>
    %47 = arith.addf %2, %46 : vector<32x128xf32>
    %c0_47 = arith.constant 0 : index
    %c1_48 = arith.constant 1 : index
    %c0_49 = arith.constant 0 : index
    %48 = vector.load %arg1[%c0_47, %c1_48, %c0_49] : memref<1x36x96xbf16, #tpu.memory_space<vmem>>, vector<1x32x96xbf16>
    %49 = vector.shape_cast %48 : vector<1x32x96xbf16> to vector<32x96xbf16>
    %c1_50 = arith.constant 1 : index
    %c1_51 = arith.constant 1 : index
    %c0_52 = arith.constant 0 : index
    %c0_53 = arith.constant 0 : index
    %50 = vector.load %arg2[%c1_50, %c1_51, %c0_52, %c0_53] : memref<5x2x96x128xbf16, #tpu.memory_space<vmem>>, vector<1x1x96x128xbf16>
    %51 = vector.shape_cast %50 : vector<1x1x96x128xbf16> to vector<96x128xbf16>
    %cst_54 = arith.constant dense<0.000000e+00> : vector<32x128xf32>
    %52 = tpu.matmul %49, %51, %cst_54 {dimension_numbers = #tpu.dot_dimension_numbers<[1], [0], [0], [1], [0, 0, 1, 1], [], []>} : vector<32x96xbf16>, vector<96x128xbf16>, vector<32x128xf32> -> vector<32x128xf32>
    %53 = arith.addf %47, %52 : vector<32x128xf32>
    %c0_55 = arith.constant 0 : index
    %c2_56 = arith.constant 2 : index
    %c0_57 = arith.constant 0 : index
    %54 = vector.load %arg1[%c0_55, %c2_56, %c0_57] : memref<1x36x96xbf16, #tpu.memory_space<vmem>>, vector<1x32x96xbf16>
    %55 = vector.shape_cast %54 : vector<1x32x96xbf16> to vector<32x96xbf16>
    %c2_58 = arith.constant 2 : index
    %c1_59 = arith.constant 1 : index
    %c0_60 = arith.constant 0 : index
    %c0_61 = arith.constant 0 : index
    %56 = vector.load %arg2[%c2_58, %c1_59, %c0_60, %c0_61] : memref<5x2x96x128xbf16, #tpu.memory_space<vmem>>, vector<1x1x96x128xbf16>
    %57 = vector.shape_cast %56 : vector<1x1x96x128xbf16> to vector<96x128xbf16>
    %cst_62 = arith.constant dense<0.000000e+00> : vector<32x128xf32>
    %58 = tpu.matmul %55, %57, %cst_62 {dimension_numbers = #tpu.dot_dimension_numbers<[1], [0], [0], [1], [0, 0, 1, 1], [], []>} : vector<32x96xbf16>, vector<96x128xbf16>, vector<32x128xf32> -> vector<32x128xf32>
    %59 = arith.addf %53, %58 : vector<32x128xf32>
    %c0_63 = arith.constant 0 : index
    %c3_64 = arith.constant 3 : index
    %c0_65 = arith.constant 0 : index
    %60 = vector.load %arg1[%c0_63, %c3_64, %c0_65] : memref<1x36x96xbf16, #tpu.memory_space<vmem>>, vector<1x32x96xbf16>
    %61 = vector.shape_cast %60 : vector<1x32x96xbf16> to vector<32x96xbf16>
    %c3_66 = arith.constant 3 : index
    %c1_67 = arith.constant 1 : index
    %c0_68 = arith.constant 0 : index
    %c0_69 = arith.constant 0 : index
    %62 = vector.load %arg2[%c3_66, %c1_67, %c0_68, %c0_69] : memref<5x2x96x128xbf16, #tpu.memory_space<vmem>>, vector<1x1x96x128xbf16>
    %63 = vector.shape_cast %62 : vector<1x1x96x128xbf16> to vector<96x128xbf16>
    %cst_70 = arith.constant dense<0.000000e+00> : vector<32x128xf32>
    %64 = tpu.matmul %61, %63, %cst_70 {dimension_numbers = #tpu.dot_dimension_numbers<[1], [0], [0], [1], [0, 0, 1, 1], [], []>} : vector<32x96xbf16>, vector<96x128xbf16>, vector<32x128xf32> -> vector<32x128xf32>
    %65 = arith.addf %59, %64 : vector<32x128xf32>
    %c0_71 = arith.constant 0 : index
    %c4_72 = arith.constant 4 : index
    %c0_73 = arith.constant 0 : index
    %66 = vector.load %arg1[%c0_71, %c4_72, %c0_73] : memref<1x36x96xbf16, #tpu.memory_space<vmem>>, vector<1x32x96xbf16>
    %67 = vector.shape_cast %66 : vector<1x32x96xbf16> to vector<32x96xbf16>
    %c4_74 = arith.constant 4 : index
    %c1_75 = arith.constant 1 : index
    %c0_76 = arith.constant 0 : index
    %c0_77 = arith.constant 0 : index
    %68 = vector.load %arg2[%c4_74, %c1_75, %c0_76, %c0_77] : memref<5x2x96x128xbf16, #tpu.memory_space<vmem>>, vector<1x1x96x128xbf16>
    %69 = vector.shape_cast %68 : vector<1x1x96x128xbf16> to vector<96x128xbf16>
    %cst_78 = arith.constant dense<0.000000e+00> : vector<32x128xf32>
    %70 = tpu.matmul %67, %69, %cst_78 {dimension_numbers = #tpu.dot_dimension_numbers<[1], [0], [0], [1], [0, 0, 1, 1], [], []>} : vector<32x96xbf16>, vector<96x128xbf16>, vector<32x128xf32> -> vector<32x128xf32>
    %71 = arith.addf %65, %70 : vector<32x128xf32>
    %cst_79 = arith.constant 5.000000e-01 : f32
    %72 = vector.broadcast %cst_79 : f32 to vector<32x128xf32>
    %73 = arith.mulf %72, %71 : vector<32x128xf32>
    %cst_80 = arith.constant 0.707106769 : f32
    %74 = vector.broadcast %cst_80 : f32 to vector<32x128xf32>
    %75 = arith.mulf %71, %74 : vector<32x128xf32>
    %76 = math.erf %75 : vector<32x128xf32>
    %cst_81 = arith.constant 1.000000e+00 : f32
    %77 = vector.broadcast %cst_81 : f32 to vector<32x128xf32>
    %78 = arith.addf %77, %76 : vector<32x128xf32>
    %79 = arith.mulf %73, %78 : vector<32x128xf32>
    %80 = arith.truncf %79 : vector<32x128xf32> to vector<32x128xbf16>
    %c0_82 = arith.constant 0 : index
    %c0_83 = arith.constant 0 : index
    %c0_84 = arith.constant 0 : index
    %81 = vector.load %arg4[%c0_82, %c0_83, %c0_84] : memref<2x20x32xbf16, #tpu.memory_space<vmem>>, vector<1x20x32xbf16>
    %82 = vector.shape_cast %81 : vector<1x20x32xbf16> to vector<20x32xbf16>
    %cst_85 = arith.constant dense<0.000000e+00> : vector<20x128xf32>
    %83 = tpu.matmul %82, %41, %cst_85 {dimension_numbers = #tpu.dot_dimension_numbers<[1], [0], [0], [1], [0, 0, 1, 1], [], []>} : vector<20x32xbf16>, vector<32x128xbf16>, vector<20x128xf32> -> vector<20x128xf32>
    %c0_86 = arith.constant 0 : index
    %c0_87 = arith.constant 0 : index
    %c0_88 = arith.constant 0 : index
    %84 = vector.load %arg4[%c0_86, %c0_87, %c0_88] : memref<2x20x32xbf16, #tpu.memory_space<vmem>>, vector<1x20x32xbf16>
    %85 = vector.shape_cast %84 : vector<1x20x32xbf16> to vector<20x32xbf16>
    %cst_89 = arith.constant dense<0.000000e+00> : vector<20x128xf32>
    %86 = tpu.matmul %85, %80, %cst_89 {dimension_numbers = #tpu.dot_dimension_numbers<[1], [0], [0], [1], [0, 0, 1, 1], [], []>} : vector<20x32xbf16>, vector<32x128xbf16>, vector<20x128xf32> -> vector<20x128xf32>
    %c1_90 = arith.constant 1 : index
    %c0_91 = arith.constant 0 : index
    %c0_92 = arith.constant 0 : index
    %87 = vector.load %arg4[%c1_90, %c0_91, %c0_92] : memref<2x20x32xbf16, #tpu.memory_space<vmem>>, vector<1x20x32xbf16>
    %88 = vector.shape_cast %87 : vector<1x20x32xbf16> to vector<20x32xbf16>
    %cst_93 = arith.constant dense<0.000000e+00> : vector<20x128xf32>
    %89 = tpu.matmul %88, %41, %cst_93 {dimension_numbers = #tpu.dot_dimension_numbers<[1], [0], [0], [1], [0, 0, 1, 1], [], []>} : vector<20x32xbf16>, vector<32x128xbf16>, vector<20x128xf32> -> vector<20x128xf32>
    %c1_94 = arith.constant 1 : index
    %c0_95 = arith.constant 0 : index
    %c0_96 = arith.constant 0 : index
    %90 = vector.load %arg4[%c1_94, %c0_95, %c0_96] : memref<2x20x32xbf16, #tpu.memory_space<vmem>>, vector<1x20x32xbf16>
    %91 = vector.shape_cast %90 : vector<1x20x32xbf16> to vector<20x32xbf16>
    %cst_97 = arith.constant dense<0.000000e+00> : vector<20x128xf32>
    %92 = tpu.matmul %91, %80, %cst_97 {dimension_numbers = #tpu.dot_dimension_numbers<[1], [0], [0], [1], [0, 0, 1, 1], [], []>} : vector<20x32xbf16>, vector<32x128xbf16>, vector<20x128xf32> -> vector<20x128xf32>
    %93 = arith.maximumf %83, %86 : vector<20x128xf32>
    %94 = arith.maximumf %89, %92 : vector<20x128xf32>
    %95 = arith.maximumf %93, %94 : vector<20x128xf32>
    %96 = arith.truncf %95 : vector<20x128xf32> to vector<20x128xbf16>
    %c0_98 = arith.constant 0 : index
    %c0_99 = arith.constant 0 : index
    %97 = vector.load %arg11[%c0_98, %c0_99] : memref<20x128xbf16, #tpu.memory_space<vmem>>, vector<20x128xbf16>
    tpu.vector_store %arg11[%c0_98, %c0_99], %96 {strides = array<i32>} : memref<20x128xbf16, #tpu.memory_space<vmem>>, vector<20x128xbf16>,
    %c0_100 = arith.constant 0 : index
    %c0_101 = arith.constant 0 : index
    %98 = vector.load %arg6[%c0_100, %c0_101] : memref<1x512xf32, #tpu.memory_space<vmem>>, vector<1x512xf32>
    %99 = vector.shape_cast %98 : vector<1x512xf32> to vector<1x512xf32>
    %100 = vector.broadcast %99 : vector<1x512xf32> to vector<16x512xf32>
    %c0_102 = arith.constant 0 : index
    %c0_103 = arith.constant 0 : index
    %101 = vector.load %arg11[%c0_102, %c0_103] : memref<20x128xbf16, #tpu.memory_space<vmem>>, vector<16x128xbf16>
    %c0_104 = arith.constant 0 : index
    %c0_105 = arith.constant 0 : index
    %c0_106 = arith.constant 0 : index
    %c0_107 = arith.constant 0 : index
    %102 = vector.load %arg5[%c0_104, %c0_105, %c0_106, %c0_107] : memref<5x2x128x512xbf16, #tpu.memory_space<vmem>>, vector<1x1x128x512xbf16>
    %103 = vector.shape_cast %102 : vector<1x1x128x512xbf16> to vector<128x512xbf16>
    %cst_108 = arith.constant dense<0.000000e+00> : vector<16x512xf32>
    %104 = tpu.matmul %101, %103, %cst_108 {dimension_numbers = #tpu.dot_dimension_numbers<[1], [0], [0], [1], [0, 0, 1, 1], [], []>} : vector<16x128xbf16>, vector<128x512xbf16>, vector<16x512xf32> -> vector<16x512xf32>
    %105 = arith.addf %100, %104 : vector<16x512xf32>
    %c1_109 = arith.constant 1 : index
    %c0_110 = arith.constant 0 : index
    %106 = vector.load %arg11[%c1_109, %c0_110] : memref<20x128xbf16, #tpu.memory_space<vmem>>, vector<16x128xbf16>
    %c1_111 = arith.constant 1 : index
    %c0_112 = arith.constant 0 : index
    %c0_113 = arith.constant 0 : index
    %c0_114 = arith.constant 0 : index
    %107 = vector.load %arg5[%c1_111, %c0_112, %c0_113, %c0_114] : memref<5x2x128x512xbf16, #tpu.memory_space<vmem>>, vector<1x1x128x512xbf16>
    %108 = vector.shape_cast %107 : vector<1x1x128x512xbf16> to vector<128x512xbf16>
    %cst_115 = arith.constant dense<0.000000e+00> : vector<16x512xf32>
    %109 = tpu.matmul %106, %108, %cst_115 {dimension_numbers = #tpu.dot_dimension_numbers<[1], [0], [0], [1], [0, 0, 1, 1], [], []>} : vector<16x128xbf16>, vector<128x512xbf16>, vector<16x512xf32> -> vector<16x512xf32>
    %110 = arith.addf %105, %109 : vector<16x512xf32>
    %c2_116 = arith.constant 2 : index
    %c0_117 = arith.constant 0 : index
    %111 = vector.load %arg11[%c2_116, %c0_117] : memref<20x128xbf16, #tpu.memory_space<vmem>>, vector<16x128xbf16>
    %c2_118 = arith.constant 2 : index
    %c0_119 = arith.constant 0 : index
    %c0_120 = arith.constant 0 : index
    %c0_121 = arith.constant 0 : index
    %112 = vector.load %arg5[%c2_118, %c0_119, %c0_120, %c0_121] : memref<5x2x128x512xbf16, #tpu.memory_space<vmem>>, vector<1x1x128x512xbf16>
    %113 = vector.shape_cast %112 : vector<1x1x128x512xbf16> to vector<128x512xbf16>
    %cst_122 = arith.constant dense<0.000000e+00> : vector<16x512xf32>
    %114 = tpu.matmul %111, %113, %cst_122 {dimension_numbers = #tpu.dot_dimension_numbers<[1], [0], [0], [1], [0, 0, 1, 1], [], []>} : vector<16x128xbf16>, vector<128x512xbf16>, vector<16x512xf32> -> vector<16x512xf32>
    %115 = arith.addf %110, %114 : vector<16x512xf32>
    %c3_123 = arith.constant 3 : index
    %c0_124 = arith.constant 0 : index
    %116 = vector.load %arg11[%c3_123, %c0_124] : memref<20x128xbf16, #tpu.memory_space<vmem>>, vector<16x128xbf16>
    %c3_125 = arith.constant 3 : index
    %c0_126 = arith.constant 0 : index
    %c0_127 = arith.constant 0 : index
    %c0_128 = arith.constant 0 : index
    %117 = vector.load %arg5[%c3_125, %c0_126, %c0_127, %c0_128] : memref<5x2x128x512xbf16, #tpu.memory_space<vmem>>, vector<1x1x128x512xbf16>
    %118 = vector.shape_cast %117 : vector<1x1x128x512xbf16> to vector<128x512xbf16>
    %cst_129 = arith.constant dense<0.000000e+00> : vector<16x512xf32>
    %119 = tpu.matmul %116, %118, %cst_129 {dimension_numbers = #tpu.dot_dimension_numbers<[1], [0], [0], [1], [0, 0, 1, 1], [], []>} : vector<16x128xbf16>, vector<128x512xbf16>, vector<16x512xf32> -> vector<16x512xf32>
    %120 = arith.addf %115, %119 : vector<16x512xf32>
    %c4_130 = arith.constant 4 : index
    %c0_131 = arith.constant 0 : index
    %121 = vector.load %arg11[%c4_130, %c0_131] : memref<20x128xbf16, #tpu.memory_space<vmem>>, vector<16x128xbf16>
    %c4_132 = arith.constant 4 : index
    %c0_133 = arith.constant 0 : index
    %c0_134 = arith.constant 0 : index
    %c0_135 = arith.constant 0 : index
    %122 = vector.load %arg5[%c4_132, %c0_133, %c0_134, %c0_135] : memref<5x2x128x512xbf16, #tpu.memory_space<vmem>>, vector<1x1x128x512xbf16>
    %123 = vector.shape_cast %122 : vector<1x1x128x512xbf16> to vector<128x512xbf16>
    %cst_136 = arith.constant dense<0.000000e+00> : vector<16x512xf32>
    %124 = tpu.matmul %121, %123, %cst_136 {dimension_numbers = #tpu.dot_dimension_numbers<[1], [0], [0], [1], [0, 0, 1, 1], [], []>} : vector<16x128xbf16>, vector<128x512xbf16>, vector<16x512xf32> -> vector<16x512xf32>
    %125 = arith.addf %120, %124 : vector<16x512xf32>
    %cst_137 = arith.constant 5.000000e-01 : f32
    %126 = vector.broadcast %cst_137 : f32 to vector<16x512xf32>
    %127 = arith.mulf %126, %125 : vector<16x512xf32>
    %cst_138 = arith.constant 0.707106769 : f32
    %128 = vector.broadcast %cst_138 : f32 to vector<16x512xf32>
    %129 = arith.mulf %125, %128 : vector<16x512xf32>
    %130 = math.erf %129 : vector<16x512xf32>
    %cst_139 = arith.constant 1.000000e+00 : f32
    %131 = vector.broadcast %cst_139 : f32 to vector<16x512xf32>
    %132 = arith.addf %131, %130 : vector<16x512xf32>
    %133 = arith.mulf %127, %132 : vector<16x512xf32>
    %134 = arith.truncf %133 : vector<16x512xf32> to vector<16x512xbf16>
    %c0_140 = arith.constant 0 : index
    %c0_141 = arith.constant 0 : index
    %135 = vector.load %arg11[%c0_140, %c0_141] : memref<20x128xbf16, #tpu.memory_space<vmem>>, vector<16x128xbf16>
    %c0_142 = arith.constant 0 : index
    %c1_143 = arith.constant 1 : index
    %c0_144 = arith.constant 0 : index
    %c0_145 = arith.constant 0 : index
    %136 = vector.load %arg5[%c0_142, %c1_143, %c0_144, %c0_145] : memref<5x2x128x512xbf16, #tpu.memory_space<vmem>>, vector<1x1x128x512xbf16>
    %137 = vector.shape_cast %136 : vector<1x1x128x512xbf16> to vector<128x512xbf16>
    %cst_146 = arith.constant dense<0.000000e+00> : vector<16x512xf32>
    %138 = tpu.matmul %135, %137, %cst_146 {dimension_numbers = #tpu.dot_dimension_numbers<[1], [0], [0], [1], [0, 0, 1, 1], [], []>} : vector<16x128xbf16>, vector<128x512xbf16>, vector<16x512xf32> -> vector<16x512xf32>
    %139 = arith.addf %100, %138 : vector<16x512xf32>
    %c1_147 = arith.constant 1 : index
    %c0_148 = arith.constant 0 : index
    %140 = vector.load %arg11[%c1_147, %c0_148] : memref<20x128xbf16, #tpu.memory_space<vmem>>, vector<16x128xbf16>
    %c1_149 = arith.constant 1 : index
    %c1_150 = arith.constant 1 : index
    %c0_151 = arith.constant 0 : index
    %c0_152 = arith.constant 0 : index
    %141 = vector.load %arg5[%c1_149, %c1_150, %c0_151, %c0_152] : memref<5x2x128x512xbf16, #tpu.memory_space<vmem>>, vector<1x1x128x512xbf16>
    %142 = vector.shape_cast %141 : vector<1x1x128x512xbf16> to vector<128x512xbf16>
    %cst_153 = arith.constant dense<0.000000e+00> : vector<16x512xf32>
    %143 = tpu.matmul %140, %142, %cst_153 {dimension_numbers = #tpu.dot_dimension_numbers<[1], [0], [0], [1], [0, 0, 1, 1], [], []>} : vector<16x128xbf16>, vector<128x512xbf16>, vector<16x512xf32> -> vector<16x512xf32>
    %144 = arith.addf %139, %143 : vector<16x512xf32>
    %c2_154 = arith.constant 2 : index
    %c0_155 = arith.constant 0 : index
    %145 = vector.load %arg11[%c2_154, %c0_155] : memref<20x128xbf16, #tpu.memory_space<vmem>>, vector<16x128xbf16>
    %c2_156 = arith.constant 2 : index
    %c1_157 = arith.constant 1 : index
    %c0_158 = arith.constant 0 : index
    %c0_159 = arith.constant 0 : index
    %146 = vector.load %arg5[%c2_156, %c1_157, %c0_158, %c0_159] : memref<5x2x128x512xbf16, #tpu.memory_space<vmem>>, vector<1x1x128x512xbf16>
    %147 = vector.shape_cast %146 : vector<1x1x128x512xbf16> to vector<128x512xbf16>
    %cst_160 = arith.constant dense<0.000000e+00> : vector<16x512xf32>
    %148 = tpu.matmul %145, %147, %cst_160 {dimension_numbers = #tpu.dot_dimension_numbers<[1], [0], [0], [1], [0, 0, 1, 1], [], []>} : vector<16x128xbf16>, vector<128x512xbf16>, vector<16x512xf32> -> vector<16x512xf32>
    %149 = arith.addf %144, %148 : vector<16x512xf32>
    %c3_161 = arith.constant 3 : index
    %c0_162 = arith.constant 0 : index
    %150 = vector.load %arg11[%c3_161, %c0_162] : memref<20x128xbf16, #tpu.memory_space<vmem>>, vector<16x128xbf16>
    %c3_163 = arith.constant 3 : index
    %c1_164 = arith.constant 1 : index
    %c0_165 = arith.constant 0 : index
    %c0_166 = arith.constant 0 : index
    %151 = vector.load %arg5[%c3_163, %c1_164, %c0_165, %c0_166] : memref<5x2x128x512xbf16, #tpu.memory_space<vmem>>, vector<1x1x128x512xbf16>
    %152 = vector.shape_cast %151 : vector<1x1x128x512xbf16> to vector<128x512xbf16>
    %cst_167 = arith.constant dense<0.000000e+00> : vector<16x512xf32>
    %153 = tpu.matmul %150, %152, %cst_167 {dimension_numbers = #tpu.dot_dimension_numbers<[1], [0], [0], [1], [0, 0, 1, 1], [], []>} : vector<16x128xbf16>, vector<128x512xbf16>, vector<16x512xf32> -> vector<16x512xf32>
    %154 = arith.addf %149, %153 : vector<16x512xf32>
    %c4_168 = arith.constant 4 : index
    %c0_169 = arith.constant 0 : index
    %155 = vector.load %arg11[%c4_168, %c0_169] : memref<20x128xbf16, #tpu.memory_space<vmem>>, vector<16x128xbf16>
    %c4_170 = arith.constant 4 : index
    %c1_171 = arith.constant 1 : index
    %c0_172 = arith.constant 0 : index
    %c0_173 = arith.constant 0 : index
    %156 = vector.load %arg5[%c4_170, %c1_171, %c0_172, %c0_173] : memref<5x2x128x512xbf16, #tpu.memory_space<vmem>>, vector<1x1x128x512xbf16>
    %157 = vector.shape_cast %156 : vector<1x1x128x512xbf16> to vector<128x512xbf16>
    %cst_174 = arith.constant dense<0.000000e+00> : vector<16x512xf32>
    %158 = tpu.matmul %155, %157, %cst_174 {dimension_numbers = #tpu.dot_dimension_numbers<[1], [0], [0], [1], [0, 0, 1, 1], [], []>} : vector<16x128xbf16>, vector<128x512xbf16>, vector<16x512xf32> -> vector<16x512xf32>
    %159 = arith.addf %154, %158 : vector<16x512xf32>
    %cst_175 = arith.constant 5.000000e-01 : f32
    %160 = vector.broadcast %cst_175 : f32 to vector<16x512xf32>
    %161 = arith.mulf %160, %159 : vector<16x512xf32>
    %cst_176 = arith.constant 0.707106769 : f32
    %162 = vector.broadcast %cst_176 : f32 to vector<16x512xf32>
    %163 = arith.mulf %159, %162 : vector<16x512xf32>
    %164 = math.erf %163 : vector<16x512xf32>
    %cst_177 = arith.constant 1.000000e+00 : f32
    %165 = vector.broadcast %cst_177 : f32 to vector<16x512xf32>
    %166 = arith.addf %165, %164 : vector<16x512xf32>
    %167 = arith.mulf %161, %166 : vector<16x512xf32>
    %168 = arith.truncf %167 : vector<16x512xf32> to vector<16x512xbf16>
    %c0_178 = arith.constant 0 : index
    %c0_179 = arith.constant 0 : index
    %c0_180 = arith.constant 0 : index
    %169 = vector.load %arg7[%c0_178, %c0_179, %c0_180] : memref<2x8x16xbf16, #tpu.memory_space<vmem>>, vector<1x8x16xbf16>
    %170 = vector.shape_cast %169 : vector<1x8x16xbf16> to vector<8x16xbf16>
    %cst_181 = arith.constant dense<0.000000e+00> : vector<8x512xf32>
    %171 = tpu.matmul %170, %134, %cst_181 {dimension_numbers = #tpu.dot_dimension_numbers<[1], [0], [0], [1], [0, 0, 1, 1], [], []>} : vector<8x16xbf16>, vector<16x512xbf16>, vector<8x512xf32> -> vector<8x512xf32>
    %c0_182 = arith.constant 0 : index
    %c0_183 = arith.constant 0 : index
    %c0_184 = arith.constant 0 : index
    %172 = vector.load %arg7[%c0_182, %c0_183, %c0_184] : memref<2x8x16xbf16, #tpu.memory_space<vmem>>, vector<1x8x16xbf16>
    %173 = vector.shape_cast %172 : vector<1x8x16xbf16> to vector<8x16xbf16>
    %cst_185 = arith.constant dense<0.000000e+00> : vector<8x512xf32>
    %174 = tpu.matmul %173, %168, %cst_185 {dimension_numbers = #tpu.dot_dimension_numbers<[1], [0], [0], [1], [0, 0, 1, 1], [], []>} : vector<8x16xbf16>, vector<16x512xbf16>, vector<8x512xf32> -> vector<8x512xf32>
    %c1_186 = arith.constant 1 : index
    %c0_187 = arith.constant 0 : index
    %c0_188 = arith.constant 0 : index
    %175 = vector.load %arg7[%c1_186, %c0_187, %c0_188] : memref<2x8x16xbf16, #tpu.memory_space<vmem>>, vector<1x8x16xbf16>
    %176 = vector.shape_cast %175 : vector<1x8x16xbf16> to vector<8x16xbf16>
    %cst_189 = arith.constant dense<0.000000e+00> : vector<8x512xf32>
    %177 = tpu.matmul %176, %134, %cst_189 {dimension_numbers = #tpu.dot_dimension_numbers<[1], [0], [0], [1], [0, 0, 1, 1], [], []>} : vector<8x16xbf16>, vector<16x512xbf16>, vector<8x512xf32> -> vector<8x512xf32>
    %c1_190 = arith.constant 1 : index
    %c0_191 = arith.constant 0 : index
    %c0_192 = arith.constant 0 : index
    %178 = vector.load %arg7[%c1_190, %c0_191, %c0_192] : memref<2x8x16xbf16, #tpu.memory_space<vmem>>, vector<1x8x16xbf16>
    %179 = vector.shape_cast %178 : vector<1x8x16xbf16> to vector<8x16xbf16>
    %cst_193 = arith.constant dense<0.000000e+00> : vector<8x512xf32>
    %180 = tpu.matmul %179, %168, %cst_193 {dimension_numbers = #tpu.dot_dimension_numbers<[1], [0], [0], [1], [0, 0, 1, 1], [], []>} : vector<8x16xbf16>, vector<16x512xbf16>, vector<8x512xf32> -> vector<8x512xf32>
    %181 = arith.maximumf %171, %174 : vector<8x512xf32>
    %182 = arith.maximumf %177, %180 : vector<8x512xf32>
    %183 = arith.maximumf %181, %182 : vector<8x512xf32>
    %184 = arith.truncf %183 : vector<8x512xf32> to vector<8x512xbf16>
    %c0_194 = arith.constant 0 : index
    %c0_195 = arith.constant 0 : index
    %185 = vector.load %arg12[%c0_194, %c0_195] : memref<8x512xbf16, #tpu.memory_space<vmem>>, vector<8x512xbf16>
    tpu.vector_store %arg12[%c0_194, %c0_195], %184 {strides = array<i32>} : memref<8x512xbf16, #tpu.memory_space<vmem>>, vector<8x512xbf16>,
    %c0_196 = arith.constant 0 : index
    %c0_197 = arith.constant 0 : index
    %186 = vector.load %arg9[%c0_196, %c0_197] : memref<1x128xf32, #tpu.memory_space<vmem>>, vector<1x128xf32>
    %c0_198 = arith.constant 0 : index
    %c0_199 = arith.constant 0 : index
    %187 = vector.load %arg12[%c0_198, %c0_199] : memref<8x512xbf16, #tpu.memory_space<vmem>>, vector<1x512xbf16>
    %c0_200 = arith.constant 0 : index
    %c0_201 = arith.constant 0 : index
    %c0_202 = arith.constant 0 : index
    %188 = vector.load %arg8[%c0_200, %c0_201, %c0_202] : memref<8x512x128xbf16, #tpu.memory_space<vmem>>, vector<1x512x128xbf16>
    %189 = vector.shape_cast %188 : vector<1x512x128xbf16> to vector<512x128xbf16>
    %cst_203 = arith.constant dense<0.000000e+00> : vector<1x128xf32>
    %190 = tpu.matmul %187, %189, %cst_203 {dimension_numbers = #tpu.dot_dimension_numbers<[1], [0], [0], [1], [0, 0, 1, 1], [], []>} : vector<1x512xbf16>, vector<512x128xbf16>, vector<1x128xf32> -> vector<1x128xf32>
    %191 = arith.addf %186, %190 : vector<1x128xf32>
    %c1_204 = arith.constant 1 : index
    %c0_205 = arith.constant 0 : index
    %192 = vector.load %arg12[%c1_204, %c0_205] : memref<8x512xbf16, #tpu.memory_space<vmem>>, vector<1x512xbf16>
    %c1_206 = arith.constant 1 : index
    %c0_207 = arith.constant 0 : index
    %c0_208 = arith.constant 0 : index
    %193 = vector.load %arg8[%c1_206, %c0_207, %c0_208] : memref<8x512x128xbf16, #tpu.memory_space<vmem>>, vector<1x512x128xbf16>
    %194 = vector.shape_cast %193 : vector<1x512x128xbf16> to vector<512x128xbf16>
    %cst_209 = arith.constant dense<0.000000e+00> : vector<1x128xf32>
    %195 = tpu.matmul %192, %194, %cst_209 {dimension_numbers = #tpu.dot_dimension_numbers<[1], [0], [0], [1], [0, 0, 1, 1], [], []>} : vector<1x512xbf16>, vector<512x128xbf16>, vector<1x128xf32> -> vector<1x128xf32>
    %196 = arith.addf %191, %195 : vector<1x128xf32>
    %c2_210 = arith.constant 2 : index
    %c0_211 = arith.constant 0 : index
    %197 = vector.load %arg12[%c2_210, %c0_211] : memref<8x512xbf16, #tpu.memory_space<vmem>>, vector<1x512xbf16>
    %c2_212 = arith.constant 2 : index
    %c0_213 = arith.constant 0 : index
    %c0_214 = arith.constant 0 : index
    %198 = vector.load %arg8[%c2_212, %c0_213, %c0_214] : memref<8x512x128xbf16, #tpu.memory_space<vmem>>, vector<1x512x128xbf16>
    %199 = vector.shape_cast %198 : vector<1x512x128xbf16> to vector<512x128xbf16>
    %cst_215 = arith.constant dense<0.000000e+00> : vector<1x128xf32>
    %200 = tpu.matmul %197, %199, %cst_215 {dimension_numbers = #tpu.dot_dimension_numbers<[1], [0], [0], [1], [0, 0, 1, 1], [], []>} : vector<1x512xbf16>, vector<512x128xbf16>, vector<1x128xf32> -> vector<1x128xf32>
    %201 = arith.addf %196, %200 : vector<1x128xf32>
    %c3_216 = arith.constant 3 : index
    %c0_217 = arith.constant 0 : index
    %202 = vector.load %arg12[%c3_216, %c0_217] : memref<8x512xbf16, #tpu.memory_space<vmem>>, vector<1x512xbf16>
    %c3_218 = arith.constant 3 : index
    %c0_219 = arith.constant 0 : index
    %c0_220 = arith.constant 0 : index
    %203 = vector.load %arg8[%c3_218, %c0_219, %c0_220] : memref<8x512x128xbf16, #tpu.memory_space<vmem>>, vector<1x512x128xbf16>
    %204 = vector.shape_cast %203 : vector<1x512x128xbf16> to vector<512x128xbf16>
    %cst_221 = arith.constant dense<0.000000e+00> : vector<1x128xf32>
    %205 = tpu.matmul %202, %204, %cst_221 {dimension_numbers = #tpu.dot_dimension_numbers<[1], [0], [0], [1], [0, 0, 1, 1], [], []>} : vector<1x512xbf16>, vector<512x128xbf16>, vector<1x128xf32> -> vector<1x128xf32>
    %206 = arith.addf %201, %205 : vector<1x128xf32>
    %c4_222 = arith.constant 4 : index
    %c0_223 = arith.constant 0 : index
    %207 = vector.load %arg12[%c4_222, %c0_223] : memref<8x512xbf16, #tpu.memory_space<vmem>>, vector<1x512xbf16>
    %c4_224 = arith.constant 4 : index
    %c0_225 = arith.constant 0 : index
    %c0_226 = arith.constant 0 : index
    %208 = vector.load %arg8[%c4_224, %c0_225, %c0_226] : memref<8x512x128xbf16, #tpu.memory_space<vmem>>, vector<1x512x128xbf16>
    %209 = vector.shape_cast %208 : vector<1x512x128xbf16> to vector<512x128xbf16>
    %cst_227 = arith.constant dense<0.000000e+00> : vector<1x128xf32>
    %210 = tpu.matmul %207, %209, %cst_227 {dimension_numbers = #tpu.dot_dimension_numbers<[1], [0], [0], [1], [0, 0, 1, 1], [], []>} : vector<1x512xbf16>, vector<512x128xbf16>, vector<1x128xf32> -> vector<1x128xf32>
    %211 = arith.addf %206, %210 : vector<1x128xf32>
    %c5 = arith.constant 5 : index
    %c0_228 = arith.constant 0 : index
    %212 = vector.load %arg12[%c5, %c0_228] : memref<8x512xbf16, #tpu.memory_space<vmem>>, vector<1x512xbf16>
    %c5_229 = arith.constant 5 : index
    %c0_230 = arith.constant 0 : index
    %c0_231 = arith.constant 0 : index
    %213 = vector.load %arg8[%c5_229, %c0_230, %c0_231] : memref<8x512x128xbf16, #tpu.memory_space<vmem>>, vector<1x512x128xbf16>
    %214 = vector.shape_cast %213 : vector<1x512x128xbf16> to vector<512x128xbf16>
    %cst_232 = arith.constant dense<0.000000e+00> : vector<1x128xf32>
    %215 = tpu.matmul %212, %214, %cst_232 {dimension_numbers = #tpu.dot_dimension_numbers<[1], [0], [0], [1], [0, 0, 1, 1], [], []>} : vector<1x512xbf16>, vector<512x128xbf16>, vector<1x128xf32> -> vector<1x128xf32>
    %216 = arith.addf %211, %215 : vector<1x128xf32>
    %c6 = arith.constant 6 : index
    %c0_233 = arith.constant 0 : index
    %217 = vector.load %arg12[%c6, %c0_233] : memref<8x512xbf16, #tpu.memory_space<vmem>>, vector<1x512xbf16>
    %c6_234 = arith.constant 6 : index
    %c0_235 = arith.constant 0 : index
    %c0_236 = arith.constant 0 : index
    %218 = vector.load %arg8[%c6_234, %c0_235, %c0_236] : memref<8x512x128xbf16, #tpu.memory_space<vmem>>, vector<1x512x128xbf16>
    %219 = vector.shape_cast %218 : vector<1x512x128xbf16> to vector<512x128xbf16>
    %cst_237 = arith.constant dense<0.000000e+00> : vector<1x128xf32>
    %220 = tpu.matmul %217, %219, %cst_237 {dimension_numbers = #tpu.dot_dimension_numbers<[1], [0], [0], [1], [0, 0, 1, 1], [], []>} : vector<1x512xbf16>, vector<512x128xbf16>, vector<1x128xf32> -> vector<1x128xf32>
    %221 = arith.addf %216, %220 : vector<1x128xf32>
    %c7 = arith.constant 7 : index
    %c0_238 = arith.constant 0 : index
    %222 = vector.load %arg12[%c7, %c0_238] : memref<8x512xbf16, #tpu.memory_space<vmem>>, vector<1x512xbf16>
    %c7_239 = arith.constant 7 : index
    %c0_240 = arith.constant 0 : index
    %c0_241 = arith.constant 0 : index
    %223 = vector.load %arg8[%c7_239, %c0_240, %c0_241] : memref<8x512x128xbf16, #tpu.memory_space<vmem>>, vector<1x512x128xbf16>
    %224 = vector.shape_cast %223 : vector<1x512x128xbf16> to vector<512x128xbf16>
    %cst_242 = arith.constant dense<0.000000e+00> : vector<1x128xf32>
    %225 = tpu.matmul %222, %224, %cst_242 {dimension_numbers = #tpu.dot_dimension_numbers<[1], [0], [0], [1], [0, 0, 1, 1], [], []>} : vector<1x512xbf16>, vector<512x128xbf16>, vector<1x128xf32> -> vector<1x128xf32>
    %226 = arith.addf %221, %225 : vector<1x128xf32>
    %cst_243 = arith.constant dense<0xFF800000> : vector<1xf32>
    %227 = vector.multi_reduction <maximumf>, %226, %cst_243 [1] : vector<1x128xf32> to vector<1xf32>
    %228 = vector.shape_cast %227 : vector<1xf32> to vector<1x1xf32>
    %229 = vector.broadcast %228 : vector<1x1xf32> to vector<1x128xf32>
    %230 = arith.subf %226, %229 : vector<1x128xf32>
    %231 = math.exp %230 : vector<1x128xf32>
    %cst_244 = arith.constant dense<0.000000e+00> : vector<1xf32>
    %232 = vector.multi_reduction <add>, %231, %cst_244 [1] : vector<1x128xf32> to vector<1xf32>
    %233 = vector.shape_cast %232 : vector<1xf32> to vector<1x1xf32>
    %234 = vector.broadcast %233 : vector<1x1xf32> to vector<1x128xf32>
    %235 = arith.divf %231, %234 : vector<1x128xf32>
    %c0_245 = arith.constant 0 : index
    %c0_246 = arith.constant 0 : index
    %c0_247 = arith.constant 0 : index
    %236 = vector.load %arg10[%c0_245, %c0_246, %c0_247] : memref<1x1x128xf32, #tpu.memory_space<vmem>>, vector<1x1x128xf32>
    %237 = vector.shape_cast %236 : vector<1x1x128xf32> to vector<1x128xf32>
    %238 = vector.shape_cast %235 : vector<1x128xf32> to vector<1x1x128xf32>
    tpu.vector_store %arg10[%c0_245, %c0_246, %c0_247], %238 {strides = array<i32>} : memref<1x1x128xf32, #tpu.memory_space<vmem>>, vector<1x1x128xf32>,
    return
  }
  func.func @transform_0(%arg0: i32) -> (i32, i32, i32) {
    %c0_i32 = arith.constant 0 : i32
    %c0_i32_0 = arith.constant 0 : i32
    %c0_i32_1 = arith.constant 0 : i32
    return %arg0, %c0_i32, %c0_i32_0 : i32, i32, i32
  }
  func.func @transform_1(%arg0: i32) -> (i32, i32, i32, i32) {
    %c0_i32 = arith.constant 0 : i32
    %c0_i32_0 = arith.constant 0 : i32
    %c0_i32_1 = arith.constant 0 : i32
    %c0_i32_2 = arith.constant 0 : i32
    %c0_i32_3 = arith.constant 0 : i32
    return %c0_i32, %c0_i32_0, %c0_i32_1, %c0_i32_2 : i32, i32, i32, i32
  }
  func.func @transform_2(%arg0: i32) -> (i32, i32) {
    %c0_i32 = arith.constant 0 : i32
    %c0_i32_0 = arith.constant 0 : i32
    %c0_i32_1 = arith.constant 0 : i32
    return %c0_i32, %c0_i32_0 : i32, i32
  }
  func.func @transform_3(%arg0: i32) -> (i32, i32, i32) {
    %c0_i32 = arith.constant 0 : i32
    %c0_i32_0 = arith.constant 0 : i32
    %c0_i32_1 = arith.constant 0 : i32
    %c0_i32_2 = arith.constant 0 : i32
    return %c0_i32, %c0_i32_0, %c0_i32_1 : i32, i32, i32
  }
  func.func @transform_4(%arg0: i32) -> (i32, i32, i32, i32) {
    %c0_i32 = arith.constant 0 : i32
    %c0_i32_0 = arith.constant 0 : i32
    %c0_i32_1 = arith.constant 0 : i32
    %c0_i32_2 = arith.constant 0 : i32
    %c0_i32_3 = arith.constant 0 : i32
    return %c0_i32, %c0_i32_0, %c0_i32_1, %c0_i32_2 : i32, i32, i32, i32
  }
  func.func @transform_5(%arg0: i32) -> (i32, i32) {
    %c0_i32 = arith.constant 0 : i32
    %c0_i32_0 = arith.constant 0 : i32
    %c0_i32_1 = arith.constant 0 : i32
    return %c0_i32, %c0_i32_0 : i32, i32
  }
  func.func @transform_6(%arg0: i32) -> (i32, i32, i32) {
    %c0_i32 = arith.constant 0 : i32
    %c0_i32_0 = arith.constant 0 : i32
    %c0_i32_1 = arith.constant 0 : i32
    %c0_i32_2 = arith.constant 0 : i32
    return %c0_i32, %c0_i32_0, %c0_i32_1 : i32, i32, i32
  }
  func.func @transform_7(%arg0: i32) -> (i32, i32, i32) {
    %c0_i32 = arith.constant 0 : i32
    %c0_i32_0 = arith.constant 0 : i32
    %c0_i32_1 = arith.constant 0 : i32
    %c0_i32_2 = arith.constant 0 : i32
    return %c0_i32, %c0_i32_0, %c0_i32_1 : i32, i32, i32
  }
  func.func @transform_8(%arg0: i32) -> (i32, i32) {
    %c0_i32 = arith.constant 0 : i32
    %c0_i32_0 = arith.constant 0 : i32
    %c0_i32_1 = arith.constant 0 : i32
    return %c0_i32, %c0_i32_0 : i32, i32
  }
  func.func @transform_9(%arg0: i32) -> (i32, i32, i32) {
    %c0_i32 = arith.constant 0 : i32
    %c0_i32_0 = arith.constant 0 : i32
    %c0_i32_1 = arith.constant 0 : i32
    return %arg0, %c0_i32, %c0_i32_0 : i32, i32, i32
  }
}

</mosaic_0001>

<llo_original>
// kernel: shallow_cnn_forward.1
$region0: #{shallow_cnn_forward.1}
  #allocation0 [shape = 'u32[]', space=smem, size = 0x4, offset = 0x4, fixed_abs, tag = 'smem constant byte address 0x4 - core index']
  #allocation1 [shape = 'u32[144,128]{1,0:T(1,128)}', space=vmem, size = 0x12000, scoped, tag = 'internal scratch']
  #allocation2 [shape = 'bf16[20,128]{1,0:T(8,128)(2,1)}', space=vmem, size = 0x1800, scoped, tag = 'scratch operand']
  #allocation3 [shape = 'bf16[8,512]{1,0:T(8,128)(2,1)}', space=vmem, size = 0x2000, scoped, tag = 'scratch operand']
  %s0 = inlined_call_operand.vmem [shape: bf16[2,36,96], index: 0, kind: input, shape index: {}]
  %s1 = inlined_call_operand.hbm [shape: bf16[5,2,96,128], index: 1, kind: input, shape index: {}]
  %s2 = inlined_call_operand.hbm [shape: f32[1,128], index: 2, kind: input, shape index: {}]
  %s3 = inlined_call_operand.vmem [shape: bf16[2,20,32], index: 3, kind: input, shape index: {}]
  %s4 = inlined_call_operand.hbm [shape: bf16[5,2,128,512], index: 4, kind: input, shape index: {}]
  %s5 = inlined_call_operand.hbm [shape: f32[1,512], index: 5, kind: input, shape index: {}]
  %s6 = inlined_call_operand.hbm [shape: bf16[2,8,16], index: 6, kind: input, shape index: {}]
  %s7 = inlined_call_operand.hbm [shape: bf16[8,512,128], index: 7, kind: input, shape index: {}]
  %s8 = inlined_call_operand.hbm [shape: f32[1,128], index: 8, kind: input, shape index: {}]
  %s9 = inlined_call_operand.hbm [shape: f32[2,1,128], index: 9, kind: output, shape index: {}]
  %s10 = sld [smem:[#allocation0]]
  $region97: #{shallow_cnn_forward.1} parent=0
    _
  %s12 = ssub.s32 1, %s10
  %s13 = scalar_select 0, %s12, %s10
  $region1: #{shallow_cnn_forward.1} parent=0
    #allocation4 [shape = 'u8[245760]{0}', space=vmem, size = 0x3c000, scoped, tag = 'input window, operand 1, single buffered']
    #allocation5 [shape = 's32[2]{0}', space=sflag, size = 0x8, scoped, tag = 'scoped memory for shallow_cnn_forward.1']
    #allocation6 [shape = 's32[2]{0}', space=sflag, size = 0x8, scoped, tag = 'scoped memory for shallow_cnn_forward.1']
    #allocation7 [shape = 'u8[512]{0}', space=vmem, size = 0x400, scoped, tag = 'input window, operand 2, single buffered']
    #allocation8 [shape = 's32[1]{0}', space=sflag, size = 0x4, scoped, tag = 'scoped memory for shallow_cnn_forward.1']
    #allocation9 [shape = 'u8[1310720]{0}', space=vmem, size = 0x140000, scoped, tag = 'input window, operand 4, single buffered']
    #allocation10 [shape = 'u8[2048]{0}', space=vmem, size = 0x800, scoped, tag = 'input window, operand 5, single buffered']
    #allocation11 [shape = 's32[1]{0}', space=sflag, size = 0x4, scoped, tag = 'scoped memory for shallow_cnn_forward.1']
    #allocation12 [shape = 'u8[4096]{0}', space=vmem, size = 0x1000, scoped, tag = 'input window, operand 6, single buffered']
    #allocation13 [shape = 'u8[1048576]{0}', space=vmem, size = 0x100000, scoped, tag = 'input window, operand 7, single buffered']
    #allocation14 [shape = 's32[1]{0}', space=sflag, size = 0x4, scoped, tag = 'scoped memory for shallow_cnn_forward.1']
    #allocation15 [shape = 'u8[512]{0}', space=vmem, size = 0x400, scoped, tag = 'input window, operand 8, single buffered']
    #allocation16 [shape = 'u8[1024]{0}', space=vmem, size = 0x400, scoped, tag = 'output window, operand 0']
    %14 = vsyncpa [#allocation5], 0
    %15 = vsyncpa [#allocation8], 0
    %16 = vsyncpa [#allocation11], 0
    %17 = vsyncpa [#allocation14], 0
    %18 = vsyncpa [#allocation6], 0
    %s19 = scalar_lea.sflag [#allocation6], 1
    %20 = vsyncpa %s19, 0
    loop: start=0, step=1, limit=4
    $region2: #{shallow_cnn_forward.1} parent=1 // loop_pre_header
      _
    $region3: #{shallow_cnn_forward.1} parent=1 // loop_header
      %s22 = sphi 0, %s26
      %p23 = scmp.ge.s32.totalorder %s22, 4
      %s32 = sphi 0, %s34
      %s35 = sphi 0, %s32
      %s36 = sphi 0, %s35
      %s52 = sphi 0, %s36
      %s56 = sphi 0, %s56
      %s58 = sphi 0, %s56
      %s59 = sphi 0, %s58
      %s73 = sphi 0, %s59
      %s77 = sphi 0, %s77
      %s79 = sphi 0, %s77
      %s80 = sphi 0, %s79
      %s94 = sphi 0, %s80
      %s98 = sphi 0, %s98
      %s100 = sphi 0, %s98
      %s101 = sphi 0, %s100
      %s115 = sphi 0, %s101
      %s119 = sphi 0, %s119
      %s121 = sphi 0, %s119
      %s122 = sphi 0, %s121
      %s136 = sphi 0, %s122
      %s140 = sphi 0, %s140
      %s142 = sphi 0, %s140
      %s143 = sphi 0, %s142
      %s157 = sphi 0, %s143
      %s161 = sphi 0, %s161
      %s163 = sphi 0, %s161
      %s164 = sphi 0, %s163
      %s178 = sphi 0, %s164
      %s182 = sphi 0, %s182
      %s184 = sphi 0, %s182
      %s185 = sphi 0, %s184
      %s199 = sphi 0, %s185
      %s203 = sphi 0, %s203
      %s205 = sphi 0, %s203
      %s206 = sphi 0, %s205
      %s220 = sphi 0, %s206
      %s226 = sphi 0, %s228
      %s229 = sphi 0, %s226
      %s230 = sphi 0, %s229
      %s246 = sphi 0, %s230
    $region4: #{shallow_cnn_forward.1} parent=1 // loop_header_branch
      %25 = sbr.rel (%p23) target = $region8
    $region5: #{shallow_cnn_forward.1} parent=1 // loop_body
      %s27 = ssub.s32 %s22, 1
      %s28 = ssub.s32 %s22, 2
      %s29 = sadd.s32 %s22, 1
      %s30 = ssub.s32 %s22, %s29
      %p31 = scmp.eq.s32.totalorder %s30, 0
      %s33 = sadd.s32 %s32, 1
      %s34 = scalar_select %p31, %s32, %s33
      %p37 = pneg %p31
      %p38 = scmp.eq.s32.totalorder %s22, 1
      %p39 = por %p37, %p38
      %p40 = scmp.ne.s32.totalorder %s32, %s35
      %p41 = scmp.eq.s32.totalorder %s22, 0
      %p42 = por %p40, %p41
      %p43 = scmp.ne.s32.totalorder %s32, %s35
      %p44 = scmp.eq.s32.totalorder %s27, 1
      %p45 = por %p43, %p44
      %p46 = scmp.ne.s32.totalorder %s35, %s36
      %p47 = scmp.eq.s32.totalorder %s27, 0
      %p48 = por %p46, %p47
      %p49 = scmp.ne.s32.totalorder %s35, %s36
      %p50 = scmp.eq.s32.totalorder %s28, 1
      %p51 = por %p49, %p50
      %p53 = scmp.ne.s32.totalorder %s36, %s52
      %p54 = scmp.eq.s32.totalorder %s28, 0
      %p55 = por %p53, %p54
      %s57 = sadd.s32 %s56, 1
      %p60 = scmp.eq.s32.totalorder %s22, 1
      %p61 = scmp.ne.s32.totalorder %s56, %s58
      %p62 = scmp.eq.s32.totalorder %s22, 0
      %p63 = por %p61, %p62
      %p64 = scmp.ne.s32.totalorder %s56, %s58
      %p65 = scmp.eq.s32.totalorder %s27, 1
      %p66 = por %p64, %p65
      %p67 = scmp.ne.s32.totalorder %s58, %s59
      %p68 = scmp.eq.s32.totalorder %s27, 0
      %p69 = por %p67, %p68
      %p70 = scmp.ne.s32.totalorder %s58, %s59
      %p71 = scmp.eq.s32.totalorder %s28, 1
      %p72 = por %p70, %p71
      %p74 = scmp.ne.s32.totalorder %s59, %s73
      %p75 = scmp.eq.s32.totalorder %s28, 0
      %p76 = por %p74, %p75
      %s78 = sadd.s32 %s77, 1
      %p81 = scmp.eq.s32.totalorder %s22, 1
      %p82 = scmp.ne.s32.totalorder %s77, %s79
      %p83 = scmp.eq.s32.totalorder %s22, 0
      %p84 = por %p82, %p83
      %p85 = scmp.ne.s32.totalorder %s77, %s79
      %p86 = scmp.eq.s32.totalorder %s27, 1
      %p87 = por %p85, %p86
      %p88 = scmp.ne.s32.totalorder %s79, %s80
      %p89 = scmp.eq.s32.totalorder %s27, 0
      %p90 = por %p88, %p89
      %p91 = scmp.ne.s32.totalorder %s79, %s80
      %p92 = scmp.eq.s32.totalorder %s28, 1
      %p93 = por %p91, %p92
      %p95 = scmp.ne.s32.totalorder %s80, %s94
      %p96 = scmp.eq.s32.totalorder %s28, 0
      %p97 = por %p95, %p96
      %s99 = sadd.s32 %s98, 1
      %p102 = scmp.eq.s32.totalorder %s22, 1
      %p103 = scmp.ne.s32.totalorder %s98, %s100
      %p104 = scmp.eq.s32.totalorder %s22, 0
      %p105 = por %p103, %p104
      %p106 = scmp.ne.s32.totalorder %s98, %s100
      %p107 = scmp.eq.s32.totalorder %s27, 1
      %p108 = por %p106, %p107
      %p109 = scmp.ne.s32.totalorder %s100, %s101
      %p110 = scmp.eq.s32.totalorder %s27, 0
      %p111 = por %p109, %p110
      %p112 = scmp.ne.s32.totalorder %s100, %s101
      %p113 = scmp.eq.s32.totalorder %s28, 1
      %p114 = por %p112, %p113
      %p116 = scmp.ne.s32.totalorder %s101, %s115
      %p117 = scmp.eq.s32.totalorder %s28, 0
      %p118 = por %p116, %p117
      %s120 = sadd.s32 %s119, 1
      %p123 = scmp.eq.s32.totalorder %s22, 1
      %p124 = scmp.ne.s32.totalorder %s119, %s121
      %p125 = scmp.eq.s32.totalorder %s22, 0
      %p126 = por %p124, %p125
      %p127 = scmp.ne.s32.totalorder %s119, %s121
      %p128 = scmp.eq.s32.totalorder %s27, 1
      %p129 = por %p127, %p128
      %p130 = scmp.ne.s32.totalorder %s121, %s122
      %p131 = scmp.eq.s32.totalorder %s27, 0
      %p132 = por %p130, %p131
      %p133 = scmp.ne.s32.totalorder %s121, %s122
      %p134 = scmp.eq.s32.totalorder %s28, 1
      %p135 = por %p133, %p134
      %p137 = scmp.ne.s32.totalorder %s122, %s136
      %p138 = scmp.eq.s32.totalorder %s28, 0
      %p139 = por %p137, %p138
      %s141 = sadd.s32 %s140, 1
      %p144 = scmp.eq.s32.totalorder %s22, 1
      %p145 = scmp.ne.s32.totalorder %s140, %s142
      %p146 = scmp.eq.s32.totalorder %s22, 0
      %p147 = por %p145, %p146
      %p148 = scmp.ne.s32.totalorder %s140, %s142
      %p149 = scmp.eq.s32.totalorder %s27, 1
      %p150 = por %p148, %p149
      %p151 = scmp.ne.s32.totalorder %s142, %s143
      %p152 = scmp.eq.s32.totalorder %s27, 0
      %p153 = por %p151, %p152
      %p154 = scmp.ne.s32.totalorder %s142, %s143
      %p155 = scmp.eq.s32.totalorder %s28, 1
      %p156 = por %p154, %p155
      %p158 = scmp.ne.s32.totalorder %s143, %s157
      %p159 = scmp.eq.s32.totalorder %s28, 0
      %p160 = por %p158, %p159
      %s162 = sadd.s32 %s161, 1
      %p165 = scmp.eq.s32.totalorder %s22, 1
      %p166 = scmp.ne.s32.totalorder %s161, %s163
      %p167 = scmp.eq.s32.totalorder %s22, 0
      %p168 = por %p166, %p167
      %p169 = scmp.ne.s32.totalorder %s161, %s163
      %p170 = scmp.eq.s32.totalorder %s27, 1
      %p171 = por %p169, %p170
      %p172 = scmp.ne.s32.totalorder %s163, %s164
      %p173 = scmp.eq.s32.totalorder %s27, 0
      %p174 = por %p172, %p173
      %p175 = scmp.ne.s32.totalorder %s163, %s164
      %p176 = scmp.eq.s32.totalorder %s28, 1
      %p177 = por %p175, %p176
      %p179 = scmp.ne.s32.totalorder %s164, %s178
      %p180 = scmp.eq.s32.totalorder %s28, 0
      %p181 = por %p179, %p180
      %s183 = sadd.s32 %s182, 1
      %p186 = scmp.eq.s32.totalorder %s22, 1
      %p187 = scmp.ne.s32.totalorder %s182, %s184
      %p188 = scmp.eq.s32.totalorder %s22, 0
      %p189 = por %p187, %p188
      %p190 = scmp.ne.s32.totalorder %s182, %s184
      %p191 = scmp.eq.s32.totalorder %s27, 1
      %p192 = por %p190, %p191
      %p193 = scmp.ne.s32.totalorder %s184, %s185
      %p194 = scmp.eq.s32.totalorder %s27, 0
      %p195 = por %p193, %p194
      %p196 = scmp.ne.s32.totalorder %s184, %s185
      %p197 = scmp.eq.s32.totalorder %s28, 1
      %p198 = por %p196, %p197
      %p200 = scmp.ne.s32.totalorder %s185, %s199
      %p201 = scmp.eq.s32.totalorder %s28, 0
      %p202 = por %p200, %p201
      %s204 = sadd.s32 %s203, 1
      %p207 = scmp.eq.s32.totalorder %s22, 1
      %p208 = scmp.ne.s32.totalorder %s203, %s205
      %p209 = scmp.eq.s32.totalorder %s22, 0
      %p210 = por %p208, %p209
      %p211 = scmp.ne.s32.totalorder %s203, %s205
      %p212 = scmp.eq.s32.totalorder %s27, 1
      %p213 = por %p211, %p212
      %p214 = scmp.ne.s32.totalorder %s205, %s206
      %p215 = scmp.eq.s32.totalorder %s27, 0
      %p216 = por %p214, %p215
      %p217 = scmp.ne.s32.totalorder %s205, %s206
      %p218 = scmp.eq.s32.totalorder %s28, 1
      %p219 = por %p217, %p218
      %p221 = scmp.ne.s32.totalorder %s206, %s220
      %p222 = scmp.eq.s32.totalorder %s28, 0
      %p223 = por %p221, %p222
      %s224 = ssub.s32 %s22, %s29
      %p225 = scmp.eq.s32.totalorder %s224, 0
      %s227 = sadd.s32 %s226, 1
      %s228 = scalar_select %p225, %s226, %s227
      %p231 = pneg %p225
      %p232 = scmp.eq.s32.totalorder %s22, 1
      %p233 = por %p231, %p232
      %p234 = scmp.ne.s32.totalorder %s226, %s229
      %p235 = scmp.eq.s32.totalorder %s22, 0
      %p236 = por %p234, %p235
      %p237 = scmp.ne.s32.totalorder %s226, %s229
      %p238 = scmp.eq.s32.totalorder %s27, 1
      %p239 = por %p237, %p238
      %p240 = scmp.ne.s32.totalorder %s229, %s230
      %p241 = scmp.eq.s32.totalorder %s27, 0
      %p242 = por %p240, %p241
      %p243 = scmp.ne.s32.totalorder %s229, %s230
      %p244 = scmp.eq.s32.totalorder %s28, 1
      %p245 = por %p243, %p244
      %p247 = scmp.ne.s32.totalorder %s230, %s246
      %p248 = scmp.eq.s32.totalorder %s28, 0
      %p249 = por %p247, %p248
      %p250 = scmp.le.s32.totalorder 1, %s22
      %p251 = scmp.lt.s32.totalorder %s22, 3
      %p252 = pnand %p250, %p251
      %p253 = pneg %p252
      // Predicated region
      $region9: #{shallow_cnn_forward.1} parent=5 // pred_check
        _
      $region10: #{shallow_cnn_forward.1} parent=5 // pred_check_branch
        %255 = sbr.rel (%p252) target = $region12
      $region11: #{shallow_cnn_forward.1} parent=5 // pred_region
        %s256 = ssub.s32 %s22, 1
        // Predicated region
        $region13: #{shallow_cnn_forward.1} parent=11 // pred_check
          %p257 = pneg %p69
        $region14: #{shallow_cnn_forward.1} parent=11 // pred_check_branch
          %259 = sbr.rel (%p257) target = $region16
        $region15: #{shallow_cnn_forward.1} parent=11 // pred_region
          %s261 = ssub.s32 7680, 7680
          %262 = vsyncadd [#allocation5], %s261
          %s263 = sshll.u32 [#allocation4], 4
          %s264 = int_to_ptr.vmem [resolvable:$true] %s263
          %269 = dma.hbm_to_vmem [thread:$0]  %s1, 7680, %s264, [#allocation5], 64, 64, 4
        $region16: #{shallow_cnn_forward.1} parent=11 // pred_fallthru
          _
        // Predicated region
        $region17: #{shallow_cnn_forward.1} parent=11 // pred_check
          %p270 = pneg %p90
        $region18: #{shallow_cnn_forward.1} parent=11 // pred_check_branch
          %272 = sbr.rel (%p270) target = $region20
        $region19: #{shallow_cnn_forward.1} parent=11 // pred_region
          %s274 = ssub.s32 16, 16
          %275 = vsyncadd [#allocation8], %s274
          %s277 = sshll.u32 [#allocation7], 4
          %s278 = int_to_ptr.vmem [resolvable:$true] %s277
          %280 = dma.hbm_to_vmem [thread:$0]  %s2, 16, %s278, [#allocation8]
        $region20: #{shallow_cnn_forward.1} parent=11 // pred_fallthru
          _
        // Predicated region
        $region21: #{shallow_cnn_forward.1} parent=11 // pred_check
          %p281 = pneg %p111
        $region22: #{shallow_cnn_forward.1} parent=11 // pred_check_branch
          %283 = sbr.rel (%p281) target = $region24
        $region23: #{shallow_cnn_forward.1} parent=11 // pred_region
          _
        $region24: #{shallow_cnn_forward.1} parent=11 // pred_fallthru
          _
        // Predicated region
        $region25: #{shallow_cnn_forward.1} parent=11 // pred_check
          %p284 = pneg %p132
        $region26: #{shallow_cnn_forward.1} parent=11 // pred_check_branch
          %286 = sbr.rel (%p284) target = $region28
        $region27: #{shallow_cnn_forward.1} parent=11 // pred_region
          %s288 = ssub.s32 40960, 40960
          %289 = vsyncadd [#allocation8], %s288
          %s290 = sshll.u32 [#allocation9], 4
          %s291 = int_to_ptr.vmem [resolvable:$true] %s290
          %296 = dma.hbm_to_vmem [thread:$0]  %s4, 40960, %s291, [#allocation8], 256, 256, 16
        $region28: #{shallow_cnn_forward.1} parent=11 // pred_fallthru
          _
        // Predicated region
        $region29: #{shallow_cnn_forward.1} parent=11 // pred_check
          %p297 = pneg %p153
        $region30: #{shallow_cnn_forward.1} parent=11 // pred_check_branch
          %299 = sbr.rel (%p297) target = $region32
        $region31: #{shallow_cnn_forward.1} parent=11 // pred_region
          %s301 = ssub.s32 64, 64
          %302 = vsyncadd [#allocation11], %s301
          %s304 = sshll.u32 [#allocation10], 4
          %s305 = int_to_ptr.vmem [resolvable:$true] %s304
          %307 = dma.hbm_to_vmem [thread:$0]  %s5, 64, %s305, [#allocation11]
        $region32: #{shallow_cnn_forward.1} parent=11 // pred_fallthru
          _
        // Predicated region
        $region33: #{shallow_cnn_forward.1} parent=11 // pred_check
          %p308 = pneg %p174
        $region34: #{shallow_cnn_forward.1} parent=11 // pred_check_branch
          %310 = sbr.rel (%p308) target = $region36
        $region35: #{shallow_cnn_forward.1} parent=11 // pred_region
          %s312 = ssub.s32 128, 128
          %313 = vsyncadd [#allocation11], %s312
          %s314 = sshll.u32 [#allocation12], 4
          %s315 = int_to_ptr.vmem [resolvable:$true] %s314
          %320 = dma.hbm_to_vmem [thread:$0]  %s6, 128, %s315, [#allocation11], 64, 64, 4
        $region36: #{shallow_cnn_forward.1} parent=11 // pred_fallthru
          _
        // Predicated region
        $region37: #{shallow_cnn_forward.1} parent=11 // pred_check
          %p321 = pneg %p195
        $region38: #{shallow_cnn_forward.1} parent=11 // pred_check_branch
          %323 = sbr.rel (%p321) target = $region40
        $region39: #{shallow_cnn_forward.1} parent=11 // pred_region
          %s325 = ssub.s32 32768, 32768
          %326 = vsyncadd [#allocation14], %s325
          %s327 = sshll.u32 [#allocation13], 4
          %s328 = int_to_ptr.vmem [resolvable:$true] %s327
          %333 = dma.hbm_to_vmem [thread:$0]  %s7, 32768, %s328, [#allocation14], 64, 64, 4
        $region40: #{shallow_cnn_forward.1} parent=11 // pred_fallthru
          _
        // Predicated region
        $region41: #{shallow_cnn_forward.1} parent=11 // pred_check
          %p334 = pneg %p216
        $region42: #{shallow_cnn_forward.1} parent=11 // pred_check_branch
          %336 = sbr.rel (%p334) target = $region44
        $region43: #{shallow_cnn_forward.1} parent=11 // pred_region
          %s338 = ssub.s32 16, 16
          %339 = vsyncadd [#allocation14], %s338
          %s341 = sshll.u32 [#allocation15], 4
          %s342 = int_to_ptr.vmem [resolvable:$true] %s341
          %344 = dma.hbm_to_vmem [thread:$0]  %s8, 16, %s342, [#allocation14]
        $region44: #{shallow_cnn_forward.1} parent=11 // pred_fallthru
          _
      $region12: #{shallow_cnn_forward.1} parent=5 // pred_fallthru
        _
      %p345 = scmp.lt.s32.totalorder %s22, 2
      // Predicated region
      $region45: #{shallow_cnn_forward.1} parent=5 // pred_check
        %p346 = pneg %p345
      $region46: #{shallow_cnn_forward.1} parent=5 // pred_check_branch
        %348 = sbr.rel (%p346) target = $region48
      $region47: #{shallow_cnn_forward.1} parent=5 // pred_region
        // Predicated region
        $region49: #{shallow_cnn_forward.1} parent=47 // pred_check
          %p349 = pneg %p42
        $region50: #{shallow_cnn_forward.1} parent=47 // pred_check_branch
          %351 = sbr.rel (%p349) target = $region52
        $region51: #{shallow_cnn_forward.1} parent=47 // pred_region
          %p352 = scmp.lt.s32.totalorder %s22, 1
          %s353 = scalar_select %p352, %s22, 1
          %s354 = smul.addr %s353, 5
          %s355 = smul.addr %s354, 4
          %s356 = scalar_lea.vmem %s0, %s355
        $region52: #{shallow_cnn_forward.1} parent=47 // pred_fallthru
          _
      $region48: #{shallow_cnn_forward.1} parent=5 // pred_fallthru
        _
      %p357 = scmp.le.s32.totalorder 1, %s22
      %p358 = scmp.lt.s32.totalorder %s22, 3
      %p359 = pnand %p357, %p358
      %p360 = pneg %p359
      // Predicated region
      $region53: #{shallow_cnn_forward.1} parent=5 // pred_check
        _
      $region54: #{shallow_cnn_forward.1} parent=5 // pred_check_branch
        %362 = sbr.rel (%p359) target = $region56
      $region55: #{shallow_cnn_forward.1} parent=5 // pred_region
        %s363 = ssub.s32 %s22, 1
        // Predicated region
        $region57: #{shallow_cnn_forward.1} parent=55 // pred_check
          %p364 = pneg %p69
        $region58: #{shallow_cnn_forward.1} parent=55 // pred_check_branch
          %366 = sbr.rel (%p364) target = $region60
        $region59: #{shallow_cnn_forward.1} parent=55 // pred_region
          %367 = dma.done [#allocation5], 7680
        $region60: #{shallow_cnn_forward.1} parent=55 // pred_fallthru
          _
        // Predicated region
        $region61: #{shallow_cnn_forward.1} parent=55 // pred_check
          %p368 = pneg %p90
        $region62: #{shallow_cnn_forward.1} parent=55 // pred_check_branch
          %370 = sbr.rel (%p368) target = $region64
        $region63: #{shallow_cnn_forward.1} parent=55 // pred_region
          %371 = dma.done [#allocation8], 16
        $region64: #{shallow_cnn_forward.1} parent=55 // pred_fallthru
          _
        // Predicated region
        $region65: #{shallow_cnn_forward.1} parent=55 // pred_check
          %p372 = pneg %p132
        $region66: #{shallow_cnn_forward.1} parent=55 // pred_check_branch
          %374 = sbr.rel (%p372) target = $region68
        $region67: #{shallow_cnn_forward.1} parent=55 // pred_region
          %375 = dma.done [#allocation8], 40960
        $region68: #{shallow_cnn_forward.1} parent=55 // pred_fallthru
          _
        // Predicated region
        $region69: #{shallow_cnn_forward.1} parent=55 // pred_check
          %p376 = pneg %p153
        $region70: #{shallow_cnn_forward.1} parent=55 // pred_check_branch
          %378 = sbr.rel (%p376) target = $region72
        $region71: #{shallow_cnn_forward.1} parent=55 // pred_region
          %379 = dma.done [#allocation11], 64
        $region72: #{shallow_cnn_forward.1} parent=55 // pred_fallthru
          _
        // Predicated region
        $region73: #{shallow_cnn_forward.1} parent=55 // pred_check
          %p380 = pneg %p174
        $region74: #{shallow_cnn_forward.1} parent=55 // pred_check_branch
          %382 = sbr.rel (%p380) target = $region76
        $region75: #{shallow_cnn_forward.1} parent=55 // pred_region
          %383 = dma.done [#allocation11], 128
        $region76: #{shallow_cnn_forward.1} parent=55 // pred_fallthru
          _
        // Predicated region
        $region77: #{shallow_cnn_forward.1} parent=55 // pred_check
          %p384 = pneg %p195
        $region78: #{shallow_cnn_forward.1} parent=55 // pred_check_branch
          %386 = sbr.rel (%p384) target = $region80
        $region79: #{shallow_cnn_forward.1} parent=55 // pred_region
          %387 = dma.done [#allocation14], 32768
        $region80: #{shallow_cnn_forward.1} parent=55 // pred_fallthru
          _
        // Predicated region
        $region81: #{shallow_cnn_forward.1} parent=55 // pred_check
          %p388 = pneg %p216
        $region82: #{shallow_cnn_forward.1} parent=55 // pred_check_branch
          %390 = sbr.rel (%p388) target = $region84
        $region83: #{shallow_cnn_forward.1} parent=55 // pred_region
          %391 = dma.done [#allocation14], 16
        $region84: #{shallow_cnn_forward.1} parent=55 // pred_fallthru
          _
        %p392 = scmp.lt.s32.totalorder %s27, 1
        %s393 = scalar_select %p392, %s27, 1
        %s394 = smul.addr %s393, 5
        %s395 = smul.addr %s394, 4
        %s396 = scalar_lea.vmem %s0, %s395
        %p397 = pneg %p48
        %p398 = pneg %p45
        %p399 = pneg %p69
        %p400 = pneg %p66
        %p401 = pneg %p90
        %p402 = pneg %p87
        %p403 = pneg %p111
        %p404 = pneg %p108
        %p405 = pneg %p132
        %p406 = pneg %p129
        %p407 = pneg %p153
        %p408 = pneg %p150
        %p409 = pneg %p174
        %p410 = pneg %p171
        %p411 = pneg %p195
        %p412 = pneg %p192
        %p413 = pneg %p216
        %p414 = pneg %p213
        %p415 = pneg %p242
        %p416 = pneg %p239
        %s417 = sand.u32 %s229, 1
        %s418 = scalar_lea.sflag [#allocation6], %s417
        %s419 = sand.u32 %s229, 1
        %s420 = scalar_lea.vmem [#allocation16], %s419
        %p421 = scmp.lt.s32.totalorder %s27, 1
        %s422 = scalar_select %p421, %s27, 1
        %s423 = smul.addr %s422, 5
        %s424 = smul.addr %s423, 4
        %s425 = scalar_lea.vmem %s0, %s424
        %v427 = vld [vmem:[#allocation7] sm:$0x1]
        %v429 = vlaneseq
        %v430 = vshrl.u32 %v429, 7
        %v431 = vsub.s32 0, %v430
        %v432 = vrot.slane %v427, %v431
        %v434 = vld [vmem:[%s425] sm:$0xf]
        %v435 = vld [vmem:[%s425 + $0x4] sm:$0xf]
        %v436 = vld [vmem:[%s425 + $0x8] sm:$0xf]
        %v437 = vld [vmem:[%s425 + $0xc] sm:$0xf]
        %v438 = vld [vmem:[#allocation4] sm:$0xf]
        %v439 = vld [vmem:[#allocation4 + $0x4] sm:$0xf]
        %v440 = vld [vmem:[#allocation4 + $0x8] sm:$0xf]
        %v441 = vld [vmem:[#allocation4 + $0xc] sm:$0xf]
        %v442 = vld [vmem:[#allocation4 + $0x10] sm:$0xf]
        %v443 = vld [vmem:[#allocation4 + $0x14] sm:$0xf]
        %v444 = vld [vmem:[#allocation4 + $0x18] sm:$0xf]
        %v445 = vld [vmem:[#allocation4 + $0x1c] sm:$0xf]
        %v446 = vld [vmem:[#allocation4 + $0x20] sm:$0xf]
        %v447 = vld [vmem:[#allocation4 + $0x24] sm:$0xf]
        %v448 = vld [vmem:[#allocation4 + $0x28] sm:$0xf]
        %v449 = vld [vmem:[#allocation4 + $0x2c] sm:$0xf]
        %v454 = vunpack.c.l.b16 %v434
        %v455 = vunpack.c.l.b16 %v435
        %v456 = vunpack.c.l.b16 %v436
        %v457 = vunpack.c.l.b16 %v437
        %v458 = vpack.c.b16 %v455, %v454
        %v459 = vpack.c.b16 %v457, %v456
        %v472 = vunpack.c.l.b16 %v438
        %v473 = vunpack.c.l.b16 %v439
        %v474 = vunpack.c.l.b16 %v440
        %v475 = vunpack.c.l.b16 %v441
        %v476 = vunpack.c.l.b16 %v442
        %v477 = vunpack.c.l.b16 %v443
        %v478 = vunpack.c.l.b16 %v444
        %v479 = vunpack.c.l.b16 %v445
        %v480 = vunpack.c.l.b16 %v446
        %v481 = vunpack.c.l.b16 %v447
        %v482 = vunpack.c.l.b16 %v448
        %v483 = vunpack.c.l.b16 %v449
        %v484 = vpack.c.b16 %v473, %v472
        %v485 = vpack.c.b16 %v475, %v474
        %v486 = vpack.c.b16 %v477, %v476
        %v487 = vpack.c.b16 %v479, %v478
        %v488 = vpack.c.b16 %v481, %v480
        %v489 = vpack.c.b16 %v483, %v482
        %vm496 = vcmask 785408
        %v498 = vsel %vm496, %v458, 0
        %v501 = vsel %vm496, %v459, 0
        %503 = vmatprep.subr.bf16.mxu0 0
        %504 = vmatpush1.bf16.msra.mxu0 %v484
        %505 = vmatprep.subr.bf16.mxu0 0
        %506 = vmatpush1.bf16.msra.mxu0 %v485
        %507 = vmatprep.subr.bf16.mxu0 0
        %508 = vmatpush1.bf16.msra.mxu0 %v486
        %509 = vmatprep.subr.bf16.mxu0 0
        %510 = vmatpush1.bf16.msra.mxu0 %v487
        %511 = vmatprep.subr.bf16.mxu0 0
        %512 = vmatpush1.bf16.msra.mxu0 %v488
        %513 = vmatprep.subr.bf16.mxu0 0
        %514 = vmatpush1.bf16.msra.mxu0 %v489
        %515 = vmatprep.subr.bf16.mxu0 0
        %516 = vmatpush1.bf16.msra.mxu0 0
        %517 = vmatprep.subr.bf16.mxu0 0
        %518 = vmatpush1.bf16.msra.mxu0 0
        %519 = vmatprep.subr.bf16.mxu0 0
        %520 = vmatpush1.bf16.msra.mxu0 0
        %521 = vmatprep.subr.bf16.mxu0 0
        %522 = vmatpush1.bf16.msra.mxu0 0
        %523 = vmatprep.subr.bf16.mxu0 0
        %524 = vmatpush1.bf16.msra.mxu0 0
        %525 = vmatprep.subr.bf16.mxu0 0
        %526 = vmatpush1.bf16.msra.mxu0 0
        %527 = vmatprep.subr.bf16.mxu0 0
        %528 = vmatpush1.bf16.msra.mxu0 0
        %529 = vmatprep.subr.bf16.mxu0 0
        %530 = vmatpush1.bf16.msra.mxu0 0
        %531 = vmatprep.subr.bf16.mxu0 0
        %532 = vmatpush1.bf16.msra.mxu0 0
        %533 = vmatprep.subr.bf16.mxu0 0
        %534 = vmatpush1.bf16.msra.mxu0 0
        %535 = vmatprep.mubr.bf16.mxu0 0
        %536 = vmatmul.mubr.bf16.gmra.mrb[0].mxu0 %v498
        %v537 = vpop.f32.mrb[0].mxu0
        %v538 = vadd.f32 0.0, %v537
        %v539 = vpop.f32.mrb[0].mxu0
        %v540 = vpop.f32.mrb[0].mxu0
        %v541 = vadd.f32 0.0, %v540
        %v542 = vpop.f32.mrb[0].mxu0
        %543 = vmatprep.mubr.bf16.mxu0 0
        %544 = vmatmul.mubr.bf16.gmra.mrb[0].mxu0 %v501
        %v545 = vpop.f32.mrb[0].mxu0
        %v546 = vadd.f32 0.0, %v545
        %v547 = vpop.f32.mrb[0].mxu0
        %v548 = vpop.f32.mrb[0].mxu0
        %v549 = vadd.f32 0.0, %v548
        %v550 = vpop.f32.mrb[0].mxu0
        %551 = vdwg.mxu0
        %v552 = vadd.f32 %v432, %v538
        %v553 = vadd.f32 %v432, %v541
        %v554 = vadd.f32 %v432, %v546
        %v555 = vadd.f32 %v432, %v549
        %v556 = vld [vmem:[%s425] sm:$0xf]
        %v557 = vld [vmem:[%s425 + $0x4] sm:$0xf]
        %v558 = vld [vmem:[%s425 + $0x8] sm:$0xf]
        %v559 = vld [vmem:[%s425 + $0xc] sm:$0xf]
        %v560 = vld [vmem:[%s425 + $0x10] sm:$0x1]
        %s561 = scalar_lea.vmem [#allocation4], 96
        %v562 = vld [vmem:[%s561] sm:$0xf]
        %v563 = vld [vmem:[%s561 + $0x4] sm:$0xf]
        %v564 = vld [vmem:[%s561 + $0x8] sm:$0xf]
        %v565 = vld [vmem:[%s561 + $0xc] sm:$0xf]
        %v566 = vld [vmem:[%s561 + $0x10] sm:$0xf]
        %v567 = vld [vmem:[%s561 + $0x14] sm:$0xf]
        %v568 = vld [vmem:[%s561 + $0x18] sm:$0xf]
        %v569 = vld [vmem:[%s561 + $0x1c] sm:$0xf]
        %v570 = vld [vmem:[%s561 + $0x20] sm:$0xf]
        %v571 = vld [vmem:[%s561 + $0x24] sm:$0xf]
        %v572 = vld [vmem:[%s561 + $0x28] sm:$0xf]
        %v573 = vld [vmem:[%s561 + $0x2c] sm:$0xf]
        %v579 = vunpack.c.l.b16 %v556
        %v580 = vunpack.c.l.b16 %v557
        %v581 = vunpack.c.l.b16 %v558
        %v582 = vunpack.c.l.b16 %v559
        %v583 = vunpack.c.l.b16 %v560
        %v584 = vpack.c.b16 %v580, %v579
        %v585 = vpack.c.b16 %v582, %v581
        %v586 = vpack.c.b16 %v583, %v583
        %vm587 = vsmask.f32 7424
        %v589 = vshrl.u32 %v584, 16
        %v591 = vshll.u32 %v584, 16
        %v593 = vrot.slane %v591, 1
        %v594 = vor.u32 %v589, %v593
        %v596 = vshll.u32 %v585, 16
        %v598 = vrot.slane %v596, 1
        %v599 = vsel %vm587, %v594, %v598
        %v600 = vshrl.u32 %v585, 16
        %v602 = vor.u32 %v600, %v598
        %v604 = vshll.u32 %v586, 16
        %v606 = vrot.slane %v604, 1
        %v607 = vsel %vm587, %v602, %v606
        %v620 = vunpack.c.l.b16 %v562
        %v621 = vunpack.c.l.b16 %v563
        %v622 = vunpack.c.l.b16 %v564
        %v623 = vunpack.c.l.b16 %v565
        %v624 = vunpack.c.l.b16 %v566
        %v625 = vunpack.c.l.b16 %v567
        %v626 = vunpack.c.l.b16 %v568
        %v627 = vunpack.c.l.b16 %v569
        %v628 = vunpack.c.l.b16 %v570
        %v629 = vunpack.c.l.b16 %v571
        %v630 = vunpack.c.l.b16 %v572
        %v631 = vunpack.c.l.b16 %v573
        %v632 = vpack.c.b16 %v621, %v620
        %v633 = vpack.c.b16 %v623, %v622
        %v634 = vpack.c.b16 %v625, %v624
        %v635 = vpack.c.b16 %v627, %v626
        %v636 = vpack.c.b16 %v629, %v628
        %v637 = vpack.c.b16 %v631, %v630
        %v645 = vsel %vm496, %v599, 0
        %v648 = vsel %vm496, %v607, 0
        %650 = vmatprep.subr.bf16.mxu0 0
        %651 = vmatpush1.bf16.msra.mxu0 %v632
        %652 = vmatprep.subr.bf16.mxu0 0
        %653 = vmatpush1.bf16.msra.mxu0 %v633
        %654 = vmatprep.subr.bf16.mxu0 0
        %655 = vmatpush1.bf16.msra.mxu0 %v634
        %656 = vmatprep.subr.bf16.mxu0 0
        %657 = vmatpush1.bf16.msra.mxu0 %v635
        %658 = vmatprep.subr.bf16.mxu0 0
        %659 = vmatpush1.bf16.msra.mxu0 %v636
        %660 = vmatprep.subr.bf16.mxu0 0
        %661 = vmatpush1.bf16.msra.mxu0 %v637
        %662 = vmatprep.subr.bf16.mxu0 0
        %663 = vmatpush1.bf16.msra.mxu0 0
        %664 = vmatprep.subr.bf16.mxu0 0
        %665 = vmatpush1.bf16.msra.mxu0 0
        %666 = vmatprep.subr.bf16.mxu0 0
        %667 = vmatpush1.bf16.msra.mxu0 0
        %668 = vmatprep.subr.bf16.mxu0 0
        %669 = vmatpush1.bf16.msra.mxu0 0
        %670 = vmatprep.subr.bf16.mxu0 0
        %671 = vmatpush1.bf16.msra.mxu0 0
        %672 = vmatprep.subr.bf16.mxu0 0
        %673 = vmatpush1.bf16.msra.mxu0 0
        %674 = vmatprep.subr.bf16.mxu0 0
        %675 = vmatpush1.bf16.msra.mxu0 0
        %676 = vmatprep.subr.bf16.mxu0 0
        %677 = vmatpush1.bf16.msra.mxu0 0
        %678 = vmatprep.subr.bf16.mxu0 0
        %679 = vmatpush1.bf16.msra.mxu0 0
        %680 = vmatprep.subr.bf16.mxu0 0
        %681 = vmatpush1.bf16.msra.mxu0 0
        %682 = vmatprep.mubr.bf16.mxu0 0
        %683 = vmatmul.mubr.bf16.gmra.mrb[0].mxu0 %v645
        %v684 = vpop.f32.mrb[0].mxu0
        %v685 = vadd.f32 0.0, %v684
        %v686 = vpop.f32.mrb[0].mxu0
        %v687 = vpop.f32.mrb[0].mxu0
        %v688 = vadd.f32 0.0, %v687
        %v689 = vpop.f32.mrb[0].mxu0
        %690 = vmatprep.mubr.bf16.mxu0 0
        %691 = vmatmul.mubr.bf16.gmra.mrb[0].mxu0 %v648
        %v692 = vpop.f32.mrb[0].mxu0
        %v693 = vadd.f32 0.0, %v692
        %v694 = vpop.f32.mrb[0].mxu0
        %v695 = vpop.f32.mrb[0].mxu0
        %v696 = vadd.f32 0.0, %v695
        %v697 = vpop.f32.mrb[0].mxu0
        %698 = vdwg.mxu0
        %v699 = vadd.f32 %v552, %v685
        %v700 = vadd.f32 %v553, %v688
        %v701 = vadd.f32 %v554, %v693
        %v702 = vadd.f32 %v555, %v696
        %v703 = vld [vmem:[%s425] sm:$0xe]
        %s704 = scalar_lea.vmem [#allocation4], 192
        %v705 = vld [vmem:[%s704] sm:$0xf]
        %v706 = vld [vmem:[%s704 + $0x4] sm:$0xf]
        %v707 = vld [vmem:[%s704 + $0x8] sm:$0xf]
        %v708 = vld [vmem:[%s704 + $0xc] sm:$0xf]
        %v709 = vld [vmem:[%s704 + $0x10] sm:$0xf]
        %v710 = vld [vmem:[%s704 + $0x14] sm:$0xf]
        %v711 = vld [vmem:[%s704 + $0x18] sm:$0xf]
        %v712 = vld [vmem:[%s704 + $0x1c] sm:$0xf]
        %v713 = vld [vmem:[%s704 + $0x20] sm:$0xf]
        %v714 = vld [vmem:[%s704 + $0x24] sm:$0xf]
        %v715 = vld [vmem:[%s704 + $0x28] sm:$0xf]
        %v716 = vld [vmem:[%s704 + $0x2c] sm:$0xf]
        %v718 = vunpack.c.l.b16 %v703
        %v719 = vpack.c.b16 %v580, %v718
        %vm720 = vcmask 1046528
        %v721 = vrot.slane %v719, 1
        %v722 = vrot.slane %v585, 1
        %v723 = vsel %vm720, %v721, %v722
        %v724 = vrot.slane %v586, 1
        %v725 = vsel %vm720, %v722, %v724
        %v738 = vunpack.c.l.b16 %v705
        %v739 = vunpack.c.l.b16 %v706
        %v740 = vunpack.c.l.b16 %v707
        %v741 = vunpack.c.l.b16 %v708
        %v742 = vunpack.c.l.b16 %v709
        %v743 = vunpack.c.l.b16 %v710
        %v744 = vunpack.c.l.b16 %v711
        %v745 = vunpack.c.l.b16 %v712
        %v746 = vunpack.c.l.b16 %v713
        %v747 = vunpack.c.l.b16 %v714
        %v748 = vunpack.c.l.b16 %v715
        %v749 = vunpack.c.l.b16 %v716
        %v750 = vpack.c.b16 %v739, %v738
        %v751 = vpack.c.b16 %v741, %v740
        %v752 = vpack.c.b16 %v743, %v742
        %v753 = vpack.c.b16 %v745, %v744
        %v754 = vpack.c.b16 %v747, %v746
        %v755 = vpack.c.b16 %v749, %v748
        %v763 = vsel %vm496, %v723, 0
        %v766 = vsel %vm496, %v725, 0
        %768 = vmatprep.subr.bf16.mxu0 0
        %769 = vmatpush1.bf16.msra.mxu0 %v750
        %770 = vmatprep.subr.bf16.mxu0 0
        %771 = vmatpush1.bf16.msra.mxu0 %v751
        %772 = vmatprep.subr.bf16.mxu0 0
        %773 = vmatpush1.bf16.msra.mxu0 %v752
        %774 = vmatprep.subr.bf16.mxu0 0
        %775 = vmatpush1.bf16.msra.mxu0 %v753
        %776 = vmatprep.subr.bf16.mxu0 0
        %777 = vmatpush1.bf16.msra.mxu0 %v754
        %778 = vmatprep.subr.bf16.mxu0 0
        %779 = vmatpush1.bf16.msra.mxu0 %v755
        %780 = vmatprep.subr.bf16.mxu0 0
        %781 = vmatpush1.bf16.msra.mxu0 0
        %782 = vmatprep.subr.bf16.mxu0 0
        %783 = vmatpush1.bf16.msra.mxu0 0
        %784 = vmatprep.subr.bf16.mxu0 0
        %785 = vmatpush1.bf16.msra.mxu0 0
        %786 = vmatprep.subr.bf16.mxu0 0
        %787 = vmatpush1.bf16.msra.mxu0 0
        %788 = vmatprep.subr.bf16.mxu0 0
        %789 = vmatpush1.bf16.msra.mxu0 0
        %790 = vmatprep.subr.bf16.mxu0 0
        %791 = vmatpush1.bf16.msra.mxu0 0
        %792 = vmatprep.subr.bf16.mxu0 0
        %793 = vmatpush1.bf16.msra.mxu0 0
        %794 = vmatprep.subr.bf16.mxu0 0
        %795 = vmatpush1.bf16.msra.mxu0 0
        %796 = vmatprep.subr.bf16.mxu0 0
        %797 = vmatpush1.bf16.msra.mxu0 0
        %798 = vmatprep.subr.bf16.mxu0 0
        %799 = vmatpush1.bf16.msra.mxu0 0
        %800 = vmatprep.mubr.bf16.mxu0 0
        %801 = vmatmul.mubr.bf16.gmra.mrb[0].mxu0 %v763
        %v802 = vpop.f32.mrb[0].mxu0
        %v803 = vadd.f32 0.0, %v802
        %v804 = vpop.f32.mrb[0].mxu0
        %v805 = vpop.f32.mrb[0].mxu0
        %v806 = vadd.f32 0.0, %v805
        %v807 = vpop.f32.mrb[0].mxu0
        %808 = vmatprep.mubr.bf16.mxu0 0
        %809 = vmatmul.mubr.bf16.gmra.mrb[0].mxu0 %v766
        %v810 = vpop.f32.mrb[0].mxu0
        %v811 = vadd.f32 0.0, %v810
        %v812 = vpop.f32.mrb[0].mxu0
        %v813 = vpop.f32.mrb[0].mxu0
        %v814 = vadd.f32 0.0, %v813
        %v815 = vpop.f32.mrb[0].mxu0
        %816 = vdwg.mxu0
        %v817 = vadd.f32 %v699, %v803
        %v818 = vadd.f32 %v700, %v806
        %v819 = vadd.f32 %v701, %v811
        %v820 = vadd.f32 %v702, %v814
        %v821 = vld [vmem:[%s425 + $0x10] sm:$0x3]
        %s822 = scalar_lea.vmem [#allocation4], 288
        %v823 = vld [vmem:[%s822] sm:$0xf]
        %v824 = vld [vmem:[%s822 + $0x4] sm:$0xf]
        %v825 = vld [vmem:[%s822 + $0x8] sm:$0xf]
        %v826 = vld [vmem:[%s822 + $0xc] sm:$0xf]
        %v827 = vld [vmem:[%s822 + $0x10] sm:$0xf]
        %v828 = vld [vmem:[%s822 + $0x14] sm:$0xf]
        %v829 = vld [vmem:[%s822 + $0x18] sm:$0xf]
        %v830 = vld [vmem:[%s822 + $0x1c] sm:$0xf]
        %v831 = vld [vmem:[%s822 + $0x20] sm:$0xf]
        %v832 = vld [vmem:[%s822 + $0x24] sm:$0xf]
        %v833 = vld [vmem:[%s822 + $0x28] sm:$0xf]
        %v834 = vld [vmem:[%s822 + $0x2c] sm:$0xf]
        %v836 = vunpack.c.l.b16 %v821
        %v837 = vpack.c.b16 %v836, %v836
        %vm838 = vsmask.f32 6400
        %v840 = vshrl.u32 %v719, 16
        %v842 = vrot.slane %v840, 1
        %v843 = vshll.u32 %v719, 16
        %v845 = vrot.slane %v843, 2
        %v846 = vor.u32 %v842, %v845
        %v847 = vrot.slane %v600, 1
        %v848 = vrot.slane %v596, 2
        %v849 = vor.u32 %v847, %v848
        %v850 = vsel %vm838, %v846, %v849
        %v852 = vshrl.u32 %v837, 16
        %v854 = vrot.slane %v852, 1
        %v855 = vshll.u32 %v837, 16
        %v857 = vrot.slane %v855, 2
        %v858 = vor.u32 %v854, %v857
        %v859 = vsel %vm838, %v849, %v858
        %v872 = vunpack.c.l.b16 %v823
        %v873 = vunpack.c.l.b16 %v824
        %v874 = vunpack.c.l.b16 %v825
        %v875 = vunpack.c.l.b16 %v826
        %v876 = vunpack.c.l.b16 %v827
        %v877 = vunpack.c.l.b16 %v828
        %v878 = vunpack.c.l.b16 %v829
        %v879 = vunpack.c.l.b16 %v830
        %v880 = vunpack.c.l.b16 %v831
        %v881 = vunpack.c.l.b16 %v832
        %v882 = vunpack.c.l.b16 %v833
        %v883 = vunpack.c.l.b16 %v834
        %v884 = vpack.c.b16 %v873, %v872
        %v885 = vpack.c.b16 %v875, %v874
        %v886 = vpack.c.b16 %v877, %v876
        %v887 = vpack.c.b16 %v879, %v878
        %v888 = vpack.c.b16 %v881, %v880
        %v889 = vpack.c.b16 %v883, %v882
        %v897 = vsel %vm496, %v850, 0
        %v900 = vsel %vm496, %v859, 0
        %902 = vmatprep.subr.bf16.mxu0 0
        %903 = vmatpush1.bf16.msra.mxu0 %v884
        %904 = vmatprep.subr.bf16.mxu0 0
        %905 = vmatpush1.bf16.msra.mxu0 %v885
        %906 = vmatprep.subr.bf16.mxu0 0
        %907 = vmatpush1.bf16.msra.mxu0 %v886
        %908 = vmatprep.subr.bf16.mxu0 0
        %909 = vmatpush1.bf16.msra.mxu0 %v887
        %910 = vmatprep.subr.bf16.mxu0 0
        %911 = vmatpush1.bf16.msra.mxu0 %v888
        %912 = vmatprep.subr.bf16.mxu0 0
        %913 = vmatpush1.bf16.msra.mxu0 %v889
        %914 = vmatprep.subr.bf16.mxu0 0
        %915 = vmatpush1.bf16.msra.mxu0 0
        %916 = vmatprep.subr.bf16.mxu0 0
        %917 = vmatpush1.bf16.msra.mxu0 0
        %918 = vmatprep.subr.bf16.mxu0 0
        %919 = vmatpush1.bf16.msra.mxu0 0
        %920 = vmatprep.subr.bf16.mxu0 0
        %921 = vmatpush1.bf16.msra.mxu0 0
        %922 = vmatprep.subr.bf16.mxu0 0
        %923 = vmatpush1.bf16.msra.mxu0 0
        %924 = vmatprep.subr.bf16.mxu0 0
        %925 = vmatpush1.bf16.msra.mxu0 0
        %926 = vmatprep.subr.bf16.mxu0 0
        %927 = vmatpush1.bf16.msra.mxu0 0
        %928 = vmatprep.subr.bf16.mxu0 0
        %929 = vmatpush1.bf16.msra.mxu0 0
        %930 = vmatprep.subr.bf16.mxu0 0
        %931 = vmatpush1.bf16.msra.mxu0 0
        %932 = vmatprep.subr.bf16.mxu0 0
        %933 = vmatpush1.bf16.msra.mxu0 0
        %934 = vmatprep.mubr.bf16.mxu0 0
        %935 = vmatmul.mubr.bf16.gmra.mrb[0].mxu0 %v897
        %v936 = vpop.f32.mrb[0].mxu0
        %v937 = vadd.f32 0.0, %v936
        %v938 = vpop.f32.mrb[0].mxu0
        %v939 = vpop.f32.mrb[0].mxu0
        %v940 = vadd.f32 0.0, %v939
        %v941 = vpop.f32.mrb[0].mxu0
        %942 = vmatprep.mubr.bf16.mxu0 0
        %943 = vmatmul.mubr.bf16.gmra.mrb[0].mxu0 %v900
        %v944 = vpop.f32.mrb[0].mxu0
        %v945 = vadd.f32 0.0, %v944
        %v946 = vpop.f32.mrb[0].mxu0
        %v947 = vpop.f32.mrb[0].mxu0
        %v948 = vadd.f32 0.0, %v947
        %v949 = vpop.f32.mrb[0].mxu0
        %950 = vdwg.mxu0
        %v951 = vadd.f32 %v817, %v937
        %v952 = vadd.f32 %v818, %v940
        %v953 = vadd.f32 %v819, %v945
        %v954 = vadd.f32 %v820, %v948
        %v955 = vld [vmem:[%s425] sm:$0xc]
        %s956 = scalar_lea.vmem [#allocation4], 384
        %v957 = vld [vmem:[%s956] sm:$0xf]
        %v958 = vld [vmem:[%s956 + $0x4] sm:$0xf]
        %v959 = vld [vmem:[%s956 + $0x8] sm:$0xf]
        %v960 = vld [vmem:[%s956 + $0xc] sm:$0xf]
        %v961 = vld [vmem:[%s956 + $0x10] sm:$0xf]
        %v962 = vld [vmem:[%s956 + $0x14] sm:$0xf]
        %v963 = vld [vmem:[%s956 + $0x18] sm:$0xf]
        %v964 = vld [vmem:[%s956 + $0x1c] sm:$0xf]
        %v965 = vld [vmem:[%s956 + $0x20] sm:$0xf]
        %v966 = vld [vmem:[%s956 + $0x24] sm:$0xf]
        %v967 = vld [vmem:[%s956 + $0x28] sm:$0xf]
        %v968 = vld [vmem:[%s956 + $0x2c] sm:$0xf]
        %v970 = vunpack.c.l.b16 %v955
        %v971 = vpack.c.b16 %v580, %v970
        %vm972 = vcmask 1045504
        %v973 = vrot.slane %v971, 2
        %v974 = vrot.slane %v585, 2
        %v975 = vsel %vm972, %v973, %v974
        %v976 = vrot.slane %v837, 2
        %v977 = vsel %vm972, %v974, %v976
        %v990 = vunpack.c.l.b16 %v957
        %v991 = vunpack.c.l.b16 %v958
        %v992 = vunpack.c.l.b16 %v959
        %v993 = vunpack.c.l.b16 %v960
        %v994 = vunpack.c.l.b16 %v961
        %v995 = vunpack.c.l.b16 %v962
        %v996 = vunpack.c.l.b16 %v963
        %v997 = vunpack.c.l.b16 %v964
        %v998 = vunpack.c.l.b16 %v965
        %v999 = vunpack.c.l.b16 %v966
        %v1000 = vunpack.c.l.b16 %v967
        %v1001 = vunpack.c.l.b16 %v968
        %v1002 = vpack.c.b16 %v991, %v990
        %v1003 = vpack.c.b16 %v993, %v992
        %v1004 = vpack.c.b16 %v995, %v994
        %v1005 = vpack.c.b16 %v997, %v996
        %v1006 = vpack.c.b16 %v999, %v998
        %v1007 = vpack.c.b16 %v1001, %v1000
        %v1015 = vsel %vm496, %v975, 0
        %v1018 = vsel %vm496, %v977, 0
        %1020 = vmatprep.subr.bf16.mxu0 0
        %1021 = vmatpush1.bf16.msra.mxu0 %v1002
        %1022 = vmatprep.subr.bf16.mxu0 0
        %1023 = vmatpush1.bf16.msra.mxu0 %v1003
        %1024 = vmatprep.subr.bf16.mxu0 0
        %1025 = vmatpush1.bf16.msra.mxu0 %v1004
        %1026 = vmatprep.subr.bf16.mxu0 0
        %1027 = vmatpush1.bf16.msra.mxu0 %v1005
        %1028 = vmatprep.subr.bf16.mxu0 0
        %1029 = vmatpush1.bf16.msra.mxu0 %v1006
        %1030 = vmatprep.subr.bf16.mxu0 0
        %1031 = vmatpush1.bf16.msra.mxu0 %v1007
        %1032 = vmatprep.subr.bf16.mxu0 0
        %1033 = vmatpush1.bf16.msra.mxu0 0
        %1034 = vmatprep.subr.bf16.mxu0 0
        %1035 = vmatpush1.bf16.msra.mxu0 0
        %1036 = vmatprep.subr.bf16.mxu0 0
        %1037 = vmatpush1.bf16.msra.mxu0 0
        %1038 = vmatprep.subr.bf16.mxu0 0
        %1039 = vmatpush1.bf16.msra.mxu0 0
        %1040 = vmatprep.subr.bf16.mxu0 0
        %1041 = vmatpush1.bf16.msra.mxu0 0
        %1042 = vmatprep.subr.bf16.mxu0 0
        %1043 = vmatpush1.bf16.msra.mxu0 0
        %1044 = vmatprep.subr.bf16.mxu0 0
        %1045 = vmatpush1.bf16.msra.mxu0 0
        %1046 = vmatprep.subr.bf16.mxu0 0
        %1047 = vmatpush1.bf16.msra.mxu0 0
        %1048 = vmatprep.subr.bf16.mxu0 0
        %1049 = vmatpush1.bf16.msra.mxu0 0
        %1050 = vmatprep.subr.bf16.mxu0 0
        %1051 = vmatpush1.bf16.msra.mxu0 0
        %1052 = vmatprep.mubr.bf16.mxu0 0
        %1053 = vmatmul.mubr.bf16.gmra.mrb[0].mxu0 %v1015
        %v1054 = vpop.f32.mrb[0].mxu0
        %v1055 = vadd.f32 0.0, %v1054
        %v1056 = vpop.f32.mrb[0].mxu0
        %v1057 = vpop.f32.mrb[0].mxu0
        %v1058 = vadd.f32 0.0, %v1057
        %v1059 = vpop.f32.mrb[0].mxu0
        %1060 = vmatprep.mubr.bf16.mxu0 0
        %1061 = vmatmul.mubr.bf16.gmra.mrb[0].mxu0 %v1018
        %v1062 = vpop.f32.mrb[0].mxu0
        %v1063 = vadd.f32 0.0, %v1062
        %v1064 = vpop.f32.mrb[0].mxu0
        %v1065 = vpop.f32.mrb[0].mxu0
        %v1066 = vadd.f32 0.0, %v1065
        %v1067 = vpop.f32.mrb[0].mxu0
        %1068 = vdwg.mxu0
        %v1069 = vadd.f32 %v951, %v1055
        %v1070 = vadd.f32 %v952, %v1058
        %v1071 = vadd.f32 %v953, %v1063
        %v1072 = vadd.f32 %v954, %v1066
        %v1073 = vmul.f32 %v1069, 0.5
        %v1074 = vmul.f32 %v1070, 0.5
        %v1075 = vmul.f32 %v1071, 0.5
        %v1076 = vmul.f32 %v1072, 0.5
        %v1077 = vmul.f32 %v1069, 0.70710677
        %v1078 = vmul.f32 %v1070, 0.70710677
        %v1079 = vmul.f32 %v1071, 0.70710677
        %v1080 = vmul.f32 %v1072, 0.70710677
        %v1081 = verf.f32.pop %v1077
        %v1082 = verf.f32.pop %v1078
        %v1083 = verf.f32.pop %v1079
        %v1084 = verf.f32.pop %v1080
        %v1085 = vadd.f32 %v1081, 1.0
        %v1086 = vadd.f32 %v1082, 1.0
        %v1087 = vadd.f32 %v1083, 1.0
        %v1088 = vadd.f32 %v1084, 1.0
        %v1089 = vmul.f32 %v1073, %v1085
        %v1090 = vmul.f32 %v1074, %v1086
        %v1091 = vmul.f32 %v1075, %v1087
        %v1092 = vmul.f32 %v1076, %v1088
        %v1093 = vpack.c.bf16 %v1090, %v1089
        %v1094 = vpack.c.bf16 %v1092, %v1091
        %s1095 = scalar_lea.vmem [#allocation4], 48
        %v1096 = vld [vmem:[%s1095] sm:$0xf]
        %v1097 = vld [vmem:[%s1095 + $0x4] sm:$0xf]
        %v1098 = vld [vmem:[%s1095 + $0x8] sm:$0xf]
        %v1099 = vld [vmem:[%s1095 + $0xc] sm:$0xf]
        %v1100 = vld [vmem:[%s1095 + $0x10] sm:$0xf]
        %v1101 = vld [vmem:[%s1095 + $0x14] sm:$0xf]
        %v1102 = vld [vmem:[%s1095 + $0x18] sm:$0xf]
        %v1103 = vld [vmem:[%s1095 + $0x1c] sm:$0xf]
        %v1104 = vld [vmem:[%s1095 + $0x20] sm:$0xf]
        %v1105 = vld [vmem:[%s1095 + $0x24] sm:$0xf]
        %v1106 = vld [vmem:[%s1095 + $0x28] sm:$0xf]
        %v1107 = vld [vmem:[%s1095 + $0x2c] sm:$0xf]
        %v1120 = vunpack.c.l.b16 %v1096
        %v1121 = vunpack.c.l.b16 %v1097
        %v1122 = vunpack.c.l.b16 %v1098
        %v1123 = vunpack.c.l.b16 %v1099
        %v1124 = vunpack.c.l.b16 %v1100
        %v1125 = vunpack.c.l.b16 %v1101
        %v1126 = vunpack.c.l.b16 %v1102
        %v1127 = vunpack.c.l.b16 %v1103
        %v1128 = vunpack.c.l.b16 %v1104
        %v1129 = vunpack.c.l.b16 %v1105
        %v1130 = vunpack.c.l.b16 %v1106
        %v1131 = vunpack.c.l.b16 %v1107
        %v1132 = vpack.c.b16 %v1121, %v1120
        %v1133 = vpack.c.b16 %v1123, %v1122
        %v1134 = vpack.c.b16 %v1125, %v1124
        %v1135 = vpack.c.b16 %v1127, %v1126
        %v1136 = vpack.c.b16 %v1129, %v1128
        %v1137 = vpack.c.b16 %v1131, %v1130
        %1144 = vmatprep.subr.bf16.mxu0 0
        %1145 = vmatpush1.bf16.msra.mxu0 %v1132
        %1146 = vmatprep.subr.bf16.mxu0 0
        %1147 = vmatpush1.bf16.msra.mxu0 %v1133
        %1148 = vmatprep.subr.bf16.mxu0 0
        %1149 = vmatpush1.bf16.msra.mxu0 %v1134
        %1150 = vmatprep.subr.bf16.mxu0 0
        %1151 = vmatpush1.bf16.msra.mxu0 %v1135
        %1152 = vmatprep.subr.bf16.mxu0 0
        %1153 = vmatpush1.bf16.msra.mxu0 %v1136
        %1154 = vmatprep.subr.bf16.mxu0 0
        %1155 = vmatpush1.bf16.msra.mxu0 %v1137
        %1156 = vmatprep.subr.bf16.mxu0 0
        %1157 = vmatpush1.bf16.msra.mxu0 0
        %1158 = vmatprep.subr.bf16.mxu0 0
        %1159 = vmatpush1.bf16.msra.mxu0 0
        %1160 = vmatprep.subr.bf16.mxu0 0
        %1161 = vmatpush1.bf16.msra.mxu0 0
        %1162 = vmatprep.subr.bf16.mxu0 0
        %1163 = vmatpush1.bf16.msra.mxu0 0
        %1164 = vmatprep.subr.bf16.mxu0 0
        %1165 = vmatpush1.bf16.msra.mxu0 0
        %1166 = vmatprep.subr.bf16.mxu0 0
        %1167 = vmatpush1.bf16.msra.mxu0 0
        %1168 = vmatprep.subr.bf16.mxu0 0
        %1169 = vmatpush1.bf16.msra.mxu0 0
        %1170 = vmatprep.subr.bf16.mxu0 0
        %1171 = vmatpush1.bf16.msra.mxu0 0
        %1172 = vmatprep.subr.bf16.mxu0 0
        %1173 = vmatpush1.bf16.msra.mxu0 0
        %1174 = vmatprep.subr.bf16.mxu0 0
        %1175 = vmatpush1.bf16.msra.mxu0 0
        %1176 = vmatprep.mubr.bf16.mxu0 0
        %1177 = vmatmul.mubr.bf16.gmra.mrb[0].mxu0 %v498
        %v1178 = vpop.f32.mrb[0].mxu0
        %v1179 = vadd.f32 0.0, %v1178
        %v1180 = vpop.f32.mrb[0].mxu0
        %v1181 = vpop.f32.mrb[0].mxu0
        %v1182 = vadd.f32 0.0, %v1181
        %v1183 = vpop.f32.mrb[0].mxu0
        %1184 = vmatprep.mubr.bf16.mxu0 0
        %1185 = vmatmul.mubr.bf16.gmra.mrb[0].mxu0 %v501
        %v1186 = vpop.f32.mrb[0].mxu0
        %v1187 = vadd.f32 0.0, %v1186
        %v1188 = vpop.f32.mrb[0].mxu0
        %v1189 = vpop.f32.mrb[0].mxu0
        %v1190 = vadd.f32 0.0, %v1189
        %v1191 = vpop.f32.mrb[0].mxu0
        %1192 = vdwg.mxu0
        %v1193 = vadd.f32 %v432, %v1179
        %v1194 = vadd.f32 %v432, %v1182
        %v1195 = vadd.f32 %v432, %v1187
        %v1196 = vadd.f32 %v432, %v1190
        %s1197 = scalar_lea.vmem [#allocation4], 144
        %v1198 = vld [vmem:[%s1197] sm:$0xf]
        %v1199 = vld [vmem:[%s1197 + $0x4] sm:$0xf]
        %v1200 = vld [vmem:[%s1197 + $0x8] sm:$0xf]
        %v1201 = vld [vmem:[%s1197 + $0xc] sm:$0xf]
        %v1202 = vld [vmem:[%s1197 + $0x10] sm:$0xf]
        %v1203 = vld [vmem:[%s1197 + $0x14] sm:$0xf]
        %v1204 = vld [vmem:[%s1197 + $0x18] sm:$0xf]
        %v1205 = vld [vmem:[%s1197 + $0x1c] sm:$0xf]
        %v1206 = vld [vmem:[%s1197 + $0x20] sm:$0xf]
        %v1207 = vld [vmem:[%s1197 + $0x24] sm:$0xf]
        %v1208 = vld [vmem:[%s1197 + $0x28] sm:$0xf]
        %v1209 = vld [vmem:[%s1197 + $0x2c] sm:$0xf]
        %v1222 = vunpack.c.l.b16 %v1198
        %v1223 = vunpack.c.l.b16 %v1199
        %v1224 = vunpack.c.l.b16 %v1200
        %v1225 = vunpack.c.l.b16 %v1201
        %v1226 = vunpack.c.l.b16 %v1202
        %v1227 = vunpack.c.l.b16 %v1203
        %v1228 = vunpack.c.l.b16 %v1204
        %v1229 = vunpack.c.l.b16 %v1205
        %v1230 = vunpack.c.l.b16 %v1206
        %v1231 = vunpack.c.l.b16 %v1207
        %v1232 = vunpack.c.l.b16 %v1208
        %v1233 = vunpack.c.l.b16 %v1209
        %v1234 = vpack.c.b16 %v1223, %v1222
        %v1235 = vpack.c.b16 %v1225, %v1224
        %v1236 = vpack.c.b16 %v1227, %v1226
        %v1237 = vpack.c.b16 %v1229, %v1228
        %v1238 = vpack.c.b16 %v1231, %v1230
        %v1239 = vpack.c.b16 %v1233, %v1232
        %1246 = vmatprep.subr.bf16.mxu0 0
        %1247 = vmatpush1.bf16.msra.mxu0 %v1234
        %1248 = vmatprep.subr.bf16.mxu0 0
        %1249 = vmatpush1.bf16.msra.mxu0 %v1235
        %1250 = vmatprep.subr.bf16.mxu0 0
        %1251 = vmatpush1.bf16.msra.mxu0 %v1236
        %1252 = vmatprep.subr.bf16.mxu0 0
        %1253 = vmatpush1.bf16.msra.mxu0 %v1237
        %1254 = vmatprep.subr.bf16.mxu0 0
        %1255 = vmatpush1.bf16.msra.mxu0 %v1238
        %1256 = vmatprep.subr.bf16.mxu0 0
        %1257 = vmatpush1.bf16.msra.mxu0 %v1239
        %1258 = vmatprep.subr.bf16.mxu0 0
        %1259 = vmatpush1.bf16.msra.mxu0 0
        %1260 = vmatprep.subr.bf16.mxu0 0
        %1261 = vmatpush1.bf16.msra.mxu0 0
        %1262 = vmatprep.subr.bf16.mxu0 0
        %1263 = vmatpush1.bf16.msra.mxu0 0
        %1264 = vmatprep.subr.bf16.mxu0 0
        %1265 = vmatpush1.bf16.msra.mxu0 0
        %1266 = vmatprep.subr.bf16.mxu0 0
        %1267 = vmatpush1.bf16.msra.mxu0 0
        %1268 = vmatprep.subr.bf16.mxu0 0
        %1269 = vmatpush1.bf16.msra.mxu0 0
        %1270 = vmatprep.subr.bf16.mxu0 0
        %1271 = vmatpush1.bf16.msra.mxu0 0
        %1272 = vmatprep.subr.bf16.mxu0 0
        %1273 = vmatpush1.bf16.msra.mxu0 0
        %1274 = vmatprep.subr.bf16.mxu0 0
        %1275 = vmatpush1.bf16.msra.mxu0 0
        %1276 = vmatprep.subr.bf16.mxu0 0
        %1277 = vmatpush1.bf16.msra.mxu0 0
        %1278 = vmatprep.mubr.bf16.mxu0 0
        %1279 = vmatmul.mubr.bf16.gmra.mrb[0].mxu0 %v645
        %v1280 = vpop.f32.mrb[0].mxu0
        %v1281 = vadd.f32 0.0, %v1280
        %v1282 = vpop.f32.mrb[0].mxu0
        %v1283 = vpop.f32.mrb[0].mxu0
        %v1284 = vadd.f32 0.0, %v1283
        %v1285 = vpop.f32.mrb[0].mxu0
        %1286 = vmatprep.mubr.bf16.mxu0 0
        %1287 = vmatmul.mubr.bf16.gmra.mrb[0].mxu0 %v648
        %v1288 = vpop.f32.mrb[0].mxu0
        %v1289 = vadd.f32 0.0, %v1288
        %v1290 = vpop.f32.mrb[0].mxu0
        %v1291 = vpop.f32.mrb[0].mxu0
        %v1292 = vadd.f32 0.0, %v1291
        %v1293 = vpop.f32.mrb[0].mxu0
        %1294 = vdwg.mxu0
        %v1295 = vadd.f32 %v1193, %v1281
        %v1296 = vadd.f32 %v1194, %v1284
        %v1297 = vadd.f32 %v1195, %v1289
        %v1298 = vadd.f32 %v1196, %v1292
        %s1299 = scalar_lea.vmem [#allocation4], 240
        %v1300 = vld [vmem:[%s1299] sm:$0xf]
        %v1301 = vld [vmem:[%s1299 + $0x4] sm:$0xf]
        %v1302 = vld [vmem:[%s1299 + $0x8] sm:$0xf]
        %v1303 = vld [vmem:[%s1299 + $0xc] sm:$0xf]
        %v1304 = vld [vmem:[%s1299 + $0x10] sm:$0xf]
        %v1305 = vld [vmem:[%s1299 + $0x14] sm:$0xf]
        %v1306 = vld [vmem:[%s1299 + $0x18] sm:$0xf]
        %v1307 = vld [vmem:[%s1299 + $0x1c] sm:$0xf]
        %v1308 = vld [vmem:[%s1299 + $0x20] sm:$0xf]
        %v1309 = vld [vmem:[%s1299 + $0x24] sm:$0xf]
        %v1310 = vld [vmem:[%s1299 + $0x28] sm:$0xf]
        %v1311 = vld [vmem:[%s1299 + $0x2c] sm:$0xf]
        %v1324 = vunpack.c.l.b16 %v1300
        %v1325 = vunpack.c.l.b16 %v1301
        %v1326 = vunpack.c.l.b16 %v1302
        %v1327 = vunpack.c.l.b16 %v1303
        %v1328 = vunpack.c.l.b16 %v1304
        %v1329 = vunpack.c.l.b16 %v1305
        %v1330 = vunpack.c.l.b16 %v1306
        %v1331 = vunpack.c.l.b16 %v1307
        %v1332 = vunpack.c.l.b16 %v1308
        %v1333 = vunpack.c.l.b16 %v1309
        %v1334 = vunpack.c.l.b16 %v1310
        %v1335 = vunpack.c.l.b16 %v1311
        %v1336 = vpack.c.b16 %v1325, %v1324
        %v1337 = vpack.c.b16 %v1327, %v1326
        %v1338 = vpack.c.b16 %v1329, %v1328
        %v1339 = vpack.c.b16 %v1331, %v1330
        %v1340 = vpack.c.b16 %v1333, %v1332
        %v1341 = vpack.c.b16 %v1335, %v1334
        %1348 = vmatprep.subr.bf16.mxu0 0
        %1349 = vmatpush1.bf16.msra.mxu0 %v1336
        %1350 = vmatprep.subr.bf16.mxu0 0
        %1351 = vmatpush1.bf16.msra.mxu0 %v1337
        %1352 = vmatprep.subr.bf16.mxu0 0
        %1353 = vmatpush1.bf16.msra.mxu0 %v1338
        %1354 = vmatprep.subr.bf16.mxu0 0
        %1355 = vmatpush1.bf16.msra.mxu0 %v1339
        %1356 = vmatprep.subr.bf16.mxu0 0
        %1357 = vmatpush1.bf16.msra.mxu0 %v1340
        %1358 = vmatprep.subr.bf16.mxu0 0
        %1359 = vmatpush1.bf16.msra.mxu0 %v1341
        %1360 = vmatprep.subr.bf16.mxu0 0
        %1361 = vmatpush1.bf16.msra.mxu0 0
        %1362 = vmatprep.subr.bf16.mxu0 0
        %1363 = vmatpush1.bf16.msra.mxu0 0
        %1364 = vmatprep.subr.bf16.mxu0 0
        %1365 = vmatpush1.bf16.msra.mxu0 0
        %1366 = vmatprep.subr.bf16.mxu0 0
        %1367 = vmatpush1.bf16.msra.mxu0 0
        %1368 = vmatprep.subr.bf16.mxu0 0
        %1369 = vmatpush1.bf16.msra.mxu0 0
        %1370 = vmatprep.subr.bf16.mxu0 0
        %1371 = vmatpush1.bf16.msra.mxu0 0
        %1372 = vmatprep.subr.bf16.mxu0 0
        %1373 = vmatpush1.bf16.msra.mxu0 0
        %1374 = vmatprep.subr.bf16.mxu0 0
        %1375 = vmatpush1.bf16.msra.mxu0 0
        %1376 = vmatprep.subr.bf16.mxu0 0
        %1377 = vmatpush1.bf16.msra.mxu0 0
        %1378 = vmatprep.subr.bf16.mxu0 0
        %1379 = vmatpush1.bf16.msra.mxu0 0
        %1380 = vmatprep.mubr.bf16.mxu0 0
        %1381 = vmatmul.mubr.bf16.gmra.mrb[0].mxu0 %v763
        %v1382 = vpop.f32.mrb[0].mxu0
        %v1383 = vadd.f32 0.0, %v1382
        %v1384 = vpop.f32.mrb[0].mxu0
        %v1385 = vpop.f32.mrb[0].mxu0
        %v1386 = vadd.f32 0.0, %v1385
        %v1387 = vpop.f32.mrb[0].mxu0
        %1388 = vmatprep.mubr.bf16.mxu0 0
        %1389 = vmatmul.mubr.bf16.gmra.mrb[0].mxu0 %v766
        %v1390 = vpop.f32.mrb[0].mxu0
        %v1391 = vadd.f32 0.0, %v1390
        %v1392 = vpop.f32.mrb[0].mxu0
        %v1393 = vpop.f32.mrb[0].mxu0
        %v1394 = vadd.f32 0.0, %v1393
        %v1395 = vpop.f32.mrb[0].mxu0
        %1396 = vdwg.mxu0
        %v1397 = vadd.f32 %v1295, %v1383
        %v1398 = vadd.f32 %v1296, %v1386
        %v1399 = vadd.f32 %v1297, %v1391
        %v1400 = vadd.f32 %v1298, %v1394
        %s1401 = scalar_lea.vmem [#allocation4], 336
        %v1402 = vld [vmem:[%s1401] sm:$0xf]
        %v1403 = vld [vmem:[%s1401 + $0x4] sm:$0xf]
        %v1404 = vld [vmem:[%s1401 + $0x8] sm:$0xf]
        %v1405 = vld [vmem:[%s1401 + $0xc] sm:$0xf]
        %v1406 = vld [vmem:[%s1401 + $0x10] sm:$0xf]
        %v1407 = vld [vmem:[%s1401 + $0x14] sm:$0xf]
        %v1408 = vld [vmem:[%s1401 + $0x18] sm:$0xf]
        %v1409 = vld [vmem:[%s1401 + $0x1c] sm:$0xf]
        %v1410 = vld [vmem:[%s1401 + $0x20] sm:$0xf]
        %v1411 = vld [vmem:[%s1401 + $0x24] sm:$0xf]
        %v1412 = vld [vmem:[%s1401 + $0x28] sm:$0xf]
        %v1413 = vld [vmem:[%s1401 + $0x2c] sm:$0xf]
        %v1426 = vunpack.c.l.b16 %v1402
        %v1427 = vunpack.c.l.b16 %v1403
        %v1428 = vunpack.c.l.b16 %v1404
        %v1429 = vunpack.c.l.b16 %v1405
        %v1430 = vunpack.c.l.b16 %v1406
        %v1431 = vunpack.c.l.b16 %v1407
        %v1432 = vunpack.c.l.b16 %v1408
        %v1433 = vunpack.c.l.b16 %v1409
        %v1434 = vunpack.c.l.b16 %v1410
        %v1435 = vunpack.c.l.b16 %v1411
        %v1436 = vunpack.c.l.b16 %v1412
        %v1437 = vunpack.c.l.b16 %v1413
        %v1438 = vpack.c.b16 %v1427, %v1426
        %v1439 = vpack.c.b16 %v1429, %v1428
        %v1440 = vpack.c.b16 %v1431, %v1430
        %v1441 = vpack.c.b16 %v1433, %v1432
        %v1442 = vpack.c.b16 %v1435, %v1434
        %v1443 = vpack.c.b16 %v1437, %v1436
        %1450 = vmatprep.subr.bf16.mxu0 0
        %1451 = vmatpush1.bf16.msra.mxu0 %v1438
        %1452 = vmatprep.subr.bf16.mxu0 0
        %1453 = vmatpush1.bf16.msra.mxu0 %v1439
        %1454 = vmatprep.subr.bf16.mxu0 0
        %1455 = vmatpush1.bf16.msra.mxu0 %v1440
        %1456 = vmatprep.subr.bf16.mxu0 0
        %1457 = vmatpush1.bf16.msra.mxu0 %v1441
        %1458 = vmatprep.subr.bf16.mxu0 0
        %1459 = vmatpush1.bf16.msra.mxu0 %v1442
        %1460 = vmatprep.subr.bf16.mxu0 0
        %1461 = vmatpush1.bf16.msra.mxu0 %v1443
        %1462 = vmatprep.subr.bf16.mxu0 0
        %1463 = vmatpush1.bf16.msra.mxu0 0
        %1464 = vmatprep.subr.bf16.mxu0 0
        %1465 = vmatpush1.bf16.msra.mxu0 0
        %1466 = vmatprep.subr.bf16.mxu0 0
        %1467 = vmatpush1.bf16.msra.mxu0 0
        %1468 = vmatprep.subr.bf16.mxu0 0
        %1469 = vmatpush1.bf16.msra.mxu0 0
        %1470 = vmatprep.subr.bf16.mxu0 0
        %1471 = vmatpush1.bf16.msra.mxu0 0
        %1472 = vmatprep.subr.bf16.mxu0 0
        %1473 = vmatpush1.bf16.msra.mxu0 0
        %1474 = vmatprep.subr.bf16.mxu0 0
        %1475 = vmatpush1.bf16.msra.mxu0 0
        %1476 = vmatprep.subr.bf16.mxu0 0
        %1477 = vmatpush1.bf16.msra.mxu0 0
        %1478 = vmatprep.subr.bf16.mxu0 0
        %1479 = vmatpush1.bf16.msra.mxu0 0
        %1480 = vmatprep.subr.bf16.mxu0 0
        %1481 = vmatpush1.bf16.msra.mxu0 0
        %1482 = vmatprep.mubr.bf16.mxu0 0
        %1483 = vmatmul.mubr.bf16.gmra.mrb[0].mxu0 %v897
        %v1484 = vpop.f32.mrb[0].mxu0
        %v1485 = vadd.f32 0.0, %v1484
        %v1486 = vpop.f32.mrb[0].mxu0
        %v1487 = vpop.f32.mrb[0].mxu0
        %v1488 = vadd.f32 0.0, %v1487
        %v1489 = vpop.f32.mrb[0].mxu0
        %1490 = vmatprep.mubr.bf16.mxu0 0
        %1491 = vmatmul.mubr.bf16.gmra.mrb[0].mxu0 %v900
        %v1492 = vpop.f32.mrb[0].mxu0
        %v1493 = vadd.f32 0.0, %v1492
        %v1494 = vpop.f32.mrb[0].mxu0
        %v1495 = vpop.f32.mrb[0].mxu0
        %v1496 = vadd.f32 0.0, %v1495
        %v1497 = vpop.f32.mrb[0].mxu0
        %1498 = vdwg.mxu0
        %v1499 = vadd.f32 %v1397, %v1485
        %v1500 = vadd.f32 %v1398, %v1488
        %v1501 = vadd.f32 %v1399, %v1493
        %v1502 = vadd.f32 %v1400, %v1496
        %s1503 = scalar_lea.vmem [#allocation4], 432
        %v1504 = vld [vmem:[%s1503] sm:$0xf]
        %v1505 = vld [vmem:[%s1503 + $0x4] sm:$0xf]
        %v1506 = vld [vmem:[%s1503 + $0x8] sm:$0xf]
        %v1507 = vld [vmem:[%s1503 + $0xc] sm:$0xf]
        %v1508 = vld [vmem:[%s1503 + $0x10] sm:$0xf]
        %v1509 = vld [vmem:[%s1503 + $0x14] sm:$0xf]
        %v1510 = vld [vmem:[%s1503 + $0x18] sm:$0xf]
        %v1511 = vld [vmem:[%s1503 + $0x1c] sm:$0xf]
        %v1512 = vld [vmem:[%s1503 + $0x20] sm:$0xf]
        %v1513 = vld [vmem:[%s1503 + $0x24] sm:$0xf]
        %v1514 = vld [vmem:[%s1503 + $0x28] sm:$0xf]
        %v1515 = vld [vmem:[%s1503 + $0x2c] sm:$0xf]
        %v1528 = vunpack.c.l.b16 %v1504
        %v1529 = vunpack.c.l.b16 %v1505
        %v1530 = vunpack.c.l.b16 %v1506
        %v1531 = vunpack.c.l.b16 %v1507
        %v1532 = vunpack.c.l.b16 %v1508
        %v1533 = vunpack.c.l.b16 %v1509
        %v1534 = vunpack.c.l.b16 %v1510
        %v1535 = vunpack.c.l.b16 %v1511
        %v1536 = vunpack.c.l.b16 %v1512
        %v1537 = vunpack.c.l.b16 %v1513
        %v1538 = vunpack.c.l.b16 %v1514
        %v1539 = vunpack.c.l.b16 %v1515
        %v1540 = vpack.c.b16 %v1529, %v1528
        %v1541 = vpack.c.b16 %v1531, %v1530
        %v1542 = vpack.c.b16 %v1533, %v1532
        %v1543 = vpack.c.b16 %v1535, %v1534
        %v1544 = vpack.c.b16 %v1537, %v1536
        %v1545 = vpack.c.b16 %v1539, %v1538
        %1552 = vmatprep.subr.bf16.mxu0 0
        %1553 = vmatpush1.bf16.msra.mxu0 %v1540
        %1554 = vmatprep.subr.bf16.mxu0 0
        %1555 = vmatpush1.bf16.msra.mxu0 %v1541
        %1556 = vmatprep.subr.bf16.mxu0 0
        %1557 = vmatpush1.bf16.msra.mxu0 %v1542
        %1558 = vmatprep.subr.bf16.mxu0 0
        %1559 = vmatpush1.bf16.msra.mxu0 %v1543
        %1560 = vmatprep.subr.bf16.mxu0 0
        %1561 = vmatpush1.bf16.msra.mxu0 %v1544
        %1562 = vmatprep.subr.bf16.mxu0 0
        %1563 = vmatpush1.bf16.msra.mxu0 %v1545
        %1564 = vmatprep.subr.bf16.mxu0 0
        %1565 = vmatpush1.bf16.msra.mxu0 0
        %1566 = vmatprep.subr.bf16.mxu0 0
        %1567 = vmatpush1.bf16.msra.mxu0 0
        %1568 = vmatprep.subr.bf16.mxu0 0
        %1569 = vmatpush1.bf16.msra.mxu0 0
        %1570 = vmatprep.subr.bf16.mxu0 0
        %1571 = vmatpush1.bf16.msra.mxu0 0
        %1572 = vmatprep.subr.bf16.mxu0 0
        %1573 = vmatpush1.bf16.msra.mxu0 0
        %1574 = vmatprep.subr.bf16.mxu0 0
        %1575 = vmatpush1.bf16.msra.mxu0 0
        %1576 = vmatprep.subr.bf16.mxu0 0
        %1577 = vmatpush1.bf16.msra.mxu0 0
        %1578 = vmatprep.subr.bf16.mxu0 0
        %1579 = vmatpush1.bf16.msra.mxu0 0
        %1580 = vmatprep.subr.bf16.mxu0 0
        %1581 = vmatpush1.bf16.msra.mxu0 0
        %1582 = vmatprep.subr.bf16.mxu0 0
        %1583 = vmatpush1.bf16.msra.mxu0 0
        %1584 = vmatprep.mubr.bf16.mxu0 0
        %1585 = vmatmul.mubr.bf16.gmra.mrb[0].mxu0 %v1015
        %v1586 = vpop.f32.mrb[0].mxu0
        %v1587 = vadd.f32 0.0, %v1586
        %v1588 = vpop.f32.mrb[0].mxu0
        %v1589 = vpop.f32.mrb[0].mxu0
        %v1590 = vadd.f32 0.0, %v1589
        %v1591 = vpop.f32.mrb[0].mxu0
        %1592 = vmatprep.mubr.bf16.mxu0 0
        %1593 = vmatmul.mubr.bf16.gmra.mrb[0].mxu0 %v1018
        %v1594 = vpop.f32.mrb[0].mxu0
        %v1595 = vadd.f32 0.0, %v1594
        %v1596 = vpop.f32.mrb[0].mxu0
        %v1597 = vpop.f32.mrb[0].mxu0
        %v1598 = vadd.f32 0.0, %v1597
        %v1599 = vpop.f32.mrb[0].mxu0
        %1600 = vdwg.mxu0
        %v1601 = vadd.f32 %v1499, %v1587
        %v1602 = vadd.f32 %v1500, %v1590
        %v1603 = vadd.f32 %v1501, %v1595
        %v1604 = vadd.f32 %v1502, %v1598
        %v1605 = vmul.f32 %v1601, 0.5
        %v1606 = vmul.f32 %v1602, 0.5
        %v1607 = vmul.f32 %v1603, 0.5
        %v1608 = vmul.f32 %v1604, 0.5
        %v1609 = vmul.f32 %v1601, 0.70710677
        %v1610 = vmul.f32 %v1602, 0.70710677
        %v1611 = vmul.f32 %v1603, 0.70710677
        %v1612 = vmul.f32 %v1604, 0.70710677
        %v1613 = verf.f32.pop %v1609
        %v1614 = verf.f32.pop %v1610
        %v1615 = verf.f32.pop %v1611
        %v1616 = verf.f32.pop %v1612
        %v1617 = vadd.f32 %v1613, 1.0
        %v1618 = vadd.f32 %v1614, 1.0
        %v1619 = vadd.f32 %v1615, 1.0
        %v1620 = vadd.f32 %v1616, 1.0
        %v1621 = vmul.f32 %v1605, %v1617
        %v1622 = vmul.f32 %v1606, %v1618
        %v1623 = vmul.f32 %v1607, %v1619
        %v1624 = vmul.f32 %v1608, %v1620
        %v1625 = vpack.c.bf16 %v1622, %v1621
        %v1626 = vpack.c.bf16 %v1624, %v1623
        %v1627 = vld [vmem:[%s3] sm:$0xf]
        %v1628 = vld [vmem:[%s3 + $0x4] sm:$0xf]
        %v1629 = vld [vmem:[%s3 + $0x8] sm:$0x3]
        %v1633 = vunpack.c.l.b16 %v1627
        %v1634 = vunpack.c.l.b16 %v1628
        %v1635 = vunpack.c.l.b16 %v1629
        %v1636 = vpack.c.b16 %v1634, %v1633
        %v1637 = vpack.c.b16 %v1635, %v1635
        %vm1638 = vcmask 261120
        %v1640 = vsel %vm1638, %v1636, 0
        %v1643 = vsel %vm1638, %v1637, 0
        %1645 = vmatprep.subr.bf16.mxu0 0
        %1646 = vmatpush1.bf16.msra.mxu0 %v1093
        %1647 = vmatprep.subr.bf16.mxu0 0
        %1648 = vmatpush1.bf16.msra.mxu0 %v1094
        %1649 = vmatprep.subr.bf16.mxu0 0
        %1650 = vmatpush1.bf16.msra.mxu0 0
        %1651 = vmatprep.subr.bf16.mxu0 0
        %1652 = vmatpush1.bf16.msra.mxu0 0
        %1653 = vmatprep.subr.bf16.mxu0 0
        %1654 = vmatpush1.bf16.msra.mxu0 0
        %1655 = vmatprep.subr.bf16.mxu0 0
        %1656 = vmatpush1.bf16.msra.mxu0 0
        %1657 = vmatprep.subr.bf16.mxu0 0
        %1658 = vmatpush1.bf16.msra.mxu0 0
        %1659 = vmatprep.subr.bf16.mxu0 0
        %1660 = vmatpush1.bf16.msra.mxu0 0
        %1661 = vmatprep.subr.bf16.mxu0 0
        %1662 = vmatpush1.bf16.msra.mxu0 0
        %1663 = vmatprep.subr.bf16.mxu0 0
        %1664 = vmatpush1.bf16.msra.mxu0 0
        %1665 = vmatprep.subr.bf16.mxu0 0
        %1666 = vmatpush1.bf16.msra.mxu0 0
        %1667 = vmatprep.subr.bf16.mxu0 0
        %1668 = vmatpush1.bf16.msra.mxu0 0
        %1669 = vmatprep.subr.bf16.mxu0 0
        %1670 = vmatpush1.bf16.msra.mxu0 0
        %1671 = vmatprep.subr.bf16.mxu0 0
        %1672 = vmatpush1.bf16.msra.mxu0 0
        %1673 = vmatprep.subr.bf16.mxu0 0
        %1674 = vmatpush1.bf16.msra.mxu0 0
        %1675 = vmatprep.subr.bf16.mxu0 0
        %1676 = vmatpush1.bf16.msra.mxu0 0
        %1677 = vmatprep.mubr.bf16.mxu0 0
        %1678 = vmatmul.mubr.bf16.gmra.mrb[0].mxu0 %v1640
        %v1679 = vpop.f32.mrb[0].mxu0
        %v1680 = vadd.f32 0.0, %v1679
        %v1681 = vpop.f32.mrb[0].mxu0
        %v1682 = vpop.f32.mrb[0].mxu0
        %v1683 = vadd.f32 0.0, %v1682
        %v1684 = vpop.f32.mrb[0].mxu0
        %1685 = vmatprep.mubr.bf16.mxu0 0
        %1686 = vmatmul.mubr.bf16.gmra.mrb[0].mxu0 %v1643
        %v1687 = vpop.f32.mrb[0].mxu0
        %v1688 = vadd.f32 0.0, %v1687
        %v1689 = vpop.f32.mrb[0].mxu0
        %v1690 = vpop.f32.mrb[0].mxu0
        %v1691 = vpop.f32.mrb[0].mxu0
        %1692 = vdwg.mxu0
        %1693 = vmatprep.subr.bf16.mxu0 0
        %1694 = vmatpush1.bf16.msra.mxu0 %v1625
        %1695 = vmatprep.subr.bf16.mxu0 0
        %1696 = vmatpush1.bf16.msra.mxu0 %v1626
        %1697 = vmatprep.subr.bf16.mxu0 0
        %1698 = vmatpush1.bf16.msra.mxu0 0
        %1699 = vmatprep.subr.bf16.mxu0 0
        %1700 = vmatpush1.bf16.msra.mxu0 0
        %1701 = vmatprep.subr.bf16.mxu0 0
        %1702 = vmatpush1.bf16.msra.mxu0 0
        %1703 = vmatprep.subr.bf16.mxu0 0
        %1704 = vmatpush1.bf16.msra.mxu0 0
        %1705 = vmatprep.subr.bf16.mxu0 0
        %1706 = vmatpush1.bf16.msra.mxu0 0
        %1707 = vmatprep.subr.bf16.mxu0 0
        %1708 = vmatpush1.bf16.msra.mxu0 0
        %1709 = vmatprep.subr.bf16.mxu0 0
        %1710 = vmatpush1.bf16.msra.mxu0 0
        %1711 = vmatprep.subr.bf16.mxu0 0
        %1712 = vmatpush1.bf16.msra.mxu0 0
        %1713 = vmatprep.subr.bf16.mxu0 0
        %1714 = vmatpush1.bf16.msra.mxu0 0
        %1715 = vmatprep.subr.bf16.mxu0 0
        %1716 = vmatpush1.bf16.msra.mxu0 0
        %1717 = vmatprep.subr.bf16.mxu0 0
        %1718 = vmatpush1.bf16.msra.mxu0 0
        %1719 = vmatprep.subr.bf16.mxu0 0
        %1720 = vmatpush1.bf16.msra.mxu0 0
        %1721 = vmatprep.subr.bf16.mxu0 0
        %1722 = vmatpush1.bf16.msra.mxu0 0
        %1723 = vmatprep.subr.bf16.mxu0 0
        %1724 = vmatpush1.bf16.msra.mxu0 0
        %1725 = vmatprep.mubr.bf16.mxu0 0
        %1726 = vmatmul.mubr.bf16.gmra.mrb[0].mxu0 %v1640
        %v1727 = vpop.f32.mrb[0].mxu0
        %v1728 = vadd.f32 0.0, %v1727
        %v1729 = vpop.f32.mrb[0].mxu0
        %v1730 = vpop.f32.mrb[0].mxu0
        %v1731 = vadd.f32 0.0, %v1730
        %v1732 = vpop.f32.mrb[0].mxu0
        %1733 = vmatprep.mubr.bf16.mxu0 0
        %1734 = vmatmul.mubr.bf16.gmra.mrb[0].mxu0 %v1643
        %v1735 = vpop.f32.mrb[0].mxu0
        %v1736 = vadd.f32 0.0, %v1735
        %v1737 = vpop.f32.mrb[0].mxu0
        %v1738 = vpop.f32.mrb[0].mxu0
        %v1739 = vpop.f32.mrb[0].mxu0
        %1740 = vdwg.mxu0
        %s1741 = scalar_lea.vmem %s3, 12
        %v1742 = vld [vmem:[%s1741] sm:$0xf]
        %v1743 = vld [vmem:[%s1741 + $0x4] sm:$0xf]
        %v1744 = vld [vmem:[%s1741 + $0x8] sm:$0x3]
        %v1748 = vunpack.c.l.b16 %v1742
        %v1749 = vunpack.c.l.b16 %v1743
        %v1750 = vunpack.c.l.b16 %v1744
        %v1751 = vpack.c.b16 %v1749, %v1748
        %v1752 = vpack.c.b16 %v1750, %v1750
        %v1754 = vsel %vm1638, %v1751, 0
        %v1757 = vsel %vm1638, %v1752, 0
        %1759 = vmatprep.subr.bf16.mxu0 0
        %1760 = vmatpush1.bf16.msra.mxu0 %v1093
        %1761 = vmatprep.subr.bf16.mxu0 0
        %1762 = vmatpush1.bf16.msra.mxu0 %v1094
        %1763 = vmatprep.subr.bf16.mxu0 0
        %1764 = vmatpush1.bf16.msra.mxu0 0
        %1765 = vmatprep.subr.bf16.mxu0 0
        %1766 = vmatpush1.bf16.msra.mxu0 0
        %1767 = vmatprep.subr.bf16.mxu0 0
        %1768 = vmatpush1.bf16.msra.mxu0 0
        %1769 = vmatprep.subr.bf16.mxu0 0
        %1770 = vmatpush1.bf16.msra.mxu0 0
        %1771 = vmatprep.subr.bf16.mxu0 0
        %1772 = vmatpush1.bf16.msra.mxu0 0
        %1773 = vmatprep.subr.bf16.mxu0 0
        %1774 = vmatpush1.bf16.msra.mxu0 0
        %1775 = vmatprep.subr.bf16.mxu0 0
        %1776 = vmatpush1.bf16.msra.mxu0 0
        %1777 = vmatprep.subr.bf16.mxu0 0
        %1778 = vmatpush1.bf16.msra.mxu0 0
        %1779 = vmatprep.subr.bf16.mxu0 0
        %1780 = vmatpush1.bf16.msra.mxu0 0
        %1781 = vmatprep.subr.bf16.mxu0 0
        %1782 = vmatpush1.bf16.msra.mxu0 0
        %1783 = vmatprep.subr.bf16.mxu0 0
        %1784 = vmatpush1.bf16.msra.mxu0 0
        %1785 = vmatprep.subr.bf16.mxu0 0
        %1786 = vmatpush1.bf16.msra.mxu0 0
        %1787 = vmatprep.subr.bf16.mxu0 0
        %1788 = vmatpush1.bf16.msra.mxu0 0
        %1789 = vmatprep.subr.bf16.mxu0 0
        %1790 = vmatpush1.bf16.msra.mxu0 0
        %1791 = vmatprep.mubr.bf16.mxu0 0
        %1792 = vmatmul.mubr.bf16.gmra.mrb[0].mxu0 %v1754
        %v1793 = vpop.f32.mrb[0].mxu0
        %v1794 = vadd.f32 0.0, %v1793
        %v1795 = vpop.f32.mrb[0].mxu0
        %v1796 = vpop.f32.mrb[0].mxu0
        %v1797 = vadd.f32 0.0, %v1796
        %v1798 = vpop.f32.mrb[0].mxu0
        %1799 = vmatprep.mubr.bf16.mxu0 0
        %1800 = vmatmul.mubr.bf16.gmra.mrb[0].mxu0 %v1757
        %v1801 = vpop.f32.mrb[0].mxu0
        %v1802 = vadd.f32 0.0, %v1801
        %v1803 = vpop.f32.mrb[0].mxu0
        %v1804 = vpop.f32.mrb[0].mxu0
        %v1805 = vpop.f32.mrb[0].mxu0
        %1806 = vdwg.mxu0
        %1807 = vmatprep.subr.bf16.mxu0 0
        %1808 = vmatpush1.bf16.msra.mxu0 %v1625
        %1809 = vmatprep.subr.bf16.mxu0 0
        %1810 = vmatpush1.bf16.msra.mxu0 %v1626
        %1811 = vmatprep.subr.bf16.mxu0 0
        %1812 = vmatpush1.bf16.msra.mxu0 0
        %1813 = vmatprep.subr.bf16.mxu0 0
        %1814 = vmatpush1.bf16.msra.mxu0 0
        %1815 = vmatprep.subr.bf16.mxu0 0
        %1816 = vmatpush1.bf16.msra.mxu0 0
        %1817 = vmatprep.subr.bf16.mxu0 0
        %1818 = vmatpush1.bf16.msra.mxu0 0
        %1819 = vmatprep.subr.bf16.mxu0 0
        %1820 = vmatpush1.bf16.msra.mxu0 0
        %1821 = vmatprep.subr.bf16.mxu0 0
        %1822 = vmatpush1.bf16.msra.mxu0 0
        %1823 = vmatprep.subr.bf16.mxu0 0
        %1824 = vmatpush1.bf16.msra.mxu0 0
        %1825 = vmatprep.subr.bf16.mxu0 0
        %1826 = vmatpush1.bf16.msra.mxu0 0
        %1827 = vmatprep.subr.bf16.mxu0 0
        %1828 = vmatpush1.bf16.msra.mxu0 0
        %1829 = vmatprep.subr.bf16.mxu0 0
        %1830 = vmatpush1.bf16.msra.mxu0 0
        %1831 = vmatprep.subr.bf16.mxu0 0
        %1832 = vmatpush1.bf16.msra.mxu0 0
        %1833 = vmatprep.subr.bf16.mxu0 0
        %1834 = vmatpush1.bf16.msra.mxu0 0
        %1835 = vmatprep.subr.bf16.mxu0 0
        %1836 = vmatpush1.bf16.msra.mxu0 0
        %1837 = vmatprep.subr.bf16.mxu0 0
        %1838 = vmatpush1.bf16.msra.mxu0 0
        %1839 = vmatprep.mubr.bf16.mxu0 0
        %1840 = vmatmul.mubr.bf16.gmra.mrb[0].mxu0 %v1754
        %v1841 = vpop.f32.mrb[0].mxu0
        %v1842 = vadd.f32 0.0, %v1841
        %v1843 = vpop.f32.mrb[0].mxu0
        %v1844 = vpop.f32.mrb[0].mxu0
        %v1845 = vadd.f32 0.0, %v1844
        %v1846 = vpop.f32.mrb[0].mxu0
        %1847 = vmatprep.mubr.bf16.mxu0 0
        %1848 = vmatmul.mubr.bf16.gmra.mrb[0].mxu0 %v1757
        %v1849 = vpop.f32.mrb[0].mxu0
        %v1850 = vadd.f32 0.0, %v1849
        %v1851 = vpop.f32.mrb[0].mxu0
        %v1852 = vpop.f32.mrb[0].mxu0
        %v1853 = vpop.f32.mrb[0].mxu0
        %1854 = vdwg.mxu0
        %v1855 = vmax.f32 %v1680, %v1728
        %v1856 = vmax.f32 %v1683, %v1731
        %v1857 = vmax.f32 %v1688, %v1736
        %v1858 = vmax.f32 %v1794, %v1842
        %v1859 = vmax.f32 %v1797, %v1845
        %v1860 = vmax.f32 %v1802, %v1850
        %v1861 = vmax.f32 %v1855, %v1858
        %v1862 = vmax.f32 %v1856, %v1859
        %v1863 = vmax.f32 %v1857, %v1860
        %v1864 = vpack.c.bf16 %v1862, %v1861
        %v1865 = vpack.c.bf16 %v1863, %v1863
        %v1868 = vunpack.c.l.b16 %v1864
        %v1869 = vunpack.c.h.b16 %v1864
        %v1870 = vunpack.c.l.b16 %v1865
        %v1871 = vpack.c.b16 %v1868, %v1868
        %v1872 = vpack.c.b16 %v1869, %v1869
        %v1873 = vpack.c.b16 %v1870, %v1870
        %1877 = vst [vmem:[#allocation2] sm:$0xf] %v1871
        %1878 = vst [vmem:[#allocation2 + $0x4] sm:$0xf] %v1872
        %1879 = vst [vmem:[#allocation2 + $0x8] sm:$0x3] %v1873
        %v1880 = vld [vmem:[#allocation10] sm:$0xf]
        %v1882 = vlaneseq
        %v1883 = vshrl.u32 %v1882, 7
        %v1884 = vsub.s32 0, %v1883
        %v1885 = vrot.slane %v1880, %v1884
        %v1886 = vlaneseq
        %v1887 = vshrl.u32 %v1886, 7
        %v1888 = vsub.s32 1, %v1887
        %v1889 = vrot.slane %v1880, %v1888
        %v1890 = vlaneseq
        %v1891 = vshrl.u32 %v1890, 7
        %v1892 = vsub.s32 2, %v1891
        %v1893 = vrot.slane %v1880, %v1892
        %v1894 = vlaneseq
        %v1895 = vshrl.u32 %v1894, 7
        %v1896 = vsub.s32 3, %v1895
        %v1897 = vrot.slane %v1880, %v1896
        %v1902 = vld [vmem:[#allocation2] sm:$0xf]
        %v1903 = vld [vmem:[#allocation2 + $0x4] sm:$0xf]
        %v1904 = vld [vmem:[#allocation9] sm:$0xff]
        %v1905 = vld [vmem:[#allocation9 + $0x8] sm:$0xff]
        %v1906 = vld [vmem:[#allocation9 + $0x10] sm:$0xff]
        %v1907 = vld [vmem:[#allocation9 + $0x18] sm:$0xff]
        %v1908 = vld [vmem:[#allocation9 + $0x20] sm:$0xff]
        %v1909 = vld [vmem:[#allocation9 + $0x28] sm:$0xff]
        %v1910 = vld [vmem:[#allocation9 + $0x30] sm:$0xff]
        %v1911 = vld [vmem:[#allocation9 + $0x38] sm:$0xff]
        %v1912 = vld [vmem:[#allocation9 + $0x40] sm:$0xff]
        %v1913 = vld [vmem:[#allocation9 + $0x48] sm:$0xff]
        %v1914 = vld [vmem:[#allocation9 + $0x50] sm:$0xff]
        %v1915 = vld [vmem:[#allocation9 + $0x58] sm:$0xff]
        %v1916 = vld [vmem:[#allocation9 + $0x60] sm:$0xff]
        %v1917 = vld [vmem:[#allocation9 + $0x68] sm:$0xff]
        %v1918 = vld [vmem:[#allocation9 + $0x70] sm:$0xff]
        %v1919 = vld [vmem:[#allocation9 + $0x78] sm:$0xff]
        %v1920 = vld [vmem:[#allocation9 + $0x80] sm:$0xff]
        %v1921 = vld [vmem:[#allocation9 + $0x88] sm:$0xff]
        %v1922 = vld [vmem:[#allocation9 + $0x90] sm:$0xff]
        %v1923 = vld [vmem:[#allocation9 + $0x98] sm:$0xff]
        %v1924 = vld [vmem:[#allocation9 + $0xa0] sm:$0xff]
        %v1925 = vld [vmem:[#allocation9 + $0xa8] sm:$0xff]
        %v1926 = vld [vmem:[#allocation9 + $0xb0] sm:$0xff]
        %v1927 = vld [vmem:[#allocation9 + $0xb8] sm:$0xff]
        %v1928 = vld [vmem:[#allocation9 + $0xc0] sm:$0xff]
        %v1929 = vld [vmem:[#allocation9 + $0xc8] sm:$0xff]
        %v1930 = vld [vmem:[#allocation9 + $0xd0] sm:$0xff]
        %v1931 = vld [vmem:[#allocation9 + $0xd8] sm:$0xff]
        %v1932 = vld [vmem:[#allocation9 + $0xe0] sm:$0xff]
        %v1933 = vld [vmem:[#allocation9 + $0xe8] sm:$0xff]
        %v1934 = vld [vmem:[#allocation9 + $0xf0] sm:$0xff]
        %v1935 = vld [vmem:[#allocation9 + $0xf8] sm:$0xff]
        %v1938 = vunpack.c.l.b16 %v1902
        %v1939 = vunpack.c.l.b16 %v1903
        %v1940 = vpack.c.b16 %v1939, %v1938
        %v1974 = vunpack.c.l.b16 %v1904
        %v1975 = vunpack.c.h.b16 %v1904
        %v1976 = vunpack.c.l.b16 %v1905
        %v1977 = vunpack.c.h.b16 %v1905
        %v1978 = vunpack.c.l.b16 %v1906
        %v1979 = vunpack.c.h.b16 %v1906
        %v1980 = vunpack.c.l.b16 %v1907
        %v1981 = vunpack.c.h.b16 %v1907
        %v1982 = vunpack.c.l.b16 %v1908
        %v1983 = vunpack.c.h.b16 %v1908
        %v1984 = vunpack.c.l.b16 %v1909
        %v1985 = vunpack.c.h.b16 %v1909
        %v1986 = vunpack.c.l.b16 %v1910
        %v1987 = vunpack.c.h.b16 %v1910
        %v1988 = vunpack.c.l.b16 %v1911
        %v1989 = vunpack.c.h.b16 %v1911
        %v1990 = vunpack.c.l.b16 %v1912
        %v1991 = vunpack.c.h.b16 %v1912
        %v1992 = vunpack.c.l.b16 %v1913
        %v1993 = vunpack.c.h.b16 %v1913
        %v1994 = vunpack.c.l.b16 %v1914
        %v1995 = vunpack.c.h.b16 %v1914
        %v1996 = vunpack.c.l.b16 %v1915
        %v1997 = vunpack.c.h.b16 %v1915
        %v1998 = vunpack.c.l.b16 %v1916
        %v1999 = vunpack.c.h.b16 %v1916
        %v2000 = vunpack.c.l.b16 %v1917
        %v2001 = vunpack.c.h.b16 %v1917
        %v2002 = vunpack.c.l.b16 %v1918
        %v2003 = vunpack.c.h.b16 %v1918
        %v2004 = vunpack.c.l.b16 %v1919
        %v2005 = vunpack.c.h.b16 %v1919
        %v2006 = vunpack.c.l.b16 %v1920
        %v2007 = vunpack.c.h.b16 %v1920
        %v2008 = vunpack.c.l.b16 %v1921
        %v2009 = vunpack.c.h.b16 %v1921
        %v2010 = vunpack.c.l.b16 %v1922
        %v2011 = vunpack.c.h.b16 %v1922
        %v2012 = vunpack.c.l.b16 %v1923
        %v2013 = vunpack.c.h.b16 %v1923
        %v2014 = vunpack.c.l.b16 %v1924
        %v2015 = vunpack.c.h.b16 %v1924
        %v2016 = vunpack.c.l.b16 %v1925
        %v2017 = vunpack.c.h.b16 %v1925
        %v2018 = vunpack.c.l.b16 %v1926
        %v2019 = vunpack.c.h.b16 %v1926
        %v2020 = vunpack.c.l.b16 %v1927
        %v2021 = vunpack.c.h.b16 %v1927
        %v2022 = vunpack.c.l.b16 %v1928
        %v2023 = vunpack.c.h.b16 %v1928
        %v2024 = vunpack.c.l.b16 %v1929
        %v2025 = vunpack.c.h.b16 %v1929
        %v2026 = vunpack.c.l.b16 %v1930
        %v2027 = vunpack.c.h.b16 %v1930
        %v2028 = vunpack.c.l.b16 %v1931
        %v2029 = vunpack.c.h.b16 %v1931
        %v2030 = vunpack.c.l.b16 %v1932
        %v2031 = vunpack.c.h.b16 %v1932
        %v2032 = vunpack.c.l.b16 %v1933
        %v2033 = vunpack.c.h.b16 %v1933
        %v2034 = vunpack.c.l.b16 %v1934
        %v2035 = vunpack.c.h.b16 %v1934
        %v2036 = vunpack.c.l.b16 %v1935
        %v2037 = vunpack.c.h.b16 %v1935
        %v2038 = vpack.c.b16 %v1978, %v1974
        %v2039 = vpack.c.b16 %v1979, %v1975
        %v2040 = vpack.c.b16 %v1980, %v1976
        %v2041 = vpack.c.b16 %v1981, %v1977
        %v2042 = vpack.c.b16 %v1986, %v1982
        %v2043 = vpack.c.b16 %v1987, %v1983
        %v2044 = vpack.c.b16 %v1988, %v1984
        %v2045 = vpack.c.b16 %v1989, %v1985
        %v2046 = vpack.c.b16 %v1994, %v1990
        %v2047 = vpack.c.b16 %v1995, %v1991
        %v2048 = vpack.c.b16 %v1996, %v1992
        %v2049 = vpack.c.b16 %v1997, %v1993
        %v2050 = vpack.c.b16 %v2002, %v1998
        %v2051 = vpack.c.b16 %v2003, %v1999
        %v2052 = vpack.c.b16 %v2004, %v2000
        %v2053 = vpack.c.b16 %v2005, %v2001
        %v2054 = vpack.c.b16 %v2010, %v2006
        %v2055 = vpack.c.b16 %v2011, %v2007
        %v2056 = vpack.c.b16 %v2012, %v2008
        %v2057 = vpack.c.b16 %v2013, %v2009
        %v2058 = vpack.c.b16 %v2018, %v2014
        %v2059 = vpack.c.b16 %v2019, %v2015
        %v2060 = vpack.c.b16 %v2020, %v2016
        %v2061 = vpack.c.b16 %v2021, %v2017
        %v2062 = vpack.c.b16 %v2026, %v2022
        %v2063 = vpack.c.b16 %v2027, %v2023
        %v2064 = vpack.c.b16 %v2028, %v2024
        %v2065 = vpack.c.b16 %v2029, %v2025
        %v2066 = vpack.c.b16 %v2034, %v2030
        %v2067 = vpack.c.b16 %v2035, %v2031
        %v2068 = vpack.c.b16 %v2036, %v2032
        %v2069 = vpack.c.b16 %v2037, %v2033
        %2102 = vmatprep.subr.bf16.mxu0 %v2039
        %2103 = vmatpush1.bf16.msra.mxu0 %v2038
        %2104 = vmatprep.subr.bf16.mxu0 %v2043
        %2105 = vmatpush1.bf16.msra.mxu0 %v2042
        %2106 = vmatprep.subr.bf16.mxu0 %v2047
        %2107 = vmatpush1.bf16.msra.mxu0 %v2046
        %2108 = vmatprep.subr.bf16.mxu0 %v2051
        %2109 = vmatpush1.bf16.msra.mxu0 %v2050
        %2110 = vmatprep.subr.bf16.mxu0 %v2055
        %2111 = vmatpush1.bf16.msra.mxu0 %v2054
        %2112 = vmatprep.subr.bf16.mxu0 %v2059
        %2113 = vmatpush1.bf16.msra.mxu0 %v2058
        %2114 = vmatprep.subr.bf16.mxu0 %v2063
        %2115 = vmatpush1.bf16.msra.mxu0 %v2062
        %2116 = vmatprep.subr.bf16.mxu0 %v2067
        %2117 = vmatpush1.bf16.msra.mxu0 %v2066
        %2118 = vmatprep.subr.bf16.mxu0 0
        %2119 = vmatpush1.bf16.msra.mxu0 0
        %2120 = vmatprep.subr.bf16.mxu0 0
        %2121 = vmatpush1.bf16.msra.mxu0 0
        %2122 = vmatprep.subr.bf16.mxu0 0
        %2123 = vmatpush1.bf16.msra.mxu0 0
        %2124 = vmatprep.subr.bf16.mxu0 0
        %2125 = vmatpush1.bf16.msra.mxu0 0
        %2126 = vmatprep.subr.bf16.mxu0 0
        %2127 = vmatpush1.bf16.msra.mxu0 0
        %2128 = vmatprep.subr.bf16.mxu0 0
        %2129 = vmatpush1.bf16.msra.mxu0 0
        %2130 = vmatprep.subr.bf16.mxu0 0
        %2131 = vmatpush1.bf16.msra.mxu0 0
        %2132 = vmatprep.subr.bf16.mxu0 0
        %2133 = vmatpush1.bf16.msra.mxu0 0
        %2134 = vmatprep.mubr.bf16.mxu0 0
        %2135 = vmatmul.mubr.bf16.gmra.mrb[0].mxu0 %v1940
        %v2136 = vpop.f32.mrb[0].mxu0
        %v2137 = vadd.f32 0.0, %v2136
        %v2138 = vpop.f32.mrb[0].mxu0
        %v2139 = vadd.f32 0.0, %v2138
        %v2140 = vpop.f32.mrb[0].mxu0
        %v2141 = vadd.f32 0.0, %v2140
        %v2142 = vpop.f32.mrb[0].mxu0
        %v2143 = vadd.f32 0.0, %v2142
        %2144 = vdwg.mxu0
        %2145 = vmatprep.subr.bf16.mxu0 %v2041
        %2146 = vmatpush1.bf16.msra.mxu0 %v2040
        %2147 = vmatprep.subr.bf16.mxu0 %v2045
        %2148 = vmatpush1.bf16.msra.mxu0 %v2044
        %2149 = vmatprep.subr.bf16.mxu0 %v2049
        %2150 = vmatpush1.bf16.msra.mxu0 %v2048
        %2151 = vmatprep.subr.bf16.mxu0 %v2053
        %2152 = vmatpush1.bf16.msra.mxu0 %v2052
        %2153 = vmatprep.subr.bf16.mxu0 %v2057
        %2154 = vmatpush1.bf16.msra.mxu0 %v2056
        %2155 = vmatprep.subr.bf16.mxu0 %v2061
        %2156 = vmatpush1.bf16.msra.mxu0 %v2060
        %2157 = vmatprep.subr.bf16.mxu0 %v2065
        %2158 = vmatpush1.bf16.msra.mxu0 %v2064
        %2159 = vmatprep.subr.bf16.mxu0 %v2069
        %2160 = vmatpush1.bf16.msra.mxu0 %v2068
        %2161 = vmatprep.subr.bf16.mxu0 0
        %2162 = vmatpush1.bf16.msra.mxu0 0
        %2163 = vmatprep.subr.bf16.mxu0 0
        %2164 = vmatpush1.bf16.msra.mxu0 0
        %2165 = vmatprep.subr.bf16.mxu0 0
        %2166 = vmatpush1.bf16.msra.mxu0 0
        %2167 = vmatprep.subr.bf16.mxu0 0
        %2168 = vmatpush1.bf16.msra.mxu0 0
        %2169 = vmatprep.subr.bf16.mxu0 0
        %2170 = vmatpush1.bf16.msra.mxu0 0
        %2171 = vmatprep.subr.bf16.mxu0 0
        %2172 = vmatpush1.bf16.msra.mxu0 0
        %2173 = vmatprep.subr.bf16.mxu0 0
        %2174 = vmatpush1.bf16.msra.mxu0 0
        %2175 = vmatprep.subr.bf16.mxu0 0
        %2176 = vmatpush1.bf16.msra.mxu0 0
        %2177 = vmatprep.mubr.bf16.mxu0 0
        %2178 = vmatmul.mubr.bf16.gmra.mrb[0].mxu0 %v1940
        %v2179 = vpop.f32.mrb[0].mxu0
        %v2180 = vadd.f32 0.0, %v2179
        %v2181 = vpop.f32.mrb[0].mxu0
        %v2182 = vadd.f32 0.0, %v2181
        %v2183 = vpop.f32.mrb[0].mxu0
        %v2184 = vadd.f32 0.0, %v2183
        %v2185 = vpop.f32.mrb[0].mxu0
        %v2186 = vadd.f32 0.0, %v2185
        %2187 = vdwg.mxu0
        %v2188 = vadd.f32 %v1885, %v2137
        %v2189 = vadd.f32 %v1889, %v2139
        %v2190 = vadd.f32 %v1893, %v2180
        %v2191 = vadd.f32 %v1897, %v2182
        %v2192 = vadd.f32 %v1885, %v2141
        %v2193 = vadd.f32 %v1889, %v2143
        %v2194 = vadd.f32 %v1893, %v2184
        %v2195 = vadd.f32 %v1897, %v2186
        %v2196 = vld [vmem:[#allocation2] sm:$0xf]
        %v2197 = vld [vmem:[#allocation2 + $0x4] sm:$0xf]
        %v2198 = vld [vmem:[#allocation2 + $0x8] sm:$0x1]
        %s2199 = scalar_lea.vmem [#allocation9], 512
        %v2200 = vld [vmem:[%s2199] sm:$0xff]
        %v2201 = vld [vmem:[%s2199 + $0x8] sm:$0xff]
        %v2202 = vld [vmem:[%s2199 + $0x10] sm:$0xff]
        %v2203 = vld [vmem:[%s2199 + $0x18] sm:$0xff]
        %v2204 = vld [vmem:[%s2199 + $0x20] sm:$0xff]
        %v2205 = vld [vmem:[%s2199 + $0x28] sm:$0xff]
        %v2206 = vld [vmem:[%s2199 + $0x30] sm:$0xff]
        %v2207 = vld [vmem:[%s2199 + $0x38] sm:$0xff]
        %v2208 = vld [vmem:[%s2199 + $0x40] sm:$0xff]
        %v2209 = vld [vmem:[%s2199 + $0x48] sm:$0xff]
        %v2210 = vld [vmem:[%s2199 + $0x50] sm:$0xff]
        %v2211 = vld [vmem:[%s2199 + $0x58] sm:$0xff]
        %v2212 = vld [vmem:[%s2199 + $0x60] sm:$0xff]
        %v2213 = vld [vmem:[%s2199 + $0x68] sm:$0xff]
        %v2214 = vld [vmem:[%s2199 + $0x70] sm:$0xff]
        %v2215 = vld [vmem:[%s2199 + $0x78] sm:$0xff]
        %v2216 = vld [vmem:[%s2199 + $0x80] sm:$0xff]
        %v2217 = vld [vmem:[%s2199 + $0x88] sm:$0xff]
        %v2218 = vld [vmem:[%s2199 + $0x90] sm:$0xff]
        %v2219 = vld [vmem:[%s2199 + $0x98] sm:$0xff]
        %v2220 = vld [vmem:[%s2199 + $0xa0] sm:$0xff]
        %v2221 = vld [vmem:[%s2199 + $0xa8] sm:$0xff]
        %v2222 = vld [vmem:[%s2199 + $0xb0] sm:$0xff]
        %v2223 = vld [vmem:[%s2199 + $0xb8] sm:$0xff]
        %v2224 = vld [vmem:[%s2199 + $0xc0] sm:$0xff]
        %v2225 = vld [vmem:[%s2199 + $0xc8] sm:$0xff]
        %v2226 = vld [vmem:[%s2199 + $0xd0] sm:$0xff]
        %v2227 = vld [vmem:[%s2199 + $0xd8] sm:$0xff]
        %v2228 = vld [vmem:[%s2199 + $0xe0] sm:$0xff]
        %v2229 = vld [vmem:[%s2199 + $0xe8] sm:$0xff]
        %v2230 = vld [vmem:[%s2199 + $0xf0] sm:$0xff]
        %v2231 = vld [vmem:[%s2199 + $0xf8] sm:$0xff]
        %v2235 = vunpack.c.l.b16 %v2196
        %v2236 = vunpack.c.l.b16 %v2197
        %v2237 = vunpack.c.l.b16 %v2198
        %v2238 = vpack.c.b16 %v2236, %v2235
        %v2239 = vpack.c.b16 %v2237, %v2237
        %v2241 = vshrl.u32 %v2238, 16
        %v2243 = vshll.u32 %v2238, 16
        %v2245 = vrot.slane %v2243, 1
        %v2246 = vor.u32 %v2241, %v2245
        %v2248 = vshll.u32 %v2239, 16
        %v2250 = vrot.slane %v2248, 1
        %v2251 = vsel %vm587, %v2246, %v2250
        %v2285 = vunpack.c.l.b16 %v2200
        %v2286 = vunpack.c.h.b16 %v2200
        %v2287 = vunpack.c.l.b16 %v2201
        %v2288 = vunpack.c.h.b16 %v2201
        %v2289 = vunpack.c.l.b16 %v2202
        %v2290 = vunpack.c.h.b16 %v2202
        %v2291 = vunpack.c.l.b16 %v2203
        %v2292 = vunpack.c.h.b16 %v2203
        %v2293 = vunpack.c.l.b16 %v2204
        %v2294 = vunpack.c.h.b16 %v2204
        %v2295 = vunpack.c.l.b16 %v2205
        %v2296 = vunpack.c.h.b16 %v2205
        %v2297 = vunpack.c.l.b16 %v2206
        %v2298 = vunpack.c.h.b16 %v2206
        %v2299 = vunpack.c.l.b16 %v2207
        %v2300 = vunpack.c.h.b16 %v2207
        %v2301 = vunpack.c.l.b16 %v2208
        %v2302 = vunpack.c.h.b16 %v2208
        %v2303 = vunpack.c.l.b16 %v2209
        %v2304 = vunpack.c.h.b16 %v2209
        %v2305 = vunpack.c.l.b16 %v2210
        %v2306 = vunpack.c.h.b16 %v2210
        %v2307 = vunpack.c.l.b16 %v2211
        %v2308 = vunpack.c.h.b16 %v2211
        %v2309 = vunpack.c.l.b16 %v2212
        %v2310 = vunpack.c.h.b16 %v2212
        %v2311 = vunpack.c.l.b16 %v2213
        %v2312 = vunpack.c.h.b16 %v2213
        %v2313 = vunpack.c.l.b16 %v2214
        %v2314 = vunpack.c.h.b16 %v2214
        %v2315 = vunpack.c.l.b16 %v2215
        %v2316 = vunpack.c.h.b16 %v2215
        %v2317 = vunpack.c.l.b16 %v2216
        %v2318 = vunpack.c.h.b16 %v2216
        %v2319 = vunpack.c.l.b16 %v2217
        %v2320 = vunpack.c.h.b16 %v2217
        %v2321 = vunpack.c.l.b16 %v2218
        %v2322 = vunpack.c.h.b16 %v2218
        %v2323 = vunpack.c.l.b16 %v2219
        %v2324 = vunpack.c.h.b16 %v2219
        %v2325 = vunpack.c.l.b16 %v2220
        %v2326 = vunpack.c.h.b16 %v2220
        %v2327 = vunpack.c.l.b16 %v2221
        %v2328 = vunpack.c.h.b16 %v2221
        %v2329 = vunpack.c.l.b16 %v2222
        %v2330 = vunpack.c.h.b16 %v2222
        %v2331 = vunpack.c.l.b16 %v2223
        %v2332 = vunpack.c.h.b16 %v2223
        %v2333 = vunpack.c.l.b16 %v2224
        %v2334 = vunpack.c.h.b16 %v2224
        %v2335 = vunpack.c.l.b16 %v2225
        %v2336 = vunpack.c.h.b16 %v2225
        %v2337 = vunpack.c.l.b16 %v2226
        %v2338 = vunpack.c.h.b16 %v2226
        %v2339 = vunpack.c.l.b16 %v2227
        %v2340 = vunpack.c.h.b16 %v2227
        %v2341 = vunpack.c.l.b16 %v2228
        %v2342 = vunpack.c.h.b16 %v2228
        %v2343 = vunpack.c.l.b16 %v2229
        %v2344 = vunpack.c.h.b16 %v2229
        %v2345 = vunpack.c.l.b16 %v2230
        %v2346 = vunpack.c.h.b16 %v2230
        %v2347 = vunpack.c.l.b16 %v2231
        %v2348 = vunpack.c.h.b16 %v2231
        %v2349 = vpack.c.b16 %v2289, %v2285
        %v2350 = vpack.c.b16 %v2290, %v2286
        %v2351 = vpack.c.b16 %v2291, %v2287
        %v2352 = vpack.c.b16 %v2292, %v2288
        %v2353 = vpack.c.b16 %v2297, %v2293
        %v2354 = vpack.c.b16 %v2298, %v2294
        %v2355 = vpack.c.b16 %v2299, %v2295
        %v2356 = vpack.c.b16 %v2300, %v2296
        %v2357 = vpack.c.b16 %v2305, %v2301
        %v2358 = vpack.c.b16 %v2306, %v2302
        %v2359 = vpack.c.b16 %v2307, %v2303
        %v2360 = vpack.c.b16 %v2308, %v2304
        %v2361 = vpack.c.b16 %v2313, %v2309
        %v2362 = vpack.c.b16 %v2314, %v2310
        %v2363 = vpack.c.b16 %v2315, %v2311
        %v2364 = vpack.c.b16 %v2316, %v2312
        %v2365 = vpack.c.b16 %v2321, %v2317
        %v2366 = vpack.c.b16 %v2322, %v2318
        %v2367 = vpack.c.b16 %v2323, %v2319
        %v2368 = vpack.c.b16 %v2324, %v2320
        %v2369 = vpack.c.b16 %v2329, %v2325
        %v2370 = vpack.c.b16 %v2330, %v2326
        %v2371 = vpack.c.b16 %v2331, %v2327
        %v2372 = vpack.c.b16 %v2332, %v2328
        %v2373 = vpack.c.b16 %v2337, %v2333
        %v2374 = vpack.c.b16 %v2338, %v2334
        %v2375 = vpack.c.b16 %v2339, %v2335
        %v2376 = vpack.c.b16 %v2340, %v2336
        %v2377 = vpack.c.b16 %v2345, %v2341
        %v2378 = vpack.c.b16 %v2346, %v2342
        %v2379 = vpack.c.b16 %v2347, %v2343
        %v2380 = vpack.c.b16 %v2348, %v2344
        %2413 = vmatprep.subr.bf16.mxu0 %v2350
        %2414 = vmatpush1.bf16.msra.mxu0 %v2349
        %2415 = vmatprep.subr.bf16.mxu0 %v2354
        %2416 = vmatpush1.bf16.msra.mxu0 %v2353
        %2417 = vmatprep.subr.bf16.mxu0 %v2358
        %2418 = vmatpush1.bf16.msra.mxu0 %v2357
        %2419 = vmatprep.subr.bf16.mxu0 %v2362
        %2420 = vmatpush1.bf16.msra.mxu0 %v2361
        %2421 = vmatprep.subr.bf16.mxu0 %v2366
        %2422 = vmatpush1.bf16.msra.mxu0 %v2365
        %2423 = vmatprep.subr.bf16.mxu0 %v2370
        %2424 = vmatpush1.bf16.msra.mxu0 %v2369
        %2425 = vmatprep.subr.bf16.mxu0 %v2374
        %2426 = vmatpush1.bf16.msra.mxu0 %v2373
        %2427 = vmatprep.subr.bf16.mxu0 %v2378
        %2428 = vmatpush1.bf16.msra.mxu0 %v2377
        %2429 = vmatprep.subr.bf16.mxu0 0
        %2430 = vmatpush1.bf16.msra.mxu0 0
        %2431 = vmatprep.subr.bf16.mxu0 0
        %2432 = vmatpush1.bf16.msra.mxu0 0
        %2433 = vmatprep.subr.bf16.mxu0 0
        %2434 = vmatpush1.bf16.msra.mxu0 0
        %2435 = vmatprep.subr.bf16.mxu0 0
        %2436 = vmatpush1.bf16.msra.mxu0 0
        %2437 = vmatprep.subr.bf16.mxu0 0
        %2438 = vmatpush1.bf16.msra.mxu0 0
        %2439 = vmatprep.subr.bf16.mxu0 0
        %2440 = vmatpush1.bf16.msra.mxu0 0
        %2441 = vmatprep.subr.bf16.mxu0 0
        %2442 = vmatpush1.bf16.msra.mxu0 0
        %2443 = vmatprep.subr.bf16.mxu0 0
        %2444 = vmatpush1.bf16.msra.mxu0 0
        %2445 = vmatprep.mubr.bf16.mxu0 0
        %2446 = vmatmul.mubr.bf16.gmra.mrb[0].mxu0 %v2251
        %v2447 = vpop.f32.mrb[0].mxu0
        %v2448 = vadd.f32 0.0, %v2447
        %v2449 = vpop.f32.mrb[0].mxu0
        %v2450 = vadd.f32 0.0, %v2449
        %v2451 = vpop.f32.mrb[0].mxu0
        %v2452 = vadd.f32 0.0, %v2451
        %v2453 = vpop.f32.mrb[0].mxu0
        %v2454 = vadd.f32 0.0, %v2453
        %2455 = vdwg.mxu0
        %2456 = vmatprep.subr.bf16.mxu0 %v2352
        %2457 = vmatpush1.bf16.msra.mxu0 %v2351
        %2458 = vmatprep.subr.bf16.mxu0 %v2356
        %2459 = vmatpush1.bf16.msra.mxu0 %v2355
        %2460 = vmatprep.subr.bf16.mxu0 %v2360
        %2461 = vmatpush1.bf16.msra.mxu0 %v2359
        %2462 = vmatprep.subr.bf16.mxu0 %v2364
        %2463 = vmatpush1.bf16.msra.mxu0 %v2363
        %2464 = vmatprep.subr.bf16.mxu0 %v2368
        %2465 = vmatpush1.bf16.msra.mxu0 %v2367
        %2466 = vmatprep.subr.bf16.mxu0 %v2372
        %2467 = vmatpush1.bf16.msra.mxu0 %v2371
        %2468 = vmatprep.subr.bf16.mxu0 %v2376
        %2469 = vmatpush1.bf16.msra.mxu0 %v2375
        %2470 = vmatprep.subr.bf16.mxu0 %v2380
        %2471 = vmatpush1.bf16.msra.mxu0 %v2379
        %2472 = vmatprep.subr.bf16.mxu0 0
        %2473 = vmatpush1.bf16.msra.mxu0 0
        %2474 = vmatprep.subr.bf16.mxu0 0
        %2475 = vmatpush1.bf16.msra.mxu0 0
        %2476 = vmatprep.subr.bf16.mxu0 0
        %2477 = vmatpush1.bf16.msra.mxu0 0
        %2478 = vmatprep.subr.bf16.mxu0 0
        %2479 = vmatpush1.bf16.msra.mxu0 0
        %2480 = vmatprep.subr.bf16.mxu0 0
        %2481 = vmatpush1.bf16.msra.mxu0 0
        %2482 = vmatprep.subr.bf16.mxu0 0
        %2483 = vmatpush1.bf16.msra.mxu0 0
        %2484 = vmatprep.subr.bf16.mxu0 0
        %2485 = vmatpush1.bf16.msra.mxu0 0
        %2486 = vmatprep.subr.bf16.mxu0 0
        %2487 = vmatpush1.bf16.msra.mxu0 0
        %2488 = vmatprep.mubr.bf16.mxu0 0
        %2489 = vmatmul.mubr.bf16.gmra.mrb[0].mxu0 %v2251
        %v2490 = vpop.f32.mrb[0].mxu0
        %v2491 = vadd.f32 0.0, %v2490
        %v2492 = vpop.f32.mrb[0].mxu0
        %v2493 = vadd.f32 0.0, %v2492
        %v2494 = vpop.f32.mrb[0].mxu0
        %v2495 = vadd.f32 0.0, %v2494
        %v2496 = vpop.f32.mrb[0].mxu0
        %v2497 = vadd.f32 0.0, %v2496
        %2498 = vdwg.mxu0
        %v2499 = vadd.f32 %v2188, %v2448
        %v2500 = vadd.f32 %v2189, %v2450
        %v2501 = vadd.f32 %v2190, %v2491
        %v2502 = vadd.f32 %v2191, %v2493
        %v2503 = vadd.f32 %v2192, %v2452
        %v2504 = vadd.f32 %v2193, %v2454
        %v2505 = vadd.f32 %v2194, %v2495
        %v2506 = vadd.f32 %v2195, %v2497
        %v2507 = vld [vmem:[#allocation2] sm:$0xe]
        %s2508 = scalar_lea.vmem [#allocation9], 1024
        %v2509 = vld [vmem:[%s2508] sm:$0xff]
        %v2510 = vld [vmem:[%s2508 + $0x8] sm:$0xff]
        %v2511 = vld [vmem:[%s2508 + $0x10] sm:$0xff]
        %v2512 = vld [vmem:[%s2508 + $0x18] sm:$0xff]
        %v2513 = vld [vmem:[%s2508 + $0x20] sm:$0xff]
        %v2514 = vld [vmem:[%s2508 + $0x28] sm:$0xff]
        %v2515 = vld [vmem:[%s2508 + $0x30] sm:$0xff]
        %v2516 = vld [vmem:[%s2508 + $0x38] sm:$0xff]
        %v2517 = vld [vmem:[%s2508 + $0x40] sm:$0xff]
        %v2518 = vld [vmem:[%s2508 + $0x48] sm:$0xff]
        %v2519 = vld [vmem:[%s2508 + $0x50] sm:$0xff]
        %v2520 = vld [vmem:[%s2508 + $0x58] sm:$0xff]
        %v2521 = vld [vmem:[%s2508 + $0x60] sm:$0xff]
        %v2522 = vld [vmem:[%s2508 + $0x68] sm:$0xff]
        %v2523 = vld [vmem:[%s2508 + $0x70] sm:$0xff]
        %v2524 = vld [vmem:[%s2508 + $0x78] sm:$0xff]
        %v2525 = vld [vmem:[%s2508 + $0x80] sm:$0xff]
        %v2526 = vld [vmem:[%s2508 + $0x88] sm:$0xff]
        %v2527 = vld [vmem:[%s2508 + $0x90] sm:$0xff]
        %v2528 = vld [vmem:[%s2508 + $0x98] sm:$0xff]
        %v2529 = vld [vmem:[%s2508 + $0xa0] sm:$0xff]
        %v2530 = vld [vmem:[%s2508 + $0xa8] sm:$0xff]
        %v2531 = vld [vmem:[%s2508 + $0xb0] sm:$0xff]
        %v2532 = vld [vmem:[%s2508 + $0xb8] sm:$0xff]
        %v2533 = vld [vmem:[%s2508 + $0xc0] sm:$0xff]
        %v2534 = vld [vmem:[%s2508 + $0xc8] sm:$0xff]
        %v2535 = vld [vmem:[%s2508 + $0xd0] sm:$0xff]
        %v2536 = vld [vmem:[%s2508 + $0xd8] sm:$0xff]
        %v2537 = vld [vmem:[%s2508 + $0xe0] sm:$0xff]
        %v2538 = vld [vmem:[%s2508 + $0xe8] sm:$0xff]
        %v2539 = vld [vmem:[%s2508 + $0xf0] sm:$0xff]
        %v2540 = vld [vmem:[%s2508 + $0xf8] sm:$0xff]
        %v2542 = vunpack.c.l.b16 %v2507
        %v2543 = vpack.c.b16 %v2236, %v2542
        %v2544 = vrot.slane %v2543, 1
        %v2545 = vrot.slane %v2239, 1
        %v2546 = vsel %vm720, %v2544, %v2545
        %v2580 = vunpack.c.l.b16 %v2509
        %v2581 = vunpack.c.h.b16 %v2509
        %v2582 = vunpack.c.l.b16 %v2510
        %v2583 = vunpack.c.h.b16 %v2510
        %v2584 = vunpack.c.l.b16 %v2511
        %v2585 = vunpack.c.h.b16 %v2511
        %v2586 = vunpack.c.l.b16 %v2512
        %v2587 = vunpack.c.h.b16 %v2512
        %v2588 = vunpack.c.l.b16 %v2513
        %v2589 = vunpack.c.h.b16 %v2513
        %v2590 = vunpack.c.l.b16 %v2514
        %v2591 = vunpack.c.h.b16 %v2514
        %v2592 = vunpack.c.l.b16 %v2515
        %v2593 = vunpack.c.h.b16 %v2515
        %v2594 = vunpack.c.l.b16 %v2516
        %v2595 = vunpack.c.h.b16 %v2516
        %v2596 = vunpack.c.l.b16 %v2517
        %v2597 = vunpack.c.h.b16 %v2517
        %v2598 = vunpack.c.l.b16 %v2518
        %v2599 = vunpack.c.h.b16 %v2518
        %v2600 = vunpack.c.l.b16 %v2519
        %v2601 = vunpack.c.h.b16 %v2519
        %v2602 = vunpack.c.l.b16 %v2520
        %v2603 = vunpack.c.h.b16 %v2520
        %v2604 = vunpack.c.l.b16 %v2521
        %v2605 = vunpack.c.h.b16 %v2521
        %v2606 = vunpack.c.l.b16 %v2522
        %v2607 = vunpack.c.h.b16 %v2522
        %v2608 = vunpack.c.l.b16 %v2523
        %v2609 = vunpack.c.h.b16 %v2523
        %v2610 = vunpack.c.l.b16 %v2524
        %v2611 = vunpack.c.h.b16 %v2524
        %v2612 = vunpack.c.l.b16 %v2525
        %v2613 = vunpack.c.h.b16 %v2525
        %v2614 = vunpack.c.l.b16 %v2526
        %v2615 = vunpack.c.h.b16 %v2526
        %v2616 = vunpack.c.l.b16 %v2527
        %v2617 = vunpack.c.h.b16 %v2527
        %v2618 = vunpack.c.l.b16 %v2528
        %v2619 = vunpack.c.h.b16 %v2528
        %v2620 = vunpack.c.l.b16 %v2529
        %v2621 = vunpack.c.h.b16 %v2529
        %v2622 = vunpack.c.l.b16 %v2530
        %v2623 = vunpack.c.h.b16 %v2530
        %v2624 = vunpack.c.l.b16 %v2531
        %v2625 = vunpack.c.h.b16 %v2531
        %v2626 = vunpack.c.l.b16 %v2532
        %v2627 = vunpack.c.h.b16 %v2532
        %v2628 = vunpack.c.l.b16 %v2533
        %v2629 = vunpack.c.h.b16 %v2533
        %v2630 = vunpack.c.l.b16 %v2534
        %v2631 = vunpack.c.h.b16 %v2534
        %v2632 = vunpack.c.l.b16 %v2535
        %v2633 = vunpack.c.h.b16 %v2535
        %v2634 = vunpack.c.l.b16 %v2536
        %v2635 = vunpack.c.h.b16 %v2536
        %v2636 = vunpack.c.l.b16 %v2537
        %v2637 = vunpack.c.h.b16 %v2537
        %v2638 = vunpack.c.l.b16 %v2538
        %v2639 = vunpack.c.h.b16 %v2538
        %v2640 = vunpack.c.l.b16 %v2539
        %v2641 = vunpack.c.h.b16 %v2539
        %v2642 = vunpack.c.l.b16 %v2540
        %v2643 = vunpack.c.h.b16 %v2540
        %v2644 = vpack.c.b16 %v2584, %v2580
        %v2645 = vpack.c.b16 %v2585, %v2581
        %v2646 = vpack.c.b16 %v2586, %v2582
        %v2647 = vpack.c.b16 %v2587, %v2583
        %v2648 = vpack.c.b16 %v2592, %v2588
        %v2649 = vpack.c.b16 %v2593, %v2589
        %v2650 = vpack.c.b16 %v2594, %v2590
        %v2651 = vpack.c.b16 %v2595, %v2591
        %v2652 = vpack.c.b16 %v2600, %v2596
        %v2653 = vpack.c.b16 %v2601, %v2597
        %v2654 = vpack.c.b16 %v2602, %v2598
        %v2655 = vpack.c.b16 %v2603, %v2599
        %v2656 = vpack.c.b16 %v2608, %v2604
        %v2657 = vpack.c.b16 %v2609, %v2605
        %v2658 = vpack.c.b16 %v2610, %v2606
        %v2659 = vpack.c.b16 %v2611, %v2607
        %v2660 = vpack.c.b16 %v2616, %v2612
        %v2661 = vpack.c.b16 %v2617, %v2613
        %v2662 = vpack.c.b16 %v2618, %v2614
        %v2663 = vpack.c.b16 %v2619, %v2615
        %v2664 = vpack.c.b16 %v2624, %v2620
        %v2665 = vpack.c.b16 %v2625, %v2621
        %v2666 = vpack.c.b16 %v2626, %v2622
        %v2667 = vpack.c.b16 %v2627, %v2623
        %v2668 = vpack.c.b16 %v2632, %v2628
        %v2669 = vpack.c.b16 %v2633, %v2629
        %v2670 = vpack.c.b16 %v2634, %v2630
        %v2671 = vpack.c.b16 %v2635, %v2631
        %v2672 = vpack.c.b16 %v2640, %v2636
        %v2673 = vpack.c.b16 %v2641, %v2637
        %v2674 = vpack.c.b16 %v2642, %v2638
        %v2675 = vpack.c.b16 %v2643, %v2639
        %2708 = vmatprep.subr.bf16.mxu0 %v2645
        %2709 = vmatpush1.bf16.msra.mxu0 %v2644
        %2710 = vmatprep.subr.bf16.mxu0 %v2649
        %2711 = vmatpush1.bf16.msra.mxu0 %v2648
        %2712 = vmatprep.subr.bf16.mxu0 %v2653
        %2713 = vmatpush1.bf16.msra.mxu0 %v2652
        %2714 = vmatprep.subr.bf16.mxu0 %v2657
        %2715 = vmatpush1.bf16.msra.mxu0 %v2656
        %2716 = vmatprep.subr.bf16.mxu0 %v2661
        %2717 = vmatpush1.bf16.msra.mxu0 %v2660
        %2718 = vmatprep.subr.bf16.mxu0 %v2665
        %2719 = vmatpush1.bf16.msra.mxu0 %v2664
        %2720 = vmatprep.subr.bf16.mxu0 %v2669
        %2721 = vmatpush1.bf16.msra.mxu0 %v2668
        %2722 = vmatprep.subr.bf16.mxu0 %v2673
        %2723 = vmatpush1.bf16.msra.mxu0 %v2672
        %2724 = vmatprep.subr.bf16.mxu0 0
        %2725 = vmatpush1.bf16.msra.mxu0 0
        %2726 = vmatprep.subr.bf16.mxu0 0
        %2727 = vmatpush1.bf16.msra.mxu0 0
        %2728 = vmatprep.subr.bf16.mxu0 0
        %2729 = vmatpush1.bf16.msra.mxu0 0
        %2730 = vmatprep.subr.bf16.mxu0 0
        %2731 = vmatpush1.bf16.msra.mxu0 0
        %2732 = vmatprep.subr.bf16.mxu0 0
        %2733 = vmatpush1.bf16.msra.mxu0 0
        %2734 = vmatprep.subr.bf16.mxu0 0
        %2735 = vmatpush1.bf16.msra.mxu0 0
        %2736 = vmatprep.subr.bf16.mxu0 0
        %2737 = vmatpush1.bf16.msra.mxu0 0
        %2738 = vmatprep.subr.bf16.mxu0 0
        %2739 = vmatpush1.bf16.msra.mxu0 0
        %2740 = vmatprep.mubr.bf16.mxu0 0
        %2741 = vmatmul.mubr.bf16.gmra.mrb[0].mxu0 %v2546
        %v2742 = vpop.f32.mrb[0].mxu0
        %v2743 = vadd.f32 0.0, %v2742
        %v2744 = vpop.f32.mrb[0].mxu0
        %v2745 = vadd.f32 0.0, %v2744
        %v2746 = vpop.f32.mrb[0].mxu0
        %v2747 = vadd.f32 0.0, %v2746
        %v2748 = vpop.f32.mrb[0].mxu0
        %v2749 = vadd.f32 0.0, %v2748
        %2750 = vdwg.mxu0
        %2751 = vmatprep.subr.bf16.mxu0 %v2647
        %2752 = vmatpush1.bf16.msra.mxu0 %v2646
        %2753 = vmatprep.subr.bf16.mxu0 %v2651
        %2754 = vmatpush1.bf16.msra.mxu0 %v2650
        %2755 = vmatprep.subr.bf16.mxu0 %v2655
        %2756 = vmatpush1.bf16.msra.mxu0 %v2654
        %2757 = vmatprep.subr.bf16.mxu0 %v2659
        %2758 = vmatpush1.bf16.msra.mxu0 %v2658
        %2759 = vmatprep.subr.bf16.mxu0 %v2663
        %2760 = vmatpush1.bf16.msra.mxu0 %v2662
        %2761 = vmatprep.subr.bf16.mxu0 %v2667
        %2762 = vmatpush1.bf16.msra.mxu0 %v2666
        %2763 = vmatprep.subr.bf16.mxu0 %v2671
        %2764 = vmatpush1.bf16.msra.mxu0 %v2670
        %2765 = vmatprep.subr.bf16.mxu0 %v2675
        %2766 = vmatpush1.bf16.msra.mxu0 %v2674
        %2767 = vmatprep.subr.bf16.mxu0 0
        %2768 = vmatpush1.bf16.msra.mxu0 0
        %2769 = vmatprep.subr.bf16.mxu0 0
        %2770 = vmatpush1.bf16.msra.mxu0 0
        %2771 = vmatprep.subr.bf16.mxu0 0
        %2772 = vmatpush1.bf16.msra.mxu0 0
        %2773 = vmatprep.subr.bf16.mxu0 0
        %2774 = vmatpush1.bf16.msra.mxu0 0
        %2775 = vmatprep.subr.bf16.mxu0 0
        %2776 = vmatpush1.bf16.msra.mxu0 0
        %2777 = vmatprep.subr.bf16.mxu0 0
        %2778 = vmatpush1.bf16.msra.mxu0 0
        %2779 = vmatprep.subr.bf16.mxu0 0
        %2780 = vmatpush1.bf16.msra.mxu0 0
        %2781 = vmatprep.subr.bf16.mxu0 0
        %2782 = vmatpush1.bf16.msra.mxu0 0
        %2783 = vmatprep.mubr.bf16.mxu0 0
        %2784 = vmatmul.mubr.bf16.gmra.mrb[0].mxu0 %v2546
        %v2785 = vpop.f32.mrb[0].mxu0
        %v2786 = vadd.f32 0.0, %v2785
        %v2787 = vpop.f32.mrb[0].mxu0
        %v2788 = vadd.f32 0.0, %v2787
        %v2789 = vpop.f32.mrb[0].mxu0
        %v2790 = vadd.f32 0.0, %v2789
        %v2791 = vpop.f32.mrb[0].mxu0
        %v2792 = vadd.f32 0.0, %v2791
        %2793 = vdwg.mxu0
        %v2794 = vadd.f32 %v2499, %v2743
        %v2795 = vadd.f32 %v2500, %v2745
        %v2796 = vadd.f32 %v2501, %v2786
        %v2797 = vadd.f32 %v2502, %v2788
        %v2798 = vadd.f32 %v2503, %v2747
        %v2799 = vadd.f32 %v2504, %v2749
        %v2800 = vadd.f32 %v2505, %v2790
        %v2801 = vadd.f32 %v2506, %v2792
        %v2802 = vld [vmem:[#allocation2 + $0x8] sm:$0x3]
        %s2803 = scalar_lea.vmem [#allocation9], 1536
        %v2804 = vld [vmem:[%s2803] sm:$0xff]
        %v2805 = vld [vmem:[%s2803 + $0x8] sm:$0xff]
        %v2806 = vld [vmem:[%s2803 + $0x10] sm:$0xff]
        %v2807 = vld [vmem:[%s2803 + $0x18] sm:$0xff]
        %v2808 = vld [vmem:[%s2803 + $0x20] sm:$0xff]
        %v2809 = vld [vmem:[%s2803 + $0x28] sm:$0xff]
        %v2810 = vld [vmem:[%s2803 + $0x30] sm:$0xff]
        %v2811 = vld [vmem:[%s2803 + $0x38] sm:$0xff]
        %v2812 = vld [vmem:[%s2803 + $0x40] sm:$0xff]
        %v2813 = vld [vmem:[%s2803 + $0x48] sm:$0xff]
        %v2814 = vld [vmem:[%s2803 + $0x50] sm:$0xff]
        %v2815 = vld [vmem:[%s2803 + $0x58] sm:$0xff]
        %v2816 = vld [vmem:[%s2803 + $0x60] sm:$0xff]
        %v2817 = vld [vmem:[%s2803 + $0x68] sm:$0xff]
        %v2818 = vld [vmem:[%s2803 + $0x70] sm:$0xff]
        %v2819 = vld [vmem:[%s2803 + $0x78] sm:$0xff]
        %v2820 = vld [vmem:[%s2803 + $0x80] sm:$0xff]
        %v2821 = vld [vmem:[%s2803 + $0x88] sm:$0xff]
        %v2822 = vld [vmem:[%s2803 + $0x90] sm:$0xff]
        %v2823 = vld [vmem:[%s2803 + $0x98] sm:$0xff]
        %v2824 = vld [vmem:[%s2803 + $0xa0] sm:$0xff]
        %v2825 = vld [vmem:[%s2803 + $0xa8] sm:$0xff]
        %v2826 = vld [vmem:[%s2803 + $0xb0] sm:$0xff]
        %v2827 = vld [vmem:[%s2803 + $0xb8] sm:$0xff]
        %v2828 = vld [vmem:[%s2803 + $0xc0] sm:$0xff]
        %v2829 = vld [vmem:[%s2803 + $0xc8] sm:$0xff]
        %v2830 = vld [vmem:[%s2803 + $0xd0] sm:$0xff]
        %v2831 = vld [vmem:[%s2803 + $0xd8] sm:$0xff]
        %v2832 = vld [vmem:[%s2803 + $0xe0] sm:$0xff]
        %v2833 = vld [vmem:[%s2803 + $0xe8] sm:$0xff]
        %v2834 = vld [vmem:[%s2803 + $0xf0] sm:$0xff]
        %v2835 = vld [vmem:[%s2803 + $0xf8] sm:$0xff]
        %v2837 = vunpack.c.l.b16 %v2802
        %v2838 = vpack.c.b16 %v2837, %v2837
        %v2840 = vshrl.u32 %v2543, 16
        %v2842 = vrot.slane %v2840, 1
        %v2843 = vshll.u32 %v2543, 16
        %v2845 = vrot.slane %v2843, 2
        %v2846 = vor.u32 %v2842, %v2845
        %v2848 = vshrl.u32 %v2838, 16
        %v2850 = vrot.slane %v2848, 1
        %v2851 = vshll.u32 %v2838, 16
        %v2853 = vrot.slane %v2851, 2
        %v2854 = vor.u32 %v2850, %v2853
        %v2855 = vsel %vm838, %v2846, %v2854
        %v2889 = vunpack.c.l.b16 %v2804
        %v2890 = vunpack.c.h.b16 %v2804
        %v2891 = vunpack.c.l.b16 %v2805
        %v2892 = vunpack.c.h.b16 %v2805
        %v2893 = vunpack.c.l.b16 %v2806
        %v2894 = vunpack.c.h.b16 %v2806
        %v2895 = vunpack.c.l.b16 %v2807
        %v2896 = vunpack.c.h.b16 %v2807
        %v2897 = vunpack.c.l.b16 %v2808
        %v2898 = vunpack.c.h.b16 %v2808
        %v2899 = vunpack.c.l.b16 %v2809
        %v2900 = vunpack.c.h.b16 %v2809
        %v2901 = vunpack.c.l.b16 %v2810
        %v2902 = vunpack.c.h.b16 %v2810
        %v2903 = vunpack.c.l.b16 %v2811
        %v2904 = vunpack.c.h.b16 %v2811
        %v2905 = vunpack.c.l.b16 %v2812
        %v2906 = vunpack.c.h.b16 %v2812
        %v2907 = vunpack.c.l.b16 %v2813
        %v2908 = vunpack.c.h.b16 %v2813
        %v2909 = vunpack.c.l.b16 %v2814
        %v2910 = vunpack.c.h.b16 %v2814
        %v2911 = vunpack.c.l.b16 %v2815
        %v2912 = vunpack.c.h.b16 %v2815
        %v2913 = vunpack.c.l.b16 %v2816
        %v2914 = vunpack.c.h.b16 %v2816
        %v2915 = vunpack.c.l.b16 %v2817
        %v2916 = vunpack.c.h.b16 %v2817
        %v2917 = vunpack.c.l.b16 %v2818
        %v2918 = vunpack.c.h.b16 %v2818
        %v2919 = vunpack.c.l.b16 %v2819
        %v2920 = vunpack.c.h.b16 %v2819
        %v2921 = vunpack.c.l.b16 %v2820
        %v2922 = vunpack.c.h.b16 %v2820
        %v2923 = vunpack.c.l.b16 %v2821
        %v2924 = vunpack.c.h.b16 %v2821
        %v2925 = vunpack.c.l.b16 %v2822
        %v2926 = vunpack.c.h.b16 %v2822
        %v2927 = vunpack.c.l.b16 %v2823
        %v2928 = vunpack.c.h.b16 %v2823
        %v2929 = vunpack.c.l.b16 %v2824
        %v2930 = vunpack.c.h.b16 %v2824
        %v2931 = vunpack.c.l.b16 %v2825
        %v2932 = vunpack.c.h.b16 %v2825
        %v2933 = vunpack.c.l.b16 %v2826
        %v2934 = vunpack.c.h.b16 %v2826
        %v2935 = vunpack.c.l.b16 %v2827
        %v2936 = vunpack.c.h.b16 %v2827
        %v2937 = vunpack.c.l.b16 %v2828
        %v2938 = vunpack.c.h.b16 %v2828
        %v2939 = vunpack.c.l.b16 %v2829
        %v2940 = vunpack.c.h.b16 %v2829
        %v2941 = vunpack.c.l.b16 %v2830
        %v2942 = vunpack.c.h.b16 %v2830
        %v2943 = vunpack.c.l.b16 %v2831
        %v2944 = vunpack.c.h.b16 %v2831
        %v2945 = vunpack.c.l.b16 %v2832
        %v2946 = vunpack.c.h.b16 %v2832
        %v2947 = vunpack.c.l.b16 %v2833
        %v2948 = vunpack.c.h.b16 %v2833
        %v2949 = vunpack.c.l.b16 %v2834
        %v2950 = vunpack.c.h.b16 %v2834
        %v2951 = vunpack.c.l.b16 %v2835
        %v2952 = vunpack.c.h.b16 %v2835
        %v2953 = vpack.c.b16 %v2893, %v2889
        %v2954 = vpack.c.b16 %v2894, %v2890
        %v2955 = vpack.c.b16 %v2895, %v2891
        %v2956 = vpack.c.b16 %v2896, %v2892
        %v2957 = vpack.c.b16 %v2901, %v2897
        %v2958 = vpack.c.b16 %v2902, %v2898
        %v2959 = vpack.c.b16 %v2903, %v2899
        %v2960 = vpack.c.b16 %v2904, %v2900
        %v2961 = vpack.c.b16 %v2909, %v2905
        %v2962 = vpack.c.b16 %v2910, %v2906
        %v2963 = vpack.c.b16 %v2911, %v2907
        %v2964 = vpack.c.b16 %v2912, %v2908
        %v2965 = vpack.c.b16 %v2917, %v2913
        %v2966 = vpack.c.b16 %v2918, %v2914
        %v2967 = vpack.c.b16 %v2919, %v2915
        %v2968 = vpack.c.b16 %v2920, %v2916
        %v2969 = vpack.c.b16 %v2925, %v2921
        %v2970 = vpack.c.b16 %v2926, %v2922
        %v2971 = vpack.c.b16 %v2927, %v2923
        %v2972 = vpack.c.b16 %v2928, %v2924
        %v2973 = vpack.c.b16 %v2933, %v2929
        %v2974 = vpack.c.b16 %v2934, %v2930
        %v2975 = vpack.c.b16 %v2935, %v2931
        %v2976 = vpack.c.b16 %v2936, %v2932
        %v2977 = vpack.c.b16 %v2941, %v2937
        %v2978 = vpack.c.b16 %v2942, %v2938
        %v2979 = vpack.c.b16 %v2943, %v2939
        %v2980 = vpack.c.b16 %v2944, %v2940
        %v2981 = vpack.c.b16 %v2949, %v2945
        %v2982 = vpack.c.b16 %v2950, %v2946
        %v2983 = vpack.c.b16 %v2951, %v2947
        %v2984 = vpack.c.b16 %v2952, %v2948
        %3017 = vmatprep.subr.bf16.mxu0 %v2954
        %3018 = vmatpush1.bf16.msra.mxu0 %v2953
        %3019 = vmatprep.subr.bf16.mxu0 %v2958
        %3020 = vmatpush1.bf16.msra.mxu0 %v2957
        %3021 = vmatprep.subr.bf16.mxu0 %v2962
        %3022 = vmatpush1.bf16.msra.mxu0 %v2961
        %3023 = vmatprep.subr.bf16.mxu0 %v2966
        %3024 = vmatpush1.bf16.msra.mxu0 %v2965
        %3025 = vmatprep.subr.bf16.mxu0 %v2970
        %3026 = vmatpush1.bf16.msra.mxu0 %v2969
        %3027 = vmatprep.subr.bf16.mxu0 %v2974
        %3028 = vmatpush1.bf16.msra.mxu0 %v2973
        %3029 = vmatprep.subr.bf16.mxu0 %v2978
        %3030 = vmatpush1.bf16.msra.mxu0 %v2977
        %3031 = vmatprep.subr.bf16.mxu0 %v2982
        %3032 = vmatpush1.bf16.msra.mxu0 %v2981
        %3033 = vmatprep.subr.bf16.mxu0 0
        %3034 = vmatpush1.bf16.msra.mxu0 0
        %3035 = vmatprep.subr.bf16.mxu0 0
        %3036 = vmatpush1.bf16.msra.mxu0 0
        %3037 = vmatprep.subr.bf16.mxu0 0
        %3038 = vmatpush1.bf16.msra.mxu0 0
        %3039 = vmatprep.subr.bf16.mxu0 0
        %3040 = vmatpush1.bf16.msra.mxu0 0
        %3041 = vmatprep.subr.bf16.mxu0 0
        %3042 = vmatpush1.bf16.msra.mxu0 0
        %3043 = vmatprep.subr.bf16.mxu0 0
        %3044 = vmatpush1.bf16.msra.mxu0 0
        %3045 = vmatprep.subr.bf16.mxu0 0
        %3046 = vmatpush1.bf16.msra.mxu0 0
        %3047 = vmatprep.subr.bf16.mxu0 0
        %3048 = vmatpush1.bf16.msra.mxu0 0
        %3049 = vmatprep.mubr.bf16.mxu0 0
        %3050 = vmatmul.mubr.bf16.gmra.mrb[0].mxu0 %v2855
        %v3051 = vpop.f32.mrb[0].mxu0
        %v3052 = vadd.f32 0.0, %v3051
        %v3053 = vpop.f32.mrb[0].mxu0
        %v3054 = vadd.f32 0.0, %v3053
        %v3055 = vpop.f32.mrb[0].mxu0
        %v3056 = vadd.f32 0.0, %v3055
        %v3057 = vpop.f32.mrb[0].mxu0
        %v3058 = vadd.f32 0.0, %v3057
        %3059 = vdwg.mxu0
        %3060 = vmatprep.subr.bf16.mxu0 %v2956
        %3061 = vmatpush1.bf16.msra.mxu0 %v2955
        %3062 = vmatprep.subr.bf16.mxu0 %v2960
        %3063 = vmatpush1.bf16.msra.mxu0 %v2959
        %3064 = vmatprep.subr.bf16.mxu0 %v2964
        %3065 = vmatpush1.bf16.msra.mxu0 %v2963
        %3066 = vmatprep.subr.bf16.mxu0 %v2968
        %3067 = vmatpush1.bf16.msra.mxu0 %v2967
        %3068 = vmatprep.subr.bf16.mxu0 %v2972
        %3069 = vmatpush1.bf16.msra.mxu0 %v2971
        %3070 = vmatprep.subr.bf16.mxu0 %v2976
        %3071 = vmatpush1.bf16.msra.mxu0 %v2975
        %3072 = vmatprep.subr.bf16.mxu0 %v2980
        %3073 = vmatpush1.bf16.msra.mxu0 %v2979
        %3074 = vmatprep.subr.bf16.mxu0 %v2984
        %3075 = vmatpush1.bf16.msra.mxu0 %v2983
        %3076 = vmatprep.subr.bf16.mxu0 0
        %3077 = vmatpush1.bf16.msra.mxu0 0
        %3078 = vmatprep.subr.bf16.mxu0 0
        %3079 = vmatpush1.bf16.msra.mxu0 0
        %3080 = vmatprep.subr.bf16.mxu0 0
        %3081 = vmatpush1.bf16.msra.mxu0 0
        %3082 = vmatprep.subr.bf16.mxu0 0
        %3083 = vmatpush1.bf16.msra.mxu0 0
        %3084 = vmatprep.subr.bf16.mxu0 0
        %3085 = vmatpush1.bf16.msra.mxu0 0
        %3086 = vmatprep.subr.bf16.mxu0 0
        %3087 = vmatpush1.bf16.msra.mxu0 0
        %3088 = vmatprep.subr.bf16.mxu0 0
        %3089 = vmatpush1.bf16.msra.mxu0 0
        %3090 = vmatprep.subr.bf16.mxu0 0
        %3091 = vmatpush1.bf16.msra.mxu0 0
        %3092 = vmatprep.mubr.bf16.mxu0 0
        %3093 = vmatmul.mubr.bf16.gmra.mrb[0].mxu0 %v2855
        %v3094 = vpop.f32.mrb[0].mxu0
        %v3095 = vadd.f32 0.0, %v3094
        %v3096 = vpop.f32.mrb[0].mxu0
        %v3097 = vadd.f32 0.0, %v3096
        %v3098 = vpop.f32.mrb[0].mxu0
        %v3099 = vadd.f32 0.0, %v3098
        %v3100 = vpop.f32.mrb[0].mxu0
        %v3101 = vadd.f32 0.0, %v3100
        %3102 = vdwg.mxu0
        %v3103 = vadd.f32 %v2794, %v3052
        %v3104 = vadd.f32 %v2795, %v3054
        %v3105 = vadd.f32 %v2796, %v3095
        %v3106 = vadd.f32 %v2797, %v3097
        %v3107 = vadd.f32 %v2798, %v3056
        %v3108 = vadd.f32 %v2799, %v3058
        %v3109 = vadd.f32 %v2800, %v3099
        %v3110 = vadd.f32 %v2801, %v3101
        %v3111 = vld [vmem:[#allocation2] sm:$0xc]
        %s3112 = scalar_lea.vmem [#allocation9], 2048
        %v3113 = vld [vmem:[%s3112] sm:$0xff]
        %v3114 = vld [vmem:[%s3112 + $0x8] sm:$0xff]
        %v3115 = vld [vmem:[%s3112 + $0x10] sm:$0xff]
        %v3116 = vld [vmem:[%s3112 + $0x18] sm:$0xff]
        %v3117 = vld [vmem:[%s3112 + $0x20] sm:$0xff]
        %v3118 = vld [vmem:[%s3112 + $0x28] sm:$0xff]
        %v3119 = vld [vmem:[%s3112 + $0x30] sm:$0xff]
        %v3120 = vld [vmem:[%s3112 + $0x38] sm:$0xff]
        %v3121 = vld [vmem:[%s3112 + $0x40] sm:$0xff]
        %v3122 = vld [vmem:[%s3112 + $0x48] sm:$0xff]
        %v3123 = vld [vmem:[%s3112 + $0x50] sm:$0xff]
        %v3124 = vld [vmem:[%s3112 + $0x58] sm:$0xff]
        %v3125 = vld [vmem:[%s3112 + $0x60] sm:$0xff]
        %v3126 = vld [vmem:[%s3112 + $0x68] sm:$0xff]
        %v3127 = vld [vmem:[%s3112 + $0x70] sm:$0xff]
        %v3128 = vld [vmem:[%s3112 + $0x78] sm:$0xff]
        %v3129 = vld [vmem:[%s3112 + $0x80] sm:$0xff]
        %v3130 = vld [vmem:[%s3112 + $0x88] sm:$0xff]
        %v3131 = vld [vmem:[%s3112 + $0x90] sm:$0xff]
        %v3132 = vld [vmem:[%s3112 + $0x98] sm:$0xff]
        %v3133 = vld [vmem:[%s3112 + $0xa0] sm:$0xff]
        %v3134 = vld [vmem:[%s3112 + $0xa8] sm:$0xff]
        %v3135 = vld [vmem:[%s3112 + $0xb0] sm:$0xff]
        %v3136 = vld [vmem:[%s3112 + $0xb8] sm:$0xff]
        %v3137 = vld [vmem:[%s3112 + $0xc0] sm:$0xff]
        %v3138 = vld [vmem:[%s3112 + $0xc8] sm:$0xff]
        %v3139 = vld [vmem:[%s3112 + $0xd0] sm:$0xff]
        %v3140 = vld [vmem:[%s3112 + $0xd8] sm:$0xff]
        %v3141 = vld [vmem:[%s3112 + $0xe0] sm:$0xff]
        %v3142 = vld [vmem:[%s3112 + $0xe8] sm:$0xff]
        %v3143 = vld [vmem:[%s3112 + $0xf0] sm:$0xff]
        %v3144 = vld [vmem:[%s3112 + $0xf8] sm:$0xff]
        %v3146 = vunpack.c.l.b16 %v3111
        %v3147 = vpack.c.b16 %v2236, %v3146
        %v3148 = vrot.slane %v3147, 2
        %v3149 = vrot.slane %v2838, 2
        %v3150 = vsel %vm972, %v3148, %v3149
        %v3184 = vunpack.c.l.b16 %v3113
        %v3185 = vunpack.c.h.b16 %v3113
        %v3186 = vunpack.c.l.b16 %v3114
        %v3187 = vunpack.c.h.b16 %v3114
        %v3188 = vunpack.c.l.b16 %v3115
        %v3189 = vunpack.c.h.b16 %v3115
        %v3190 = vunpack.c.l.b16 %v3116
        %v3191 = vunpack.c.h.b16 %v3116
        %v3192 = vunpack.c.l.b16 %v3117
        %v3193 = vunpack.c.h.b16 %v3117
        %v3194 = vunpack.c.l.b16 %v3118
        %v3195 = vunpack.c.h.b16 %v3118
        %v3196 = vunpack.c.l.b16 %v3119
        %v3197 = vunpack.c.h.b16 %v3119
        %v3198 = vunpack.c.l.b16 %v3120
        %v3199 = vunpack.c.h.b16 %v3120
        %v3200 = vunpack.c.l.b16 %v3121
        %v3201 = vunpack.c.h.b16 %v3121
        %v3202 = vunpack.c.l.b16 %v3122
        %v3203 = vunpack.c.h.b16 %v3122
        %v3204 = vunpack.c.l.b16 %v3123
        %v3205 = vunpack.c.h.b16 %v3123
        %v3206 = vunpack.c.l.b16 %v3124
        %v3207 = vunpack.c.h.b16 %v3124
        %v3208 = vunpack.c.l.b16 %v3125
        %v3209 = vunpack.c.h.b16 %v3125
        %v3210 = vunpack.c.l.b16 %v3126
        %v3211 = vunpack.c.h.b16 %v3126
        %v3212 = vunpack.c.l.b16 %v3127
        %v3213 = vunpack.c.h.b16 %v3127
        %v3214 = vunpack.c.l.b16 %v3128
        %v3215 = vunpack.c.h.b16 %v3128
        %v3216 = vunpack.c.l.b16 %v3129
        %v3217 = vunpack.c.h.b16 %v3129
        %v3218 = vunpack.c.l.b16 %v3130
        %v3219 = vunpack.c.h.b16 %v3130
        %v3220 = vunpack.c.l.b16 %v3131
        %v3221 = vunpack.c.h.b16 %v3131
        %v3222 = vunpack.c.l.b16 %v3132
        %v3223 = vunpack.c.h.b16 %v3132
        %v3224 = vunpack.c.l.b16 %v3133
        %v3225 = vunpack.c.h.b16 %v3133
        %v3226 = vunpack.c.l.b16 %v3134
        %v3227 = vunpack.c.h.b16 %v3134
        %v3228 = vunpack.c.l.b16 %v3135
        %v3229 = vunpack.c.h.b16 %v3135
        %v3230 = vunpack.c.l.b16 %v3136
        %v3231 = vunpack.c.h.b16 %v3136
        %v3232 = vunpack.c.l.b16 %v3137
        %v3233 = vunpack.c.h.b16 %v3137
        %v3234 = vunpack.c.l.b16 %v3138
        %v3235 = vunpack.c.h.b16 %v3138
        %v3236 = vunpack.c.l.b16 %v3139
        %v3237 = vunpack.c.h.b16 %v3139
        %v3238 = vunpack.c.l.b16 %v3140
        %v3239 = vunpack.c.h.b16 %v3140
        %v3240 = vunpack.c.l.b16 %v3141
        %v3241 = vunpack.c.h.b16 %v3141
        %v3242 = vunpack.c.l.b16 %v3142
        %v3243 = vunpack.c.h.b16 %v3142
        %v3244 = vunpack.c.l.b16 %v3143
        %v3245 = vunpack.c.h.b16 %v3143
        %v3246 = vunpack.c.l.b16 %v3144
        %v3247 = vunpack.c.h.b16 %v3144
        %v3248 = vpack.c.b16 %v3188, %v3184
        %v3249 = vpack.c.b16 %v3189, %v3185
        %v3250 = vpack.c.b16 %v3190, %v3186
        %v3251 = vpack.c.b16 %v3191, %v3187
        %v3252 = vpack.c.b16 %v3196, %v3192
        %v3253 = vpack.c.b16 %v3197, %v3193
        %v3254 = vpack.c.b16 %v3198, %v3194
        %v3255 = vpack.c.b16 %v3199, %v3195
        %v3256 = vpack.c.b16 %v3204, %v3200
        %v3257 = vpack.c.b16 %v3205, %v3201
        %v3258 = vpack.c.b16 %v3206, %v3202
        %v3259 = vpack.c.b16 %v3207, %v3203
        %v3260 = vpack.c.b16 %v3212, %v3208
        %v3261 = vpack.c.b16 %v3213, %v3209
        %v3262 = vpack.c.b16 %v3214, %v3210
        %v3263 = vpack.c.b16 %v3215, %v3211
        %v3264 = vpack.c.b16 %v3220, %v3216
        %v3265 = vpack.c.b16 %v3221, %v3217
        %v3266 = vpack.c.b16 %v3222, %v3218
        %v3267 = vpack.c.b16 %v3223, %v3219
        %v3268 = vpack.c.b16 %v3228, %v3224
        %v3269 = vpack.c.b16 %v3229, %v3225
        %v3270 = vpack.c.b16 %v3230, %v3226
        %v3271 = vpack.c.b16 %v3231, %v3227
        %v3272 = vpack.c.b16 %v3236, %v3232
        %v3273 = vpack.c.b16 %v3237, %v3233
        %v3274 = vpack.c.b16 %v3238, %v3234
        %v3275 = vpack.c.b16 %v3239, %v3235
        %v3276 = vpack.c.b16 %v3244, %v3240
        %v3277 = vpack.c.b16 %v3245, %v3241
        %v3278 = vpack.c.b16 %v3246, %v3242
        %v3279 = vpack.c.b16 %v3247, %v3243
        %3312 = vmatprep.subr.bf16.mxu0 %v3249
        %3313 = vmatpush1.bf16.msra.mxu0 %v3248
        %3314 = vmatprep.subr.bf16.mxu0 %v3253
        %3315 = vmatpush1.bf16.msra.mxu0 %v3252
        %3316 = vmatprep.subr.bf16.mxu0 %v3257
        %3317 = vmatpush1.bf16.msra.mxu0 %v3256
        %3318 = vmatprep.subr.bf16.mxu0 %v3261
        %3319 = vmatpush1.bf16.msra.mxu0 %v3260
        %3320 = vmatprep.subr.bf16.mxu0 %v3265
        %3321 = vmatpush1.bf16.msra.mxu0 %v3264
        %3322 = vmatprep.subr.bf16.mxu0 %v3269
        %3323 = vmatpush1.bf16.msra.mxu0 %v3268
        %3324 = vmatprep.subr.bf16.mxu0 %v3273
        %3325 = vmatpush1.bf16.msra.mxu0 %v3272
        %3326 = vmatprep.subr.bf16.mxu0 %v3277
        %3327 = vmatpush1.bf16.msra.mxu0 %v3276
        %3328 = vmatprep.subr.bf16.mxu0 0
        %3329 = vmatpush1.bf16.msra.mxu0 0
        %3330 = vmatprep.subr.bf16.mxu0 0
        %3331 = vmatpush1.bf16.msra.mxu0 0
        %3332 = vmatprep.subr.bf16.mxu0 0
        %3333 = vmatpush1.bf16.msra.mxu0 0
        %3334 = vmatprep.subr.bf16.mxu0 0
        %3335 = vmatpush1.bf16.msra.mxu0 0
        %3336 = vmatprep.subr.bf16.mxu0 0
        %3337 = vmatpush1.bf16.msra.mxu0 0
        %3338 = vmatprep.subr.bf16.mxu0 0
        %3339 = vmatpush1.bf16.msra.mxu0 0
        %3340 = vmatprep.subr.bf16.mxu0 0
        %3341 = vmatpush1.bf16.msra.mxu0 0
        %3342 = vmatprep.subr.bf16.mxu0 0
        %3343 = vmatpush1.bf16.msra.mxu0 0
        %3344 = vmatprep.mubr.bf16.mxu0 0
        %3345 = vmatmul.mubr.bf16.gmra.mrb[0].mxu0 %v3150
        %v3346 = vpop.f32.mrb[0].mxu0
        %v3347 = vadd.f32 0.0, %v3346
        %v3348 = vpop.f32.mrb[0].mxu0
        %v3349 = vadd.f32 0.0, %v3348
        %v3350 = vpop.f32.mrb[0].mxu0
        %v3351 = vadd.f32 0.0, %v3350
        %v3352 = vpop.f32.mrb[0].mxu0
        %v3353 = vadd.f32 0.0, %v3352
        %3354 = vdwg.mxu0
        %3355 = vmatprep.subr.bf16.mxu0 %v3251
        %3356 = vmatpush1.bf16.msra.mxu0 %v3250
        %3357 = vmatprep.subr.bf16.mxu0 %v3255
        %3358 = vmatpush1.bf16.msra.mxu0 %v3254
        %3359 = vmatprep.subr.bf16.mxu0 %v3259
        %3360 = vmatpush1.bf16.msra.mxu0 %v3258
        %3361 = vmatprep.subr.bf16.mxu0 %v3263
        %3362 = vmatpush1.bf16.msra.mxu0 %v3262
        %3363 = vmatprep.subr.bf16.mxu0 %v3267
        %3364 = vmatpush1.bf16.msra.mxu0 %v3266
        %3365 = vmatprep.subr.bf16.mxu0 %v3271
        %3366 = vmatpush1.bf16.msra.mxu0 %v3270
        %3367 = vmatprep.subr.bf16.mxu0 %v3275
        %3368 = vmatpush1.bf16.msra.mxu0 %v3274
        %3369 = vmatprep.subr.bf16.mxu0 %v3279
        %3370 = vmatpush1.bf16.msra.mxu0 %v3278
        %3371 = vmatprep.subr.bf16.mxu0 0
        %3372 = vmatpush1.bf16.msra.mxu0 0
        %3373 = vmatprep.subr.bf16.mxu0 0
        %3374 = vmatpush1.bf16.msra.mxu0 0
        %3375 = vmatprep.subr.bf16.mxu0 0
        %3376 = vmatpush1.bf16.msra.mxu0 0
        %3377 = vmatprep.subr.bf16.mxu0 0
        %3378 = vmatpush1.bf16.msra.mxu0 0
        %3379 = vmatprep.subr.bf16.mxu0 0
        %3380 = vmatpush1.bf16.msra.mxu0 0
        %3381 = vmatprep.subr.bf16.mxu0 0
        %3382 = vmatpush1.bf16.msra.mxu0 0
        %3383 = vmatprep.subr.bf16.mxu0 0
        %3384 = vmatpush1.bf16.msra.mxu0 0
        %3385 = vmatprep.subr.bf16.mxu0 0
        %3386 = vmatpush1.bf16.msra.mxu0 0
        %3387 = vmatprep.mubr.bf16.mxu0 0
        %3388 = vmatmul.mubr.bf16.gmra.mrb[0].mxu0 %v3150
        %v3389 = vpop.f32.mrb[0].mxu0
        %v3390 = vadd.f32 0.0, %v3389
        %v3391 = vpop.f32.mrb[0].mxu0
        %v3392 = vadd.f32 0.0, %v3391
        %v3393 = vpop.f32.mrb[0].mxu0
        %v3394 = vadd.f32 0.0, %v3393
        %v3395 = vpop.f32.mrb[0].mxu0
        %v3396 = vadd.f32 0.0, %v3395
        %3397 = vdwg.mxu0
        %v3398 = vadd.f32 %v3103, %v3347
        %v3399 = vadd.f32 %v3104, %v3349
        %v3400 = vadd.f32 %v3105, %v3390
        %v3401 = vadd.f32 %v3106, %v3392
        %v3402 = vadd.f32 %v3107, %v3351
        %v3403 = vadd.f32 %v3108, %v3353
        %v3404 = vadd.f32 %v3109, %v3394
        %v3405 = vadd.f32 %v3110, %v3396
        %v3406 = vmul.f32 %v3398, 0.5
        %v3407 = vmul.f32 %v3399, 0.5
        %v3408 = vmul.f32 %v3400, 0.5
        %v3409 = vmul.f32 %v3401, 0.5
        %v3410 = vmul.f32 %v3402, 0.5
        %v3411 = vmul.f32 %v3403, 0.5
        %v3412 = vmul.f32 %v3404, 0.5
        %v3413 = vmul.f32 %v3405, 0.5
        %v3414 = vmul.f32 %v3398, 0.70710677
        %v3415 = vmul.f32 %v3399, 0.70710677
        %v3416 = vmul.f32 %v3400, 0.70710677
        %v3417 = vmul.f32 %v3401, 0.70710677
        %v3418 = vmul.f32 %v3402, 0.70710677
        %v3419 = vmul.f32 %v3403, 0.70710677
        %v3420 = vmul.f32 %v3404, 0.70710677
        %v3421 = vmul.f32 %v3405, 0.70710677
        %v3422 = verf.f32.pop %v3414
        %v3423 = verf.f32.pop %v3415
        %v3424 = verf.f32.pop %v3416
        %v3425 = verf.f32.pop %v3417
        %v3426 = verf.f32.pop %v3418
        %v3427 = verf.f32.pop %v3419
        %v3428 = verf.f32.pop %v3420
        %v3429 = verf.f32.pop %v3421
        %v3430 = vadd.f32 %v3422, 1.0
        %v3431 = vadd.f32 %v3423, 1.0
        %v3432 = vadd.f32 %v3424, 1.0
        %v3433 = vadd.f32 %v3425, 1.0
        %v3434 = vadd.f32 %v3426, 1.0
        %v3435 = vadd.f32 %v3427, 1.0
        %v3436 = vadd.f32 %v3428, 1.0
        %v3437 = vadd.f32 %v3429, 1.0
        %v3438 = vmul.f32 %v3406, %v3430
        %v3439 = vmul.f32 %v3407, %v3431
        %v3440 = vmul.f32 %v3408, %v3432
        %v3441 = vmul.f32 %v3409, %v3433
        %v3442 = vmul.f32 %v3410, %v3434
        %v3443 = vmul.f32 %v3411, %v3435
        %v3444 = vmul.f32 %v3412, %v3436
        %v3445 = vmul.f32 %v3413, %v3437
        %v3446 = vpack.c.bf16 %v3442, %v3438
        %v3447 = vpack.c.bf16 %v3443, %v3439
        %v3448 = vpack.c.bf16 %v3444, %v3440
        %v3449 = vpack.c.bf16 %v3445, %v3441
        %s3450 = scalar_lea.vmem [#allocation9], 256
        %v3451 = vld [vmem:[%s3450] sm:$0xff]
        %v3452 = vld [vmem:[%s3450 + $0x8] sm:$0xff]
        %v3453 = vld [vmem:[%s3450 + $0x10] sm:$0xff]
        %v3454 = vld [vmem:[%s3450 + $0x18] sm:$0xff]
        %v3455 = vld [vmem:[%s3450 + $0x20] sm:$0xff]
        %v3456 = vld [vmem:[%s3450 + $0x28] sm:$0xff]
        %v3457 = vld [vmem:[%s3450 + $0x30] sm:$0xff]
        %v3458 = vld [vmem:[%s3450 + $0x38] sm:$0xff]
        %v3459 = vld [vmem:[%s3450 + $0x40] sm:$0xff]
        %v3460 = vld [vmem:[%s3450 + $0x48] sm:$0xff]
        %v3461 = vld [vmem:[%s3450 + $0x50] sm:$0xff]
        %v3462 = vld [vmem:[%s3450 + $0x58] sm:$0xff]
        %v3463 = vld [vmem:[%s3450 + $0x60] sm:$0xff]
        %v3464 = vld [vmem:[%s3450 + $0x68] sm:$0xff]
        %v3465 = vld [vmem:[%s3450 + $0x70] sm:$0xff]
        %v3466 = vld [vmem:[%s3450 + $0x78] sm:$0xff]
        %v3467 = vld [vmem:[%s3450 + $0x80] sm:$0xff]
        %v3468 = vld [vmem:[%s3450 + $0x88] sm:$0xff]
        %v3469 = vld [vmem:[%s3450 + $0x90] sm:$0xff]
        %v3470 = vld [vmem:[%s3450 + $0x98] sm:$0xff]
        %v3471 = vld [vmem:[%s3450 + $0xa0] sm:$0xff]
        %v3472 = vld [vmem:[%s3450 + $0xa8] sm:$0xff]
        %v3473 = vld [vmem:[%s3450 + $0xb0] sm:$0xff]
        %v3474 = vld [vmem:[%s3450 + $0xb8] sm:$0xff]
        %v3475 = vld [vmem:[%s3450 + $0xc0] sm:$0xff]
        %v3476 = vld [vmem:[%s3450 + $0xc8] sm:$0xff]
        %v3477 = vld [vmem:[%s3450 + $0xd0] sm:$0xff]
        %v3478 = vld [vmem:[%s3450 + $0xd8] sm:$0xff]
        %v3479 = vld [vmem:[%s3450 + $0xe0] sm:$0xff]
        %v3480 = vld [vmem:[%s3450 + $0xe8] sm:$0xff]
        %v3481 = vld [vmem:[%s3450 + $0xf0] sm:$0xff]
        %v3482 = vld [vmem:[%s3450 + $0xf8] sm:$0xff]
        %v3515 = vunpack.c.l.b16 %v3451
        %v3516 = vunpack.c.h.b16 %v3451
        %v3517 = vunpack.c.l.b16 %v3452
        %v3518 = vunpack.c.h.b16 %v3452
        %v3519 = vunpack.c.l.b16 %v3453
        %v3520 = vunpack.c.h.b16 %v3453
        %v3521 = vunpack.c.l.b16 %v3454
        %v3522 = vunpack.c.h.b16 %v3454
        %v3523 = vunpack.c.l.b16 %v3455
        %v3524 = vunpack.c.h.b16 %v3455
        %v3525 = vunpack.c.l.b16 %v3456
        %v3526 = vunpack.c.h.b16 %v3456
        %v3527 = vunpack.c.l.b16 %v3457
        %v3528 = vunpack.c.h.b16 %v3457
        %v3529 = vunpack.c.l.b16 %v3458
        %v3530 = vunpack.c.h.b16 %v3458
        %v3531 = vunpack.c.l.b16 %v3459
        %v3532 = vunpack.c.h.b16 %v3459
        %v3533 = vunpack.c.l.b16 %v3460
        %v3534 = vunpack.c.h.b16 %v3460
        %v3535 = vunpack.c.l.b16 %v3461
        %v3536 = vunpack.c.h.b16 %v3461
        %v3537 = vunpack.c.l.b16 %v3462
        %v3538 = vunpack.c.h.b16 %v3462
        %v3539 = vunpack.c.l.b16 %v3463
        %v3540 = vunpack.c.h.b16 %v3463
        %v3541 = vunpack.c.l.b16 %v3464
        %v3542 = vunpack.c.h.b16 %v3464
        %v3543 = vunpack.c.l.b16 %v3465
        %v3544 = vunpack.c.h.b16 %v3465
        %v3545 = vunpack.c.l.b16 %v3466
        %v3546 = vunpack.c.h.b16 %v3466
        %v3547 = vunpack.c.l.b16 %v3467
        %v3548 = vunpack.c.h.b16 %v3467
        %v3549 = vunpack.c.l.b16 %v3468
        %v3550 = vunpack.c.h.b16 %v3468
        %v3551 = vunpack.c.l.b16 %v3469
        %v3552 = vunpack.c.h.b16 %v3469
        %v3553 = vunpack.c.l.b16 %v3470
        %v3554 = vunpack.c.h.b16 %v3470
        %v3555 = vunpack.c.l.b16 %v3471
        %v3556 = vunpack.c.h.b16 %v3471
        %v3557 = vunpack.c.l.b16 %v3472
        %v3558 = vunpack.c.h.b16 %v3472
        %v3559 = vunpack.c.l.b16 %v3473
        %v3560 = vunpack.c.h.b16 %v3473
        %v3561 = vunpack.c.l.b16 %v3474
        %v3562 = vunpack.c.h.b16 %v3474
        %v3563 = vunpack.c.l.b16 %v3475
        %v3564 = vunpack.c.h.b16 %v3475
        %v3565 = vunpack.c.l.b16 %v3476
        %v3566 = vunpack.c.h.b16 %v3476
        %v3567 = vunpack.c.l.b16 %v3477
        %v3568 = vunpack.c.h.b16 %v3477
        %v3569 = vunpack.c.l.b16 %v3478
        %v3570 = vunpack.c.h.b16 %v3478
        %v3571 = vunpack.c.l.b16 %v3479
        %v3572 = vunpack.c.h.b16 %v3479
        %v3573 = vunpack.c.l.b16 %v3480
        %v3574 = vunpack.c.h.b16 %v3480
        %v3575 = vunpack.c.l.b16 %v3481
        %v3576 = vunpack.c.h.b16 %v3481
        %v3577 = vunpack.c.l.b16 %v3482
        %v3578 = vunpack.c.h.b16 %v3482
        %v3579 = vpack.c.b16 %v3519, %v3515
        %v3580 = vpack.c.b16 %v3520, %v3516
        %v3581 = vpack.c.b16 %v3521, %v3517
        %v3582 = vpack.c.b16 %v3522, %v3518
        %v3583 = vpack.c.b16 %v3527, %v3523
        %v3584 = vpack.c.b16 %v3528, %v3524
        %v3585 = vpack.c.b16 %v3529, %v3525
        %v3586 = vpack.c.b16 %v3530, %v3526
        %v3587 = vpack.c.b16 %v3535, %v3531
        %v3588 = vpack.c.b16 %v3536, %v3532
        %v3589 = vpack.c.b16 %v3537, %v3533
        %v3590 = vpack.c.b16 %v3538, %v3534
        %v3591 = vpack.c.b16 %v3543, %v3539
        %v3592 = vpack.c.b16 %v3544, %v3540
        %v3593 = vpack.c.b16 %v3545, %v3541
        %v3594 = vpack.c.b16 %v3546, %v3542
        %v3595 = vpack.c.b16 %v3551, %v3547
        %v3596 = vpack.c.b16 %v3552, %v3548
        %v3597 = vpack.c.b16 %v3553, %v3549
        %v3598 = vpack.c.b16 %v3554, %v3550
        %v3599 = vpack.c.b16 %v3559, %v3555
        %v3600 = vpack.c.b16 %v3560, %v3556
        %v3601 = vpack.c.b16 %v3561, %v3557
        %v3602 = vpack.c.b16 %v3562, %v3558
        %v3603 = vpack.c.b16 %v3567, %v3563
        %v3604 = vpack.c.b16 %v3568, %v3564
        %v3605 = vpack.c.b16 %v3569, %v3565
        %v3606 = vpack.c.b16 %v3570, %v3566
        %v3607 = vpack.c.b16 %v3575, %v3571
        %v3608 = vpack.c.b16 %v3576, %v3572
        %v3609 = vpack.c.b16 %v3577, %v3573
        %v3610 = vpack.c.b16 %v3578, %v3574
        %3643 = vmatprep.subr.bf16.mxu0 %v3580
        %3644 = vmatpush1.bf16.msra.mxu0 %v3579
        %3645 = vmatprep.subr.bf16.mxu0 %v3584
        %3646 = vmatpush1.bf16.msra.mxu0 %v3583
        %3647 = vmatprep.subr.bf16.mxu0 %v3588
        %3648 = vmatpush1.bf16.msra.mxu0 %v3587
        %3649 = vmatprep.subr.bf16.mxu0 %v3592
        %3650 = vmatpush1.bf16.msra.mxu0 %v3591
        %3651 = vmatprep.subr.bf16.mxu0 %v3596
        %3652 = vmatpush1.bf16.msra.mxu0 %v3595
        %3653 = vmatprep.subr.bf16.mxu0 %v3600
        %3654 = vmatpush1.bf16.msra.mxu0 %v3599
        %3655 = vmatprep.subr.bf16.mxu0 %v3604
        %3656 = vmatpush1.bf16.msra.mxu0 %v3603
        %3657 = vmatprep.subr.bf16.mxu0 %v3608
        %3658 = vmatpush1.bf16.msra.mxu0 %v3607
        %3659 = vmatprep.subr.bf16.mxu0 0
        %3660 = vmatpush1.bf16.msra.mxu0 0
        %3661 = vmatprep.subr.bf16.mxu0 0
        %3662 = vmatpush1.bf16.msra.mxu0 0
        %3663 = vmatprep.subr.bf16.mxu0 0
        %3664 = vmatpush1.bf16.msra.mxu0 0
        %3665 = vmatprep.subr.bf16.mxu0 0
        %3666 = vmatpush1.bf16.msra.mxu0 0
        %3667 = vmatprep.subr.bf16.mxu0 0
        %3668 = vmatpush1.bf16.msra.mxu0 0
        %3669 = vmatprep.subr.bf16.mxu0 0
        %3670 = vmatpush1.bf16.msra.mxu0 0
        %3671 = vmatprep.subr.bf16.mxu0 0
        %3672 = vmatpush1.bf16.msra.mxu0 0
        %3673 = vmatprep.subr.bf16.mxu0 0
        %3674 = vmatpush1.bf16.msra.mxu0 0
        %3675 = vmatprep.mubr.bf16.mxu0 0
        %3676 = vmatmul.mubr.bf16.gmra.mrb[0].mxu0 %v1940
        %v3677 = vpop.f32.mrb[0].mxu0
        %v3678 = vadd.f32 0.0, %v3677
        %v3679 = vpop.f32.mrb[0].mxu0
        %v3680 = vadd.f32 0.0, %v3679
        %v3681 = vpop.f32.mrb[0].mxu0
        %v3682 = vadd.f32 0.0, %v3681
        %v3683 = vpop.f32.mrb[0].mxu0
        %v3684 = vadd.f32 0.0, %v3683
        %3685 = vdwg.mxu0
        %3686 = vmatprep.subr.bf16.mxu0 %v3582
        %3687 = vmatpush1.bf16.msra.mxu0 %v3581
        %3688 = vmatprep.subr.bf16.mxu0 %v3586
        %3689 = vmatpush1.bf16.msra.mxu0 %v3585
        %3690 = vmatprep.subr.bf16.mxu0 %v3590
        %3691 = vmatpush1.bf16.msra.mxu0 %v3589
        %3692 = vmatprep.subr.bf16.mxu0 %v3594
        %3693 = vmatpush1.bf16.msra.mxu0 %v3593
        %3694 = vmatprep.subr.bf16.mxu0 %v3598
        %3695 = vmatpush1.bf16.msra.mxu0 %v3597
        %3696 = vmatprep.subr.bf16.mxu0 %v3602
        %3697 = vmatpush1.bf16.msra.mxu0 %v3601
        %3698 = vmatprep.subr.bf16.mxu0 %v3606
        %3699 = vmatpush1.bf16.msra.mxu0 %v3605
        %3700 = vmatprep.subr.bf16.mxu0 %v3610
        %3701 = vmatpush1.bf16.msra.mxu0 %v3609
        %3702 = vmatprep.subr.bf16.mxu0 0
        %3703 = vmatpush1.bf16.msra.mxu0 0
        %3704 = vmatprep.subr.bf16.mxu0 0
        %3705 = vmatpush1.bf16.msra.mxu0 0
        %3706 = vmatprep.subr.bf16.mxu0 0
        %3707 = vmatpush1.bf16.msra.mxu0 0
        %3708 = vmatprep.subr.bf16.mxu0 0
        %3709 = vmatpush1.bf16.msra.mxu0 0
        %3710 = vmatprep.subr.bf16.mxu0 0
        %3711 = vmatpush1.bf16.msra.mxu0 0
        %3712 = vmatprep.subr.bf16.mxu0 0
        %3713 = vmatpush1.bf16.msra.mxu0 0
        %3714 = vmatprep.subr.bf16.mxu0 0
        %3715 = vmatpush1.bf16.msra.mxu0 0
        %3716 = vmatprep.subr.bf16.mxu0 0
        %3717 = vmatpush1.bf16.msra.mxu0 0
        %3718 = vmatprep.mubr.bf16.mxu0 0
        %3719 = vmatmul.mubr.bf16.gmra.mrb[0].mxu0 %v1940
        %v3720 = vpop.f32.mrb[0].mxu0
        %v3721 = vadd.f32 0.0, %v3720
        %v3722 = vpop.f32.mrb[0].mxu0
        %v3723 = vadd.f32 0.0, %v3722
        %v3724 = vpop.f32.mrb[0].mxu0
        %v3725 = vadd.f32 0.0, %v3724
        %v3726 = vpop.f32.mrb[0].mxu0
        %v3727 = vadd.f32 0.0, %v3726
        %3728 = vdwg.mxu0
        %v3729 = vadd.f32 %v1885, %v3678
        %v3730 = vadd.f32 %v1889, %v3680
        %v3731 = vadd.f32 %v1893, %v3721
        %v3732 = vadd.f32 %v1897, %v3723
        %v3733 = vadd.f32 %v1885, %v3682
        %v3734 = vadd.f32 %v1889, %v3684
        %v3735 = vadd.f32 %v1893, %v3725
        %v3736 = vadd.f32 %v1897, %v3727
        %s3737 = scalar_lea.vmem [#allocation9], 768
        %v3738 = vld [vmem:[%s3737] sm:$0xff]
        %v3739 = vld [vmem:[%s3737 + $0x8] sm:$0xff]
        %v3740 = vld [vmem:[%s3737 + $0x10] sm:$0xff]
        %v3741 = vld [vmem:[%s3737 + $0x18] sm:$0xff]
        %v3742 = vld [vmem:[%s3737 + $0x20] sm:$0xff]
        %v3743 = vld [vmem:[%s3737 + $0x28] sm:$0xff]
        %v3744 = vld [vmem:[%s3737 + $0x30] sm:$0xff]
        %v3745 = vld [vmem:[%s3737 + $0x38] sm:$0xff]
        %v3746 = vld [vmem:[%s3737 + $0x40] sm:$0xff]
        %v3747 = vld [vmem:[%s3737 + $0x48] sm:$0xff]
        %v3748 = vld [vmem:[%s3737 + $0x50] sm:$0xff]
        %v3749 = vld [vmem:[%s3737 + $0x58] sm:$0xff]
        %v3750 = vld [vmem:[%s3737 + $0x60] sm:$0xff]
        %v3751 = vld [vmem:[%s3737 + $0x68] sm:$0xff]
        %v3752 = vld [vmem:[%s3737 + $0x70] sm:$0xff]
        %v3753 = vld [vmem:[%s3737 + $0x78] sm:$0xff]
        %v3754 = vld [vmem:[%s3737 + $0x80] sm:$0xff]
        %v3755 = vld [vmem:[%s3737 + $0x88] sm:$0xff]
        %v3756 = vld [vmem:[%s3737 + $0x90] sm:$0xff]
        %v3757 = vld [vmem:[%s3737 + $0x98] sm:$0xff]
        %v3758 = vld [vmem:[%s3737 + $0xa0] sm:$0xff]
        %v3759 = vld [vmem:[%s3737 + $0xa8] sm:$0xff]
        %v3760 = vld [vmem:[%s3737 + $0xb0] sm:$0xff]
        %v3761 = vld [vmem:[%s3737 + $0xb8] sm:$0xff]
        %v3762 = vld [vmem:[%s3737 + $0xc0] sm:$0xff]
        %v3763 = vld [vmem:[%s3737 + $0xc8] sm:$0xff]
        %v3764 = vld [vmem:[%s3737 + $0xd0] sm:$0xff]
        %v3765 = vld [vmem:[%s3737 + $0xd8] sm:$0xff]
        %v3766 = vld [vmem:[%s3737 + $0xe0] sm:$0xff]
        %v3767 = vld [vmem:[%s3737 + $0xe8] sm:$0xff]
        %v3768 = vld [vmem:[%s3737 + $0xf0] sm:$0xff]
        %v3769 = vld [vmem:[%s3737 + $0xf8] sm:$0xff]
        %v3802 = vunpack.c.l.b16 %v3738
        %v3803 = vunpack.c.h.b16 %v3738
        %v3804 = vunpack.c.l.b16 %v3739
        %v3805 = vunpack.c.h.b16 %v3739
        %v3806 = vunpack.c.l.b16 %v3740
        %v3807 = vunpack.c.h.b16 %v3740
        %v3808 = vunpack.c.l.b16 %v3741
        %v3809 = vunpack.c.h.b16 %v3741
        %v3810 = vunpack.c.l.b16 %v3742
        %v3811 = vunpack.c.h.b16 %v3742
        %v3812 = vunpack.c.l.b16 %v3743
        %v3813 = vunpack.c.h.b16 %v3743
        %v3814 = vunpack.c.l.b16 %v3744
        %v3815 = vunpack.c.h.b16 %v3744
        %v3816 = vunpack.c.l.b16 %v3745
        %v3817 = vunpack.c.h.b16 %v3745
        %v3818 = vunpack.c.l.b16 %v3746
        %v3819 = vunpack.c.h.b16 %v3746
        %v3820 = vunpack.c.l.b16 %v3747
        %v3821 = vunpack.c.h.b16 %v3747
        %v3822 = vunpack.c.l.b16 %v3748
        %v3823 = vunpack.c.h.b16 %v3748
        %v3824 = vunpack.c.l.b16 %v3749
        %v3825 = vunpack.c.h.b16 %v3749
        %v3826 = vunpack.c.l.b16 %v3750
        %v3827 = vunpack.c.h.b16 %v3750
        %v3828 = vunpack.c.l.b16 %v3751
        %v3829 = vunpack.c.h.b16 %v3751
        %v3830 = vunpack.c.l.b16 %v3752
        %v3831 = vunpack.c.h.b16 %v3752
        %v3832 = vunpack.c.l.b16 %v3753
        %v3833 = vunpack.c.h.b16 %v3753
        %v3834 = vunpack.c.l.b16 %v3754
        %v3835 = vunpack.c.h.b16 %v3754
        %v3836 = vunpack.c.l.b16 %v3755
        %v3837 = vunpack.c.h.b16 %v3755
        %v3838 = vunpack.c.l.b16 %v3756
        %v3839 = vunpack.c.h.b16 %v3756
        %v3840 = vunpack.c.l.b16 %v3757
        %v3841 = vunpack.c.h.b16 %v3757
        %v3842 = vunpack.c.l.b16 %v3758
        %v3843 = vunpack.c.h.b16 %v3758
        %v3844 = vunpack.c.l.b16 %v3759
        %v3845 = vunpack.c.h.b16 %v3759
        %v3846 = vunpack.c.l.b16 %v3760
        %v3847 = vunpack.c.h.b16 %v3760
        %v3848 = vunpack.c.l.b16 %v3761
        %v3849 = vunpack.c.h.b16 %v3761
        %v3850 = vunpack.c.l.b16 %v3762
        %v3851 = vunpack.c.h.b16 %v3762
        %v3852 = vunpack.c.l.b16 %v3763
        %v3853 = vunpack.c.h.b16 %v3763
        %v3854 = vunpack.c.l.b16 %v3764
        %v3855 = vunpack.c.h.b16 %v3764
        %v3856 = vunpack.c.l.b16 %v3765
        %v3857 = vunpack.c.h.b16 %v3765
        %v3858 = vunpack.c.l.b16 %v3766
        %v3859 = vunpack.c.h.b16 %v3766
        %v3860 = vunpack.c.l.b16 %v3767
        %v3861 = vunpack.c.h.b16 %v3767
        %v3862 = vunpack.c.l.b16 %v3768
        %v3863 = vunpack.c.h.b16 %v3768
        %v3864 = vunpack.c.l.b16 %v3769
        %v3865 = vunpack.c.h.b16 %v3769
        %v3866 = vpack.c.b16 %v3806, %v3802
        %v3867 = vpack.c.b16 %v3807, %v3803
        %v3868 = vpack.c.b16 %v3808, %v3804
        %v3869 = vpack.c.b16 %v3809, %v3805
        %v3870 = vpack.c.b16 %v3814, %v3810
        %v3871 = vpack.c.b16 %v3815, %v3811
        %v3872 = vpack.c.b16 %v3816, %v3812
        %v3873 = vpack.c.b16 %v3817, %v3813
        %v3874 = vpack.c.b16 %v3822, %v3818
        %v3875 = vpack.c.b16 %v3823, %v3819
        %v3876 = vpack.c.b16 %v3824, %v3820
        %v3877 = vpack.c.b16 %v3825, %v3821
        %v3878 = vpack.c.b16 %v3830, %v3826
        %v3879 = vpack.c.b16 %v3831, %v3827
        %v3880 = vpack.c.b16 %v3832, %v3828
        %v3881 = vpack.c.b16 %v3833, %v3829
        %v3882 = vpack.c.b16 %v3838, %v3834
        %v3883 = vpack.c.b16 %v3839, %v3835
        %v3884 = vpack.c.b16 %v3840, %v3836
        %v3885 = vpack.c.b16 %v3841, %v3837
        %v3886 = vpack.c.b16 %v3846, %v3842
        %v3887 = vpack.c.b16 %v3847, %v3843
        %v3888 = vpack.c.b16 %v3848, %v3844
        %v3889 = vpack.c.b16 %v3849, %v3845
        %v3890 = vpack.c.b16 %v3854, %v3850
        %v3891 = vpack.c.b16 %v3855, %v3851
        %v3892 = vpack.c.b16 %v3856, %v3852
        %v3893 = vpack.c.b16 %v3857, %v3853
        %v3894 = vpack.c.b16 %v3862, %v3858
        %v3895 = vpack.c.b16 %v3863, %v3859
        %v3896 = vpack.c.b16 %v3864, %v3860
        %v3897 = vpack.c.b16 %v3865, %v3861
        %3930 = vmatprep.subr.bf16.mxu0 %v3867
        %3931 = vmatpush1.bf16.msra.mxu0 %v3866
        %3932 = vmatprep.subr.bf16.mxu0 %v3871
        %3933 = vmatpush1.bf16.msra.mxu0 %v3870
        %3934 = vmatprep.subr.bf16.mxu0 %v3875
        %3935 = vmatpush1.bf16.msra.mxu0 %v3874
        %3936 = vmatprep.subr.bf16.mxu0 %v3879
        %3937 = vmatpush1.bf16.msra.mxu0 %v3878
        %3938 = vmatprep.subr.bf16.mxu0 %v3883
        %3939 = vmatpush1.bf16.msra.mxu0 %v3882
        %3940 = vmatprep.subr.bf16.mxu0 %v3887
        %3941 = vmatpush1.bf16.msra.mxu0 %v3886
        %3942 = vmatprep.subr.bf16.mxu0 %v3891
        %3943 = vmatpush1.bf16.msra.mxu0 %v3890
        %3944 = vmatprep.subr.bf16.mxu0 %v3895
        %3945 = vmatpush1.bf16.msra.mxu0 %v3894
        %3946 = vmatprep.subr.bf16.mxu0 0
        %3947 = vmatpush1.bf16.msra.mxu0 0
        %3948 = vmatprep.subr.bf16.mxu0 0
        %3949 = vmatpush1.bf16.msra.mxu0 0
        %3950 = vmatprep.subr.bf16.mxu0 0
        %3951 = vmatpush1.bf16.msra.mxu0 0
        %3952 = vmatprep.subr.bf16.mxu0 0
        %3953 = vmatpush1.bf16.msra.mxu0 0
        %3954 = vmatprep.subr.bf16.mxu0 0
        %3955 = vmatpush1.bf16.msra.mxu0 0
        %3956 = vmatprep.subr.bf16.mxu0 0
        %3957 = vmatpush1.bf16.msra.mxu0 0
        %3958 = vmatprep.subr.bf16.mxu0 0
        %3959 = vmatpush1.bf16.msra.mxu0 0
        %3960 = vmatprep.subr.bf16.mxu0 0
        %3961 = vmatpush1.bf16.msra.mxu0 0
        %3962 = vmatprep.mubr.bf16.mxu0 0
        %3963 = vmatmul.mubr.bf16.gmra.mrb[0].mxu0 %v2251
        %v3964 = vpop.f32.mrb[0].mxu0
        %v3965 = vadd.f32 0.0, %v3964
        %v3966 = vpop.f32.mrb[0].mxu0
        %v3967 = vadd.f32 0.0, %v3966
        %v3968 = vpop.f32.mrb[0].mxu0
        %v3969 = vadd.f32 0.0, %v3968
        %v3970 = vpop.f32.mrb[0].mxu0
        %v3971 = vadd.f32 0.0, %v3970
        %3972 = vdwg.mxu0
        %3973 = vmatprep.subr.bf16.mxu0 %v3869
        %3974 = vmatpush1.bf16.msra.mxu0 %v3868
        %3975 = vmatprep.subr.bf16.mxu0 %v3873
        %3976 = vmatpush1.bf16.msra.mxu0 %v3872
        %3977 = vmatprep.subr.bf16.mxu0 %v3877
        %3978 = vmatpush1.bf16.msra.mxu0 %v3876
        %3979 = vmatprep.subr.bf16.mxu0 %v3881
        %3980 = vmatpush1.bf16.msra.mxu0 %v3880
        %3981 = vmatprep.subr.bf16.mxu0 %v3885
        %3982 = vmatpush1.bf16.msra.mxu0 %v3884
        %3983 = vmatprep.subr.bf16.mxu0 %v3889
        %3984 = vmatpush1.bf16.msra.mxu0 %v3888
        %3985 = vmatprep.subr.bf16.mxu0 %v3893
        %3986 = vmatpush1.bf16.msra.mxu0 %v3892
        %3987 = vmatprep.subr.bf16.mxu0 %v3897
        %3988 = vmatpush1.bf16.msra.mxu0 %v3896
        %3989 = vmatprep.subr.bf16.mxu0 0
        %3990 = vmatpush1.bf16.msra.mxu0 0
        %3991 = vmatprep.subr.bf16.mxu0 0
        %3992 = vmatpush1.bf16.msra.mxu0 0
        %3993 = vmatprep.subr.bf16.mxu0 0
        %3994 = vmatpush1.bf16.msra.mxu0 0
        %3995 = vmatprep.subr.bf16.mxu0 0
        %3996 = vmatpush1.bf16.msra.mxu0 0
        %3997 = vmatprep.subr.bf16.mxu0 0
        %3998 = vmatpush1.bf16.msra.mxu0 0
        %3999 = vmatprep.subr.bf16.mxu0 0
        %4000 = vmatpush1.bf16.msra.mxu0 0
        %4001 = vmatprep.subr.bf16.mxu0 0
        %4002 = vmatpush1.bf16.msra.mxu0 0
        %4003 = vmatprep.subr.bf16.mxu0 0
        %4004 = vmatpush1.bf16.msra.mxu0 0
        %4005 = vmatprep.mubr.bf16.mxu0 0
        %4006 = vmatmul.mubr.bf16.gmra.mrb[0].mxu0 %v2251
        %v4007 = vpop.f32.mrb[0].mxu0
        %v4008 = vadd.f32 0.0, %v4007
        %v4009 = vpop.f32.mrb[0].mxu0
        %v4010 = vadd.f32 0.0, %v4009
        %v4011 = vpop.f32.mrb[0].mxu0
        %v4012 = vadd.f32 0.0, %v4011
        %v4013 = vpop.f32.mrb[0].mxu0
        %v4014 = vadd.f32 0.0, %v4013
        %4015 = vdwg.mxu0
        %v4016 = vadd.f32 %v3729, %v3965
        %v4017 = vadd.f32 %v3730, %v3967
        %v4018 = vadd.f32 %v3731, %v4008
        %v4019 = vadd.f32 %v3732, %v4010
        %v4020 = vadd.f32 %v3733, %v3969
        %v4021 = vadd.f32 %v3734, %v3971
        %v4022 = vadd.f32 %v3735, %v4012
        %v4023 = vadd.f32 %v3736, %v4014
        %s4024 = scalar_lea.vmem [#allocation9], 1280
        %v4025 = vld [vmem:[%s4024] sm:$0xff]
        %v4026 = vld [vmem:[%s4024 + $0x8] sm:$0xff]
        %v4027 = vld [vmem:[%s4024 + $0x10] sm:$0xff]
        %v4028 = vld [vmem:[%s4024 + $0x18] sm:$0xff]
        %v4029 = vld [vmem:[%s4024 + $0x20] sm:$0xff]
        %v4030 = vld [vmem:[%s4024 + $0x28] sm:$0xff]
        %v4031 = vld [vmem:[%s4024 + $0x30] sm:$0xff]
        %v4032 = vld [vmem:[%s4024 + $0x38] sm:$0xff]
        %v4033 = vld [vmem:[%s4024 + $0x40] sm:$0xff]
        %v4034 = vld [vmem:[%s4024 + $0x48] sm:$0xff]
        %v4035 = vld [vmem:[%s4024 + $0x50] sm:$0xff]
        %v4036 = vld [vmem:[%s4024 + $0x58] sm:$0xff]
        %v4037 = vld [vmem:[%s4024 + $0x60] sm:$0xff]
        %v4038 = vld [vmem:[%s4024 + $0x68] sm:$0xff]
        %v4039 = vld [vmem:[%s4024 + $0x70] sm:$0xff]
        %v4040 = vld [vmem:[%s4024 + $0x78] sm:$0xff]
        %v4041 = vld [vmem:[%s4024 + $0x80] sm:$0xff]
        %v4042 = vld [vmem:[%s4024 + $0x88] sm:$0xff]
        %v4043 = vld [vmem:[%s4024 + $0x90] sm:$0xff]
        %v4044 = vld [vmem:[%s4024 + $0x98] sm:$0xff]
        %v4045 = vld [vmem:[%s4024 + $0xa0] sm:$0xff]
        %v4046 = vld [vmem:[%s4024 + $0xa8] sm:$0xff]
        %v4047 = vld [vmem:[%s4024 + $0xb0] sm:$0xff]
        %v4048 = vld [vmem:[%s4024 + $0xb8] sm:$0xff]
        %v4049 = vld [vmem:[%s4024 + $0xc0] sm:$0xff]
        %v4050 = vld [vmem:[%s4024 + $0xc8] sm:$0xff]
        %v4051 = vld [vmem:[%s4024 + $0xd0] sm:$0xff]
        %v4052 = vld [vmem:[%s4024 + $0xd8] sm:$0xff]
        %v4053 = vld [vmem:[%s4024 + $0xe0] sm:$0xff]
        %v4054 = vld [vmem:[%s4024 + $0xe8] sm:$0xff]
        %v4055 = vld [vmem:[%s4024 + $0xf0] sm:$0xff]
        %v4056 = vld [vmem:[%s4024 + $0xf8] sm:$0xff]
        %v4089 = vunpack.c.l.b16 %v4025
        %v4090 = vunpack.c.h.b16 %v4025
        %v4091 = vunpack.c.l.b16 %v4026
        %v4092 = vunpack.c.h.b16 %v4026
        %v4093 = vunpack.c.l.b16 %v4027
        %v4094 = vunpack.c.h.b16 %v4027
        %v4095 = vunpack.c.l.b16 %v4028
        %v4096 = vunpack.c.h.b16 %v4028
        %v4097 = vunpack.c.l.b16 %v4029
        %v4098 = vunpack.c.h.b16 %v4029
        %v4099 = vunpack.c.l.b16 %v4030
        %v4100 = vunpack.c.h.b16 %v4030
        %v4101 = vunpack.c.l.b16 %v4031
        %v4102 = vunpack.c.h.b16 %v4031
        %v4103 = vunpack.c.l.b16 %v4032
        %v4104 = vunpack.c.h.b16 %v4032
        %v4105 = vunpack.c.l.b16 %v4033
        %v4106 = vunpack.c.h.b16 %v4033
        %v4107 = vunpack.c.l.b16 %v4034
        %v4108 = vunpack.c.h.b16 %v4034
        %v4109 = vunpack.c.l.b16 %v4035
        %v4110 = vunpack.c.h.b16 %v4035
        %v4111 = vunpack.c.l.b16 %v4036
        %v4112 = vunpack.c.h.b16 %v4036
        %v4113 = vunpack.c.l.b16 %v4037
        %v4114 = vunpack.c.h.b16 %v4037
        %v4115 = vunpack.c.l.b16 %v4038
        %v4116 = vunpack.c.h.b16 %v4038
        %v4117 = vunpack.c.l.b16 %v4039
        %v4118 = vunpack.c.h.b16 %v4039
        %v4119 = vunpack.c.l.b16 %v4040
        %v4120 = vunpack.c.h.b16 %v4040
        %v4121 = vunpack.c.l.b16 %v4041
        %v4122 = vunpack.c.h.b16 %v4041
        %v4123 = vunpack.c.l.b16 %v4042
        %v4124 = vunpack.c.h.b16 %v4042
        %v4125 = vunpack.c.l.b16 %v4043
        %v4126 = vunpack.c.h.b16 %v4043
        %v4127 = vunpack.c.l.b16 %v4044
        %v4128 = vunpack.c.h.b16 %v4044
        %v4129 = vunpack.c.l.b16 %v4045
        %v4130 = vunpack.c.h.b16 %v4045
        %v4131 = vunpack.c.l.b16 %v4046
        %v4132 = vunpack.c.h.b16 %v4046
        %v4133 = vunpack.c.l.b16 %v4047
        %v4134 = vunpack.c.h.b16 %v4047
        %v4135 = vunpack.c.l.b16 %v4048
        %v4136 = vunpack.c.h.b16 %v4048
        %v4137 = vunpack.c.l.b16 %v4049
        %v4138 = vunpack.c.h.b16 %v4049
        %v4139 = vunpack.c.l.b16 %v4050
        %v4140 = vunpack.c.h.b16 %v4050
        %v4141 = vunpack.c.l.b16 %v4051
        %v4142 = vunpack.c.h.b16 %v4051
        %v4143 = vunpack.c.l.b16 %v4052
        %v4144 = vunpack.c.h.b16 %v4052
        %v4145 = vunpack.c.l.b16 %v4053
        %v4146 = vunpack.c.h.b16 %v4053
        %v4147 = vunpack.c.l.b16 %v4054
        %v4148 = vunpack.c.h.b16 %v4054
        %v4149 = vunpack.c.l.b16 %v4055
        %v4150 = vunpack.c.h.b16 %v4055
        %v4151 = vunpack.c.l.b16 %v4056
        %v4152 = vunpack.c.h.b16 %v4056
        %v4153 = vpack.c.b16 %v4093, %v4089
        %v4154 = vpack.c.b16 %v4094, %v4090
        %v4155 = vpack.c.b16 %v4095, %v4091
        %v4156 = vpack.c.b16 %v4096, %v4092
        %v4157 = vpack.c.b16 %v4101, %v4097
        %v4158 = vpack.c.b16 %v4102, %v4098
        %v4159 = vpack.c.b16 %v4103, %v4099
        %v4160 = vpack.c.b16 %v4104, %v4100
        %v4161 = vpack.c.b16 %v4109, %v4105
        %v4162 = vpack.c.b16 %v4110, %v4106
        %v4163 = vpack.c.b16 %v4111, %v4107
        %v4164 = vpack.c.b16 %v4112, %v4108
        %v4165 = vpack.c.b16 %v4117, %v4113
        %v4166 = vpack.c.b16 %v4118, %v4114
        %v4167 = vpack.c.b16 %v4119, %v4115
        %v4168 = vpack.c.b16 %v4120, %v4116
        %v4169 = vpack.c.b16 %v4125, %v4121
        %v4170 = vpack.c.b16 %v4126, %v4122
        %v4171 = vpack.c.b16 %v4127, %v4123
        %v4172 = vpack.c.b16 %v4128, %v4124
        %v4173 = vpack.c.b16 %v4133, %v4129
        %v4174 = vpack.c.b16 %v4134, %v4130
        %v4175 = vpack.c.b16 %v4135, %v4131
        %v4176 = vpack.c.b16 %v4136, %v4132
        %v4177 = vpack.c.b16 %v4141, %v4137
        %v4178 = vpack.c.b16 %v4142, %v4138
        %v4179 = vpack.c.b16 %v4143, %v4139
        %v4180 = vpack.c.b16 %v4144, %v4140
        %v4181 = vpack.c.b16 %v4149, %v4145
        %v4182 = vpack.c.b16 %v4150, %v4146
        %v4183 = vpack.c.b16 %v4151, %v4147
        %v4184 = vpack.c.b16 %v4152, %v4148
        %4217 = vmatprep.subr.bf16.mxu0 %v4154
        %4218 = vmatpush1.bf16.msra.mxu0 %v4153
        %4219 = vmatprep.subr.bf16.mxu0 %v4158
        %4220 = vmatpush1.bf16.msra.mxu0 %v4157
        %4221 = vmatprep.subr.bf16.mxu0 %v4162
        %4222 = vmatpush1.bf16.msra.mxu0 %v4161
        %4223 = vmatprep.subr.bf16.mxu0 %v4166
        %4224 = vmatpush1.bf16.msra.mxu0 %v4165
        %4225 = vmatprep.subr.bf16.mxu0 %v4170
        %4226 = vmatpush1.bf16.msra.mxu0 %v4169
        %4227 = vmatprep.subr.bf16.mxu0 %v4174
        %4228 = vmatpush1.bf16.msra.mxu0 %v4173
        %4229 = vmatprep.subr.bf16.mxu0 %v4178
        %4230 = vmatpush1.bf16.msra.mxu0 %v4177
        %4231 = vmatprep.subr.bf16.mxu0 %v4182
        %4232 = vmatpush1.bf16.msra.mxu0 %v4181
        %4233 = vmatprep.subr.bf16.mxu0 0
        %4234 = vmatpush1.bf16.msra.mxu0 0
        %4235 = vmatprep.subr.bf16.mxu0 0
        %4236 = vmatpush1.bf16.msra.mxu0 0
        %4237 = vmatprep.subr.bf16.mxu0 0
        %4238 = vmatpush1.bf16.msra.mxu0 0
        %4239 = vmatprep.subr.bf16.mxu0 0
        %4240 = vmatpush1.bf16.msra.mxu0 0
        %4241 = vmatprep.subr.bf16.mxu0 0
        %4242 = vmatpush1.bf16.msra.mxu0 0
        %4243 = vmatprep.subr.bf16.mxu0 0
        %4244 = vmatpush1.bf16.msra.mxu0 0
        %4245 = vmatprep.subr.bf16.mxu0 0
        %4246 = vmatpush1.bf16.msra.mxu0 0
        %4247 = vmatprep.subr.bf16.mxu0 0
        %4248 = vmatpush1.bf16.msra.mxu0 0
        %4249 = vmatprep.mubr.bf16.mxu0 0
        %4250 = vmatmul.mubr.bf16.gmra.mrb[0].mxu0 %v2546
        %v4251 = vpop.f32.mrb[0].mxu0
        %v4252 = vadd.f32 0.0, %v4251
        %v4253 = vpop.f32.mrb[0].mxu0
        %v4254 = vadd.f32 0.0, %v4253
        %v4255 = vpop.f32.mrb[0].mxu0
        %v4256 = vadd.f32 0.0, %v4255
        %v4257 = vpop.f32.mrb[0].mxu0
        %v4258 = vadd.f32 0.0, %v4257
        %4259 = vdwg.mxu0
        %4260 = vmatprep.subr.bf16.mxu0 %v4156
        %4261 = vmatpush1.bf16.msra.mxu0 %v4155
        %4262 = vmatprep.subr.bf16.mxu0 %v4160
        %4263 = vmatpush1.bf16.msra.mxu0 %v4159
        %4264 = vmatprep.subr.bf16.mxu0 %v4164
        %4265 = vmatpush1.bf16.msra.mxu0 %v4163
        %4266 = vmatprep.subr.bf16.mxu0 %v4168
        %4267 = vmatpush1.bf16.msra.mxu0 %v4167
        %4268 = vmatprep.subr.bf16.mxu0 %v4172
        %4269 = vmatpush1.bf16.msra.mxu0 %v4171
        %4270 = vmatprep.subr.bf16.mxu0 %v4176
        %4271 = vmatpush1.bf16.msra.mxu0 %v4175
        %4272 = vmatprep.subr.bf16.mxu0 %v4180
        %4273 = vmatpush1.bf16.msra.mxu0 %v4179
        %4274 = vmatprep.subr.bf16.mxu0 %v4184
        %4275 = vmatpush1.bf16.msra.mxu0 %v4183
        %4276 = vmatprep.subr.bf16.mxu0 0
        %4277 = vmatpush1.bf16.msra.mxu0 0
        %4278 = vmatprep.subr.bf16.mxu0 0
        %4279 = vmatpush1.bf16.msra.mxu0 0
        %4280 = vmatprep.subr.bf16.mxu0 0
        %4281 = vmatpush1.bf16.msra.mxu0 0
        %4282 = vmatprep.subr.bf16.mxu0 0
        %4283 = vmatpush1.bf16.msra.mxu0 0
        %4284 = vmatprep.subr.bf16.mxu0 0
        %4285 = vmatpush1.bf16.msra.mxu0 0
        %4286 = vmatprep.subr.bf16.mxu0 0
        %4287 = vmatpush1.bf16.msra.mxu0 0
        %4288 = vmatprep.subr.bf16.mxu0 0
        %4289 = vmatpush1.bf16.msra.mxu0 0
        %4290 = vmatprep.subr.bf16.mxu0 0
        %4291 = vmatpush1.bf16.msra.mxu0 0
        %4292 = vmatprep.mubr.bf16.mxu0 0
        %4293 = vmatmul.mubr.bf16.gmra.mrb[0].mxu0 %v2546
        %v4294 = vpop.f32.mrb[0].mxu0
        %v4295 = vadd.f32 0.0, %v4294
        %v4296 = vpop.f32.mrb[0].mxu0
        %v4297 = vadd.f32 0.0, %v4296
        %v4298 = vpop.f32.mrb[0].mxu0
        %v4299 = vadd.f32 0.0, %v4298
        %v4300 = vpop.f32.mrb[0].mxu0
        %v4301 = vadd.f32 0.0, %v4300
        %4302 = vdwg.mxu0
        %v4303 = vadd.f32 %v4016, %v4252
        %v4304 = vadd.f32 %v4017, %v4254
        %v4305 = vadd.f32 %v4018, %v4295
        %v4306 = vadd.f32 %v4019, %v4297
        %v4307 = vadd.f32 %v4020, %v4256
        %v4308 = vadd.f32 %v4021, %v4258
        %v4309 = vadd.f32 %v4022, %v4299
        %v4310 = vadd.f32 %v4023, %v4301
        %s4311 = scalar_lea.vmem [#allocation9], 1792
        %v4312 = vld [vmem:[%s4311] sm:$0xff]
        %v4313 = vld [vmem:[%s4311 + $0x8] sm:$0xff]
        %v4314 = vld [vmem:[%s4311 + $0x10] sm:$0xff]
        %v4315 = vld [vmem:[%s4311 + $0x18] sm:$0xff]
        %v4316 = vld [vmem:[%s4311 + $0x20] sm:$0xff]
        %v4317 = vld [vmem:[%s4311 + $0x28] sm:$0xff]
        %v4318 = vld [vmem:[%s4311 + $0x30] sm:$0xff]
        %v4319 = vld [vmem:[%s4311 + $0x38] sm:$0xff]
        %v4320 = vld [vmem:[%s4311 + $0x40] sm:$0xff]
        %v4321 = vld [vmem:[%s4311 + $0x48] sm:$0xff]
        %v4322 = vld [vmem:[%s4311 + $0x50] sm:$0xff]
        %v4323 = vld [vmem:[%s4311 + $0x58] sm:$0xff]
        %v4324 = vld [vmem:[%s4311 + $0x60] sm:$0xff]
        %v4325 = vld [vmem:[%s4311 + $0x68] sm:$0xff]
        %v4326 = vld [vmem:[%s4311 + $0x70] sm:$0xff]
        %v4327 = vld [vmem:[%s4311 + $0x78] sm:$0xff]
        %v4328 = vld [vmem:[%s4311 + $0x80] sm:$0xff]
        %v4329 = vld [vmem:[%s4311 + $0x88] sm:$0xff]
        %v4330 = vld [vmem:[%s4311 + $0x90] sm:$0xff]
        %v4331 = vld [vmem:[%s4311 + $0x98] sm:$0xff]
        %v4332 = vld [vmem:[%s4311 + $0xa0] sm:$0xff]
        %v4333 = vld [vmem:[%s4311 + $0xa8] sm:$0xff]
        %v4334 = vld [vmem:[%s4311 + $0xb0] sm:$0xff]
        %v4335 = vld [vmem:[%s4311 + $0xb8] sm:$0xff]
        %v4336 = vld [vmem:[%s4311 + $0xc0] sm:$0xff]
        %v4337 = vld [vmem:[%s4311 + $0xc8] sm:$0xff]
        %v4338 = vld [vmem:[%s4311 + $0xd0] sm:$0xff]
        %v4339 = vld [vmem:[%s4311 + $0xd8] sm:$0xff]
        %v4340 = vld [vmem:[%s4311 + $0xe0] sm:$0xff]
        %v4341 = vld [vmem:[%s4311 + $0xe8] sm:$0xff]
        %v4342 = vld [vmem:[%s4311 + $0xf0] sm:$0xff]
        %v4343 = vld [vmem:[%s4311 + $0xf8] sm:$0xff]
        %v4376 = vunpack.c.l.b16 %v4312
        %v4377 = vunpack.c.h.b16 %v4312
        %v4378 = vunpack.c.l.b16 %v4313
        %v4379 = vunpack.c.h.b16 %v4313
        %v4380 = vunpack.c.l.b16 %v4314
        %v4381 = vunpack.c.h.b16 %v4314
        %v4382 = vunpack.c.l.b16 %v4315
        %v4383 = vunpack.c.h.b16 %v4315
        %v4384 = vunpack.c.l.b16 %v4316
        %v4385 = vunpack.c.h.b16 %v4316
        %v4386 = vunpack.c.l.b16 %v4317
        %v4387 = vunpack.c.h.b16 %v4317
        %v4388 = vunpack.c.l.b16 %v4318
        %v4389 = vunpack.c.h.b16 %v4318
        %v4390 = vunpack.c.l.b16 %v4319
        %v4391 = vunpack.c.h.b16 %v4319
        %v4392 = vunpack.c.l.b16 %v4320
        %v4393 = vunpack.c.h.b16 %v4320
        %v4394 = vunpack.c.l.b16 %v4321
        %v4395 = vunpack.c.h.b16 %v4321
        %v4396 = vunpack.c.l.b16 %v4322
        %v4397 = vunpack.c.h.b16 %v4322
        %v4398 = vunpack.c.l.b16 %v4323
        %v4399 = vunpack.c.h.b16 %v4323
        %v4400 = vunpack.c.l.b16 %v4324
        %v4401 = vunpack.c.h.b16 %v4324
        %v4402 = vunpack.c.l.b16 %v4325
        %v4403 = vunpack.c.h.b16 %v4325
        %v4404 = vunpack.c.l.b16 %v4326
        %v4405 = vunpack.c.h.b16 %v4326
        %v4406 = vunpack.c.l.b16 %v4327
        %v4407 = vunpack.c.h.b16 %v4327
        %v4408 = vunpack.c.l.b16 %v4328
        %v4409 = vunpack.c.h.b16 %v4328
        %v4410 = vunpack.c.l.b16 %v4329
        %v4411 = vunpack.c.h.b16 %v4329
        %v4412 = vunpack.c.l.b16 %v4330
        %v4413 = vunpack.c.h.b16 %v4330
        %v4414 = vunpack.c.l.b16 %v4331
        %v4415 = vunpack.c.h.b16 %v4331
        %v4416 = vunpack.c.l.b16 %v4332
        %v4417 = vunpack.c.h.b16 %v4332
        %v4418 = vunpack.c.l.b16 %v4333
        %v4419 = vunpack.c.h.b16 %v4333
        %v4420 = vunpack.c.l.b16 %v4334
        %v4421 = vunpack.c.h.b16 %v4334
        %v4422 = vunpack.c.l.b16 %v4335
        %v4423 = vunpack.c.h.b16 %v4335
        %v4424 = vunpack.c.l.b16 %v4336
        %v4425 = vunpack.c.h.b16 %v4336
        %v4426 = vunpack.c.l.b16 %v4337
        %v4427 = vunpack.c.h.b16 %v4337
        %v4428 = vunpack.c.l.b16 %v4338
        %v4429 = vunpack.c.h.b16 %v4338
        %v4430 = vunpack.c.l.b16 %v4339
        %v4431 = vunpack.c.h.b16 %v4339
        %v4432 = vunpack.c.l.b16 %v4340
        %v4433 = vunpack.c.h.b16 %v4340
        %v4434 = vunpack.c.l.b16 %v4341
        %v4435 = vunpack.c.h.b16 %v4341
        %v4436 = vunpack.c.l.b16 %v4342
        %v4437 = vunpack.c.h.b16 %v4342
        %v4438 = vunpack.c.l.b16 %v4343
        %v4439 = vunpack.c.h.b16 %v4343
        %v4440 = vpack.c.b16 %v4380, %v4376
        %v4441 = vpack.c.b16 %v4381, %v4377
        %v4442 = vpack.c.b16 %v4382, %v4378
        %v4443 = vpack.c.b16 %v4383, %v4379
        %v4444 = vpack.c.b16 %v4388, %v4384
        %v4445 = vpack.c.b16 %v4389, %v4385
        %v4446 = vpack.c.b16 %v4390, %v4386
        %v4447 = vpack.c.b16 %v4391, %v4387
        %v4448 = vpack.c.b16 %v4396, %v4392
        %v4449 = vpack.c.b16 %v4397, %v4393
        %v4450 = vpack.c.b16 %v4398, %v4394
        %v4451 = vpack.c.b16 %v4399, %v4395
        %v4452 = vpack.c.b16 %v4404, %v4400
        %v4453 = vpack.c.b16 %v4405, %v4401
        %v4454 = vpack.c.b16 %v4406, %v4402
        %v4455 = vpack.c.b16 %v4407, %v4403
        %v4456 = vpack.c.b16 %v4412, %v4408
        %v4457 = vpack.c.b16 %v4413, %v4409
        %v4458 = vpack.c.b16 %v4414, %v4410
        %v4459 = vpack.c.b16 %v4415, %v4411
        %v4460 = vpack.c.b16 %v4420, %v4416
        %v4461 = vpack.c.b16 %v4421, %v4417
        %v4462 = vpack.c.b16 %v4422, %v4418
        %v4463 = vpack.c.b16 %v4423, %v4419
        %v4464 = vpack.c.b16 %v4428, %v4424
        %v4465 = vpack.c.b16 %v4429, %v4425
        %v4466 = vpack.c.b16 %v4430, %v4426
        %v4467 = vpack.c.b16 %v4431, %v4427
        %v4468 = vpack.c.b16 %v4436, %v4432
        %v4469 = vpack.c.b16 %v4437, %v4433
        %v4470 = vpack.c.b16 %v4438, %v4434
        %v4471 = vpack.c.b16 %v4439, %v4435
        %4504 = vmatprep.subr.bf16.mxu0 %v4441
        %4505 = vmatpush1.bf16.msra.mxu0 %v4440
        %4506 = vmatprep.subr.bf16.mxu0 %v4445
        %4507 = vmatpush1.bf16.msra.mxu0 %v4444
        %4508 = vmatprep.subr.bf16.mxu0 %v4449
        %4509 = vmatpush1.bf16.msra.mxu0 %v4448
        %4510 = vmatprep.subr.bf16.mxu0 %v4453
        %4511 = vmatpush1.bf16.msra.mxu0 %v4452
        %4512 = vmatprep.subr.bf16.mxu0 %v4457
        %4513 = vmatpush1.bf16.msra.mxu0 %v4456
        %4514 = vmatprep.subr.bf16.mxu0 %v4461
        %4515 = vmatpush1.bf16.msra.mxu0 %v4460
        %4516 = vmatprep.subr.bf16.mxu0 %v4465
        %4517 = vmatpush1.bf16.msra.mxu0 %v4464
        %4518 = vmatprep.subr.bf16.mxu0 %v4469
        %4519 = vmatpush1.bf16.msra.mxu0 %v4468
        %4520 = vmatprep.subr.bf16.mxu0 0
        %4521 = vmatpush1.bf16.msra.mxu0 0
        %4522 = vmatprep.subr.bf16.mxu0 0
        %4523 = vmatpush1.bf16.msra.mxu0 0
        %4524 = vmatprep.subr.bf16.mxu0 0
        %4525 = vmatpush1.bf16.msra.mxu0 0
        %4526 = vmatprep.subr.bf16.mxu0 0
        %4527 = vmatpush1.bf16.msra.mxu0 0
        %4528 = vmatprep.subr.bf16.mxu0 0
        %4529 = vmatpush1.bf16.msra.mxu0 0
        %4530 = vmatprep.subr.bf16.mxu0 0
        %4531 = vmatpush1.bf16.msra.mxu0 0
        %4532 = vmatprep.subr.bf16.mxu0 0
        %4533 = vmatpush1.bf16.msra.mxu0 0
        %4534 = vmatprep.subr.bf16.mxu0 0
        %4535 = vmatpush1.bf16.msra.mxu0 0
        %4536 = vmatprep.mubr.bf16.mxu0 0
        %4537 = vmatmul.mubr.bf16.gmra.mrb[0].mxu0 %v2855
        %v4538 = vpop.f32.mrb[0].mxu0
        %v4539 = vadd.f32 0.0, %v4538
        %v4540 = vpop.f32.mrb[0].mxu0
        %v4541 = vadd.f32 0.0, %v4540
        %v4542 = vpop.f32.mrb[0].mxu0
        %v4543 = vadd.f32 0.0, %v4542
        %v4544 = vpop.f32.mrb[0].mxu0
        %v4545 = vadd.f32 0.0, %v4544
        %4546 = vdwg.mxu0
        %4547 = vmatprep.subr.bf16.mxu0 %v4443
        %4548 = vmatpush1.bf16.msra.mxu0 %v4442
        %4549 = vmatprep.subr.bf16.mxu0 %v4447
        %4550 = vmatpush1.bf16.msra.mxu0 %v4446
        %4551 = vmatprep.subr.bf16.mxu0 %v4451
        %4552 = vmatpush1.bf16.msra.mxu0 %v4450
        %4553 = vmatprep.subr.bf16.mxu0 %v4455
        %4554 = vmatpush1.bf16.msra.mxu0 %v4454
        %4555 = vmatprep.subr.bf16.mxu0 %v4459
        %4556 = vmatpush1.bf16.msra.mxu0 %v4458
        %4557 = vmatprep.subr.bf16.mxu0 %v4463
        %4558 = vmatpush1.bf16.msra.mxu0 %v4462
        %4559 = vmatprep.subr.bf16.mxu0 %v4467
        %4560 = vmatpush1.bf16.msra.mxu0 %v4466
        %4561 = vmatprep.subr.bf16.mxu0 %v4471
        %4562 = vmatpush1.bf16.msra.mxu0 %v4470
        %4563 = vmatprep.subr.bf16.mxu0 0
        %4564 = vmatpush1.bf16.msra.mxu0 0
        %4565 = vmatprep.subr.bf16.mxu0 0
        %4566 = vmatpush1.bf16.msra.mxu0 0
        %4567 = vmatprep.subr.bf16.mxu0 0
        %4568 = vmatpush1.bf16.msra.mxu0 0
        %4569 = vmatprep.subr.bf16.mxu0 0
        %4570 = vmatpush1.bf16.msra.mxu0 0
        %4571 = vmatprep.subr.bf16.mxu0 0
        %4572 = vmatpush1.bf16.msra.mxu0 0
        %4573 = vmatprep.subr.bf16.mxu0 0
        %4574 = vmatpush1.bf16.msra.mxu0 0
        %4575 = vmatprep.subr.bf16.mxu0 0
        %4576 = vmatpush1.bf16.msra.mxu0 0
        %4577 = vmatprep.subr.bf16.mxu0 0
        %4578 = vmatpush1.bf16.msra.mxu0 0
        %4579 = vmatprep.mubr.bf16.mxu0 0
        %4580 = vmatmul.mubr.bf16.gmra.mrb[0].mxu0 %v2855
        %v4581 = vpop.f32.mrb[0].mxu0
        %v4582 = vadd.f32 0.0, %v4581
        %v4583 = vpop.f32.mrb[0].mxu0
        %v4584 = vadd.f32 0.0, %v4583
        %v4585 = vpop.f32.mrb[0].mxu0
        %v4586 = vadd.f32 0.0, %v4585
        %v4587 = vpop.f32.mrb[0].mxu0
        %v4588 = vadd.f32 0.0, %v4587
        %4589 = vdwg.mxu0
        %v4590 = vadd.f32 %v4303, %v4539
        %v4591 = vadd.f32 %v4304, %v4541
        %v4592 = vadd.f32 %v4305, %v4582
        %v4593 = vadd.f32 %v4306, %v4584
        %v4594 = vadd.f32 %v4307, %v4543
        %v4595 = vadd.f32 %v4308, %v4545
        %v4596 = vadd.f32 %v4309, %v4586
        %v4597 = vadd.f32 %v4310, %v4588
        %s4598 = scalar_lea.vmem [#allocation9], 2304
        %v4599 = vld [vmem:[%s4598] sm:$0xff]
        %v4600 = vld [vmem:[%s4598 + $0x8] sm:$0xff]
        %v4601 = vld [vmem:[%s4598 + $0x10] sm:$0xff]
        %v4602 = vld [vmem:[%s4598 + $0x18] sm:$0xff]
        %v4603 = vld [vmem:[%s4598 + $0x20] sm:$0xff]
        %v4604 = vld [vmem:[%s4598 + $0x28] sm:$0xff]
        %v4605 = vld [vmem:[%s4598 + $0x30] sm:$0xff]
        %v4606 = vld [vmem:[%s4598 + $0x38] sm:$0xff]
        %v4607 = vld [vmem:[%s4598 + $0x40] sm:$0xff]
        %v4608 = vld [vmem:[%s4598 + $0x48] sm:$0xff]
        %v4609 = vld [vmem:[%s4598 + $0x50] sm:$0xff]
        %v4610 = vld [vmem:[%s4598 + $0x58] sm:$0xff]
        %v4611 = vld [vmem:[%s4598 + $0x60] sm:$0xff]
        %v4612 = vld [vmem:[%s4598 + $0x68] sm:$0xff]
        %v4613 = vld [vmem:[%s4598 + $0x70] sm:$0xff]
        %v4614 = vld [vmem:[%s4598 + $0x78] sm:$0xff]
        %v4615 = vld [vmem:[%s4598 + $0x80] sm:$0xff]
        %v4616 = vld [vmem:[%s4598 + $0x88] sm:$0xff]
        %v4617 = vld [vmem:[%s4598 + $0x90] sm:$0xff]
        %v4618 = vld [vmem:[%s4598 + $0x98] sm:$0xff]
        %v4619 = vld [vmem:[%s4598 + $0xa0] sm:$0xff]
        %v4620 = vld [vmem:[%s4598 + $0xa8] sm:$0xff]
        %v4621 = vld [vmem:[%s4598 + $0xb0] sm:$0xff]
        %v4622 = vld [vmem:[%s4598 + $0xb8] sm:$0xff]
        %v4623 = vld [vmem:[%s4598 + $0xc0] sm:$0xff]
        %v4624 = vld [vmem:[%s4598 + $0xc8] sm:$0xff]
        %v4625 = vld [vmem:[%s4598 + $0xd0] sm:$0xff]
        %v4626 = vld [vmem:[%s4598 + $0xd8] sm:$0xff]
        %v4627 = vld [vmem:[%s4598 + $0xe0] sm:$0xff]
        %v4628 = vld [vmem:[%s4598 + $0xe8] sm:$0xff]
        %v4629 = vld [vmem:[%s4598 + $0xf0] sm:$0xff]
        %v4630 = vld [vmem:[%s4598 + $0xf8] sm:$0xff]
        %v4663 = vunpack.c.l.b16 %v4599
        %v4664 = vunpack.c.h.b16 %v4599
        %v4665 = vunpack.c.l.b16 %v4600
        %v4666 = vunpack.c.h.b16 %v4600
        %v4667 = vunpack.c.l.b16 %v4601
        %v4668 = vunpack.c.h.b16 %v4601
        %v4669 = vunpack.c.l.b16 %v4602
        %v4670 = vunpack.c.h.b16 %v4602
        %v4671 = vunpack.c.l.b16 %v4603
        %v4672 = vunpack.c.h.b16 %v4603
        %v4673 = vunpack.c.l.b16 %v4604
        %v4674 = vunpack.c.h.b16 %v4604
        %v4675 = vunpack.c.l.b16 %v4605
        %v4676 = vunpack.c.h.b16 %v4605
        %v4677 = vunpack.c.l.b16 %v4606
        %v4678 = vunpack.c.h.b16 %v4606
        %v4679 = vunpack.c.l.b16 %v4607
        %v4680 = vunpack.c.h.b16 %v4607
        %v4681 = vunpack.c.l.b16 %v4608
        %v4682 = vunpack.c.h.b16 %v4608
        %v4683 = vunpack.c.l.b16 %v4609
        %v4684 = vunpack.c.h.b16 %v4609
        %v4685 = vunpack.c.l.b16 %v4610
        %v4686 = vunpack.c.h.b16 %v4610
        %v4687 = vunpack.c.l.b16 %v4611
        %v4688 = vunpack.c.h.b16 %v4611
        %v4689 = vunpack.c.l.b16 %v4612
        %v4690 = vunpack.c.h.b16 %v4612
        %v4691 = vunpack.c.l.b16 %v4613
        %v4692 = vunpack.c.h.b16 %v4613
        %v4693 = vunpack.c.l.b16 %v4614
        %v4694 = vunpack.c.h.b16 %v4614
        %v4695 = vunpack.c.l.b16 %v4615
        %v4696 = vunpack.c.h.b16 %v4615
        %v4697 = vunpack.c.l.b16 %v4616
        %v4698 = vunpack.c.h.b16 %v4616
        %v4699 = vunpack.c.l.b16 %v4617
        %v4700 = vunpack.c.h.b16 %v4617
        %v4701 = vunpack.c.l.b16 %v4618
        %v4702 = vunpack.c.h.b16 %v4618
        %v4703 = vunpack.c.l.b16 %v4619
        %v4704 = vunpack.c.h.b16 %v4619
        %v4705 = vunpack.c.l.b16 %v4620
        %v4706 = vunpack.c.h.b16 %v4620
        %v4707 = vunpack.c.l.b16 %v4621
        %v4708 = vunpack.c.h.b16 %v4621
        %v4709 = vunpack.c.l.b16 %v4622
        %v4710 = vunpack.c.h.b16 %v4622
        %v4711 = vunpack.c.l.b16 %v4623
        %v4712 = vunpack.c.h.b16 %v4623
        %v4713 = vunpack.c.l.b16 %v4624
        %v4714 = vunpack.c.h.b16 %v4624
        %v4715 = vunpack.c.l.b16 %v4625
        %v4716 = vunpack.c.h.b16 %v4625
        %v4717 = vunpack.c.l.b16 %v4626
        %v4718 = vunpack.c.h.b16 %v4626
        %v4719 = vunpack.c.l.b16 %v4627
        %v4720 = vunpack.c.h.b16 %v4627
        %v4721 = vunpack.c.l.b16 %v4628
        %v4722 = vunpack.c.h.b16 %v4628
        %v4723 = vunpack.c.l.b16 %v4629
        %v4724 = vunpack.c.h.b16 %v4629
        %v4725 = vunpack.c.l.b16 %v4630
        %v4726 = vunpack.c.h.b16 %v4630
        %v4727 = vpack.c.b16 %v4667, %v4663
        %v4728 = vpack.c.b16 %v4668, %v4664
        %v4729 = vpack.c.b16 %v4669, %v4665
        %v4730 = vpack.c.b16 %v4670, %v4666
        %v4731 = vpack.c.b16 %v4675, %v4671
        %v4732 = vpack.c.b16 %v4676, %v4672
        %v4733 = vpack.c.b16 %v4677, %v4673
        %v4734 = vpack.c.b16 %v4678, %v4674
        %v4735 = vpack.c.b16 %v4683, %v4679
        %v4736 = vpack.c.b16 %v4684, %v4680
        %v4737 = vpack.c.b16 %v4685, %v4681
        %v4738 = vpack.c.b16 %v4686, %v4682
        %v4739 = vpack.c.b16 %v4691, %v4687
        %v4740 = vpack.c.b16 %v4692, %v4688
        %v4741 = vpack.c.b16 %v4693, %v4689
        %v4742 = vpack.c.b16 %v4694, %v4690
        %v4743 = vpack.c.b16 %v4699, %v4695
        %v4744 = vpack.c.b16 %v4700, %v4696
        %v4745 = vpack.c.b16 %v4701, %v4697
        %v4746 = vpack.c.b16 %v4702, %v4698
        %v4747 = vpack.c.b16 %v4707, %v4703
        %v4748 = vpack.c.b16 %v4708, %v4704
        %v4749 = vpack.c.b16 %v4709, %v4705
        %v4750 = vpack.c.b16 %v4710, %v4706
        %v4751 = vpack.c.b16 %v4715, %v4711
        %v4752 = vpack.c.b16 %v4716, %v4712
        %v4753 = vpack.c.b16 %v4717, %v4713
        %v4754 = vpack.c.b16 %v4718, %v4714
        %v4755 = vpack.c.b16 %v4723, %v4719
        %v4756 = vpack.c.b16 %v4724, %v4720
        %v4757 = vpack.c.b16 %v4725, %v4721
        %v4758 = vpack.c.b16 %v4726, %v4722
        %4791 = vmatprep.subr.bf16.mxu0 %v4728
        %4792 = vmatpush1.bf16.msra.mxu0 %v4727
        %4793 = vmatprep.subr.bf16.mxu0 %v4732
        %4794 = vmatpush1.bf16.msra.mxu0 %v4731
        %4795 = vmatprep.subr.bf16.mxu0 %v4736
        %4796 = vmatpush1.bf16.msra.mxu0 %v4735
        %4797 = vmatprep.subr.bf16.mxu0 %v4740
        %4798 = vmatpush1.bf16.msra.mxu0 %v4739
        %4799 = vmatprep.subr.bf16.mxu0 %v4744
        %4800 = vmatpush1.bf16.msra.mxu0 %v4743
        %4801 = vmatprep.subr.bf16.mxu0 %v4748
        %4802 = vmatpush1.bf16.msra.mxu0 %v4747
        %4803 = vmatprep.subr.bf16.mxu0 %v4752
        %4804 = vmatpush1.bf16.msra.mxu0 %v4751
        %4805 = vmatprep.subr.bf16.mxu0 %v4756
        %4806 = vmatpush1.bf16.msra.mxu0 %v4755
        %4807 = vmatprep.subr.bf16.mxu0 0
        %4808 = vmatpush1.bf16.msra.mxu0 0
        %4809 = vmatprep.subr.bf16.mxu0 0
        %4810 = vmatpush1.bf16.msra.mxu0 0
        %4811 = vmatprep.subr.bf16.mxu0 0
        %4812 = vmatpush1.bf16.msra.mxu0 0
        %4813 = vmatprep.subr.bf16.mxu0 0
        %4814 = vmatpush1.bf16.msra.mxu0 0
        %4815 = vmatprep.subr.bf16.mxu0 0
        %4816 = vmatpush1.bf16.msra.mxu0 0
        %4817 = vmatprep.subr.bf16.mxu0 0
        %4818 = vmatpush1.bf16.msra.mxu0 0
        %4819 = vmatprep.subr.bf16.mxu0 0
        %4820 = vmatpush1.bf16.msra.mxu0 0
        %4821 = vmatprep.subr.bf16.mxu0 0
        %4822 = vmatpush1.bf16.msra.mxu0 0
        %4823 = vmatprep.mubr.bf16.mxu0 0
        %4824 = vmatmul.mubr.bf16.gmra.mrb[0].mxu0 %v3150
        %v4825 = vpop.f32.mrb[0].mxu0
        %v4826 = vadd.f32 0.0, %v4825
        %v4827 = vpop.f32.mrb[0].mxu0
        %v4828 = vadd.f32 0.0, %v4827
        %v4829 = vpop.f32.mrb[0].mxu0
        %v4830 = vadd.f32 0.0, %v4829
        %v4831 = vpop.f32.mrb[0].mxu0
        %v4832 = vadd.f32 0.0, %v4831
        %4833 = vdwg.mxu0
        %4834 = vmatprep.subr.bf16.mxu0 %v4730
        %4835 = vmatpush1.bf16.msra.mxu0 %v4729
        %4836 = vmatprep.subr.bf16.mxu0 %v4734
        %4837 = vmatpush1.bf16.msra.mxu0 %v4733
        %4838 = vmatprep.subr.bf16.mxu0 %v4738
        %4839 = vmatpush1.bf16.msra.mxu0 %v4737
        %4840 = vmatprep.subr.bf16.mxu0 %v4742
        %4841 = vmatpush1.bf16.msra.mxu0 %v4741
        %4842 = vmatprep.subr.bf16.mxu0 %v4746
        %4843 = vmatpush1.bf16.msra.mxu0 %v4745
        %4844 = vmatprep.subr.bf16.mxu0 %v4750
        %4845 = vmatpush1.bf16.msra.mxu0 %v4749
        %4846 = vmatprep.subr.bf16.mxu0 %v4754
        %4847 = vmatpush1.bf16.msra.mxu0 %v4753
        %4848 = vmatprep.subr.bf16.mxu0 %v4758
        %4849 = vmatpush1.bf16.msra.mxu0 %v4757
        %4850 = vmatprep.subr.bf16.mxu0 0
        %4851 = vmatpush1.bf16.msra.mxu0 0
        %4852 = vmatprep.subr.bf16.mxu0 0
        %4853 = vmatpush1.bf16.msra.mxu0 0
        %4854 = vmatprep.subr.bf16.mxu0 0
        %4855 = vmatpush1.bf16.msra.mxu0 0
        %4856 = vmatprep.subr.bf16.mxu0 0
        %4857 = vmatpush1.bf16.msra.mxu0 0
        %4858 = vmatprep.subr.bf16.mxu0 0
        %4859 = vmatpush1.bf16.msra.mxu0 0
        %4860 = vmatprep.subr.bf16.mxu0 0
        %4861 = vmatpush1.bf16.msra.mxu0 0
        %4862 = vmatprep.subr.bf16.mxu0 0
        %4863 = vmatpush1.bf16.msra.mxu0 0
        %4864 = vmatprep.subr.bf16.mxu0 0
        %4865 = vmatpush1.bf16.msra.mxu0 0
        %4866 = vmatprep.mubr.bf16.mxu0 0
        %4867 = vmatmul.mubr.bf16.gmra.mrb[0].mxu0 %v3150
        %v4868 = vpop.f32.mrb[0].mxu0
        %v4869 = vadd.f32 0.0, %v4868
        %v4870 = vpop.f32.mrb[0].mxu0
        %v4871 = vadd.f32 0.0, %v4870
        %v4872 = vpop.f32.mrb[0].mxu0
        %v4873 = vadd.f32 0.0, %v4872
        %v4874 = vpop.f32.mrb[0].mxu0
        %v4875 = vadd.f32 0.0, %v4874
        %4876 = vdwg.mxu0
        %v4877 = vadd.f32 %v4590, %v4826
        %v4878 = vadd.f32 %v4591, %v4828
        %v4879 = vadd.f32 %v4592, %v4869
        %v4880 = vadd.f32 %v4593, %v4871
        %v4881 = vadd.f32 %v4594, %v4830
        %v4882 = vadd.f32 %v4595, %v4832
        %v4883 = vadd.f32 %v4596, %v4873
        %v4884 = vadd.f32 %v4597, %v4875
        %v4885 = vmul.f32 %v4877, 0.5
        %v4886 = vmul.f32 %v4878, 0.5
        %v4887 = vmul.f32 %v4879, 0.5
        %v4888 = vmul.f32 %v4880, 0.5
        %v4889 = vmul.f32 %v4881, 0.5
        %v4890 = vmul.f32 %v4882, 0.5
        %v4891 = vmul.f32 %v4883, 0.5
        %v4892 = vmul.f32 %v4884, 0.5
        %v4893 = vmul.f32 %v4877, 0.70710677
        %v4894 = vmul.f32 %v4878, 0.70710677
        %v4895 = vmul.f32 %v4879, 0.70710677
        %v4896 = vmul.f32 %v4880, 0.70710677
        %v4897 = vmul.f32 %v4881, 0.70710677
        %v4898 = vmul.f32 %v4882, 0.70710677
        %v4899 = vmul.f32 %v4883, 0.70710677
        %v4900 = vmul.f32 %v4884, 0.70710677
        %v4901 = verf.f32.pop %v4893
        %v4902 = verf.f32.pop %v4894
        %v4903 = verf.f32.pop %v4895
        %v4904 = verf.f32.pop %v4896
        %v4905 = verf.f32.pop %v4897
        %v4906 = verf.f32.pop %v4898
        %v4907 = verf.f32.pop %v4899
        %v4908 = verf.f32.pop %v4900
        %v4909 = vadd.f32 %v4901, 1.0
        %v4910 = vadd.f32 %v4902, 1.0
        %v4911 = vadd.f32 %v4903, 1.0
        %v4912 = vadd.f32 %v4904, 1.0
        %v4913 = vadd.f32 %v4905, 1.0
        %v4914 = vadd.f32 %v4906, 1.0
        %v4915 = vadd.f32 %v4907, 1.0
        %v4916 = vadd.f32 %v4908, 1.0
        %v4917 = vmul.f32 %v4885, %v4909
        %v4918 = vmul.f32 %v4886, %v4910
        %v4919 = vmul.f32 %v4887, %v4911
        %v4920 = vmul.f32 %v4888, %v4912
        %v4921 = vmul.f32 %v4889, %v4913
        %v4922 = vmul.f32 %v4890, %v4914
        %v4923 = vmul.f32 %v4891, %v4915
        %v4924 = vmul.f32 %v4892, %v4916
        %v4925 = vpack.c.bf16 %v4921, %v4917
        %v4926 = vpack.c.bf16 %v4922, %v4918
        %v4927 = vpack.c.bf16 %v4923, %v4919
        %v4928 = vpack.c.bf16 %v4924, %v4920
        %v4929 = vld [vmem:[#allocation12] sm:$0xf]
        %vm4930 = vcmask 130048
        %v4932 = vsel %vm4930, %v4929, 0
        %4934 = vmatprep.subr.bf16.mxu0 %v3447
        %4935 = vmatpush1.bf16.msra.mxu0 %v3446
        %4936 = vmatprep.subr.bf16.mxu0 0
        %4937 = vmatpush1.bf16.msra.mxu0 0
        %4938 = vmatprep.subr.bf16.mxu0 0
        %4939 = vmatpush1.bf16.msra.mxu0 0
        %4940 = vmatprep.subr.bf16.mxu0 0
        %4941 = vmatpush1.bf16.msra.mxu0 0
        %4942 = vmatprep.subr.bf16.mxu0 0
        %4943 = vmatpush1.bf16.msra.mxu0 0
        %4944 = vmatprep.subr.bf16.mxu0 0
        %4945 = vmatpush1.bf16.msra.mxu0 0
        %4946 = vmatprep.subr.bf16.mxu0 0
        %4947 = vmatpush1.bf16.msra.mxu0 0
        %4948 = vmatprep.subr.bf16.mxu0 0
        %4949 = vmatpush1.bf16.msra.mxu0 0
        %4950 = vmatprep.subr.bf16.mxu0 0
        %4951 = vmatpush1.bf16.msra.mxu0 0
        %4952 = vmatprep.subr.bf16.mxu0 0
        %4953 = vmatpush1.bf16.msra.mxu0 0
        %4954 = vmatprep.subr.bf16.mxu0 0
        %4955 = vmatpush1.bf16.msra.mxu0 0
        %4956 = vmatprep.subr.bf16.mxu0 0
        %4957 = vmatpush1.bf16.msra.mxu0 0
        %4958 = vmatprep.subr.bf16.mxu0 0
        %4959 = vmatpush1.bf16.msra.mxu0 0
        %4960 = vmatprep.subr.bf16.mxu0 0
        %4961 = vmatpush1.bf16.msra.mxu0 0
        %4962 = vmatprep.subr.bf16.mxu0 0
        %4963 = vmatpush1.bf16.msra.mxu0 0
        %4964 = vmatprep.subr.bf16.mxu0 0
        %4965 = vmatpush1.bf16.msra.mxu0 0
        %4966 = vmatprep.mubr.bf16.mxu0 0
        %4967 = vmatmul.mubr.bf16.gmra.mrb[0].mxu0 %v4932
        %v4968 = vpop.f32.mrb[0].mxu0
        %v4969 = vadd.f32 0.0, %v4968
        %v4970 = vpop.f32.mrb[0].mxu0
        %v4971 = vadd.f32 0.0, %v4970
        %v4972 = vpop.f32.mrb[0].mxu0
        %v4973 = vpop.f32.mrb[0].mxu0
        %4974 = vdwg.mxu0
        %4975 = vmatprep.subr.bf16.mxu0 %v3449
        %4976 = vmatpush1.bf16.msra.mxu0 %v3448
        %4977 = vmatprep.subr.bf16.mxu0 0
        %4978 = vmatpush1.bf16.msra.mxu0 0
        %4979 = vmatprep.subr.bf16.mxu0 0
        %4980 = vmatpush1.bf16.msra.mxu0 0
        %4981 = vmatprep.subr.bf16.mxu0 0
        %4982 = vmatpush1.bf16.msra.mxu0 0
        %4983 = vmatprep.subr.bf16.mxu0 0
        %4984 = vmatpush1.bf16.msra.mxu0 0
        %4985 = vmatprep.subr.bf16.mxu0 0
        %4986 = vmatpush1.bf16.msra.mxu0 0
        %4987 = vmatprep.subr.bf16.mxu0 0
        %4988 = vmatpush1.bf16.msra.mxu0 0
        %4989 = vmatprep.subr.bf16.mxu0 0
        %4990 = vmatpush1.bf16.msra.mxu0 0
        %4991 = vmatprep.subr.bf16.mxu0 0
        %4992 = vmatpush1.bf16.msra.mxu0 0
        %4993 = vmatprep.subr.bf16.mxu0 0
        %4994 = vmatpush1.bf16.msra.mxu0 0
        %4995 = vmatprep.subr.bf16.mxu0 0
        %4996 = vmatpush1.bf16.msra.mxu0 0
        %4997 = vmatprep.subr.bf16.mxu0 0
        %4998 = vmatpush1.bf16.msra.mxu0 0
        %4999 = vmatprep.subr.bf16.mxu0 0
        %5000 = vmatpush1.bf16.msra.mxu0 0
        %5001 = vmatprep.subr.bf16.mxu0 0
        %5002 = vmatpush1.bf16.msra.mxu0 0
        %5003 = vmatprep.subr.bf16.mxu0 0
        %5004 = vmatpush1.bf16.msra.mxu0 0
        %5005 = vmatprep.subr.bf16.mxu0 0
        %5006 = vmatpush1.bf16.msra.mxu0 0
        %5007 = vmatprep.mubr.bf16.mxu0 0
        %5008 = vmatmul.mubr.bf16.gmra.mrb[0].mxu0 %v4932
        %v5009 = vpop.f32.mrb[0].mxu0
        %v5010 = vadd.f32 0.0, %v5009
        %v5011 = vpop.f32.mrb[0].mxu0
        %v5012 = vadd.f32 0.0, %v5011
        %v5013 = vpop.f32.mrb[0].mxu0
        %v5014 = vpop.f32.mrb[0].mxu0
        %5015 = vdwg.mxu0
        %5016 = vmatprep.subr.bf16.mxu0 %v4926
        %5017 = vmatpush1.bf16.msra.mxu0 %v4925
        %5018 = vmatprep.subr.bf16.mxu0 0
        %5019 = vmatpush1.bf16.msra.mxu0 0
        %5020 = vmatprep.subr.bf16.mxu0 0
        %5021 = vmatpush1.bf16.msra.mxu0 0
        %5022 = vmatprep.subr.bf16.mxu0 0
        %5023 = vmatpush1.bf16.msra.mxu0 0
        %5024 = vmatprep.subr.bf16.mxu0 0
        %5025 = vmatpush1.bf16.msra.mxu0 0
        %5026 = vmatprep.subr.bf16.mxu0 0
        %5027 = vmatpush1.bf16.msra.mxu0 0
        %5028 = vmatprep.subr.bf16.mxu0 0
        %5029 = vmatpush1.bf16.msra.mxu0 0
        %5030 = vmatprep.subr.bf16.mxu0 0
        %5031 = vmatpush1.bf16.msra.mxu0 0
        %5032 = vmatprep.subr.bf16.mxu0 0
        %5033 = vmatpush1.bf16.msra.mxu0 0
        %5034 = vmatprep.subr.bf16.mxu0 0
        %5035 = vmatpush1.bf16.msra.mxu0 0
        %5036 = vmatprep.subr.bf16.mxu0 0
        %5037 = vmatpush1.bf16.msra.mxu0 0
        %5038 = vmatprep.subr.bf16.mxu0 0
        %5039 = vmatpush1.bf16.msra.mxu0 0
        %5040 = vmatprep.subr.bf16.mxu0 0
        %5041 = vmatpush1.bf16.msra.mxu0 0
        %5042 = vmatprep.subr.bf16.mxu0 0
        %5043 = vmatpush1.bf16.msra.mxu0 0
        %5044 = vmatprep.subr.bf16.mxu0 0
        %5045 = vmatpush1.bf16.msra.mxu0 0
        %5046 = vmatprep.subr.bf16.mxu0 0
        %5047 = vmatpush1.bf16.msra.mxu0 0
        %5048 = vmatprep.mubr.bf16.mxu0 0
        %5049 = vmatmul.mubr.bf16.gmra.mrb[0].mxu0 %v4932
        %v5050 = vpop.f32.mrb[0].mxu0
        %v5051 = vadd.f32 0.0, %v5050
        %v5052 = vpop.f32.mrb[0].mxu0
        %v5053 = vadd.f32 0.0, %v5052
        %v5054 = vpop.f32.mrb[0].mxu0
        %v5055 = vpop.f32.mrb[0].mxu0
        %5056 = vdwg.mxu0
        %5057 = vmatprep.subr.bf16.mxu0 %v4928
        %5058 = vmatpush1.bf16.msra.mxu0 %v4927
        %5059 = vmatprep.subr.bf16.mxu0 0
        %5060 = vmatpush1.bf16.msra.mxu0 0
        %5061 = vmatprep.subr.bf16.mxu0 0
        %5062 = vmatpush1.bf16.msra.mxu0 0
        %5063 = vmatprep.subr.bf16.mxu0 0
        %5064 = vmatpush1.bf16.msra.mxu0 0
        %5065 = vmatprep.subr.bf16.mxu0 0
        %5066 = vmatpush1.bf16.msra.mxu0 0
        %5067 = vmatprep.subr.bf16.mxu0 0
        %5068 = vmatpush1.bf16.msra.mxu0 0
        %5069 = vmatprep.subr.bf16.mxu0 0
        %5070 = vmatpush1.bf16.msra.mxu0 0
        %5071 = vmatprep.subr.bf16.mxu0 0
        %5072 = vmatpush1.bf16.msra.mxu0 0
        %5073 = vmatprep.subr.bf16.mxu0 0
        %5074 = vmatpush1.bf16.msra.mxu0 0
        %5075 = vmatprep.subr.bf16.mxu0 0
        %5076 = vmatpush1.bf16.msra.mxu0 0
        %5077 = vmatprep.subr.bf16.mxu0 0
        %5078 = vmatpush1.bf16.msra.mxu0 0
        %5079 = vmatprep.subr.bf16.mxu0 0
        %5080 = vmatpush1.bf16.msra.mxu0 0
        %5081 = vmatprep.subr.bf16.mxu0 0
        %5082 = vmatpush1.bf16.msra.mxu0 0
        %5083 = vmatprep.subr.bf16.mxu0 0
        %5084 = vmatpush1.bf16.msra.mxu0 0
        %5085 = vmatprep.subr.bf16.mxu0 0
        %5086 = vmatpush1.bf16.msra.mxu0 0
        %5087 = vmatprep.subr.bf16.mxu0 0
        %5088 = vmatpush1.bf16.msra.mxu0 0
        %5089 = vmatprep.mubr.bf16.mxu0 0
        %5090 = vmatmul.mubr.bf16.gmra.mrb[0].mxu0 %v4932
        %v5091 = vpop.f32.mrb[0].mxu0
        %v5092 = vadd.f32 0.0, %v5091
        %v5093 = vpop.f32.mrb[0].mxu0
        %v5094 = vadd.f32 0.0, %v5093
        %v5095 = vpop.f32.mrb[0].mxu0
        %v5096 = vpop.f32.mrb[0].mxu0
        %5097 = vdwg.mxu0
        %s5098 = scalar_lea.vmem [#allocation12], 4
        %v5099 = vld [vmem:[%s5098] sm:$0xf]
        %v5101 = vsel %vm4930, %v5099, 0
        %5103 = vmatprep.subr.bf16.mxu0 %v3447
        %5104 = vmatpush1.bf16.msra.mxu0 %v3446
        %5105 = vmatprep.subr.bf16.mxu0 0
        %5106 = vmatpush1.bf16.msra.mxu0 0
        %5107 = vmatprep.subr.bf16.mxu0 0
        %5108 = vmatpush1.bf16.msra.mxu0 0
        %5109 = vmatprep.subr.bf16.mxu0 0
        %5110 = vmatpush1.bf16.msra.mxu0 0
        %5111 = vmatprep.subr.bf16.mxu0 0
        %5112 = vmatpush1.bf16.msra.mxu0 0
        %5113 = vmatprep.subr.bf16.mxu0 0
        %5114 = vmatpush1.bf16.msra.mxu0 0
        %5115 = vmatprep.subr.bf16.mxu0 0
        %5116 = vmatpush1.bf16.msra.mxu0 0
        %5117 = vmatprep.subr.bf16.mxu0 0
        %5118 = vmatpush1.bf16.msra.mxu0 0
        %5119 = vmatprep.subr.bf16.mxu0 0
        %5120 = vmatpush1.bf16.msra.mxu0 0
        %5121 = vmatprep.subr.bf16.mxu0 0
        %5122 = vmatpush1.bf16.msra.mxu0 0
        %5123 = vmatprep.subr.bf16.mxu0 0
        %5124 = vmatpush1.bf16.msra.mxu0 0
        %5125 = vmatprep.subr.bf16.mxu0 0
        %5126 = vmatpush1.bf16.msra.mxu0 0
        %5127 = vmatprep.subr.bf16.mxu0 0
        %5128 = vmatpush1.bf16.msra.mxu0 0
        %5129 = vmatprep.subr.bf16.mxu0 0
        %5130 = vmatpush1.bf16.msra.mxu0 0
        %5131 = vmatprep.subr.bf16.mxu0 0
        %5132 = vmatpush1.bf16.msra.mxu0 0
        %5133 = vmatprep.subr.bf16.mxu0 0
        %5134 = vmatpush1.bf16.msra.mxu0 0
        %5135 = vmatprep.mubr.bf16.mxu0 0
        %5136 = vmatmul.mubr.bf16.gmra.mrb[0].mxu0 %v5101
        %v5137 = vpop.f32.mrb[0].mxu0
        %v5138 = vadd.f32 0.0, %v5137
        %v5139 = vpop.f32.mrb[0].mxu0
        %v5140 = vadd.f32 0.0, %v5139
        %v5141 = vpop.f32.mrb[0].mxu0
        %v5142 = vpop.f32.mrb[0].mxu0
        %5143 = vdwg.mxu0
        %5144 = vmatprep.subr.bf16.mxu0 %v3449
        %5145 = vmatpush1.bf16.msra.mxu0 %v3448
        %5146 = vmatprep.subr.bf16.mxu0 0
        %5147 = vmatpush1.bf16.msra.mxu0 0
        %5148 = vmatprep.subr.bf16.mxu0 0
        %5149 = vmatpush1.bf16.msra.mxu0 0
        %5150 = vmatprep.subr.bf16.mxu0 0
        %5151 = vmatpush1.bf16.msra.mxu0 0
        %5152 = vmatprep.subr.bf16.mxu0 0
        %5153 = vmatpush1.bf16.msra.mxu0 0
        %5154 = vmatprep.subr.bf16.mxu0 0
        %5155 = vmatpush1.bf16.msra.mxu0 0
        %5156 = vmatprep.subr.bf16.mxu0 0
        %5157 = vmatpush1.bf16.msra.mxu0 0
        %5158 = vmatprep.subr.bf16.mxu0 0
        %5159 = vmatpush1.bf16.msra.mxu0 0
        %5160 = vmatprep.subr.bf16.mxu0 0
        %5161 = vmatpush1.bf16.msra.mxu0 0
        %5162 = vmatprep.subr.bf16.mxu0 0
        %5163 = vmatpush1.bf16.msra.mxu0 0
        %5164 = vmatprep.subr.bf16.mxu0 0
        %5165 = vmatpush1.bf16.msra.mxu0 0
        %5166 = vmatprep.subr.bf16.mxu0 0
        %5167 = vmatpush1.bf16.msra.mxu0 0
        %5168 = vmatprep.subr.bf16.mxu0 0
        %5169 = vmatpush1.bf16.msra.mxu0 0
        %5170 = vmatprep.subr.bf16.mxu0 0
        %5171 = vmatpush1.bf16.msra.mxu0 0
        %5172 = vmatprep.subr.bf16.mxu0 0
        %5173 = vmatpush1.bf16.msra.mxu0 0
        %5174 = vmatprep.subr.bf16.mxu0 0
        %5175 = vmatpush1.bf16.msra.mxu0 0
        %5176 = vmatprep.mubr.bf16.mxu0 0
        %5177 = vmatmul.mubr.bf16.gmra.mrb[0].mxu0 %v5101
        %v5178 = vpop.f32.mrb[0].mxu0
        %v5179 = vadd.f32 0.0, %v5178
        %v5180 = vpop.f32.mrb[0].mxu0
        %v5181 = vadd.f32 0.0, %v5180
        %v5182 = vpop.f32.mrb[0].mxu0
        %v5183 = vpop.f32.mrb[0].mxu0
        %5184 = vdwg.mxu0
        %5185 = vmatprep.subr.bf16.mxu0 %v4926
        %5186 = vmatpush1.bf16.msra.mxu0 %v4925
        %5187 = vmatprep.subr.bf16.mxu0 0
        %5188 = vmatpush1.bf16.msra.mxu0 0
        %5189 = vmatprep.subr.bf16.mxu0 0
        %5190 = vmatpush1.bf16.msra.mxu0 0
        %5191 = vmatprep.subr.bf16.mxu0 0
        %5192 = vmatpush1.bf16.msra.mxu0 0
        %5193 = vmatprep.subr.bf16.mxu0 0
        %5194 = vmatpush1.bf16.msra.mxu0 0
        %5195 = vmatprep.subr.bf16.mxu0 0
        %5196 = vmatpush1.bf16.msra.mxu0 0
        %5197 = vmatprep.subr.bf16.mxu0 0
        %5198 = vmatpush1.bf16.msra.mxu0 0
        %5199 = vmatprep.subr.bf16.mxu0 0
        %5200 = vmatpush1.bf16.msra.mxu0 0
        %5201 = vmatprep.subr.bf16.mxu0 0
        %5202 = vmatpush1.bf16.msra.mxu0 0
        %5203 = vmatprep.subr.bf16.mxu0 0
        %5204 = vmatpush1.bf16.msra.mxu0 0
        %5205 = vmatprep.subr.bf16.mxu0 0
        %5206 = vmatpush1.bf16.msra.mxu0 0
        %5207 = vmatprep.subr.bf16.mxu0 0
        %5208 = vmatpush1.bf16.msra.mxu0 0
        %5209 = vmatprep.subr.bf16.mxu0 0
        %5210 = vmatpush1.bf16.msra.mxu0 0
        %5211 = vmatprep.subr.bf16.mxu0 0
        %5212 = vmatpush1.bf16.msra.mxu0 0
        %5213 = vmatprep.subr.bf16.mxu0 0
        %5214 = vmatpush1.bf16.msra.mxu0 0
        %5215 = vmatprep.subr.bf16.mxu0 0
        %5216 = vmatpush1.bf16.msra.mxu0 0
        %5217 = vmatprep.mubr.bf16.mxu0 0
        %5218 = vmatmul.mubr.bf16.gmra.mrb[0].mxu0 %v5101
        %v5219 = vpop.f32.mrb[0].mxu0
        %v5220 = vadd.f32 0.0, %v5219
        %v5221 = vpop.f32.mrb[0].mxu0
        %v5222 = vadd.f32 0.0, %v5221
        %v5223 = vpop.f32.mrb[0].mxu0
        %v5224 = vpop.f32.mrb[0].mxu0
        %5225 = vdwg.mxu0
        %5226 = vmatprep.subr.bf16.mxu0 %v4928
        %5227 = vmatpush1.bf16.msra.mxu0 %v4927
        %5228 = vmatprep.subr.bf16.mxu0 0
        %5229 = vmatpush1.bf16.msra.mxu0 0
        %5230 = vmatprep.subr.bf16.mxu0 0
        %5231 = vmatpush1.bf16.msra.mxu0 0
        %5232 = vmatprep.subr.bf16.mxu0 0
        %5233 = vmatpush1.bf16.msra.mxu0 0
        %5234 = vmatprep.subr.bf16.mxu0 0
        %5235 = vmatpush1.bf16.msra.mxu0 0
        %5236 = vmatprep.subr.bf16.mxu0 0
        %5237 = vmatpush1.bf16.msra.mxu0 0
        %5238 = vmatprep.subr.bf16.mxu0 0
        %5239 = vmatpush1.bf16.msra.mxu0 0
        %5240 = vmatprep.subr.bf16.mxu0 0
        %5241 = vmatpush1.bf16.msra.mxu0 0
        %5242 = vmatprep.subr.bf16.mxu0 0
        %5243 = vmatpush1.bf16.msra.mxu0 0
        %5244 = vmatprep.subr.bf16.mxu0 0
        %5245 = vmatpush1.bf16.msra.mxu0 0
        %5246 = vmatprep.subr.bf16.mxu0 0
        %5247 = vmatpush1.bf16.msra.mxu0 0
        %5248 = vmatprep.subr.bf16.mxu0 0
        %5249 = vmatpush1.bf16.msra.mxu0 0
        %5250 = vmatprep.subr.bf16.mxu0 0
        %5251 = vmatpush1.bf16.msra.mxu0 0
        %5252 = vmatprep.subr.bf16.mxu0 0
        %5253 = vmatpush1.bf16.msra.mxu0 0
        %5254 = vmatprep.subr.bf16.mxu0 0
        %5255 = vmatpush1.bf16.msra.mxu0 0
        %5256 = vmatprep.subr.bf16.mxu0 0
        %5257 = vmatpush1.bf16.msra.mxu0 0
        %5258 = vmatprep.mubr.bf16.mxu0 0
        %5259 = vmatmul.mubr.bf16.gmra.mrb[0].mxu0 %v5101
        %v5260 = vpop.f32.mrb[0].mxu0
        %v5261 = vadd.f32 0.0, %v5260
        %v5262 = vpop.f32.mrb[0].mxu0
        %v5263 = vadd.f32 0.0, %v5262
        %v5264 = vpop.f32.mrb[0].mxu0
        %v5265 = vpop.f32.mrb[0].mxu0
        %5266 = vdwg.mxu0
        %v5267 = vmax.f32 %v4969, %v5051
        %v5268 = vmax.f32 %v4971, %v5053
        %v5269 = vmax.f32 %v5010, %v5092
        %v5270 = vmax.f32 %v5012, %v5094
        %v5271 = vmax.f32 %v5138, %v5220
        %v5272 = vmax.f32 %v5140, %v5222
        %v5273 = vmax.f32 %v5179, %v5261
        %v5274 = vmax.f32 %v5181, %v5263
        %v5275 = vmax.f32 %v5267, %v5271
        %v5276 = vmax.f32 %v5268, %v5272
        %v5277 = vmax.f32 %v5269, %v5273
        %v5278 = vmax.f32 %v5270, %v5274
        %v5279 = vpack.c.bf16 %v5275, %v5275
        %v5280 = vpack.c.bf16 %v5276, %v5276
        %v5281 = vpack.c.bf16 %v5277, %v5277
        %v5282 = vpack.c.bf16 %v5278, %v5278
        %v5287 = vunpack.c.l.b16 %v5279
        %v5288 = vunpack.c.l.b16 %v5280
        %v5289 = vunpack.c.l.b16 %v5281
        %v5290 = vunpack.c.l.b16 %v5282
        %v5291 = vpack.c.b16 %v5288, %v5287
        %v5292 = vpack.c.b16 %v5290, %v5289
        %5295 = vst [vmem:[#allocation3] sm:$0xff] %v5291
        %5296 = vst [vmem:[#allocation3 + $0x8] sm:$0xff] %v5292
        %v5297 = vld [vmem:[#allocation15] sm:$0x1]
        %v5298 = vld [vmem:[#allocation3] sm:$0x11]
        %v5299 = vld [vmem:[#allocation3 + $0x8] sm:$0x11]
        %v5300 = vld [vmem:[#allocation13] sm:$0xf]
        %v5301 = vld [vmem:[#allocation13 + $0x4] sm:$0xf]
        %v5302 = vld [vmem:[#allocation13 + $0x8] sm:$0xf]
        %v5303 = vld [vmem:[#allocation13 + $0xc] sm:$0xf]
        %v5304 = vld [vmem:[#allocation13 + $0x10] sm:$0xf]
        %v5305 = vld [vmem:[#allocation13 + $0x14] sm:$0xf]
        %v5306 = vld [vmem:[#allocation13 + $0x18] sm:$0xf]
        %v5307 = vld [vmem:[#allocation13 + $0x1c] sm:$0xf]
        %v5308 = vld [vmem:[#allocation13 + $0x20] sm:$0xf]
        %v5309 = vld [vmem:[#allocation13 + $0x24] sm:$0xf]
        %v5310 = vld [vmem:[#allocation13 + $0x28] sm:$0xf]
        %v5311 = vld [vmem:[#allocation13 + $0x2c] sm:$0xf]
        %v5312 = vld [vmem:[#allocation13 + $0x30] sm:$0xf]
        %v5313 = vld [vmem:[#allocation13 + $0x34] sm:$0xf]
        %v5314 = vld [vmem:[#allocation13 + $0x38] sm:$0xf]
        %v5315 = vld [vmem:[#allocation13 + $0x3c] sm:$0xf]
        %v5316 = vld [vmem:[#allocation13 + $0x40] sm:$0xf]
        %v5317 = vld [vmem:[#allocation13 + $0x44] sm:$0xf]
        %v5318 = vld [vmem:[#allocation13 + $0x48] sm:$0xf]
        %v5319 = vld [vmem:[#allocation13 + $0x4c] sm:$0xf]
        %v5320 = vld [vmem:[#allocation13 + $0x50] sm:$0xf]
        %v5321 = vld [vmem:[#allocation13 + $0x54] sm:$0xf]
        %v5322 = vld [vmem:[#allocation13 + $0x58] sm:$0xf]
        %v5323 = vld [vmem:[#allocation13 + $0x5c] sm:$0xf]
        %v5324 = vld [vmem:[#allocation13 + $0x60] sm:$0xf]
        %v5325 = vld [vmem:[#allocation13 + $0x64] sm:$0xf]
        %v5326 = vld [vmem:[#allocation13 + $0x68] sm:$0xf]
        %v5327 = vld [vmem:[#allocation13 + $0x6c] sm:$0xf]
        %v5328 = vld [vmem:[#allocation13 + $0x70] sm:$0xf]
        %v5329 = vld [vmem:[#allocation13 + $0x74] sm:$0xf]
        %v5330 = vld [vmem:[#allocation13 + $0x78] sm:$0xf]
        %v5331 = vld [vmem:[#allocation13 + $0x7c] sm:$0xf]
        %v5332 = vld [vmem:[#allocation13 + $0x80] sm:$0xf]
        %v5333 = vld [vmem:[#allocation13 + $0x84] sm:$0xf]
        %v5334 = vld [vmem:[#allocation13 + $0x88] sm:$0xf]
        %v5335 = vld [vmem:[#allocation13 + $0x8c] sm:$0xf]
        %v5336 = vld [vmem:[#allocation13 + $0x90] sm:$0xf]
        %v5337 = vld [vmem:[#allocation13 + $0x94] sm:$0xf]
        %v5338 = vld [vmem:[#allocation13 + $0x98] sm:$0xf]
        %v5339 = vld [vmem:[#allocation13 + $0x9c] sm:$0xf]
        %v5340 = vld [vmem:[#allocation13 + $0xa0] sm:$0xf]
        %v5341 = vld [vmem:[#allocation13 + $0xa4] sm:$0xf]
        %v5342 = vld [vmem:[#allocation13 + $0xa8] sm:$0xf]
        %v5343 = vld [vmem:[#allocation13 + $0xac] sm:$0xf]
        %v5344 = vld [vmem:[#allocation13 + $0xb0] sm:$0xf]
        %v5345 = vld [vmem:[#allocation13 + $0xb4] sm:$0xf]
        %v5346 = vld [vmem:[#allocation13 + $0xb8] sm:$0xf]
        %v5347 = vld [vmem:[#allocation13 + $0xbc] sm:$0xf]
        %v5348 = vld [vmem:[#allocation13 + $0xc0] sm:$0xf]
        %v5349 = vld [vmem:[#allocation13 + $0xc4] sm:$0xf]
        %v5350 = vld [vmem:[#allocation13 + $0xc8] sm:$0xf]
        %v5351 = vld [vmem:[#allocation13 + $0xcc] sm:$0xf]
        %v5352 = vld [vmem:[#allocation13 + $0xd0] sm:$0xf]
        %v5353 = vld [vmem:[#allocation13 + $0xd4] sm:$0xf]
        %v5354 = vld [vmem:[#allocation13 + $0xd8] sm:$0xf]
        %v5355 = vld [vmem:[#allocation13 + $0xdc] sm:$0xf]
        %v5356 = vld [vmem:[#allocation13 + $0xe0] sm:$0xf]
        %v5357 = vld [vmem:[#allocation13 + $0xe4] sm:$0xf]
        %v5358 = vld [vmem:[#allocation13 + $0xe8] sm:$0xf]
        %v5359 = vld [vmem:[#allocation13 + $0xec] sm:$0xf]
        %v5360 = vld [vmem:[#allocation13 + $0xf0] sm:$0xf]
        %v5361 = vld [vmem:[#allocation13 + $0xf4] sm:$0xf]
        %v5362 = vld [vmem:[#allocation13 + $0xf8] sm:$0xf]
        %v5363 = vld [vmem:[#allocation13 + $0xfc] sm:$0xf]
        %v5366 = vunpack.c.l.b16 %v5298
        %v5367 = vunpack.c.h.b16 %v5298
        %v5368 = vunpack.c.l.b16 %v5299
        %v5369 = vunpack.c.h.b16 %v5299
        %v5370 = vpack.c.b16 %v5366, %v5366
        %v5371 = vpack.c.b16 %v5367, %v5367
        %v5372 = vpack.c.b16 %v5368, %v5368
        %v5373 = vpack.c.b16 %v5369, %v5369
        %v5442 = vunpack.c.l.b16 %v5300
        %v5443 = vunpack.c.l.b16 %v5301
        %v5444 = vunpack.c.l.b16 %v5302
        %v5445 = vunpack.c.l.b16 %v5303
        %v5446 = vunpack.c.l.b16 %v5304
        %v5447 = vunpack.c.l.b16 %v5305
        %v5448 = vunpack.c.l.b16 %v5306
        %v5449 = vunpack.c.l.b16 %v5307
        %v5450 = vunpack.c.l.b16 %v5308
        %v5451 = vunpack.c.l.b16 %v5309
        %v5452 = vunpack.c.l.b16 %v5310
        %v5453 = vunpack.c.l.b16 %v5311
        %v5454 = vunpack.c.l.b16 %v5312
        %v5455 = vunpack.c.l.b16 %v5313
        %v5456 = vunpack.c.l.b16 %v5314
        %v5457 = vunpack.c.l.b16 %v5315
        %v5458 = vunpack.c.l.b16 %v5316
        %v5459 = vunpack.c.l.b16 %v5317
        %v5460 = vunpack.c.l.b16 %v5318
        %v5461 = vunpack.c.l.b16 %v5319
        %v5462 = vunpack.c.l.b16 %v5320
        %v5463 = vunpack.c.l.b16 %v5321
        %v5464 = vunpack.c.l.b16 %v5322
        %v5465 = vunpack.c.l.b16 %v5323
        %v5466 = vunpack.c.l.b16 %v5324
        %v5467 = vunpack.c.l.b16 %v5325
        %v5468 = vunpack.c.l.b16 %v5326
        %v5469 = vunpack.c.l.b16 %v5327
        %v5470 = vunpack.c.l.b16 %v5328
        %v5471 = vunpack.c.l.b16 %v5329
        %v5472 = vunpack.c.l.b16 %v5330
        %v5473 = vunpack.c.l.b16 %v5331
        %v5474 = vunpack.c.l.b16 %v5332
        %v5475 = vunpack.c.l.b16 %v5333
        %v5476 = vunpack.c.l.b16 %v5334
        %v5477 = vunpack.c.l.b16 %v5335
        %v5478 = vunpack.c.l.b16 %v5336
        %v5479 = vunpack.c.l.b16 %v5337
        %v5480 = vunpack.c.l.b16 %v5338
        %v5481 = vunpack.c.l.b16 %v5339
        %v5482 = vunpack.c.l.b16 %v5340
        %v5483 = vunpack.c.l.b16 %v5341
        %v5484 = vunpack.c.l.b16 %v5342
        %v5485 = vunpack.c.l.b16 %v5343
        %v5486 = vunpack.c.l.b16 %v5344
        %v5487 = vunpack.c.l.b16 %v5345
        %v5488 = vunpack.c.l.b16 %v5346
        %v5489 = vunpack.c.l.b16 %v5347
        %v5490 = vunpack.c.l.b16 %v5348
        %v5491 = vunpack.c.l.b16 %v5349
        %v5492 = vunpack.c.l.b16 %v5350
        %v5493 = vunpack.c.l.b16 %v5351
        %v5494 = vunpack.c.l.b16 %v5352
        %v5495 = vunpack.c.l.b16 %v5353
        %v5496 = vunpack.c.l.b16 %v5354
        %v5497 = vunpack.c.l.b16 %v5355
        %v5498 = vunpack.c.l.b16 %v5356
        %v5499 = vunpack.c.l.b16 %v5357
        %v5500 = vunpack.c.l.b16 %v5358
        %v5501 = vunpack.c.l.b16 %v5359
        %v5502 = vunpack.c.l.b16 %v5360
        %v5503 = vunpack.c.l.b16 %v5361
        %v5504 = vunpack.c.l.b16 %v5362
        %v5505 = vunpack.c.l.b16 %v5363
        %v5506 = vpack.c.b16 %v5443, %v5442
        %v5507 = vpack.c.b16 %v5445, %v5444
        %v5508 = vpack.c.b16 %v5447, %v5446
        %v5509 = vpack.c.b16 %v5449, %v5448
        %v5510 = vpack.c.b16 %v5451, %v5450
        %v5511 = vpack.c.b16 %v5453, %v5452
        %v5512 = vpack.c.b16 %v5455, %v5454
        %v5513 = vpack.c.b16 %v5457, %v5456
        %v5514 = vpack.c.b16 %v5459, %v5458
        %v5515 = vpack.c.b16 %v5461, %v5460
        %v5516 = vpack.c.b16 %v5463, %v5462
        %v5517 = vpack.c.b16 %v5465, %v5464
        %v5518 = vpack.c.b16 %v5467, %v5466
        %v5519 = vpack.c.b16 %v5469, %v5468
        %v5520 = vpack.c.b16 %v5471, %v5470
        %v5521 = vpack.c.b16 %v5473, %v5472
        %v5522 = vpack.c.b16 %v5475, %v5474
        %v5523 = vpack.c.b16 %v5477, %v5476
        %v5524 = vpack.c.b16 %v5479, %v5478
        %v5525 = vpack.c.b16 %v5481, %v5480
        %v5526 = vpack.c.b16 %v5483, %v5482
        %v5527 = vpack.c.b16 %v5485, %v5484
        %v5528 = vpack.c.b16 %v5487, %v5486
        %v5529 = vpack.c.b16 %v5489, %v5488
        %v5530 = vpack.c.b16 %v5491, %v5490
        %v5531 = vpack.c.b16 %v5493, %v5492
        %v5532 = vpack.c.b16 %v5495, %v5494
        %v5533 = vpack.c.b16 %v5497, %v5496
        %v5534 = vpack.c.b16 %v5499, %v5498
        %v5535 = vpack.c.b16 %v5501, %v5500
        %v5536 = vpack.c.b16 %v5503, %v5502
        %v5537 = vpack.c.b16 %v5505, %v5504
        %5570 = vmatprep.subr.bf16.mxu0 0
        %5571 = vmatpush1.bf16.msra.mxu0 %v5506
        %5572 = vmatprep.subr.bf16.mxu0 0
        %5573 = vmatpush1.bf16.msra.mxu0 %v5507
        %5574 = vmatprep.subr.bf16.mxu0 0
        %5575 = vmatpush1.bf16.msra.mxu0 %v5508
        %5576 = vmatprep.subr.bf16.mxu0 0
        %5577 = vmatpush1.bf16.msra.mxu0 %v5509
        %5578 = vmatprep.subr.bf16.mxu0 0
        %5579 = vmatpush1.bf16.msra.mxu0 %v5510
        %5580 = vmatprep.subr.bf16.mxu0 0
        %5581 = vmatpush1.bf16.msra.mxu0 %v5511
        %5582 = vmatprep.subr.bf16.mxu0 0
        %5583 = vmatpush1.bf16.msra.mxu0 %v5512
        %5584 = vmatprep.subr.bf16.mxu0 0
        %5585 = vmatpush1.bf16.msra.mxu0 %v5513
        %5586 = vmatprep.subr.bf16.mxu0 0
        %5587 = vmatpush1.bf16.msra.mxu0 %v5514
        %5588 = vmatprep.subr.bf16.mxu0 0
        %5589 = vmatpush1.bf16.msra.mxu0 %v5515
        %5590 = vmatprep.subr.bf16.mxu0 0
        %5591 = vmatpush1.bf16.msra.mxu0 %v5516
        %5592 = vmatprep.subr.bf16.mxu0 0
        %5593 = vmatpush1.bf16.msra.mxu0 %v5517
        %5594 = vmatprep.subr.bf16.mxu0 0
        %5595 = vmatpush1.bf16.msra.mxu0 %v5518
        %5596 = vmatprep.subr.bf16.mxu0 0
        %5597 = vmatpush1.bf16.msra.mxu0 %v5519
        %5598 = vmatprep.subr.bf16.mxu0 0
        %5599 = vmatpush1.bf16.msra.mxu0 %v5520
        %5600 = vmatprep.subr.bf16.mxu0 0
        %5601 = vmatpush1.bf16.msra.mxu0 %v5521
        %5602 = vmatprep.mubr.bf16.mxu0 %v5371
        %5603 = vmatmul.mubr.bf16.gmra.mrb[0].mxu0 %v5370
        %v5604 = vpop.f32.mrb[0].mxu0
        %v5605 = vadd.f32 0.0, %v5604
        %v5606 = vpop.f32.mrb[0].mxu0
        %v5607 = vpop.f32.mrb[0].mxu0
        %v5608 = vpop.f32.mrb[0].mxu0
        %5609 = vdwg.mxu0
        %5610 = vmatprep.subr.bf16.mxu0 0
        %5611 = vmatpush1.bf16.msra.mxu0 %v5522
        %5612 = vmatprep.subr.bf16.mxu0 0
        %5613 = vmatpush1.bf16.msra.mxu0 %v5523
        %5614 = vmatprep.subr.bf16.mxu0 0
        %5615 = vmatpush1.bf16.msra.mxu0 %v5524
        %5616 = vmatprep.subr.bf16.mxu0 0
        %5617 = vmatpush1.bf16.msra.mxu0 %v5525
        %5618 = vmatprep.subr.bf16.mxu0 0
        %5619 = vmatpush1.bf16.msra.mxu0 %v5526
        %5620 = vmatprep.subr.bf16.mxu0 0
        %5621 = vmatpush1.bf16.msra.mxu0 %v5527
        %5622 = vmatprep.subr.bf16.mxu0 0
        %5623 = vmatpush1.bf16.msra.mxu0 %v5528
        %5624 = vmatprep.subr.bf16.mxu0 0
        %5625 = vmatpush1.bf16.msra.mxu0 %v5529
        %5626 = vmatprep.subr.bf16.mxu0 0
        %5627 = vmatpush1.bf16.msra.mxu0 %v5530
        %5628 = vmatprep.subr.bf16.mxu0 0
        %5629 = vmatpush1.bf16.msra.mxu0 %v5531
        %5630 = vmatprep.subr.bf16.mxu0 0
        %5631 = vmatpush1.bf16.msra.mxu0 %v5532
        %5632 = vmatprep.subr.bf16.mxu0 0
        %5633 = vmatpush1.bf16.msra.mxu0 %v5533
        %5634 = vmatprep.subr.bf16.mxu0 0
        %5635 = vmatpush1.bf16.msra.mxu0 %v5534
        %5636 = vmatprep.subr.bf16.mxu0 0
        %5637 = vmatpush1.bf16.msra.mxu0 %v5535
        %5638 = vmatprep.subr.bf16.mxu0 0
        %5639 = vmatpush1.bf16.msra.mxu0 %v5536
        %5640 = vmatprep.subr.bf16.mxu0 0
        %5641 = vmatpush1.bf16.msra.mxu0 %v5537
        %5642 = vmatprep.mubr.bf16.mxu0 %v5373
        %5643 = vmatmul.mubr.bf16.gmra.mrb[0].mxu0 %v5372
        %v5644 = vpop.f32.mrb[0].mxu0
        %v5645 = vadd.f32 %v5605, %v5644
        %v5646 = vpop.f32.mrb[0].mxu0
        %v5647 = vpop.f32.mrb[0].mxu0
        %v5648 = vpop.f32.mrb[0].mxu0
        %5649 = vdwg.mxu0
        %v5650 = vadd.f32 %v5297, %v5645
        %s5651 = scalar_lea.vmem [#allocation13], 256
        %v5652 = vld [vmem:[%s5651] sm:$0xf]
        %v5653 = vld [vmem:[%s5651 + $0x4] sm:$0xf]
        %v5654 = vld [vmem:[%s5651 + $0x8] sm:$0xf]
        %v5655 = vld [vmem:[%s5651 + $0xc] sm:$0xf]
        %v5656 = vld [vmem:[%s5651 + $0x10] sm:$0xf]
        %v5657 = vld [vmem:[%s5651 + $0x14] sm:$0xf]
        %v5658 = vld [vmem:[%s5651 + $0x18] sm:$0xf]
        %v5659 = vld [vmem:[%s5651 + $0x1c] sm:$0xf]
        %v5660 = vld [vmem:[%s5651 + $0x20] sm:$0xf]
        %v5661 = vld [vmem:[%s5651 + $0x24] sm:$0xf]
        %v5662 = vld [vmem:[%s5651 + $0x28] sm:$0xf]
        %v5663 = vld [vmem:[%s5651 + $0x2c] sm:$0xf]
        %v5664 = vld [vmem:[%s5651 + $0x30] sm:$0xf]
        %v5665 = vld [vmem:[%s5651 + $0x34] sm:$0xf]
        %v5666 = vld [vmem:[%s5651 + $0x38] sm:$0xf]
        %v5667 = vld [vmem:[%s5651 + $0x3c] sm:$0xf]
        %v5668 = vld [vmem:[%s5651 + $0x40] sm:$0xf]
        %v5669 = vld [vmem:[%s5651 + $0x44] sm:$0xf]
        %v5670 = vld [vmem:[%s5651 + $0x48] sm:$0xf]
        %v5671 = vld [vmem:[%s5651 + $0x4c] sm:$0xf]
        %v5672 = vld [vmem:[%s5651 + $0x50] sm:$0xf]
        %v5673 = vld [vmem:[%s5651 + $0x54] sm:$0xf]
        %v5674 = vld [vmem:[%s5651 + $0x58] sm:$0xf]
        %v5675 = vld [vmem:[%s5651 + $0x5c] sm:$0xf]
        %v5676 = vld [vmem:[%s5651 + $0x60] sm:$0xf]
        %v5677 = vld [vmem:[%s5651 + $0x64] sm:$0xf]
        %v5678 = vld [vmem:[%s5651 + $0x68] sm:$0xf]
        %v5679 = vld [vmem:[%s5651 + $0x6c] sm:$0xf]
        %v5680 = vld [vmem:[%s5651 + $0x70] sm:$0xf]
        %v5681 = vld [vmem:[%s5651 + $0x74] sm:$0xf]
        %v5682 = vld [vmem:[%s5651 + $0x78] sm:$0xf]
        %v5683 = vld [vmem:[%s5651 + $0x7c] sm:$0xf]
        %v5684 = vld [vmem:[%s5651 + $0x80] sm:$0xf]
        %v5685 = vld [vmem:[%s5651 + $0x84] sm:$0xf]
        %v5686 = vld [vmem:[%s5651 + $0x88] sm:$0xf]
        %v5687 = vld [vmem:[%s5651 + $0x8c] sm:$0xf]
        %v5688 = vld [vmem:[%s5651 + $0x90] sm:$0xf]
        %v5689 = vld [vmem:[%s5651 + $0x94] sm:$0xf]
        %v5690 = vld [vmem:[%s5651 + $0x98] sm:$0xf]
        %v5691 = vld [vmem:[%s5651 + $0x9c] sm:$0xf]
        %v5692 = vld [vmem:[%s5651 + $0xa0] sm:$0xf]
        %v5693 = vld [vmem:[%s5651 + $0xa4] sm:$0xf]
        %v5694 = vld [vmem:[%s5651 + $0xa8] sm:$0xf]
        %v5695 = vld [vmem:[%s5651 + $0xac] sm:$0xf]
        %v5696 = vld [vmem:[%s5651 + $0xb0] sm:$0xf]
        %v5697 = vld [vmem:[%s5651 + $0xb4] sm:$0xf]
        %v5698 = vld [vmem:[%s5651 + $0xb8] sm:$0xf]
        %v5699 = vld [vmem:[%s5651 + $0xbc] sm:$0xf]
        %v5700 = vld [vmem:[%s5651 + $0xc0] sm:$0xf]
        %v5701 = vld [vmem:[%s5651 + $0xc4] sm:$0xf]
        %v5702 = vld [vmem:[%s5651 + $0xc8] sm:$0xf]
        %v5703 = vld [vmem:[%s5651 + $0xcc] sm:$0xf]
        %v5704 = vld [vmem:[%s5651 + $0xd0] sm:$0xf]
        %v5705 = vld [vmem:[%s5651 + $0xd4] sm:$0xf]
        %v5706 = vld [vmem:[%s5651 + $0xd8] sm:$0xf]
        %v5707 = vld [vmem:[%s5651 + $0xdc] sm:$0xf]
        %v5708 = vld [vmem:[%s5651 + $0xe0] sm:$0xf]
        %v5709 = vld [vmem:[%s5651 + $0xe4] sm:$0xf]
        %v5710 = vld [vmem:[%s5651 + $0xe8] sm:$0xf]
        %v5711 = vld [vmem:[%s5651 + $0xec] sm:$0xf]
        %v5712 = vld [vmem:[%s5651 + $0xf0] sm:$0xf]
        %v5713 = vld [vmem:[%s5651 + $0xf4] sm:$0xf]
        %v5714 = vld [vmem:[%s5651 + $0xf8] sm:$0xf]
        %v5715 = vld [vmem:[%s5651 + $0xfc] sm:$0xf]
        %v5717 = vshrl.u32 %v5370, 16
        %v5720 = vshrl.u32 %v5371, 16
        %v5723 = vshrl.u32 %v5372, 16
        %v5726 = vshrl.u32 %v5373, 16
        %v5796 = vunpack.c.l.b16 %v5652
        %v5797 = vunpack.c.l.b16 %v5653
        %v5798 = vunpack.c.l.b16 %v5654
        %v5799 = vunpack.c.l.b16 %v5655
        %v5800 = vunpack.c.l.b16 %v5656
        %v5801 = vunpack.c.l.b16 %v5657
        %v5802 = vunpack.c.l.b16 %v5658
        %v5803 = vunpack.c.l.b16 %v5659
        %v5804 = vunpack.c.l.b16 %v5660
        %v5805 = vunpack.c.l.b16 %v5661
        %v5806 = vunpack.c.l.b16 %v5662
        %v5807 = vunpack.c.l.b16 %v5663
        %v5808 = vunpack.c.l.b16 %v5664
        %v5809 = vunpack.c.l.b16 %v5665
        %v5810 = vunpack.c.l.b16 %v5666
        %v5811 = vunpack.c.l.b16 %v5667
        %v5812 = vunpack.c.l.b16 %v5668
        %v5813 = vunpack.c.l.b16 %v5669
        %v5814 = vunpack.c.l.b16 %v5670
        %v5815 = vunpack.c.l.b16 %v5671
        %v5816 = vunpack.c.l.b16 %v5672
        %v5817 = vunpack.c.l.b16 %v5673
        %v5818 = vunpack.c.l.b16 %v5674
        %v5819 = vunpack.c.l.b16 %v5675
        %v5820 = vunpack.c.l.b16 %v5676
        %v5821 = vunpack.c.l.b16 %v5677
        %v5822 = vunpack.c.l.b16 %v5678
        %v5823 = vunpack.c.l.b16 %v5679
        %v5824 = vunpack.c.l.b16 %v5680
        %v5825 = vunpack.c.l.b16 %v5681
        %v5826 = vunpack.c.l.b16 %v5682
        %v5827 = vunpack.c.l.b16 %v5683
        %v5828 = vunpack.c.l.b16 %v5684
        %v5829 = vunpack.c.l.b16 %v5685
        %v5830 = vunpack.c.l.b16 %v5686
        %v5831 = vunpack.c.l.b16 %v5687
        %v5832 = vunpack.c.l.b16 %v5688
        %v5833 = vunpack.c.l.b16 %v5689
        %v5834 = vunpack.c.l.b16 %v5690
        %v5835 = vunpack.c.l.b16 %v5691
        %v5836 = vunpack.c.l.b16 %v5692
        %v5837 = vunpack.c.l.b16 %v5693
        %v5838 = vunpack.c.l.b16 %v5694
        %v5839 = vunpack.c.l.b16 %v5695
        %v5840 = vunpack.c.l.b16 %v5696
        %v5841 = vunpack.c.l.b16 %v5697
        %v5842 = vunpack.c.l.b16 %v5698
        %v5843 = vunpack.c.l.b16 %v5699
        %v5844 = vunpack.c.l.b16 %v5700
        %v5845 = vunpack.c.l.b16 %v5701
        %v5846 = vunpack.c.l.b16 %v5702
        %v5847 = vunpack.c.l.b16 %v5703
        %v5848 = vunpack.c.l.b16 %v5704
        %v5849 = vunpack.c.l.b16 %v5705
        %v5850 = vunpack.c.l.b16 %v5706
        %v5851 = vunpack.c.l.b16 %v5707
        %v5852 = vunpack.c.l.b16 %v5708
        %v5853 = vunpack.c.l.b16 %v5709
        %v5854 = vunpack.c.l.b16 %v5710
        %v5855 = vunpack.c.l.b16 %v5711
        %v5856 = vunpack.c.l.b16 %v5712
        %v5857 = vunpack.c.l.b16 %v5713
        %v5858 = vunpack.c.l.b16 %v5714
        %v5859 = vunpack.c.l.b16 %v5715
        %v5860 = vpack.c.b16 %v5797, %v5796
        %v5861 = vpack.c.b16 %v5799, %v5798
        %v5862 = vpack.c.b16 %v5801, %v5800
        %v5863 = vpack.c.b16 %v5803, %v5802
        %v5864 = vpack.c.b16 %v5805, %v5804
        %v5865 = vpack.c.b16 %v5807, %v5806
        %v5866 = vpack.c.b16 %v5809, %v5808
        %v5867 = vpack.c.b16 %v5811, %v5810
        %v5868 = vpack.c.b16 %v5813, %v5812
        %v5869 = vpack.c.b16 %v5815, %v5814
        %v5870 = vpack.c.b16 %v5817, %v5816
        %v5871 = vpack.c.b16 %v5819, %v5818
        %v5872 = vpack.c.b16 %v5821, %v5820
        %v5873 = vpack.c.b16 %v5823, %v5822
        %v5874 = vpack.c.b16 %v5825, %v5824
        %v5875 = vpack.c.b16 %v5827, %v5826
        %v5876 = vpack.c.b16 %v5829, %v5828
        %v5877 = vpack.c.b16 %v5831, %v5830
        %v5878 = vpack.c.b16 %v5833, %v5832
        %v5879 = vpack.c.b16 %v5835, %v5834
        %v5880 = vpack.c.b16 %v5837, %v5836
        %v5881 = vpack.c.b16 %v5839, %v5838
        %v5882 = vpack.c.b16 %v5841, %v5840
        %v5883 = vpack.c.b16 %v5843, %v5842
        %v5884 = vpack.c.b16 %v5845, %v5844
        %v5885 = vpack.c.b16 %v5847, %v5846
        %v5886 = vpack.c.b16 %v5849, %v5848
        %v5887 = vpack.c.b16 %v5851, %v5850
        %v5888 = vpack.c.b16 %v5853, %v5852
        %v5889 = vpack.c.b16 %v5855, %v5854
        %v5890 = vpack.c.b16 %v5857, %v5856
        %v5891 = vpack.c.b16 %v5859, %v5858
        %5924 = vmatprep.subr.bf16.mxu0 0
        %5925 = vmatpush1.bf16.msra.mxu0 %v5860
        %5926 = vmatprep.subr.bf16.mxu0 0
        %5927 = vmatpush1.bf16.msra.mxu0 %v5861
        %5928 = vmatprep.subr.bf16.mxu0 0
        %5929 = vmatpush1.bf16.msra.mxu0 %v5862
        %5930 = vmatprep.subr.bf16.mxu0 0
        %5931 = vmatpush1.bf16.msra.mxu0 %v5863
        %5932 = vmatprep.subr.bf16.mxu0 0
        %5933 = vmatpush1.bf16.msra.mxu0 %v5864
        %5934 = vmatprep.subr.bf16.mxu0 0
        %5935 = vmatpush1.bf16.msra.mxu0 %v5865
        %5936 = vmatprep.subr.bf16.mxu0 0
        %5937 = vmatpush1.bf16.msra.mxu0 %v5866
        %5938 = vmatprep.subr.bf16.mxu0 0
        %5939 = vmatpush1.bf16.msra.mxu0 %v5867
        %5940 = vmatprep.subr.bf16.mxu0 0
        %5941 = vmatpush1.bf16.msra.mxu0 %v5868
        %5942 = vmatprep.subr.bf16.mxu0 0
        %5943 = vmatpush1.bf16.msra.mxu0 %v5869
        %5944 = vmatprep.subr.bf16.mxu0 0
        %5945 = vmatpush1.bf16.msra.mxu0 %v5870
        %5946 = vmatprep.subr.bf16.mxu0 0
        %5947 = vmatpush1.bf16.msra.mxu0 %v5871
        %5948 = vmatprep.subr.bf16.mxu0 0
        %5949 = vmatpush1.bf16.msra.mxu0 %v5872
        %5950 = vmatprep.subr.bf16.mxu0 0
        %5951 = vmatpush1.bf16.msra.mxu0 %v5873
        %5952 = vmatprep.subr.bf16.mxu0 0
        %5953 = vmatpush1.bf16.msra.mxu0 %v5874
        %5954 = vmatprep.subr.bf16.mxu0 0
        %5955 = vmatpush1.bf16.msra.mxu0 %v5875
        %5956 = vmatprep.mubr.bf16.mxu0 %v5720
        %5957 = vmatmul.mubr.bf16.gmra.mrb[0].mxu0 %v5717
        %v5958 = vpop.f32.mrb[0].mxu0
        %v5959 = vadd.f32 0.0, %v5958
        %v5960 = vpop.f32.mrb[0].mxu0
        %v5961 = vpop.f32.mrb[0].mxu0
        %v5962 = vpop.f32.mrb[0].mxu0
        %5963 = vdwg.mxu0
        %5964 = vmatprep.subr.bf16.mxu0 0
        %5965 = vmatpush1.bf16.msra.mxu0 %v5876
        %5966 = vmatprep.subr.bf16.mxu0 0
        %5967 = vmatpush1.bf16.msra.mxu0 %v5877
        %5968 = vmatprep.subr.bf16.mxu0 0
        %5969 = vmatpush1.bf16.msra.mxu0 %v5878
        %5970 = vmatprep.subr.bf16.mxu0 0
        %5971 = vmatpush1.bf16.msra.mxu0 %v5879
        %5972 = vmatprep.subr.bf16.mxu0 0
        %5973 = vmatpush1.bf16.msra.mxu0 %v5880
        %5974 = vmatprep.subr.bf16.mxu0 0
        %5975 = vmatpush1.bf16.msra.mxu0 %v5881
        %5976 = vmatprep.subr.bf16.mxu0 0
        %5977 = vmatpush1.bf16.msra.mxu0 %v5882
        %5978 = vmatprep.subr.bf16.mxu0 0
        %5979 = vmatpush1.bf16.msra.mxu0 %v5883
        %5980 = vmatprep.subr.bf16.mxu0 0
        %5981 = vmatpush1.bf16.msra.mxu0 %v5884
        %5982 = vmatprep.subr.bf16.mxu0 0
        %5983 = vmatpush1.bf16.msra.mxu0 %v5885
        %5984 = vmatprep.subr.bf16.mxu0 0
        %5985 = vmatpush1.bf16.msra.mxu0 %v5886
        %5986 = vmatprep.subr.bf16.mxu0 0
        %5987 = vmatpush1.bf16.msra.mxu0 %v5887
        %5988 = vmatprep.subr.bf16.mxu0 0
        %5989 = vmatpush1.bf16.msra.mxu0 %v5888
        %5990 = vmatprep.subr.bf16.mxu0 0
        %5991 = vmatpush1.bf16.msra.mxu0 %v5889
        %5992 = vmatprep.subr.bf16.mxu0 0
        %5993 = vmatpush1.bf16.msra.mxu0 %v5890
        %5994 = vmatprep.subr.bf16.mxu0 0
        %5995 = vmatpush1.bf16.msra.mxu0 %v5891
        %5996 = vmatprep.mubr.bf16.mxu0 %v5726
        %5997 = vmatmul.mubr.bf16.gmra.mrb[0].mxu0 %v5723
        %v5998 = vpop.f32.mrb[0].mxu0
        %v5999 = vadd.f32 %v5959, %v5998
        %v6000 = vpop.f32.mrb[0].mxu0
        %v6001 = vpop.f32.mrb[0].mxu0
        %v6002 = vpop.f32.mrb[0].mxu0
        %6003 = vdwg.mxu0
        %v6004 = vadd.f32 %v5650, %v5999
        %v6005 = vld [vmem:[#allocation3] sm:$0x22]
        %v6006 = vld [vmem:[#allocation3 + $0x8] sm:$0x22]
        %s6007 = scalar_lea.vmem [#allocation13], 512
        %v6008 = vld [vmem:[%s6007] sm:$0xf]
        %v6009 = vld [vmem:[%s6007 + $0x4] sm:$0xf]
        %v6010 = vld [vmem:[%s6007 + $0x8] sm:$0xf]
        %v6011 = vld [vmem:[%s6007 + $0xc] sm:$0xf]
        %v6012 = vld [vmem:[%s6007 + $0x10] sm:$0xf]
        %v6013 = vld [vmem:[%s6007 + $0x14] sm:$0xf]
        %v6014 = vld [vmem:[%s6007 + $0x18] sm:$0xf]
        %v6015 = vld [vmem:[%s6007 + $0x1c] sm:$0xf]
        %v6016 = vld [vmem:[%s6007 + $0x20] sm:$0xf]
        %v6017 = vld [vmem:[%s6007 + $0x24] sm:$0xf]
        %v6018 = vld [vmem:[%s6007 + $0x28] sm:$0xf]
        %v6019 = vld [vmem:[%s6007 + $0x2c] sm:$0xf]
        %v6020 = vld [vmem:[%s6007 + $0x30] sm:$0xf]
        %v6021 = vld [vmem:[%s6007 + $0x34] sm:$0xf]
        %v6022 = vld [vmem:[%s6007 + $0x38] sm:$0xf]
        %v6023 = vld [vmem:[%s6007 + $0x3c] sm:$0xf]
        %v6024 = vld [vmem:[%s6007 + $0x40] sm:$0xf]
        %v6025 = vld [vmem:[%s6007 + $0x44] sm:$0xf]
        %v6026 = vld [vmem:[%s6007 + $0x48] sm:$0xf]
        %v6027 = vld [vmem:[%s6007 + $0x4c] sm:$0xf]
        %v6028 = vld [vmem:[%s6007 + $0x50] sm:$0xf]
        %v6029 = vld [vmem:[%s6007 + $0x54] sm:$0xf]
        %v6030 = vld [vmem:[%s6007 + $0x58] sm:$0xf]
        %v6031 = vld [vmem:[%s6007 + $0x5c] sm:$0xf]
        %v6032 = vld [vmem:[%s6007 + $0x60] sm:$0xf]
        %v6033 = vld [vmem:[%s6007 + $0x64] sm:$0xf]
        %v6034 = vld [vmem:[%s6007 + $0x68] sm:$0xf]
        %v6035 = vld [vmem:[%s6007 + $0x6c] sm:$0xf]
        %v6036 = vld [vmem:[%s6007 + $0x70] sm:$0xf]
        %v6037 = vld [vmem:[%s6007 + $0x74] sm:$0xf]
        %v6038 = vld [vmem:[%s6007 + $0x78] sm:$0xf]
        %v6039 = vld [vmem:[%s6007 + $0x7c] sm:$0xf]
        %v6040 = vld [vmem:[%s6007 + $0x80] sm:$0xf]
        %v6041 = vld [vmem:[%s6007 + $0x84] sm:$0xf]
        %v6042 = vld [vmem:[%s6007 + $0x88] sm:$0xf]
        %v6043 = vld [vmem:[%s6007 + $0x8c] sm:$0xf]
        %v6044 = vld [vmem:[%s6007 + $0x90] sm:$0xf]
        %v6045 = vld [vmem:[%s6007 + $0x94] sm:$0xf]
        %v6046 = vld [vmem:[%s6007 + $0x98] sm:$0xf]
        %v6047 = vld [vmem:[%s6007 + $0x9c] sm:$0xf]
        %v6048 = vld [vmem:[%s6007 + $0xa0] sm:$0xf]
        %v6049 = vld [vmem:[%s6007 + $0xa4] sm:$0xf]
        %v6050 = vld [vmem:[%s6007 + $0xa8] sm:$0xf]
        %v6051 = vld [vmem:[%s6007 + $0xac] sm:$0xf]
        %v6052 = vld [vmem:[%s6007 + $0xb0] sm:$0xf]
        %v6053 = vld [vmem:[%s6007 + $0xb4] sm:$0xf]
        %v6054 = vld [vmem:[%s6007 + $0xb8] sm:$0xf]
        %v6055 = vld [vmem:[%s6007 + $0xbc] sm:$0xf]
        %v6056 = vld [vmem:[%s6007 + $0xc0] sm:$0xf]
        %v6057 = vld [vmem:[%s6007 + $0xc4] sm:$0xf]
        %v6058 = vld [vmem:[%s6007 + $0xc8] sm:$0xf]
        %v6059 = vld [vmem:[%s6007 + $0xcc] sm:$0xf]
        %v6060 = vld [vmem:[%s6007 + $0xd0] sm:$0xf]
        %v6061 = vld [vmem:[%s6007 + $0xd4] sm:$0xf]
        %v6062 = vld [vmem:[%s6007 + $0xd8] sm:$0xf]
        %v6063 = vld [vmem:[%s6007 + $0xdc] sm:$0xf]
        %v6064 = vld [vmem:[%s6007 + $0xe0] sm:$0xf]
        %v6065 = vld [vmem:[%s6007 + $0xe4] sm:$0xf]
        %v6066 = vld [vmem:[%s6007 + $0xe8] sm:$0xf]
        %v6067 = vld [vmem:[%s6007 + $0xec] sm:$0xf]
        %v6068 = vld [vmem:[%s6007 + $0xf0] sm:$0xf]
        %v6069 = vld [vmem:[%s6007 + $0xf4] sm:$0xf]
        %v6070 = vld [vmem:[%s6007 + $0xf8] sm:$0xf]
        %v6071 = vld [vmem:[%s6007 + $0xfc] sm:$0xf]
        %v6074 = vunpack.c.l.b16 %v6005
        %v6075 = vunpack.c.h.b16 %v6005
        %v6076 = vunpack.c.l.b16 %v6006
        %v6077 = vunpack.c.h.b16 %v6006
        %v6078 = vpack.c.b16 %v6074, %v6074
        %v6079 = vpack.c.b16 %v6075, %v6075
        %v6080 = vpack.c.b16 %v6076, %v6076
        %v6081 = vpack.c.b16 %v6077, %v6077
        %v6082 = vrot.slane %v6078, 1
        %v6083 = vrot.slane %v6079, 1
        %v6084 = vrot.slane %v6080, 1
        %v6085 = vrot.slane %v6081, 1
        %v6154 = vunpack.c.l.b16 %v6008
        %v6155 = vunpack.c.l.b16 %v6009
        %v6156 = vunpack.c.l.b16 %v6010
        %v6157 = vunpack.c.l.b16 %v6011
        %v6158 = vunpack.c.l.b16 %v6012
        %v6159 = vunpack.c.l.b16 %v6013
        %v6160 = vunpack.c.l.b16 %v6014
        %v6161 = vunpack.c.l.b16 %v6015
        %v6162 = vunpack.c.l.b16 %v6016
        %v6163 = vunpack.c.l.b16 %v6017
        %v6164 = vunpack.c.l.b16 %v6018
        %v6165 = vunpack.c.l.b16 %v6019
        %v6166 = vunpack.c.l.b16 %v6020
        %v6167 = vunpack.c.l.b16 %v6021
        %v6168 = vunpack.c.l.b16 %v6022
        %v6169 = vunpack.c.l.b16 %v6023
        %v6170 = vunpack.c.l.b16 %v6024
        %v6171 = vunpack.c.l.b16 %v6025
        %v6172 = vunpack.c.l.b16 %v6026
        %v6173 = vunpack.c.l.b16 %v6027
        %v6174 = vunpack.c.l.b16 %v6028
        %v6175 = vunpack.c.l.b16 %v6029
        %v6176 = vunpack.c.l.b16 %v6030
        %v6177 = vunpack.c.l.b16 %v6031
        %v6178 = vunpack.c.l.b16 %v6032
        %v6179 = vunpack.c.l.b16 %v6033
        %v6180 = vunpack.c.l.b16 %v6034
        %v6181 = vunpack.c.l.b16 %v6035
        %v6182 = vunpack.c.l.b16 %v6036
        %v6183 = vunpack.c.l.b16 %v6037
        %v6184 = vunpack.c.l.b16 %v6038
        %v6185 = vunpack.c.l.b16 %v6039
        %v6186 = vunpack.c.l.b16 %v6040
        %v6187 = vunpack.c.l.b16 %v6041
        %v6188 = vunpack.c.l.b16 %v6042
        %v6189 = vunpack.c.l.b16 %v6043
        %v6190 = vunpack.c.l.b16 %v6044
        %v6191 = vunpack.c.l.b16 %v6045
        %v6192 = vunpack.c.l.b16 %v6046
        %v6193 = vunpack.c.l.b16 %v6047
        %v6194 = vunpack.c.l.b16 %v6048
        %v6195 = vunpack.c.l.b16 %v6049
        %v6196 = vunpack.c.l.b16 %v6050
        %v6197 = vunpack.c.l.b16 %v6051
        %v6198 = vunpack.c.l.b16 %v6052
        %v6199 = vunpack.c.l.b16 %v6053
        %v6200 = vunpack.c.l.b16 %v6054
        %v6201 = vunpack.c.l.b16 %v6055
        %v6202 = vunpack.c.l.b16 %v6056
        %v6203 = vunpack.c.l.b16 %v6057
        %v6204 = vunpack.c.l.b16 %v6058
        %v6205 = vunpack.c.l.b16 %v6059
        %v6206 = vunpack.c.l.b16 %v6060
        %v6207 = vunpack.c.l.b16 %v6061
        %v6208 = vunpack.c.l.b16 %v6062
        %v6209 = vunpack.c.l.b16 %v6063
        %v6210 = vunpack.c.l.b16 %v6064
        %v6211 = vunpack.c.l.b16 %v6065
        %v6212 = vunpack.c.l.b16 %v6066
        %v6213 = vunpack.c.l.b16 %v6067
        %v6214 = vunpack.c.l.b16 %v6068
        %v6215 = vunpack.c.l.b16 %v6069
        %v6216 = vunpack.c.l.b16 %v6070
        %v6217 = vunpack.c.l.b16 %v6071
        %v6218 = vpack.c.b16 %v6155, %v6154
        %v6219 = vpack.c.b16 %v6157, %v6156
        %v6220 = vpack.c.b16 %v6159, %v6158
        %v6221 = vpack.c.b16 %v6161, %v6160
        %v6222 = vpack.c.b16 %v6163, %v6162
        %v6223 = vpack.c.b16 %v6165, %v6164
        %v6224 = vpack.c.b16 %v6167, %v6166
        %v6225 = vpack.c.b16 %v6169, %v6168
        %v6226 = vpack.c.b16 %v6171, %v6170
        %v6227 = vpack.c.b16 %v6173, %v6172
        %v6228 = vpack.c.b16 %v6175, %v6174
        %v6229 = vpack.c.b16 %v6177, %v6176
        %v6230 = vpack.c.b16 %v6179, %v6178
        %v6231 = vpack.c.b16 %v6181, %v6180
        %v6232 = vpack.c.b16 %v6183, %v6182
        %v6233 = vpack.c.b16 %v6185, %v6184
        %v6234 = vpack.c.b16 %v6187, %v6186
        %v6235 = vpack.c.b16 %v6189, %v6188
        %v6236 = vpack.c.b16 %v6191, %v6190
        %v6237 = vpack.c.b16 %v6193, %v6192
        %v6238 = vpack.c.b16 %v6195, %v6194
        %v6239 = vpack.c.b16 %v6197, %v6196
        %v6240 = vpack.c.b16 %v6199, %v6198
        %v6241 = vpack.c.b16 %v6201, %v6200
        %v6242 = vpack.c.b16 %v6203, %v6202
        %v6243 = vpack.c.b16 %v6205, %v6204
        %v6244 = vpack.c.b16 %v6207, %v6206
        %v6245 = vpack.c.b16 %v6209, %v6208
        %v6246 = vpack.c.b16 %v6211, %v6210
        %v6247 = vpack.c.b16 %v6213, %v6212
        %v6248 = vpack.c.b16 %v6215, %v6214
        %v6249 = vpack.c.b16 %v6217, %v6216
        %6282 = vmatprep.subr.bf16.mxu0 0
        %6283 = vmatpush1.bf16.msra.mxu0 %v6218
        %6284 = vmatprep.subr.bf16.mxu0 0
        %6285 = vmatpush1.bf16.msra.mxu0 %v6219
        %6286 = vmatprep.subr.bf16.mxu0 0
        %6287 = vmatpush1.bf16.msra.mxu0 %v6220
        %6288 = vmatprep.subr.bf16.mxu0 0
        %6289 = vmatpush1.bf16.msra.mxu0 %v6221
        %6290 = vmatprep.subr.bf16.mxu0 0
        %6291 = vmatpush1.bf16.msra.mxu0 %v6222
        %6292 = vmatprep.subr.bf16.mxu0 0
        %6293 = vmatpush1.bf16.msra.mxu0 %v6223
        %6294 = vmatprep.subr.bf16.mxu0 0
        %6295 = vmatpush1.bf16.msra.mxu0 %v6224
        %6296 = vmatprep.subr.bf16.mxu0 0
        %6297 = vmatpush1.bf16.msra.mxu0 %v6225
        %6298 = vmatprep.subr.bf16.mxu0 0
        %6299 = vmatpush1.bf16.msra.mxu0 %v6226
        %6300 = vmatprep.subr.bf16.mxu0 0
        %6301 = vmatpush1.bf16.msra.mxu0 %v6227
        %6302 = vmatprep.subr.bf16.mxu0 0
        %6303 = vmatpush1.bf16.msra.mxu0 %v6228
        %6304 = vmatprep.subr.bf16.mxu0 0
        %6305 = vmatpush1.bf16.msra.mxu0 %v6229
        %6306 = vmatprep.subr.bf16.mxu0 0
        %6307 = vmatpush1.bf16.msra.mxu0 %v6230
        %6308 = vmatprep.subr.bf16.mxu0 0
        %6309 = vmatpush1.bf16.msra.mxu0 %v6231
        %6310 = vmatprep.subr.bf16.mxu0 0
        %6311 = vmatpush1.bf16.msra.mxu0 %v6232
        %6312 = vmatprep.subr.bf16.mxu0 0
        %6313 = vmatpush1.bf16.msra.mxu0 %v6233
        %6314 = vmatprep.mubr.bf16.mxu0 %v6083
        %6315 = vmatmul.mubr.bf16.gmra.mrb[0].mxu0 %v6082
        %v6316 = vpop.f32.mrb[0].mxu0
        %v6317 = vadd.f32 0.0, %v6316
        %v6318 = vpop.f32.mrb[0].mxu0
        %v6319 = vpop.f32.mrb[0].mxu0
        %v6320 = vpop.f32.mrb[0].mxu0
        %6321 = vdwg.mxu0
        %6322 = vmatprep.subr.bf16.mxu0 0
        %6323 = vmatpush1.bf16.msra.mxu0 %v6234
        %6324 = vmatprep.subr.bf16.mxu0 0
        %6325 = vmatpush1.bf16.msra.mxu0 %v6235
        %6326 = vmatprep.subr.bf16.mxu0 0
        %6327 = vmatpush1.bf16.msra.mxu0 %v6236
        %6328 = vmatprep.subr.bf16.mxu0 0
        %6329 = vmatpush1.bf16.msra.mxu0 %v6237
        %6330 = vmatprep.subr.bf16.mxu0 0
        %6331 = vmatpush1.bf16.msra.mxu0 %v6238
        %6332 = vmatprep.subr.bf16.mxu0 0
        %6333 = vmatpush1.bf16.msra.mxu0 %v6239
        %6334 = vmatprep.subr.bf16.mxu0 0
        %6335 = vmatpush1.bf16.msra.mxu0 %v6240
        %6336 = vmatprep.subr.bf16.mxu0 0
        %6337 = vmatpush1.bf16.msra.mxu0 %v6241
        %6338 = vmatprep.subr.bf16.mxu0 0
        %6339 = vmatpush1.bf16.msra.mxu0 %v6242
        %6340 = vmatprep.subr.bf16.mxu0 0
        %6341 = vmatpush1.bf16.msra.mxu0 %v6243
        %6342 = vmatprep.subr.bf16.mxu0 0
        %6343 = vmatpush1.bf16.msra.mxu0 %v6244
        %6344 = vmatprep.subr.bf16.mxu0 0
        %6345 = vmatpush1.bf16.msra.mxu0 %v6245
        %6346 = vmatprep.subr.bf16.mxu0 0
        %6347 = vmatpush1.bf16.msra.mxu0 %v6246
        %6348 = vmatprep.subr.bf16.mxu0 0
        %6349 = vmatpush1.bf16.msra.mxu0 %v6247
        %6350 = vmatprep.subr.bf16.mxu0 0
        %6351 = vmatpush1.bf16.msra.mxu0 %v6248
        %6352 = vmatprep.subr.bf16.mxu0 0
        %6353 = vmatpush1.bf16.msra.mxu0 %v6249
        %6354 = vmatprep.mubr.bf16.mxu0 %v6085
        %6355 = vmatmul.mubr.bf16.gmra.mrb[0].mxu0 %v6084
        %v6356 = vpop.f32.mrb[0].mxu0
        %v6357 = vadd.f32 %v6317, %v6356
        %v6358 = vpop.f32.mrb[0].mxu0
        %v6359 = vpop.f32.mrb[0].mxu0
        %v6360 = vpop.f32.mrb[0].mxu0
        %6361 = vdwg.mxu0
        %v6362 = vadd.f32 %v6004, %v6357
        %s6363 = scalar_lea.vmem [#allocation13], 768
        %v6364 = vld [vmem:[%s6363] sm:$0xf]
        %v6365 = vld [vmem:[%s6363 + $0x4] sm:$0xf]
        %v6366 = vld [vmem:[%s6363 + $0x8] sm:$0xf]
        %v6367 = vld [vmem:[%s6363 + $0xc] sm:$0xf]
        %v6368 = vld [vmem:[%s6363 + $0x10] sm:$0xf]
        %v6369 = vld [vmem:[%s6363 + $0x14] sm:$0xf]
        %v6370 = vld [vmem:[%s6363 + $0x18] sm:$0xf]
        %v6371 = vld [vmem:[%s6363 + $0x1c] sm:$0xf]
        %v6372 = vld [vmem:[%s6363 + $0x20] sm:$0xf]
        %v6373 = vld [vmem:[%s6363 + $0x24] sm:$0xf]
        %v6374 = vld [vmem:[%s6363 + $0x28] sm:$0xf]
        %v6375 = vld [vmem:[%s6363 + $0x2c] sm:$0xf]
        %v6376 = vld [vmem:[%s6363 + $0x30] sm:$0xf]
        %v6377 = vld [vmem:[%s6363 + $0x34] sm:$0xf]
        %v6378 = vld [vmem:[%s6363 + $0x38] sm:$0xf]
        %v6379 = vld [vmem:[%s6363 + $0x3c] sm:$0xf]
        %v6380 = vld [vmem:[%s6363 + $0x40] sm:$0xf]
        %v6381 = vld [vmem:[%s6363 + $0x44] sm:$0xf]
        %v6382 = vld [vmem:[%s6363 + $0x48] sm:$0xf]
        %v6383 = vld [vmem:[%s6363 + $0x4c] sm:$0xf]
        %v6384 = vld [vmem:[%s6363 + $0x50] sm:$0xf]
        %v6385 = vld [vmem:[%s6363 + $0x54] sm:$0xf]
        %v6386 = vld [vmem:[%s6363 + $0x58] sm:$0xf]
        %v6387 = vld [vmem:[%s6363 + $0x5c] sm:$0xf]
        %v6388 = vld [vmem:[%s6363 + $0x60] sm:$0xf]
        %v6389 = vld [vmem:[%s6363 + $0x64] sm:$0xf]
        %v6390 = vld [vmem:[%s6363 + $0x68] sm:$0xf]
        %v6391 = vld [vmem:[%s6363 + $0x6c] sm:$0xf]
        %v6392 = vld [vmem:[%s6363 + $0x70] sm:$0xf]
        %v6393 = vld [vmem:[%s6363 + $0x74] sm:$0xf]
        %v6394 = vld [vmem:[%s6363 + $0x78] sm:$0xf]
        %v6395 = vld [vmem:[%s6363 + $0x7c] sm:$0xf]
        %v6396 = vld [vmem:[%s6363 + $0x80] sm:$0xf]
        %v6397 = vld [vmem:[%s6363 + $0x84] sm:$0xf]
        %v6398 = vld [vmem:[%s6363 + $0x88] sm:$0xf]
        %v6399 = vld [vmem:[%s6363 + $0x8c] sm:$0xf]
        %v6400 = vld [vmem:[%s6363 + $0x90] sm:$0xf]
        %v6401 = vld [vmem:[%s6363 + $0x94] sm:$0xf]
        %v6402 = vld [vmem:[%s6363 + $0x98] sm:$0xf]
        %v6403 = vld [vmem:[%s6363 + $0x9c] sm:$0xf]
        %v6404 = vld [vmem:[%s6363 + $0xa0] sm:$0xf]
        %v6405 = vld [vmem:[%s6363 + $0xa4] sm:$0xf]
        %v6406 = vld [vmem:[%s6363 + $0xa8] sm:$0xf]
        %v6407 = vld [vmem:[%s6363 + $0xac] sm:$0xf]
        %v6408 = vld [vmem:[%s6363 + $0xb0] sm:$0xf]
        %v6409 = vld [vmem:[%s6363 + $0xb4] sm:$0xf]
        %v6410 = vld [vmem:[%s6363 + $0xb8] sm:$0xf]
        %v6411 = vld [vmem:[%s6363 + $0xbc] sm:$0xf]
        %v6412 = vld [vmem:[%s6363 + $0xc0] sm:$0xf]
        %v6413 = vld [vmem:[%s6363 + $0xc4] sm:$0xf]
        %v6414 = vld [vmem:[%s6363 + $0xc8] sm:$0xf]
        %v6415 = vld [vmem:[%s6363 + $0xcc] sm:$0xf]
        %v6416 = vld [vmem:[%s6363 + $0xd0] sm:$0xf]
        %v6417 = vld [vmem:[%s6363 + $0xd4] sm:$0xf]
        %v6418 = vld [vmem:[%s6363 + $0xd8] sm:$0xf]
        %v6419 = vld [vmem:[%s6363 + $0xdc] sm:$0xf]
        %v6420 = vld [vmem:[%s6363 + $0xe0] sm:$0xf]
        %v6421 = vld [vmem:[%s6363 + $0xe4] sm:$0xf]
        %v6422 = vld [vmem:[%s6363 + $0xe8] sm:$0xf]
        %v6423 = vld [vmem:[%s6363 + $0xec] sm:$0xf]
        %v6424 = vld [vmem:[%s6363 + $0xf0] sm:$0xf]
        %v6425 = vld [vmem:[%s6363 + $0xf4] sm:$0xf]
        %v6426 = vld [vmem:[%s6363 + $0xf8] sm:$0xf]
        %v6427 = vld [vmem:[%s6363 + $0xfc] sm:$0xf]
        %v6429 = vshrl.u32 %v6078, 16
        %v6431 = vrot.slane %v6429, 1
        %v6433 = vshrl.u32 %v6079, 16
        %v6435 = vrot.slane %v6433, 1
        %v6437 = vshrl.u32 %v6080, 16
        %v6439 = vrot.slane %v6437, 1
        %v6441 = vshrl.u32 %v6081, 16
        %v6443 = vrot.slane %v6441, 1
        %v6512 = vunpack.c.l.b16 %v6364
        %v6513 = vunpack.c.l.b16 %v6365
        %v6514 = vunpack.c.l.b16 %v6366
        %v6515 = vunpack.c.l.b16 %v6367
        %v6516 = vunpack.c.l.b16 %v6368
        %v6517 = vunpack.c.l.b16 %v6369
        %v6518 = vunpack.c.l.b16 %v6370
        %v6519 = vunpack.c.l.b16 %v6371
        %v6520 = vunpack.c.l.b16 %v6372
        %v6521 = vunpack.c.l.b16 %v6373
        %v6522 = vunpack.c.l.b16 %v6374
        %v6523 = vunpack.c.l.b16 %v6375
        %v6524 = vunpack.c.l.b16 %v6376
        %v6525 = vunpack.c.l.b16 %v6377
        %v6526 = vunpack.c.l.b16 %v6378
        %v6527 = vunpack.c.l.b16 %v6379
        %v6528 = vunpack.c.l.b16 %v6380
        %v6529 = vunpack.c.l.b16 %v6381
        %v6530 = vunpack.c.l.b16 %v6382
        %v6531 = vunpack.c.l.b16 %v6383
        %v6532 = vunpack.c.l.b16 %v6384
        %v6533 = vunpack.c.l.b16 %v6385
        %v6534 = vunpack.c.l.b16 %v6386
        %v6535 = vunpack.c.l.b16 %v6387
        %v6536 = vunpack.c.l.b16 %v6388
        %v6537 = vunpack.c.l.b16 %v6389
        %v6538 = vunpack.c.l.b16 %v6390
        %v6539 = vunpack.c.l.b16 %v6391
        %v6540 = vunpack.c.l.b16 %v6392
        %v6541 = vunpack.c.l.b16 %v6393
        %v6542 = vunpack.c.l.b16 %v6394
        %v6543 = vunpack.c.l.b16 %v6395
        %v6544 = vunpack.c.l.b16 %v6396
        %v6545 = vunpack.c.l.b16 %v6397
        %v6546 = vunpack.c.l.b16 %v6398
        %v6547 = vunpack.c.l.b16 %v6399
        %v6548 = vunpack.c.l.b16 %v6400
        %v6549 = vunpack.c.l.b16 %v6401
        %v6550 = vunpack.c.l.b16 %v6402
        %v6551 = vunpack.c.l.b16 %v6403
        %v6552 = vunpack.c.l.b16 %v6404
        %v6553 = vunpack.c.l.b16 %v6405
        %v6554 = vunpack.c.l.b16 %v6406
        %v6555 = vunpack.c.l.b16 %v6407
        %v6556 = vunpack.c.l.b16 %v6408
        %v6557 = vunpack.c.l.b16 %v6409
        %v6558 = vunpack.c.l.b16 %v6410
        %v6559 = vunpack.c.l.b16 %v6411
        %v6560 = vunpack.c.l.b16 %v6412
        %v6561 = vunpack.c.l.b16 %v6413
        %v6562 = vunpack.c.l.b16 %v6414
        %v6563 = vunpack.c.l.b16 %v6415
        %v6564 = vunpack.c.l.b16 %v6416
        %v6565 = vunpack.c.l.b16 %v6417
        %v6566 = vunpack.c.l.b16 %v6418
        %v6567 = vunpack.c.l.b16 %v6419
        %v6568 = vunpack.c.l.b16 %v6420
        %v6569 = vunpack.c.l.b16 %v6421
        %v6570 = vunpack.c.l.b16 %v6422
        %v6571 = vunpack.c.l.b16 %v6423
        %v6572 = vunpack.c.l.b16 %v6424
        %v6573 = vunpack.c.l.b16 %v6425
        %v6574 = vunpack.c.l.b16 %v6426
        %v6575 = vunpack.c.l.b16 %v6427
        %v6576 = vpack.c.b16 %v6513, %v6512
        %v6577 = vpack.c.b16 %v6515, %v6514
        %v6578 = vpack.c.b16 %v6517, %v6516
        %v6579 = vpack.c.b16 %v6519, %v6518
        %v6580 = vpack.c.b16 %v6521, %v6520
        %v6581 = vpack.c.b16 %v6523, %v6522
        %v6582 = vpack.c.b16 %v6525, %v6524
        %v6583 = vpack.c.b16 %v6527, %v6526
        %v6584 = vpack.c.b16 %v6529, %v6528
        %v6585 = vpack.c.b16 %v6531, %v6530
        %v6586 = vpack.c.b16 %v6533, %v6532
        %v6587 = vpack.c.b16 %v6535, %v6534
        %v6588 = vpack.c.b16 %v6537, %v6536
        %v6589 = vpack.c.b16 %v6539, %v6538
        %v6590 = vpack.c.b16 %v6541, %v6540
        %v6591 = vpack.c.b16 %v6543, %v6542
        %v6592 = vpack.c.b16 %v6545, %v6544
        %v6593 = vpack.c.b16 %v6547, %v6546
        %v6594 = vpack.c.b16 %v6549, %v6548
        %v6595 = vpack.c.b16 %v6551, %v6550
        %v6596 = vpack.c.b16 %v6553, %v6552
        %v6597 = vpack.c.b16 %v6555, %v6554
        %v6598 = vpack.c.b16 %v6557, %v6556
        %v6599 = vpack.c.b16 %v6559, %v6558
        %v6600 = vpack.c.b16 %v6561, %v6560
        %v6601 = vpack.c.b16 %v6563, %v6562
        %v6602 = vpack.c.b16 %v6565, %v6564
        %v6603 = vpack.c.b16 %v6567, %v6566
        %v6604 = vpack.c.b16 %v6569, %v6568
        %v6605 = vpack.c.b16 %v6571, %v6570
        %v6606 = vpack.c.b16 %v6573, %v6572
        %v6607 = vpack.c.b16 %v6575, %v6574
        %6640 = vmatprep.subr.bf16.mxu0 0
        %6641 = vmatpush1.bf16.msra.mxu0 %v6576
        %6642 = vmatprep.subr.bf16.mxu0 0
        %6643 = vmatpush1.bf16.msra.mxu0 %v6577
        %6644 = vmatprep.subr.bf16.mxu0 0
        %6645 = vmatpush1.bf16.msra.mxu0 %v6578
        %6646 = vmatprep.subr.bf16.mxu0 0
        %6647 = vmatpush1.bf16.msra.mxu0 %v6579
        %6648 = vmatprep.subr.bf16.mxu0 0
        %6649 = vmatpush1.bf16.msra.mxu0 %v6580
        %6650 = vmatprep.subr.bf16.mxu0 0
        %6651 = vmatpush1.bf16.msra.mxu0 %v6581
        %6652 = vmatprep.subr.bf16.mxu0 0
        %6653 = vmatpush1.bf16.msra.mxu0 %v6582
        %6654 = vmatprep.subr.bf16.mxu0 0
        %6655 = vmatpush1.bf16.msra.mxu0 %v6583
        %6656 = vmatprep.subr.bf16.mxu0 0
        %6657 = vmatpush1.bf16.msra.mxu0 %v6584
        %6658 = vmatprep.subr.bf16.mxu0 0
        %6659 = vmatpush1.bf16.msra.mxu0 %v6585
        %6660 = vmatprep.subr.bf16.mxu0 0
        %6661 = vmatpush1.bf16.msra.mxu0 %v6586
        %6662 = vmatprep.subr.bf16.mxu0 0
        %6663 = vmatpush1.bf16.msra.mxu0 %v6587
        %6664 = vmatprep.subr.bf16.mxu0 0
        %6665 = vmatpush1.bf16.msra.mxu0 %v6588
        %6666 = vmatprep.subr.bf16.mxu0 0
        %6667 = vmatpush1.bf16.msra.mxu0 %v6589
        %6668 = vmatprep.subr.bf16.mxu0 0
        %6669 = vmatpush1.bf16.msra.mxu0 %v6590
        %6670 = vmatprep.subr.bf16.mxu0 0
        %6671 = vmatpush1.bf16.msra.mxu0 %v6591
        %6672 = vmatprep.mubr.bf16.mxu0 %v6435
        %6673 = vmatmul.mubr.bf16.gmra.mrb[0].mxu0 %v6431
        %v6674 = vpop.f32.mrb[0].mxu0
        %v6675 = vadd.f32 0.0, %v6674
        %v6676 = vpop.f32.mrb[0].mxu0
        %v6677 = vpop.f32.mrb[0].mxu0
        %v6678 = vpop.f32.mrb[0].mxu0
        %6679 = vdwg.mxu0
        %6680 = vmatprep.subr.bf16.mxu0 0
        %6681 = vmatpush1.bf16.msra.mxu0 %v6592
        %6682 = vmatprep.subr.bf16.mxu0 0
        %6683 = vmatpush1.bf16.msra.mxu0 %v6593
        %6684 = vmatprep.subr.bf16.mxu0 0
        %6685 = vmatpush1.bf16.msra.mxu0 %v6594
        %6686 = vmatprep.subr.bf16.mxu0 0
        %6687 = vmatpush1.bf16.msra.mxu0 %v6595
        %6688 = vmatprep.subr.bf16.mxu0 0
        %6689 = vmatpush1.bf16.msra.mxu0 %v6596
        %6690 = vmatprep.subr.bf16.mxu0 0
        %6691 = vmatpush1.bf16.msra.mxu0 %v6597
        %6692 = vmatprep.subr.bf16.mxu0 0
        %6693 = vmatpush1.bf16.msra.mxu0 %v6598
        %6694 = vmatprep.subr.bf16.mxu0 0
        %6695 = vmatpush1.bf16.msra.mxu0 %v6599
        %6696 = vmatprep.subr.bf16.mxu0 0
        %6697 = vmatpush1.bf16.msra.mxu0 %v6600
        %6698 = vmatprep.subr.bf16.mxu0 0
        %6699 = vmatpush1.bf16.msra.mxu0 %v6601
        %6700 = vmatprep.subr.bf16.mxu0 0
        %6701 = vmatpush1.bf16.msra.mxu0 %v6602
        %6702 = vmatprep.subr.bf16.mxu0 0
        %6703 = vmatpush1.bf16.msra.mxu0 %v6603
        %6704 = vmatprep.subr.bf16.mxu0 0
        %6705 = vmatpush1.bf16.msra.mxu0 %v6604
        %6706 = vmatprep.subr.bf16.mxu0 0
        %6707 = vmatpush1.bf16.msra.mxu0 %v6605
        %6708 = vmatprep.subr.bf16.mxu0 0
        %6709 = vmatpush1.bf16.msra.mxu0 %v6606
        %6710 = vmatprep.subr.bf16.mxu0 0
        %6711 = vmatpush1.bf16.msra.mxu0 %v6607
        %6712 = vmatprep.mubr.bf16.mxu0 %v6443
        %6713 = vmatmul.mubr.bf16.gmra.mrb[0].mxu0 %v6439
        %v6714 = vpop.f32.mrb[0].mxu0
        %v6715 = vadd.f32 %v6675, %v6714
        %v6716 = vpop.f32.mrb[0].mxu0
        %v6717 = vpop.f32.mrb[0].mxu0
        %v6718 = vpop.f32.mrb[0].mxu0
        %6719 = vdwg.mxu0
        %v6720 = vadd.f32 %v6362, %v6715
        %v6721 = vld [vmem:[#allocation3] sm:$0x44]
        %v6722 = vld [vmem:[#allocation3 + $0x8] sm:$0x44]
        %s6723 = scalar_lea.vmem [#allocation13], 1024
        %v6724 = vld [vmem:[%s6723] sm:$0xf]
        %v6725 = vld [vmem:[%s6723 + $0x4] sm:$0xf]
        %v6726 = vld [vmem:[%s6723 + $0x8] sm:$0xf]
        %v6727 = vld [vmem:[%s6723 + $0xc] sm:$0xf]
        %v6728 = vld [vmem:[%s6723 + $0x10] sm:$0xf]
        %v6729 = vld [vmem:[%s6723 + $0x14] sm:$0xf]
        %v6730 = vld [vmem:[%s6723 + $0x18] sm:$0xf]
        %v6731 = vld [vmem:[%s6723 + $0x1c] sm:$0xf]
        %v6732 = vld [vmem:[%s6723 + $0x20] sm:$0xf]
        %v6733 = vld [vmem:[%s6723 + $0x24] sm:$0xf]
        %v6734 = vld [vmem:[%s6723 + $0x28] sm:$0xf]
        %v6735 = vld [vmem:[%s6723 + $0x2c] sm:$0xf]
        %v6736 = vld [vmem:[%s6723 + $0x30] sm:$0xf]
        %v6737 = vld [vmem:[%s6723 + $0x34] sm:$0xf]
        %v6738 = vld [vmem:[%s6723 + $0x38] sm:$0xf]
        %v6739 = vld [vmem:[%s6723 + $0x3c] sm:$0xf]
        %v6740 = vld [vmem:[%s6723 + $0x40] sm:$0xf]
        %v6741 = vld [vmem:[%s6723 + $0x44] sm:$0xf]
        %v6742 = vld [vmem:[%s6723 + $0x48] sm:$0xf]
        %v6743 = vld [vmem:[%s6723 + $0x4c] sm:$0xf]
        %v6744 = vld [vmem:[%s6723 + $0x50] sm:$0xf]
        %v6745 = vld [vmem:[%s6723 + $0x54] sm:$0xf]
        %v6746 = vld [vmem:[%s6723 + $0x58] sm:$0xf]
        %v6747 = vld [vmem:[%s6723 + $0x5c] sm:$0xf]
        %v6748 = vld [vmem:[%s6723 + $0x60] sm:$0xf]
        %v6749 = vld [vmem:[%s6723 + $0x64] sm:$0xf]
        %v6750 = vld [vmem:[%s6723 + $0x68] sm:$0xf]
        %v6751 = vld [vmem:[%s6723 + $0x6c] sm:$0xf]
        %v6752 = vld [vmem:[%s6723 + $0x70] sm:$0xf]
        %v6753 = vld [vmem:[%s6723 + $0x74] sm:$0xf]
        %v6754 = vld [vmem:[%s6723 + $0x78] sm:$0xf]
        %v6755 = vld [vmem:[%s6723 + $0x7c] sm:$0xf]
        %v6756 = vld [vmem:[%s6723 + $0x80] sm:$0xf]
        %v6757 = vld [vmem:[%s6723 + $0x84] sm:$0xf]
        %v6758 = vld [vmem:[%s6723 + $0x88] sm:$0xf]
        %v6759 = vld [vmem:[%s6723 + $0x8c] sm:$0xf]
        %v6760 = vld [vmem:[%s6723 + $0x90] sm:$0xf]
        %v6761 = vld [vmem:[%s6723 + $0x94] sm:$0xf]
        %v6762 = vld [vmem:[%s6723 + $0x98] sm:$0xf]
        %v6763 = vld [vmem:[%s6723 + $0x9c] sm:$0xf]
        %v6764 = vld [vmem:[%s6723 + $0xa0] sm:$0xf]
        %v6765 = vld [vmem:[%s6723 + $0xa4] sm:$0xf]
        %v6766 = vld [vmem:[%s6723 + $0xa8] sm:$0xf]
        %v6767 = vld [vmem:[%s6723 + $0xac] sm:$0xf]
        %v6768 = vld [vmem:[%s6723 + $0xb0] sm:$0xf]
        %v6769 = vld [vmem:[%s6723 + $0xb4] sm:$0xf]
        %v6770 = vld [vmem:[%s6723 + $0xb8] sm:$0xf]
        %v6771 = vld [vmem:[%s6723 + $0xbc] sm:$0xf]
        %v6772 = vld [vmem:[%s6723 + $0xc0] sm:$0xf]
        %v6773 = vld [vmem:[%s6723 + $0xc4] sm:$0xf]
        %v6774 = vld [vmem:[%s6723 + $0xc8] sm:$0xf]
        %v6775 = vld [vmem:[%s6723 + $0xcc] sm:$0xf]
        %v6776 = vld [vmem:[%s6723 + $0xd0] sm:$0xf]
        %v6777 = vld [vmem:[%s6723 + $0xd4] sm:$0xf]
        %v6778 = vld [vmem:[%s6723 + $0xd8] sm:$0xf]
        %v6779 = vld [vmem:[%s6723 + $0xdc] sm:$0xf]
        %v6780 = vld [vmem:[%s6723 + $0xe0] sm:$0xf]
        %v6781 = vld [vmem:[%s6723 + $0xe4] sm:$0xf]
        %v6782 = vld [vmem:[%s6723 + $0xe8] sm:$0xf]
        %v6783 = vld [vmem:[%s6723 + $0xec] sm:$0xf]
        %v6784 = vld [vmem:[%s6723 + $0xf0] sm:$0xf]
        %v6785 = vld [vmem:[%s6723 + $0xf4] sm:$0xf]
        %v6786 = vld [vmem:[%s6723 + $0xf8] sm:$0xf]
        %v6787 = vld [vmem:[%s6723 + $0xfc] sm:$0xf]
        %v6790 = vunpack.c.l.b16 %v6721
        %v6791 = vunpack.c.h.b16 %v6721
        %v6792 = vunpack.c.l.b16 %v6722
        %v6793 = vunpack.c.h.b16 %v6722
        %v6794 = vpack.c.b16 %v6790, %v6790
        %v6795 = vpack.c.b16 %v6791, %v6791
        %v6796 = vpack.c.b16 %v6792, %v6792
        %v6797 = vpack.c.b16 %v6793, %v6793
        %v6798 = vrot.slane %v6794, 2
        %v6799 = vrot.slane %v6795, 2
        %v6800 = vrot.slane %v6796, 2
        %v6801 = vrot.slane %v6797, 2
        %v6870 = vunpack.c.l.b16 %v6724
        %v6871 = vunpack.c.l.b16 %v6725
        %v6872 = vunpack.c.l.b16 %v6726
        %v6873 = vunpack.c.l.b16 %v6727
        %v6874 = vunpack.c.l.b16 %v6728
        %v6875 = vunpack.c.l.b16 %v6729
        %v6876 = vunpack.c.l.b16 %v6730
        %v6877 = vunpack.c.l.b16 %v6731
        %v6878 = vunpack.c.l.b16 %v6732
        %v6879 = vunpack.c.l.b16 %v6733
        %v6880 = vunpack.c.l.b16 %v6734
        %v6881 = vunpack.c.l.b16 %v6735
        %v6882 = vunpack.c.l.b16 %v6736
        %v6883 = vunpack.c.l.b16 %v6737
        %v6884 = vunpack.c.l.b16 %v6738
        %v6885 = vunpack.c.l.b16 %v6739
        %v6886 = vunpack.c.l.b16 %v6740
        %v6887 = vunpack.c.l.b16 %v6741
        %v6888 = vunpack.c.l.b16 %v6742
        %v6889 = vunpack.c.l.b16 %v6743
        %v6890 = vunpack.c.l.b16 %v6744
        %v6891 = vunpack.c.l.b16 %v6745
        %v6892 = vunpack.c.l.b16 %v6746
        %v6893 = vunpack.c.l.b16 %v6747
        %v6894 = vunpack.c.l.b16 %v6748
        %v6895 = vunpack.c.l.b16 %v6749
        %v6896 = vunpack.c.l.b16 %v6750
        %v6897 = vunpack.c.l.b16 %v6751
        %v6898 = vunpack.c.l.b16 %v6752
        %v6899 = vunpack.c.l.b16 %v6753
        %v6900 = vunpack.c.l.b16 %v6754
        %v6901 = vunpack.c.l.b16 %v6755
        %v6902 = vunpack.c.l.b16 %v6756
        %v6903 = vunpack.c.l.b16 %v6757
        %v6904 = vunpack.c.l.b16 %v6758
        %v6905 = vunpack.c.l.b16 %v6759
        %v6906 = vunpack.c.l.b16 %v6760
        %v6907 = vunpack.c.l.b16 %v6761
        %v6908 = vunpack.c.l.b16 %v6762
        %v6909 = vunpack.c.l.b16 %v6763
        %v6910 = vunpack.c.l.b16 %v6764
        %v6911 = vunpack.c.l.b16 %v6765
        %v6912 = vunpack.c.l.b16 %v6766
        %v6913 = vunpack.c.l.b16 %v6767
        %v6914 = vunpack.c.l.b16 %v6768
        %v6915 = vunpack.c.l.b16 %v6769
        %v6916 = vunpack.c.l.b16 %v6770
        %v6917 = vunpack.c.l.b16 %v6771
        %v6918 = vunpack.c.l.b16 %v6772
        %v6919 = vunpack.c.l.b16 %v6773
        %v6920 = vunpack.c.l.b16 %v6774
        %v6921 = vunpack.c.l.b16 %v6775
        %v6922 = vunpack.c.l.b16 %v6776
        %v6923 = vunpack.c.l.b16 %v6777
        %v6924 = vunpack.c.l.b16 %v6778
        %v6925 = vunpack.c.l.b16 %v6779
        %v6926 = vunpack.c.l.b16 %v6780
        %v6927 = vunpack.c.l.b16 %v6781
        %v6928 = vunpack.c.l.b16 %v6782
        %v6929 = vunpack.c.l.b16 %v6783
        %v6930 = vunpack.c.l.b16 %v6784
        %v6931 = vunpack.c.l.b16 %v6785
        %v6932 = vunpack.c.l.b16 %v6786
        %v6933 = vunpack.c.l.b16 %v6787
        %v6934 = vpack.c.b16 %v6871, %v6870
        %v6935 = vpack.c.b16 %v6873, %v6872
        %v6936 = vpack.c.b16 %v6875, %v6874
        %v6937 = vpack.c.b16 %v6877, %v6876
        %v6938 = vpack.c.b16 %v6879, %v6878
        %v6939 = vpack.c.b16 %v6881, %v6880
        %v6940 = vpack.c.b16 %v6883, %v6882
        %v6941 = vpack.c.b16 %v6885, %v6884
        %v6942 = vpack.c.b16 %v6887, %v6886
        %v6943 = vpack.c.b16 %v6889, %v6888
        %v6944 = vpack.c.b16 %v6891, %v6890
        %v6945 = vpack.c.b16 %v6893, %v6892
        %v6946 = vpack.c.b16 %v6895, %v6894
        %v6947 = vpack.c.b16 %v6897, %v6896
        %v6948 = vpack.c.b16 %v6899, %v6898
        %v6949 = vpack.c.b16 %v6901, %v6900
        %v6950 = vpack.c.b16 %v6903, %v6902
        %v6951 = vpack.c.b16 %v6905, %v6904
        %v6952 = vpack.c.b16 %v6907, %v6906
        %v6953 = vpack.c.b16 %v6909, %v6908
        %v6954 = vpack.c.b16 %v6911, %v6910
        %v6955 = vpack.c.b16 %v6913, %v6912
        %v6956 = vpack.c.b16 %v6915, %v6914
        %v6957 = vpack.c.b16 %v6917, %v6916
        %v6958 = vpack.c.b16 %v6919, %v6918
        %v6959 = vpack.c.b16 %v6921, %v6920
        %v6960 = vpack.c.b16 %v6923, %v6922
        %v6961 = vpack.c.b16 %v6925, %v6924
        %v6962 = vpack.c.b16 %v6927, %v6926
        %v6963 = vpack.c.b16 %v6929, %v6928
        %v6964 = vpack.c.b16 %v6931, %v6930
        %v6965 = vpack.c.b16 %v6933, %v6932
        %6998 = vmatprep.subr.bf16.mxu0 0
        %6999 = vmatpush1.bf16.msra.mxu0 %v6934
        %7000 = vmatprep.subr.bf16.mxu0 0
        %7001 = vmatpush1.bf16.msra.mxu0 %v6935
        %7002 = vmatprep.subr.bf16.mxu0 0
        %7003 = vmatpush1.bf16.msra.mxu0 %v6936
        %7004 = vmatprep.subr.bf16.mxu0 0
        %7005 = vmatpush1.bf16.msra.mxu0 %v6937
        %7006 = vmatprep.subr.bf16.mxu0 0
        %7007 = vmatpush1.bf16.msra.mxu0 %v6938
        %7008 = vmatprep.subr.bf16.mxu0 0
        %7009 = vmatpush1.bf16.msra.mxu0 %v6939
        %7010 = vmatprep.subr.bf16.mxu0 0
        %7011 = vmatpush1.bf16.msra.mxu0 %v6940
        %7012 = vmatprep.subr.bf16.mxu0 0
        %7013 = vmatpush1.bf16.msra.mxu0 %v6941
        %7014 = vmatprep.subr.bf16.mxu0 0
        %7015 = vmatpush1.bf16.msra.mxu0 %v6942
        %7016 = vmatprep.subr.bf16.mxu0 0
        %7017 = vmatpush1.bf16.msra.mxu0 %v6943
        %7018 = vmatprep.subr.bf16.mxu0 0
        %7019 = vmatpush1.bf16.msra.mxu0 %v6944
        %7020 = vmatprep.subr.bf16.mxu0 0
        %7021 = vmatpush1.bf16.msra.mxu0 %v6945
        %7022 = vmatprep.subr.bf16.mxu0 0
        %7023 = vmatpush1.bf16.msra.mxu0 %v6946
        %7024 = vmatprep.subr.bf16.mxu0 0
        %7025 = vmatpush1.bf16.msra.mxu0 %v6947
        %7026 = vmatprep.subr.bf16.mxu0 0
        %7027 = vmatpush1.bf16.msra.mxu0 %v6948
        %7028 = vmatprep.subr.bf16.mxu0 0
        %7029 = vmatpush1.bf16.msra.mxu0 %v6949
        %7030 = vmatprep.mubr.bf16.mxu0 %v6799
        %7031 = vmatmul.mubr.bf16.gmra.mrb[0].mxu0 %v6798
        %v7032 = vpop.f32.mrb[0].mxu0
        %v7033 = vadd.f32 0.0, %v7032
        %v7034 = vpop.f32.mrb[0].mxu0
        %v7035 = vpop.f32.mrb[0].mxu0
        %v7036 = vpop.f32.mrb[0].mxu0
        %7037 = vdwg.mxu0
        %7038 = vmatprep.subr.bf16.mxu0 0
        %7039 = vmatpush1.bf16.msra.mxu0 %v6950
        %7040 = vmatprep.subr.bf16.mxu0 0
        %7041 = vmatpush1.bf16.msra.mxu0 %v6951
        %7042 = vmatprep.subr.bf16.mxu0 0
        %7043 = vmatpush1.bf16.msra.mxu0 %v6952
        %7044 = vmatprep.subr.bf16.mxu0 0
        %7045 = vmatpush1.bf16.msra.mxu0 %v6953
        %7046 = vmatprep.subr.bf16.mxu0 0
        %7047 = vmatpush1.bf16.msra.mxu0 %v6954
        %7048 = vmatprep.subr.bf16.mxu0 0
        %7049 = vmatpush1.bf16.msra.mxu0 %v6955
        %7050 = vmatprep.subr.bf16.mxu0 0
        %7051 = vmatpush1.bf16.msra.mxu0 %v6956
        %7052 = vmatprep.subr.bf16.mxu0 0
        %7053 = vmatpush1.bf16.msra.mxu0 %v6957
        %7054 = vmatprep.subr.bf16.mxu0 0
        %7055 = vmatpush1.bf16.msra.mxu0 %v6958
        %7056 = vmatprep.subr.bf16.mxu0 0
        %7057 = vmatpush1.bf16.msra.mxu0 %v6959
        %7058 = vmatprep.subr.bf16.mxu0 0
        %7059 = vmatpush1.bf16.msra.mxu0 %v6960
        %7060 = vmatprep.subr.bf16.mxu0 0
        %7061 = vmatpush1.bf16.msra.mxu0 %v6961
        %7062 = vmatprep.subr.bf16.mxu0 0
        %7063 = vmatpush1.bf16.msra.mxu0 %v6962
        %7064 = vmatprep.subr.bf16.mxu0 0
        %7065 = vmatpush1.bf16.msra.mxu0 %v6963
        %7066 = vmatprep.subr.bf16.mxu0 0
        %7067 = vmatpush1.bf16.msra.mxu0 %v6964
        %7068 = vmatprep.subr.bf16.mxu0 0
        %7069 = vmatpush1.bf16.msra.mxu0 %v6965
        %7070 = vmatprep.mubr.bf16.mxu0 %v6801
        %7071 = vmatmul.mubr.bf16.gmra.mrb[0].mxu0 %v6800
        %v7072 = vpop.f32.mrb[0].mxu0
        %v7073 = vadd.f32 %v7033, %v7072
        %v7074 = vpop.f32.mrb[0].mxu0
        %v7075 = vpop.f32.mrb[0].mxu0
        %v7076 = vpop.f32.mrb[0].mxu0
        %7077 = vdwg.mxu0
        %v7078 = vadd.f32 %v6720, %v7073
        %s7079 = scalar_lea.vmem [#allocation13], 1280
        %v7080 = vld [vmem:[%s7079] sm:$0xf]
        %v7081 = vld [vmem:[%s7079 + $0x4] sm:$0xf]
        %v7082 = vld [vmem:[%s7079 + $0x8] sm:$0xf]
        %v7083 = vld [vmem:[%s7079 + $0xc] sm:$0xf]
        %v7084 = vld [vmem:[%s7079 + $0x10] sm:$0xf]
        %v7085 = vld [vmem:[%s7079 + $0x14] sm:$0xf]
        %v7086 = vld [vmem:[%s7079 + $0x18] sm:$0xf]
        %v7087 = vld [vmem:[%s7079 + $0x1c] sm:$0xf]
        %v7088 = vld [vmem:[%s7079 + $0x20] sm:$0xf]
        %v7089 = vld [vmem:[%s7079 + $0x24] sm:$0xf]
        %v7090 = vld [vmem:[%s7079 + $0x28] sm:$0xf]
        %v7091 = vld [vmem:[%s7079 + $0x2c] sm:$0xf]
        %v7092 = vld [vmem:[%s7079 + $0x30] sm:$0xf]
        %v7093 = vld [vmem:[%s7079 + $0x34] sm:$0xf]
        %v7094 = vld [vmem:[%s7079 + $0x38] sm:$0xf]
        %v7095 = vld [vmem:[%s7079 + $0x3c] sm:$0xf]
        %v7096 = vld [vmem:[%s7079 + $0x40] sm:$0xf]
        %v7097 = vld [vmem:[%s7079 + $0x44] sm:$0xf]
        %v7098 = vld [vmem:[%s7079 + $0x48] sm:$0xf]
        %v7099 = vld [vmem:[%s7079 + $0x4c] sm:$0xf]
        %v7100 = vld [vmem:[%s7079 + $0x50] sm:$0xf]
        %v7101 = vld [vmem:[%s7079 + $0x54] sm:$0xf]
        %v7102 = vld [vmem:[%s7079 + $0x58] sm:$0xf]
        %v7103 = vld [vmem:[%s7079 + $0x5c] sm:$0xf]
        %v7104 = vld [vmem:[%s7079 + $0x60] sm:$0xf]
        %v7105 = vld [vmem:[%s7079 + $0x64] sm:$0xf]
        %v7106 = vld [vmem:[%s7079 + $0x68] sm:$0xf]
        %v7107 = vld [vmem:[%s7079 + $0x6c] sm:$0xf]
        %v7108 = vld [vmem:[%s7079 + $0x70] sm:$0xf]
        %v7109 = vld [vmem:[%s7079 + $0x74] sm:$0xf]
        %v7110 = vld [vmem:[%s7079 + $0x78] sm:$0xf]
        %v7111 = vld [vmem:[%s7079 + $0x7c] sm:$0xf]
        %v7112 = vld [vmem:[%s7079 + $0x80] sm:$0xf]
        %v7113 = vld [vmem:[%s7079 + $0x84] sm:$0xf]
        %v7114 = vld [vmem:[%s7079 + $0x88] sm:$0xf]
        %v7115 = vld [vmem:[%s7079 + $0x8c] sm:$0xf]
        %v7116 = vld [vmem:[%s7079 + $0x90] sm:$0xf]
        %v7117 = vld [vmem:[%s7079 + $0x94] sm:$0xf]
        %v7118 = vld [vmem:[%s7079 + $0x98] sm:$0xf]
        %v7119 = vld [vmem:[%s7079 + $0x9c] sm:$0xf]
        %v7120 = vld [vmem:[%s7079 + $0xa0] sm:$0xf]
        %v7121 = vld [vmem:[%s7079 + $0xa4] sm:$0xf]
        %v7122 = vld [vmem:[%s7079 + $0xa8] sm:$0xf]
        %v7123 = vld [vmem:[%s7079 + $0xac] sm:$0xf]
        %v7124 = vld [vmem:[%s7079 + $0xb0] sm:$0xf]
        %v7125 = vld [vmem:[%s7079 + $0xb4] sm:$0xf]
        %v7126 = vld [vmem:[%s7079 + $0xb8] sm:$0xf]
        %v7127 = vld [vmem:[%s7079 + $0xbc] sm:$0xf]
        %v7128 = vld [vmem:[%s7079 + $0xc0] sm:$0xf]
        %v7129 = vld [vmem:[%s7079 + $0xc4] sm:$0xf]
        %v7130 = vld [vmem:[%s7079 + $0xc8] sm:$0xf]
        %v7131 = vld [vmem:[%s7079 + $0xcc] sm:$0xf]
        %v7132 = vld [vmem:[%s7079 + $0xd0] sm:$0xf]
        %v7133 = vld [vmem:[%s7079 + $0xd4] sm:$0xf]
        %v7134 = vld [vmem:[%s7079 + $0xd8] sm:$0xf]
        %v7135 = vld [vmem:[%s7079 + $0xdc] sm:$0xf]
        %v7136 = vld [vmem:[%s7079 + $0xe0] sm:$0xf]
        %v7137 = vld [vmem:[%s7079 + $0xe4] sm:$0xf]
        %v7138 = vld [vmem:[%s7079 + $0xe8] sm:$0xf]
        %v7139 = vld [vmem:[%s7079 + $0xec] sm:$0xf]
        %v7140 = vld [vmem:[%s7079 + $0xf0] sm:$0xf]
        %v7141 = vld [vmem:[%s7079 + $0xf4] sm:$0xf]
        %v7142 = vld [vmem:[%s7079 + $0xf8] sm:$0xf]
        %v7143 = vld [vmem:[%s7079 + $0xfc] sm:$0xf]
        %v7145 = vshrl.u32 %v6794, 16
        %v7147 = vrot.slane %v7145, 2
        %v7149 = vshrl.u32 %v6795, 16
        %v7151 = vrot.slane %v7149, 2
        %v7153 = vshrl.u32 %v6796, 16
        %v7155 = vrot.slane %v7153, 2
        %v7157 = vshrl.u32 %v6797, 16
        %v7159 = vrot.slane %v7157, 2
        %v7228 = vunpack.c.l.b16 %v7080
        %v7229 = vunpack.c.l.b16 %v7081
        %v7230 = vunpack.c.l.b16 %v7082
        %v7231 = vunpack.c.l.b16 %v7083
        %v7232 = vunpack.c.l.b16 %v7084
        %v7233 = vunpack.c.l.b16 %v7085
        %v7234 = vunpack.c.l.b16 %v7086
        %v7235 = vunpack.c.l.b16 %v7087
        %v7236 = vunpack.c.l.b16 %v7088
        %v7237 = vunpack.c.l.b16 %v7089
        %v7238 = vunpack.c.l.b16 %v7090
        %v7239 = vunpack.c.l.b16 %v7091
        %v7240 = vunpack.c.l.b16 %v7092
        %v7241 = vunpack.c.l.b16 %v7093
        %v7242 = vunpack.c.l.b16 %v7094
        %v7243 = vunpack.c.l.b16 %v7095
        %v7244 = vunpack.c.l.b16 %v7096
        %v7245 = vunpack.c.l.b16 %v7097
        %v7246 = vunpack.c.l.b16 %v7098
        %v7247 = vunpack.c.l.b16 %v7099
        %v7248 = vunpack.c.l.b16 %v7100
        %v7249 = vunpack.c.l.b16 %v7101
        %v7250 = vunpack.c.l.b16 %v7102
        %v7251 = vunpack.c.l.b16 %v7103
        %v7252 = vunpack.c.l.b16 %v7104
        %v7253 = vunpack.c.l.b16 %v7105
        %v7254 = vunpack.c.l.b16 %v7106
        %v7255 = vunpack.c.l.b16 %v7107
        %v7256 = vunpack.c.l.b16 %v7108
        %v7257 = vunpack.c.l.b16 %v7109
        %v7258 = vunpack.c.l.b16 %v7110
        %v7259 = vunpack.c.l.b16 %v7111
        %v7260 = vunpack.c.l.b16 %v7112
        %v7261 = vunpack.c.l.b16 %v7113
        %v7262 = vunpack.c.l.b16 %v7114
        %v7263 = vunpack.c.l.b16 %v7115
        %v7264 = vunpack.c.l.b16 %v7116
        %v7265 = vunpack.c.l.b16 %v7117
        %v7266 = vunpack.c.l.b16 %v7118
        %v7267 = vunpack.c.l.b16 %v7119
        %v7268 = vunpack.c.l.b16 %v7120
        %v7269 = vunpack.c.l.b16 %v7121
        %v7270 = vunpack.c.l.b16 %v7122
        %v7271 = vunpack.c.l.b16 %v7123
        %v7272 = vunpack.c.l.b16 %v7124
        %v7273 = vunpack.c.l.b16 %v7125
        %v7274 = vunpack.c.l.b16 %v7126
        %v7275 = vunpack.c.l.b16 %v7127
        %v7276 = vunpack.c.l.b16 %v7128
        %v7277 = vunpack.c.l.b16 %v7129
        %v7278 = vunpack.c.l.b16 %v7130
        %v7279 = vunpack.c.l.b16 %v7131
        %v7280 = vunpack.c.l.b16 %v7132
        %v7281 = vunpack.c.l.b16 %v7133
        %v7282 = vunpack.c.l.b16 %v7134
        %v7283 = vunpack.c.l.b16 %v7135
        %v7284 = vunpack.c.l.b16 %v7136
        %v7285 = vunpack.c.l.b16 %v7137
        %v7286 = vunpack.c.l.b16 %v7138
        %v7287 = vunpack.c.l.b16 %v7139
        %v7288 = vunpack.c.l.b16 %v7140
        %v7289 = vunpack.c.l.b16 %v7141
        %v7290 = vunpack.c.l.b16 %v7142
        %v7291 = vunpack.c.l.b16 %v7143
        %v7292 = vpack.c.b16 %v7229, %v7228
        %v7293 = vpack.c.b16 %v7231, %v7230
        %v7294 = vpack.c.b16 %v7233, %v7232
        %v7295 = vpack.c.b16 %v7235, %v7234
        %v7296 = vpack.c.b16 %v7237, %v7236
        %v7297 = vpack.c.b16 %v7239, %v7238
        %v7298 = vpack.c.b16 %v7241, %v7240
        %v7299 = vpack.c.b16 %v7243, %v7242
        %v7300 = vpack.c.b16 %v7245, %v7244
        %v7301 = vpack.c.b16 %v7247, %v7246
        %v7302 = vpack.c.b16 %v7249, %v7248
        %v7303 = vpack.c.b16 %v7251, %v7250
        %v7304 = vpack.c.b16 %v7253, %v7252
        %v7305 = vpack.c.b16 %v7255, %v7254
        %v7306 = vpack.c.b16 %v7257, %v7256
        %v7307 = vpack.c.b16 %v7259, %v7258
        %v7308 = vpack.c.b16 %v7261, %v7260
        %v7309 = vpack.c.b16 %v7263, %v7262
        %v7310 = vpack.c.b16 %v7265, %v7264
        %v7311 = vpack.c.b16 %v7267, %v7266
        %v7312 = vpack.c.b16 %v7269, %v7268
        %v7313 = vpack.c.b16 %v7271, %v7270
        %v7314 = vpack.c.b16 %v7273, %v7272
        %v7315 = vpack.c.b16 %v7275, %v7274
        %v7316 = vpack.c.b16 %v7277, %v7276
        %v7317 = vpack.c.b16 %v7279, %v7278
        %v7318 = vpack.c.b16 %v7281, %v7280
        %v7319 = vpack.c.b16 %v7283, %v7282
        %v7320 = vpack.c.b16 %v7285, %v7284
        %v7321 = vpack.c.b16 %v7287, %v7286
        %v7322 = vpack.c.b16 %v7289, %v7288
        %v7323 = vpack.c.b16 %v7291, %v7290
        %7356 = vmatprep.subr.bf16.mxu0 0
        %7357 = vmatpush1.bf16.msra.mxu0 %v7292
        %7358 = vmatprep.subr.bf16.mxu0 0
        %7359 = vmatpush1.bf16.msra.mxu0 %v7293
        %7360 = vmatprep.subr.bf16.mxu0 0
        %7361 = vmatpush1.bf16.msra.mxu0 %v7294
        %7362 = vmatprep.subr.bf16.mxu0 0
        %7363 = vmatpush1.bf16.msra.mxu0 %v7295
        %7364 = vmatprep.subr.bf16.mxu0 0
        %7365 = vmatpush1.bf16.msra.mxu0 %v7296
        %7366 = vmatprep.subr.bf16.mxu0 0
        %7367 = vmatpush1.bf16.msra.mxu0 %v7297
        %7368 = vmatprep.subr.bf16.mxu0 0
        %7369 = vmatpush1.bf16.msra.mxu0 %v7298
        %7370 = vmatprep.subr.bf16.mxu0 0
        %7371 = vmatpush1.bf16.msra.mxu0 %v7299
        %7372 = vmatprep.subr.bf16.mxu0 0
        %7373 = vmatpush1.bf16.msra.mxu0 %v7300
        %7374 = vmatprep.subr.bf16.mxu0 0
        %7375 = vmatpush1.bf16.msra.mxu0 %v7301
        %7376 = vmatprep.subr.bf16.mxu0 0
        %7377 = vmatpush1.bf16.msra.mxu0 %v7302
        %7378 = vmatprep.subr.bf16.mxu0 0
        %7379 = vmatpush1.bf16.msra.mxu0 %v7303
        %7380 = vmatprep.subr.bf16.mxu0 0
        %7381 = vmatpush1.bf16.msra.mxu0 %v7304
        %7382 = vmatprep.subr.bf16.mxu0 0
        %7383 = vmatpush1.bf16.msra.mxu0 %v7305
        %7384 = vmatprep.subr.bf16.mxu0 0
        %7385 = vmatpush1.bf16.msra.mxu0 %v7306
        %7386 = vmatprep.subr.bf16.mxu0 0
        %7387 = vmatpush1.bf16.msra.mxu0 %v7307
        %7388 = vmatprep.mubr.bf16.mxu0 %v7151
        %7389 = vmatmul.mubr.bf16.gmra.mrb[0].mxu0 %v7147
        %v7390 = vpop.f32.mrb[0].mxu0
        %v7391 = vadd.f32 0.0, %v7390
        %v7392 = vpop.f32.mrb[0].mxu0
        %v7393 = vpop.f32.mrb[0].mxu0
        %v7394 = vpop.f32.mrb[0].mxu0
        %7395 = vdwg.mxu0
        %7396 = vmatprep.subr.bf16.mxu0 0
        %7397 = vmatpush1.bf16.msra.mxu0 %v7308
        %7398 = vmatprep.subr.bf16.mxu0 0
        %7399 = vmatpush1.bf16.msra.mxu0 %v7309
        %7400 = vmatprep.subr.bf16.mxu0 0
        %7401 = vmatpush1.bf16.msra.mxu0 %v7310
        %7402 = vmatprep.subr.bf16.mxu0 0
        %7403 = vmatpush1.bf16.msra.mxu0 %v7311
        %7404 = vmatprep.subr.bf16.mxu0 0
        %7405 = vmatpush1.bf16.msra.mxu0 %v7312
        %7406 = vmatprep.subr.bf16.mxu0 0
        %7407 = vmatpush1.bf16.msra.mxu0 %v7313
        %7408 = vmatprep.subr.bf16.mxu0 0
        %7409 = vmatpush1.bf16.msra.mxu0 %v7314
        %7410 = vmatprep.subr.bf16.mxu0 0
        %7411 = vmatpush1.bf16.msra.mxu0 %v7315
        %7412 = vmatprep.subr.bf16.mxu0 0
        %7413 = vmatpush1.bf16.msra.mxu0 %v7316
        %7414 = vmatprep.subr.bf16.mxu0 0
        %7415 = vmatpush1.bf16.msra.mxu0 %v7317
        %7416 = vmatprep.subr.bf16.mxu0 0
        %7417 = vmatpush1.bf16.msra.mxu0 %v7318
        %7418 = vmatprep.subr.bf16.mxu0 0
        %7419 = vmatpush1.bf16.msra.mxu0 %v7319
        %7420 = vmatprep.subr.bf16.mxu0 0
        %7421 = vmatpush1.bf16.msra.mxu0 %v7320
        %7422 = vmatprep.subr.bf16.mxu0 0
        %7423 = vmatpush1.bf16.msra.mxu0 %v7321
        %7424 = vmatprep.subr.bf16.mxu0 0
        %7425 = vmatpush1.bf16.msra.mxu0 %v7322
        %7426 = vmatprep.subr.bf16.mxu0 0
        %7427 = vmatpush1.bf16.msra.mxu0 %v7323
        %7428 = vmatprep.mubr.bf16.mxu0 %v7159
        %7429 = vmatmul.mubr.bf16.gmra.mrb[0].mxu0 %v7155
        %v7430 = vpop.f32.mrb[0].mxu0
        %v7431 = vadd.f32 %v7391, %v7430
        %v7432 = vpop.f32.mrb[0].mxu0
        %v7433 = vpop.f32.mrb[0].mxu0
        %v7434 = vpop.f32.mrb[0].mxu0
        %7435 = vdwg.mxu0
        %v7436 = vadd.f32 %v7078, %v7431
        %v7437 = vld [vmem:[#allocation3] sm:$0x88]
        %v7438 = vld [vmem:[#allocation3 + $0x8] sm:$0x88]
        %s7439 = scalar_lea.vmem [#allocation13], 1536
        %v7440 = vld [vmem:[%s7439] sm:$0xf]
        %v7441 = vld [vmem:[%s7439 + $0x4] sm:$0xf]
        %v7442 = vld [vmem:[%s7439 + $0x8] sm:$0xf]
        %v7443 = vld [vmem:[%s7439 + $0xc] sm:$0xf]
        %v7444 = vld [vmem:[%s7439 + $0x10] sm:$0xf]
        %v7445 = vld [vmem:[%s7439 + $0x14] sm:$0xf]
        %v7446 = vld [vmem:[%s7439 + $0x18] sm:$0xf]
        %v7447 = vld [vmem:[%s7439 + $0x1c] sm:$0xf]
        %v7448 = vld [vmem:[%s7439 + $0x20] sm:$0xf]
        %v7449 = vld [vmem:[%s7439 + $0x24] sm:$0xf]
        %v7450 = vld [vmem:[%s7439 + $0x28] sm:$0xf]
        %v7451 = vld [vmem:[%s7439 + $0x2c] sm:$0xf]
        %v7452 = vld [vmem:[%s7439 + $0x30] sm:$0xf]
        %v7453 = vld [vmem:[%s7439 + $0x34] sm:$0xf]
        %v7454 = vld [vmem:[%s7439 + $0x38] sm:$0xf]
        %v7455 = vld [vmem:[%s7439 + $0x3c] sm:$0xf]
        %v7456 = vld [vmem:[%s7439 + $0x40] sm:$0xf]
        %v7457 = vld [vmem:[%s7439 + $0x44] sm:$0xf]
        %v7458 = vld [vmem:[%s7439 + $0x48] sm:$0xf]
        %v7459 = vld [vmem:[%s7439 + $0x4c] sm:$0xf]
        %v7460 = vld [vmem:[%s7439 + $0x50] sm:$0xf]
        %v7461 = vld [vmem:[%s7439 + $0x54] sm:$0xf]
        %v7462 = vld [vmem:[%s7439 + $0x58] sm:$0xf]
        %v7463 = vld [vmem:[%s7439 + $0x5c] sm:$0xf]
        %v7464 = vld [vmem:[%s7439 + $0x60] sm:$0xf]
        %v7465 = vld [vmem:[%s7439 + $0x64] sm:$0xf]
        %v7466 = vld [vmem:[%s7439 + $0x68] sm:$0xf]
        %v7467 = vld [vmem:[%s7439 + $0x6c] sm:$0xf]
        %v7468 = vld [vmem:[%s7439 + $0x70] sm:$0xf]
        %v7469 = vld [vmem:[%s7439 + $0x74] sm:$0xf]
        %v7470 = vld [vmem:[%s7439 + $0x78] sm:$0xf]
        %v7471 = vld [vmem:[%s7439 + $0x7c] sm:$0xf]
        %v7472 = vld [vmem:[%s7439 + $0x80] sm:$0xf]
        %v7473 = vld [vmem:[%s7439 + $0x84] sm:$0xf]
        %v7474 = vld [vmem:[%s7439 + $0x88] sm:$0xf]
        %v7475 = vld [vmem:[%s7439 + $0x8c] sm:$0xf]
        %v7476 = vld [vmem:[%s7439 + $0x90] sm:$0xf]
        %v7477 = vld [vmem:[%s7439 + $0x94] sm:$0xf]
        %v7478 = vld [vmem:[%s7439 + $0x98] sm:$0xf]
        %v7479 = vld [vmem:[%s7439 + $0x9c] sm:$0xf]
        %v7480 = vld [vmem:[%s7439 + $0xa0] sm:$0xf]
        %v7481 = vld [vmem:[%s7439 + $0xa4] sm:$0xf]
        %v7482 = vld [vmem:[%s7439 + $0xa8] sm:$0xf]
        %v7483 = vld [vmem:[%s7439 + $0xac] sm:$0xf]
        %v7484 = vld [vmem:[%s7439 + $0xb0] sm:$0xf]
        %v7485 = vld [vmem:[%s7439 + $0xb4] sm:$0xf]
        %v7486 = vld [vmem:[%s7439 + $0xb8] sm:$0xf]
        %v7487 = vld [vmem:[%s7439 + $0xbc] sm:$0xf]
        %v7488 = vld [vmem:[%s7439 + $0xc0] sm:$0xf]
        %v7489 = vld [vmem:[%s7439 + $0xc4] sm:$0xf]
        %v7490 = vld [vmem:[%s7439 + $0xc8] sm:$0xf]
        %v7491 = vld [vmem:[%s7439 + $0xcc] sm:$0xf]
        %v7492 = vld [vmem:[%s7439 + $0xd0] sm:$0xf]
        %v7493 = vld [vmem:[%s7439 + $0xd4] sm:$0xf]
        %v7494 = vld [vmem:[%s7439 + $0xd8] sm:$0xf]
        %v7495 = vld [vmem:[%s7439 + $0xdc] sm:$0xf]
        %v7496 = vld [vmem:[%s7439 + $0xe0] sm:$0xf]
        %v7497 = vld [vmem:[%s7439 + $0xe4] sm:$0xf]
        %v7498 = vld [vmem:[%s7439 + $0xe8] sm:$0xf]
        %v7499 = vld [vmem:[%s7439 + $0xec] sm:$0xf]
        %v7500 = vld [vmem:[%s7439 + $0xf0] sm:$0xf]
        %v7501 = vld [vmem:[%s7439 + $0xf4] sm:$0xf]
        %v7502 = vld [vmem:[%s7439 + $0xf8] sm:$0xf]
        %v7503 = vld [vmem:[%s7439 + $0xfc] sm:$0xf]
        %v7506 = vunpack.c.l.b16 %v7437
        %v7507 = vunpack.c.h.b16 %v7437
        %v7508 = vunpack.c.l.b16 %v7438
        %v7509 = vunpack.c.h.b16 %v7438
        %v7510 = vpack.c.b16 %v7506, %v7506
        %v7511 = vpack.c.b16 %v7507, %v7507
        %v7512 = vpack.c.b16 %v7508, %v7508
        %v7513 = vpack.c.b16 %v7509, %v7509
        %v7514 = vrot.slane %v7510, 3
        %v7515 = vrot.slane %v7511, 3
        %v7516 = vrot.slane %v7512, 3
        %v7517 = vrot.slane %v7513, 3
        %v7586 = vunpack.c.l.b16 %v7440
        %v7587 = vunpack.c.l.b16 %v7441
        %v7588 = vunpack.c.l.b16 %v7442
        %v7589 = vunpack.c.l.b16 %v7443
        %v7590 = vunpack.c.l.b16 %v7444
        %v7591 = vunpack.c.l.b16 %v7445
        %v7592 = vunpack.c.l.b16 %v7446
        %v7593 = vunpack.c.l.b16 %v7447
        %v7594 = vunpack.c.l.b16 %v7448
        %v7595 = vunpack.c.l.b16 %v7449
        %v7596 = vunpack.c.l.b16 %v7450
        %v7597 = vunpack.c.l.b16 %v7451
        %v7598 = vunpack.c.l.b16 %v7452
        %v7599 = vunpack.c.l.b16 %v7453
        %v7600 = vunpack.c.l.b16 %v7454
        %v7601 = vunpack.c.l.b16 %v7455
        %v7602 = vunpack.c.l.b16 %v7456
        %v7603 = vunpack.c.l.b16 %v7457
        %v7604 = vunpack.c.l.b16 %v7458
        %v7605 = vunpack.c.l.b16 %v7459
        %v7606 = vunpack.c.l.b16 %v7460
        %v7607 = vunpack.c.l.b16 %v7461
        %v7608 = vunpack.c.l.b16 %v7462
        %v7609 = vunpack.c.l.b16 %v7463
        %v7610 = vunpack.c.l.b16 %v7464
        %v7611 = vunpack.c.l.b16 %v7465
        %v7612 = vunpack.c.l.b16 %v7466
        %v7613 = vunpack.c.l.b16 %v7467
        %v7614 = vunpack.c.l.b16 %v7468
        %v7615 = vunpack.c.l.b16 %v7469
        %v7616 = vunpack.c.l.b16 %v7470
        %v7617 = vunpack.c.l.b16 %v7471
        %v7618 = vunpack.c.l.b16 %v7472
        %v7619 = vunpack.c.l.b16 %v7473
        %v7620 = vunpack.c.l.b16 %v7474
        %v7621 = vunpack.c.l.b16 %v7475
        %v7622 = vunpack.c.l.b16 %v7476
        %v7623 = vunpack.c.l.b16 %v7477
        %v7624 = vunpack.c.l.b16 %v7478
        %v7625 = vunpack.c.l.b16 %v7479
        %v7626 = vunpack.c.l.b16 %v7480
        %v7627 = vunpack.c.l.b16 %v7481
        %v7628 = vunpack.c.l.b16 %v7482
        %v7629 = vunpack.c.l.b16 %v7483
        %v7630 = vunpack.c.l.b16 %v7484
        %v7631 = vunpack.c.l.b16 %v7485
        %v7632 = vunpack.c.l.b16 %v7486
        %v7633 = vunpack.c.l.b16 %v7487
        %v7634 = vunpack.c.l.b16 %v7488
        %v7635 = vunpack.c.l.b16 %v7489
        %v7636 = vunpack.c.l.b16 %v7490
        %v7637 = vunpack.c.l.b16 %v7491
        %v7638 = vunpack.c.l.b16 %v7492
        %v7639 = vunpack.c.l.b16 %v7493
        %v7640 = vunpack.c.l.b16 %v7494
        %v7641 = vunpack.c.l.b16 %v7495
        %v7642 = vunpack.c.l.b16 %v7496
        %v7643 = vunpack.c.l.b16 %v7497
        %v7644 = vunpack.c.l.b16 %v7498
        %v7645 = vunpack.c.l.b16 %v7499
        %v7646 = vunpack.c.l.b16 %v7500
        %v7647 = vunpack.c.l.b16 %v7501
        %v7648 = vunpack.c.l.b16 %v7502
        %v7649 = vunpack.c.l.b16 %v7503
        %v7650 = vpack.c.b16 %v7587, %v7586
        %v7651 = vpack.c.b16 %v7589, %v7588
        %v7652 = vpack.c.b16 %v7591, %v7590
        %v7653 = vpack.c.b16 %v7593, %v7592
        %v7654 = vpack.c.b16 %v7595, %v7594
        %v7655 = vpack.c.b16 %v7597, %v7596
        %v7656 = vpack.c.b16 %v7599, %v7598
        %v7657 = vpack.c.b16 %v7601, %v7600
        %v7658 = vpack.c.b16 %v7603, %v7602
        %v7659 = vpack.c.b16 %v7605, %v7604
        %v7660 = vpack.c.b16 %v7607, %v7606
        %v7661 = vpack.c.b16 %v7609, %v7608
        %v7662 = vpack.c.b16 %v7611, %v7610
        %v7663 = vpack.c.b16 %v7613, %v7612
        %v7664 = vpack.c.b16 %v7615, %v7614
        %v7665 = vpack.c.b16 %v7617, %v7616
        %v7666 = vpack.c.b16 %v7619, %v7618
        %v7667 = vpack.c.b16 %v7621, %v7620
        %v7668 = vpack.c.b16 %v7623, %v7622
        %v7669 = vpack.c.b16 %v7625, %v7624
        %v7670 = vpack.c.b16 %v7627, %v7626
        %v7671 = vpack.c.b16 %v7629, %v7628
        %v7672 = vpack.c.b16 %v7631, %v7630
        %v7673 = vpack.c.b16 %v7633, %v7632
        %v7674 = vpack.c.b16 %v7635, %v7634
        %v7675 = vpack.c.b16 %v7637, %v7636
        %v7676 = vpack.c.b16 %v7639, %v7638
        %v7677 = vpack.c.b16 %v7641, %v7640
        %v7678 = vpack.c.b16 %v7643, %v7642
        %v7679 = vpack.c.b16 %v7645, %v7644
        %v7680 = vpack.c.b16 %v7647, %v7646
        %v7681 = vpack.c.b16 %v7649, %v7648
        %7714 = vmatprep.subr.bf16.mxu0 0
        %7715 = vmatpush1.bf16.msra.mxu0 %v7650
        %7716 = vmatprep.subr.bf16.mxu0 0
        %7717 = vmatpush1.bf16.msra.mxu0 %v7651
        %7718 = vmatprep.subr.bf16.mxu0 0
        %7719 = vmatpush1.bf16.msra.mxu0 %v7652
        %7720 = vmatprep.subr.bf16.mxu0 0
        %7721 = vmatpush1.bf16.msra.mxu0 %v7653
        %7722 = vmatprep.subr.bf16.mxu0 0
        %7723 = vmatpush1.bf16.msra.mxu0 %v7654
        %7724 = vmatprep.subr.bf16.mxu0 0
        %7725 = vmatpush1.bf16.msra.mxu0 %v7655
        %7726 = vmatprep.subr.bf16.mxu0 0
        %7727 = vmatpush1.bf16.msra.mxu0 %v7656
        %7728 = vmatprep.subr.bf16.mxu0 0
        %7729 = vmatpush1.bf16.msra.mxu0 %v7657
        %7730 = vmatprep.subr.bf16.mxu0 0
        %7731 = vmatpush1.bf16.msra.mxu0 %v7658
        %7732 = vmatprep.subr.bf16.mxu0 0
        %7733 = vmatpush1.bf16.msra.mxu0 %v7659
        %7734 = vmatprep.subr.bf16.mxu0 0
        %7735 = vmatpush1.bf16.msra.mxu0 %v7660
        %7736 = vmatprep.subr.bf16.mxu0 0
        %7737 = vmatpush1.bf16.msra.mxu0 %v7661
        %7738 = vmatprep.subr.bf16.mxu0 0
        %7739 = vmatpush1.bf16.msra.mxu0 %v7662
        %7740 = vmatprep.subr.bf16.mxu0 0
        %7741 = vmatpush1.bf16.msra.mxu0 %v7663
        %7742 = vmatprep.subr.bf16.mxu0 0
        %7743 = vmatpush1.bf16.msra.mxu0 %v7664
        %7744 = vmatprep.subr.bf16.mxu0 0
        %7745 = vmatpush1.bf16.msra.mxu0 %v7665
        %7746 = vmatprep.mubr.bf16.mxu0 %v7515
        %7747 = vmatmul.mubr.bf16.gmra.mrb[0].mxu0 %v7514
        %v7748 = vpop.f32.mrb[0].mxu0
        %v7749 = vadd.f32 0.0, %v7748
        %v7750 = vpop.f32.mrb[0].mxu0
        %v7751 = vpop.f32.mrb[0].mxu0
        %v7752 = vpop.f32.mrb[0].mxu0
        %7753 = vdwg.mxu0
        %7754 = vmatprep.subr.bf16.mxu0 0
        %7755 = vmatpush1.bf16.msra.mxu0 %v7666
        %7756 = vmatprep.subr.bf16.mxu0 0
        %7757 = vmatpush1.bf16.msra.mxu0 %v7667
        %7758 = vmatprep.subr.bf16.mxu0 0
        %7759 = vmatpush1.bf16.msra.mxu0 %v7668
        %7760 = vmatprep.subr.bf16.mxu0 0
        %7761 = vmatpush1.bf16.msra.mxu0 %v7669
        %7762 = vmatprep.subr.bf16.mxu0 0
        %7763 = vmatpush1.bf16.msra.mxu0 %v7670
        %7764 = vmatprep.subr.bf16.mxu0 0
        %7765 = vmatpush1.bf16.msra.mxu0 %v7671
        %7766 = vmatprep.subr.bf16.mxu0 0
        %7767 = vmatpush1.bf16.msra.mxu0 %v7672
        %7768 = vmatprep.subr.bf16.mxu0 0
        %7769 = vmatpush1.bf16.msra.mxu0 %v7673
        %7770 = vmatprep.subr.bf16.mxu0 0
        %7771 = vmatpush1.bf16.msra.mxu0 %v7674
        %7772 = vmatprep.subr.bf16.mxu0 0
        %7773 = vmatpush1.bf16.msra.mxu0 %v7675
        %7774 = vmatprep.subr.bf16.mxu0 0
        %7775 = vmatpush1.bf16.msra.mxu0 %v7676
        %7776 = vmatprep.subr.bf16.mxu0 0
        %7777 = vmatpush1.bf16.msra.mxu0 %v7677
        %7778 = vmatprep.subr.bf16.mxu0 0
        %7779 = vmatpush1.bf16.msra.mxu0 %v7678
        %7780 = vmatprep.subr.bf16.mxu0 0
        %7781 = vmatpush1.bf16.msra.mxu0 %v7679
        %7782 = vmatprep.subr.bf16.mxu0 0
        %7783 = vmatpush1.bf16.msra.mxu0 %v7680
        %7784 = vmatprep.subr.bf16.mxu0 0
        %7785 = vmatpush1.bf16.msra.mxu0 %v7681
        %7786 = vmatprep.mubr.bf16.mxu0 %v7517
        %7787 = vmatmul.mubr.bf16.gmra.mrb[0].mxu0 %v7516
        %v7788 = vpop.f32.mrb[0].mxu0
        %v7789 = vadd.f32 %v7749, %v7788
        %v7790 = vpop.f32.mrb[0].mxu0
        %v7791 = vpop.f32.mrb[0].mxu0
        %v7792 = vpop.f32.mrb[0].mxu0
        %7793 = vdwg.mxu0
        %v7794 = vadd.f32 %v7436, %v7789
        %s7795 = scalar_lea.vmem [#allocation13], 1792
        %v7796 = vld [vmem:[%s7795] sm:$0xf]
        %v7797 = vld [vmem:[%s7795 + $0x4] sm:$0xf]
        %v7798 = vld [vmem:[%s7795 + $0x8] sm:$0xf]
        %v7799 = vld [vmem:[%s7795 + $0xc] sm:$0xf]
        %v7800 = vld [vmem:[%s7795 + $0x10] sm:$0xf]
        %v7801 = vld [vmem:[%s7795 + $0x14] sm:$0xf]
        %v7802 = vld [vmem:[%s7795 + $0x18] sm:$0xf]
        %v7803 = vld [vmem:[%s7795 + $0x1c] sm:$0xf]
        %v7804 = vld [vmem:[%s7795 + $0x20] sm:$0xf]
        %v7805 = vld [vmem:[%s7795 + $0x24] sm:$0xf]
        %v7806 = vld [vmem:[%s7795 + $0x28] sm:$0xf]
        %v7807 = vld [vmem:[%s7795 + $0x2c] sm:$0xf]
        %v7808 = vld [vmem:[%s7795 + $0x30] sm:$0xf]
        %v7809 = vld [vmem:[%s7795 + $0x34] sm:$0xf]
        %v7810 = vld [vmem:[%s7795 + $0x38] sm:$0xf]
        %v7811 = vld [vmem:[%s7795 + $0x3c] sm:$0xf]
        %v7812 = vld [vmem:[%s7795 + $0x40] sm:$0xf]
        %v7813 = vld [vmem:[%s7795 + $0x44] sm:$0xf]
        %v7814 = vld [vmem:[%s7795 + $0x48] sm:$0xf]
        %v7815 = vld [vmem:[%s7795 + $0x4c] sm:$0xf]
        %v7816 = vld [vmem:[%s7795 + $0x50] sm:$0xf]
        %v7817 = vld [vmem:[%s7795 + $0x54] sm:$0xf]
        %v7818 = vld [vmem:[%s7795 + $0x58] sm:$0xf]
        %v7819 = vld [vmem:[%s7795 + $0x5c] sm:$0xf]
        %v7820 = vld [vmem:[%s7795 + $0x60] sm:$0xf]
        %v7821 = vld [vmem:[%s7795 + $0x64] sm:$0xf]
        %v7822 = vld [vmem:[%s7795 + $0x68] sm:$0xf]
        %v7823 = vld [vmem:[%s7795 + $0x6c] sm:$0xf]
        %v7824 = vld [vmem:[%s7795 + $0x70] sm:$0xf]
        %v7825 = vld [vmem:[%s7795 + $0x74] sm:$0xf]
        %v7826 = vld [vmem:[%s7795 + $0x78] sm:$0xf]
        %v7827 = vld [vmem:[%s7795 + $0x7c] sm:$0xf]
        %v7828 = vld [vmem:[%s7795 + $0x80] sm:$0xf]
        %v7829 = vld [vmem:[%s7795 + $0x84] sm:$0xf]
        %v7830 = vld [vmem:[%s7795 + $0x88] sm:$0xf]
        %v7831 = vld [vmem:[%s7795 + $0x8c] sm:$0xf]
        %v7832 = vld [vmem:[%s7795 + $0x90] sm:$0xf]
        %v7833 = vld [vmem:[%s7795 + $0x94] sm:$0xf]
        %v7834 = vld [vmem:[%s7795 + $0x98] sm:$0xf]
        %v7835 = vld [vmem:[%s7795 + $0x9c] sm:$0xf]
        %v7836 = vld [vmem:[%s7795 + $0xa0] sm:$0xf]
        %v7837 = vld [vmem:[%s7795 + $0xa4] sm:$0xf]
        %v7838 = vld [vmem:[%s7795 + $0xa8] sm:$0xf]
        %v7839 = vld [vmem:[%s7795 + $0xac] sm:$0xf]
        %v7840 = vld [vmem:[%s7795 + $0xb0] sm:$0xf]
        %v7841 = vld [vmem:[%s7795 + $0xb4] sm:$0xf]
        %v7842 = vld [vmem:[%s7795 + $0xb8] sm:$0xf]
        %v7843 = vld [vmem:[%s7795 + $0xbc] sm:$0xf]
        %v7844 = vld [vmem:[%s7795 + $0xc0] sm:$0xf]
        %v7845 = vld [vmem:[%s7795 + $0xc4] sm:$0xf]
        %v7846 = vld [vmem:[%s7795 + $0xc8] sm:$0xf]
        %v7847 = vld [vmem:[%s7795 + $0xcc] sm:$0xf]
        %v7848 = vld [vmem:[%s7795 + $0xd0] sm:$0xf]
        %v7849 = vld [vmem:[%s7795 + $0xd4] sm:$0xf]
        %v7850 = vld [vmem:[%s7795 + $0xd8] sm:$0xf]
        %v7851 = vld [vmem:[%s7795 + $0xdc] sm:$0xf]
        %v7852 = vld [vmem:[%s7795 + $0xe0] sm:$0xf]
        %v7853 = vld [vmem:[%s7795 + $0xe4] sm:$0xf]
        %v7854 = vld [vmem:[%s7795 + $0xe8] sm:$0xf]
        %v7855 = vld [vmem:[%s7795 + $0xec] sm:$0xf]
        %v7856 = vld [vmem:[%s7795 + $0xf0] sm:$0xf]
        %v7857 = vld [vmem:[%s7795 + $0xf4] sm:$0xf]
        %v7858 = vld [vmem:[%s7795 + $0xf8] sm:$0xf]
        %v7859 = vld [vmem:[%s7795 + $0xfc] sm:$0xf]
        %v7861 = vshrl.u32 %v7510, 16
        %v7863 = vrot.slane %v7861, 3
        %v7865 = vshrl.u32 %v7511, 16
        %v7867 = vrot.slane %v7865, 3
        %v7869 = vshrl.u32 %v7512, 16
        %v7871 = vrot.slane %v7869, 3
        %v7873 = vshrl.u32 %v7513, 16
        %v7875 = vrot.slane %v7873, 3
        %v7944 = vunpack.c.l.b16 %v7796
        %v7945 = vunpack.c.l.b16 %v7797
        %v7946 = vunpack.c.l.b16 %v7798
        %v7947 = vunpack.c.l.b16 %v7799
        %v7948 = vunpack.c.l.b16 %v7800
        %v7949 = vunpack.c.l.b16 %v7801
        %v7950 = vunpack.c.l.b16 %v7802
        %v7951 = vunpack.c.l.b16 %v7803
        %v7952 = vunpack.c.l.b16 %v7804
        %v7953 = vunpack.c.l.b16 %v7805
        %v7954 = vunpack.c.l.b16 %v7806
        %v7955 = vunpack.c.l.b16 %v7807
        %v7956 = vunpack.c.l.b16 %v7808
        %v7957 = vunpack.c.l.b16 %v7809
        %v7958 = vunpack.c.l.b16 %v7810
        %v7959 = vunpack.c.l.b16 %v7811
        %v7960 = vunpack.c.l.b16 %v7812
        %v7961 = vunpack.c.l.b16 %v7813
        %v7962 = vunpack.c.l.b16 %v7814
        %v7963 = vunpack.c.l.b16 %v7815
        %v7964 = vunpack.c.l.b16 %v7816
        %v7965 = vunpack.c.l.b16 %v7817
        %v7966 = vunpack.c.l.b16 %v7818
        %v7967 = vunpack.c.l.b16 %v7819
        %v7968 = vunpack.c.l.b16 %v7820
        %v7969 = vunpack.c.l.b16 %v7821
        %v7970 = vunpack.c.l.b16 %v7822
        %v7971 = vunpack.c.l.b16 %v7823
        %v7972 = vunpack.c.l.b16 %v7824
        %v7973 = vunpack.c.l.b16 %v7825
        %v7974 = vunpack.c.l.b16 %v7826
        %v7975 = vunpack.c.l.b16 %v7827
        %v7976 = vunpack.c.l.b16 %v7828
        %v7977 = vunpack.c.l.b16 %v7829
        %v7978 = vunpack.c.l.b16 %v7830
        %v7979 = vunpack.c.l.b16 %v7831
        %v7980 = vunpack.c.l.b16 %v7832
        %v7981 = vunpack.c.l.b16 %v7833
        %v7982 = vunpack.c.l.b16 %v7834
        %v7983 = vunpack.c.l.b16 %v7835
        %v7984 = vunpack.c.l.b16 %v7836
        %v7985 = vunpack.c.l.b16 %v7837
        %v7986 = vunpack.c.l.b16 %v7838
        %v7987 = vunpack.c.l.b16 %v7839
        %v7988 = vunpack.c.l.b16 %v7840
        %v7989 = vunpack.c.l.b16 %v7841
        %v7990 = vunpack.c.l.b16 %v7842
        %v7991 = vunpack.c.l.b16 %v7843
        %v7992 = vunpack.c.l.b16 %v7844
        %v7993 = vunpack.c.l.b16 %v7845
        %v7994 = vunpack.c.l.b16 %v7846
        %v7995 = vunpack.c.l.b16 %v7847
        %v7996 = vunpack.c.l.b16 %v7848
        %v7997 = vunpack.c.l.b16 %v7849
        %v7998 = vunpack.c.l.b16 %v7850
        %v7999 = vunpack.c.l.b16 %v7851
        %v8000 = vunpack.c.l.b16 %v7852
        %v8001 = vunpack.c.l.b16 %v7853
        %v8002 = vunpack.c.l.b16 %v7854
        %v8003 = vunpack.c.l.b16 %v7855
        %v8004 = vunpack.c.l.b16 %v7856
        %v8005 = vunpack.c.l.b16 %v7857
        %v8006 = vunpack.c.l.b16 %v7858
        %v8007 = vunpack.c.l.b16 %v7859
        %v8008 = vpack.c.b16 %v7945, %v7944
        %v8009 = vpack.c.b16 %v7947, %v7946
        %v8010 = vpack.c.b16 %v7949, %v7948
        %v8011 = vpack.c.b16 %v7951, %v7950
        %v8012 = vpack.c.b16 %v7953, %v7952
        %v8013 = vpack.c.b16 %v7955, %v7954
        %v8014 = vpack.c.b16 %v7957, %v7956
        %v8015 = vpack.c.b16 %v7959, %v7958
        %v8016 = vpack.c.b16 %v7961, %v7960
        %v8017 = vpack.c.b16 %v7963, %v7962
        %v8018 = vpack.c.b16 %v7965, %v7964
        %v8019 = vpack.c.b16 %v7967, %v7966
        %v8020 = vpack.c.b16 %v7969, %v7968
        %v8021 = vpack.c.b16 %v7971, %v7970
        %v8022 = vpack.c.b16 %v7973, %v7972
        %v8023 = vpack.c.b16 %v7975, %v7974
        %v8024 = vpack.c.b16 %v7977, %v7976
        %v8025 = vpack.c.b16 %v7979, %v7978
        %v8026 = vpack.c.b16 %v7981, %v7980
        %v8027 = vpack.c.b16 %v7983, %v7982
        %v8028 = vpack.c.b16 %v7985, %v7984
        %v8029 = vpack.c.b16 %v7987, %v7986
        %v8030 = vpack.c.b16 %v7989, %v7988
        %v8031 = vpack.c.b16 %v7991, %v7990
        %v8032 = vpack.c.b16 %v7993, %v7992
        %v8033 = vpack.c.b16 %v7995, %v7994
        %v8034 = vpack.c.b16 %v7997, %v7996
        %v8035 = vpack.c.b16 %v7999, %v7998
        %v8036 = vpack.c.b16 %v8001, %v8000
        %v8037 = vpack.c.b16 %v8003, %v8002
        %v8038 = vpack.c.b16 %v8005, %v8004
        %v8039 = vpack.c.b16 %v8007, %v8006
        %8072 = vmatprep.subr.bf16.mxu0 0
        %8073 = vmatpush1.bf16.msra.mxu0 %v8008
        %8074 = vmatprep.subr.bf16.mxu0 0
        %8075 = vmatpush1.bf16.msra.mxu0 %v8009
        %8076 = vmatprep.subr.bf16.mxu0 0
        %8077 = vmatpush1.bf16.msra.mxu0 %v8010
        %8078 = vmatprep.subr.bf16.mxu0 0
        %8079 = vmatpush1.bf16.msra.mxu0 %v8011
        %8080 = vmatprep.subr.bf16.mxu0 0
        %8081 = vmatpush1.bf16.msra.mxu0 %v8012
        %8082 = vmatprep.subr.bf16.mxu0 0
        %8083 = vmatpush1.bf16.msra.mxu0 %v8013
        %8084 = vmatprep.subr.bf16.mxu0 0
        %8085 = vmatpush1.bf16.msra.mxu0 %v8014
        %8086 = vmatprep.subr.bf16.mxu0 0
        %8087 = vmatpush1.bf16.msra.mxu0 %v8015
        %8088 = vmatprep.subr.bf16.mxu0 0
        %8089 = vmatpush1.bf16.msra.mxu0 %v8016
        %8090 = vmatprep.subr.bf16.mxu0 0
        %8091 = vmatpush1.bf16.msra.mxu0 %v8017
        %8092 = vmatprep.subr.bf16.mxu0 0
        %8093 = vmatpush1.bf16.msra.mxu0 %v8018
        %8094 = vmatprep.subr.bf16.mxu0 0
        %8095 = vmatpush1.bf16.msra.mxu0 %v8019
        %8096 = vmatprep.subr.bf16.mxu0 0
        %8097 = vmatpush1.bf16.msra.mxu0 %v8020
        %8098 = vmatprep.subr.bf16.mxu0 0
        %8099 = vmatpush1.bf16.msra.mxu0 %v8021
        %8100 = vmatprep.subr.bf16.mxu0 0
        %8101 = vmatpush1.bf16.msra.mxu0 %v8022
        %8102 = vmatprep.subr.bf16.mxu0 0
        %8103 = vmatpush1.bf16.msra.mxu0 %v8023
        %8104 = vmatprep.mubr.bf16.mxu0 %v7867
        %8105 = vmatmul.mubr.bf16.gmra.mrb[0].mxu0 %v7863
        %v8106 = vpop.f32.mrb[0].mxu0
        %v8107 = vadd.f32 0.0, %v8106
        %v8108 = vpop.f32.mrb[0].mxu0
        %v8109 = vpop.f32.mrb[0].mxu0
        %v8110 = vpop.f32.mrb[0].mxu0
        %8111 = vdwg.mxu0
        %8112 = vmatprep.subr.bf16.mxu0 0
        %8113 = vmatpush1.bf16.msra.mxu0 %v8024
        %8114 = vmatprep.subr.bf16.mxu0 0
        %8115 = vmatpush1.bf16.msra.mxu0 %v8025
        %8116 = vmatprep.subr.bf16.mxu0 0
        %8117 = vmatpush1.bf16.msra.mxu0 %v8026
        %8118 = vmatprep.subr.bf16.mxu0 0
        %8119 = vmatpush1.bf16.msra.mxu0 %v8027
        %8120 = vmatprep.subr.bf16.mxu0 0
        %8121 = vmatpush1.bf16.msra.mxu0 %v8028
        %8122 = vmatprep.subr.bf16.mxu0 0
        %8123 = vmatpush1.bf16.msra.mxu0 %v8029
        %8124 = vmatprep.subr.bf16.mxu0 0
        %8125 = vmatpush1.bf16.msra.mxu0 %v8030
        %8126 = vmatprep.subr.bf16.mxu0 0
        %8127 = vmatpush1.bf16.msra.mxu0 %v8031
        %8128 = vmatprep.subr.bf16.mxu0 0
        %8129 = vmatpush1.bf16.msra.mxu0 %v8032
        %8130 = vmatprep.subr.bf16.mxu0 0
        %8131 = vmatpush1.bf16.msra.mxu0 %v8033
        %8132 = vmatprep.subr.bf16.mxu0 0
        %8133 = vmatpush1.bf16.msra.mxu0 %v8034
        %8134 = vmatprep.subr.bf16.mxu0 0
        %8135 = vmatpush1.bf16.msra.mxu0 %v8035
        %8136 = vmatprep.subr.bf16.mxu0 0
        %8137 = vmatpush1.bf16.msra.mxu0 %v8036
        %8138 = vmatprep.subr.bf16.mxu0 0
        %8139 = vmatpush1.bf16.msra.mxu0 %v8037
        %8140 = vmatprep.subr.bf16.mxu0 0
        %8141 = vmatpush1.bf16.msra.mxu0 %v8038
        %8142 = vmatprep.subr.bf16.mxu0 0
        %8143 = vmatpush1.bf16.msra.mxu0 %v8039
        %8144 = vmatprep.mubr.bf16.mxu0 %v7875
        %8145 = vmatmul.mubr.bf16.gmra.mrb[0].mxu0 %v7871
        %v8146 = vpop.f32.mrb[0].mxu0
        %v8147 = vadd.f32 %v8107, %v8146
        %v8148 = vpop.f32.mrb[0].mxu0
        %v8149 = vpop.f32.mrb[0].mxu0
        %v8150 = vpop.f32.mrb[0].mxu0
        %8151 = vdwg.mxu0
        %v8152 = vadd.f32 %v7794, %v8147
        %vm8153 = vcmask 1040384
        %v8154 = vsel %vm8153, %v8152, -inf
        %8155 = vmax.xlane.f32.xlu0 %v8154
        %v8156 = vpop.xlane.xlu0 %8155
        %v8157 = vsub.f32 %v8152, %v8156
        %v8158 = vmul.f32 %v8157, 1.442695
        %v8159 = vpow.pop %v8158
        %v8160 = vsel %vm8153, %v8159, 0.0
        %8161 = vadd.xlane.f32.xlu0 %v8160
        %v8162 = vpop.xlane.xlu0 %8161
        %v8163 = vrcp.pop %v8162
        %v8164 = vmul.f32 %v8159, %v8163
        %8165 = vst [vmem:[%s420] sm:$0x1] %v8164
        %s8166 = sand.u32 %s229, 1
        %s8167 = scalar_lea.sflag [#allocation6], %s8166
        %s8168 = sand.u32 %s229, 1
        %s8169 = scalar_lea.vmem [#allocation16], %s8168
        // Predicated region
        $region85: #{shallow_cnn_forward.1} parent=55 // pred_check
          %p8170 = pneg %p239
        $region86: #{shallow_cnn_forward.1} parent=55 // pred_check_branch
          %8172 = sbr.rel (%p8170) target = $region88
        $region87: #{shallow_cnn_forward.1} parent=55 // pred_region
          %s8174 = ssub.s32 16, 16
          %8175 = vsyncadd %s8167, %s8174
          %s8176 = smul.addr %s27, 16
          %s8177 = scalar_lea.hbm %s9, %s8176
          %s8179 = sshll.u32 %s8169, 4
          %s8180 = int_to_ptr.vmem [resolvable:$true] %s8179
          %8182 = dma.vmem_to_hbm [thread:$0]  %s8180, 16, %s8177, %s8167
        $region88: #{shallow_cnn_forward.1} parent=55 // pred_fallthru
          _
      $region56: #{shallow_cnn_forward.1} parent=5 // pred_fallthru
        _
      %p8183 = scmp.le.s32.totalorder 2, %s22
      // Predicated region
      $region89: #{shallow_cnn_forward.1} parent=5 // pred_check
        %p8184 = pneg %p8183
      $region90: #{shallow_cnn_forward.1} parent=5 // pred_check_branch
        %8186 = sbr.rel (%p8184) target = $region92
      $region91: #{shallow_cnn_forward.1} parent=5 // pred_region
        %s8187 = ssub.s32 %s22, 2
        // Predicated region
        $region93: #{shallow_cnn_forward.1} parent=91 // pred_check
          %p8188 = pneg %p245
        $region94: #{shallow_cnn_forward.1} parent=91 // pred_check_branch
          %8190 = sbr.rel (%p8188) target = $region96
        $region95: #{shallow_cnn_forward.1} parent=91 // pred_region
          %s8191 = sand.u32 %s230, 1
          %s8192 = scalar_lea.sflag [#allocation6], %s8191
          %s8193 = sand.u32 %s230, 1
          %s8194 = scalar_lea.vmem [#allocation16], %s8193
          %8195 = dma.done %s8192, 16
        $region96: #{shallow_cnn_forward.1} parent=91 // pred_fallthru
          _
      $region92: #{shallow_cnn_forward.1} parent=5 // pred_fallthru
        _
    $region6: #{shallow_cnn_forward.1} parent=1 // loop_footer
      %s26 = sadd.s32 1, %s22
    $region7: #{shallow_cnn_forward.1} parent=1 // loop_footer_branch
      %21 = sbr.rel target = $region3
    $region8: #{shallow_cnn_forward.1} parent=1 // loop_exit
      _
    %8196 = vsyncpa [#allocation5], 1
    %s8197 = scalar_lea.sflag [#allocation5], 1
    %8198 = vsyncpa %s8197, 1
    %8199 = vsyncpa [#allocation8], 1
    %8200 = vsyncpa [#allocation11], 1
    %8201 = vsyncpa [#allocation14], 1
    %8202 = vsyncpa [#allocation6], 1
    %s8203 = scalar_lea.sflag [#allocation6], 1
    %8204 = vsyncpa %s8203, 1

</llo_original>
